<compile_context>
chip_gen: v6e
topology: v6e:2x2x1
jax: 0.10.0
libtpu: 0.0.40
codegen_flags: <defaults>
</compile_context>

<pallas_src>
import functools

import jax
import jax.numpy as jnp
from jax import lax
from jax.experimental import pallas as pl
from jax.experimental.pallas import tpu as pltpu


# Row layout of the per-block packed 1-D parameter array (R, Wpack).
(_R_N1G, _R_N1B, _R_G1, _R_N2G, _R_N2B, _R_G2,
 _R_PRB, _R_MB2, _R_MB1, _R_BQKV) = range(10)
_R_MASK0 = 10          # rows 10 .. 10+num_heads-1 hold the per-head channel masks


def _gelu_erf(x):
    """Exact GELU: 0.5*x*(1+erf(x/sqrt(2))) with the Abramowitz-Stegun 7.1.26
    erf approximation (|erf error| < 1.5e-7).  exp and the reciprocal go to the
    EUP slot; only a 5-FMA polynomial remains on the VPU."""
    z = x * 0.7071067811865476
    az = jnp.abs(z)
    t = pl.reciprocal(1.0 + 0.3275911 * az, approx=False)
    poly = ((((1.061405429 * t - 1.453152027) * t + 1.421413741) * t
             - 0.284496736) * t + 0.254829592) * t
    erf_abs = 1.0 - poly * jnp.exp(-(az * az))
    erf = jnp.where(z >= 0.0, erf_abs, -erf_abs)
    return 0.5 * x * (1.0 + erf)


def _layer_norm(x, g, b):
    mu = jnp.mean(x, axis=-1, keepdims=True)
    var = jnp.mean((x - mu) ** 2, axis=-1, keepdims=True)
    return (x - mu) * lax.rsqrt(var + 1e-5) * g + b


def _block_body(x2d, q_ext, pk_ref, wqkv_ref, wp_ref, w1_ref, w2_ref, bias2d,
                *, G, N, C, num_heads):
    """One GCViT block (norm1 -> attention -> residual -> norm2 -> MLP -> residual).
      q_ext is None  -> WindowAttention        (q from the fused qkv projection)
      q_ext is given -> WindowAttentionGlobal  (q = raw layer-input tokens;
                                                qk scale pre-folded into Wk)."""
    nh = num_heads
    hidden = w1_ref.shape[1]
    n_qkv = wqkv_ref.shape[1] // C

    pk = pk_ref[...]                                    # (R, Wpack) f32
    n1g, n1b = pk[_R_N1G, :C], pk[_R_N1B, :C]
    n2g, n2b = pk[_R_N2G, :C], pk[_R_N2B, :C]
    g1, g2 = pk[_R_G1, :C], pk[_R_G2, :C]
    prb, mb2 = pk[_R_PRB, :C], pk[_R_MB2, :C]
    mb1 = pk[_R_MB1, :hidden]
    bqkv = pk[_R_BQKV, :n_qkv * C]
    masks = [pk[_R_MASK0 + h, :C] for h in range(nh)]   # 0/1 head-channel masks
    masks_b = [m.astype(jnp.bfloat16) for m in masks]

    # ---- norm1; the residual shortcut is the *normed* tokens (spec:
    #      `shortcut = x_windows` is taken AFTER self.norm1) -------------------
    xn = _layer_norm(x2d, n1g, n1b)

    # ---- fused QKV / KV projection: single whole-C bf16 MXU matmul ----------
    qkv = jnp.dot(xn.astype(jnp.bfloat16), wqkv_ref[...],
                  preferred_element_type=jnp.float32) + bqkv
    if q_ext is None:                       # WindowAttention
        q3 = qkv[:, :C].reshape(G, N, C)
        k3 = qkv[:, C:2 * C].reshape(G, N, C)
        v3 = qkv[:, 2 * C:].reshape(G, N, C)
    else:                                   # WindowAttentionGlobal
        q3 = q_ext                          # (G, N, C) raw tokens (scale in Wk)
        k3 = qkv[:, :C].reshape(G, N, C)
        v3 = qkv[:, C:].reshape(G, N, C)

    # ---- head-stacked attention (all heads in two batched bf16 matmuls) -----
    q_b = q3.astype(jnp.bfloat16)
    k_b = k3.astype(jnp.bfloat16)
    v_b = v3.astype(jnp.bfloat16)
    # q replicated per head and masked to its hd channels, stacked on the
    # token (sublane) axis: rows [h*N, (h+1)*N) of q_exp belong to head h.
    q_exp = jnp.concatenate([q_b * masks_b[h] for h in range(nh)], axis=1)

    s = jnp.einsum('gnc,gmc->gnm', q_exp, k_b,
                   preferred_element_type=jnp.float32)       # (G, nh*N, N)
    s = s + bias2d.astype(jnp.float32)                       # rel-pos bias (nh*N, N)
    s = s - jnp.max(s, axis=-1, keepdims=True)
    e = jnp.exp(s)                                           # f32 (v5e-safe)
    p = e * pl.reciprocal(jnp.sum(e, axis=-1, keepdims=True), approx=True)

    full = jnp.einsum('gnm,gmc->gnc', p.astype(jnp.bfloat16), v_b,
                      preferred_element_type=jnp.float32)    # (G, nh*N, C)

    # "concat heads": head h contributes only its hd channels -> masked slab sum
    ctx = full[:, 0:N, :] * masks[0]
    for h in range(1, nh):
        ctx = ctx + full[:, h * N:(h + 1) * N, :] * masks[h]
    ctx2d = ctx.reshape(G * N, C)

    # ---- output projection (single (C, C) bf16 matmul) ----------------------
    attn = jnp.dot(ctx2d.astype(jnp.bfloat16), wp_ref[...],
                   preferred_element_type=jnp.float32) + prb

    # ---- residual #1 (shortcut is the normed tokens, as in the spec) --------
    y = xn + g1 * attn

    # ---- norm2 + MLP (dim -> hidden -> dim, exact-erf GELU) -----------------
    yn = _layer_norm(y, n2g, n2b)
    h1 = jnp.dot(yn.astype(jnp.bfloat16), w1_ref[...],
                 preferred_element_type=jnp.float32) + mb1
    h1 = _gelu_erf(h1)
    m = jnp.dot(h1.astype(jnp.bfloat16), w2_ref[...],
                preferred_element_type=jnp.float32) + mb2
    return y + g2 * m


def _gcvit_layer_kernel(x_ref,
                        pk1_ref, wqkv1_ref, wp1_ref, w11_ref, w21_ref,
                        pk2_ref, wqkv2_ref, wp2_ref, w12_ref, w22_ref,
                        bias_ref, o_ref, *, G, N, C, num_heads):
    x = x_ref[...]                          # (G, N, C) f32 windows
    x2d = x.reshape(G * N, C)

    # block 1: WindowAttention
    y1 = _block_body(x2d, None, pk1_ref, wqkv1_ref, wp1_ref, w11_ref, w21_ref,
                     bias_ref[0], G=G, N=N, C=C, num_heads=num_heads)
    # block 2: WindowAttentionGlobal; for ratio <= 8 the global query is the
    # RAW layer-input tokens already resident in VMEM (scale folded into Wk).
    y2 = _block_body(y1, x, pk2_ref, wqkv2_ref, wp2_ref, w12_ref, w22_ref,
                     bias_ref[1], G=G, N=N, C=C, num_heads=num_heads)

    o_ref[...] = y2.reshape(G, N, C)


# ----------------------------------------------------------------------------
# Plain-JAX glue (runs once in the wrapper, outside the hot path)
# ----------------------------------------------------------------------------
def _const_spec(a):
    idx = (0,) * a.ndim
    return pl.BlockSpec(a.shape, lambda b, _i=idx: _i)


def _relative_position_bias(table, wh, ww, max_ws, num_heads):
    # identical index arithmetic to WindowAttention / WindowAttentionGlobal
    N = wh * ww
    ch = jnp.arange(wh)
    cw = jnp.arange(ww)
    coords = jnp.stack(jnp.meshgrid(ch, cw, indexing='ij'))        # (2, wh, ww)
    cf = coords.reshape(2, -1)                                     # (2, N)
    rel = (cf[:, :, None] - cf[:, None, :]).transpose(1, 2, 0)     # (N, N, 2)
    r0 = (rel[..., 0] + (max_ws[0] - 1)) * (2 * max_ws[1] - 1)
    r1 = rel[..., 1] + (max_ws[1] - 1)
    idx = (r0 + r1).reshape(-1)
    bias = table[idx].reshape(N, N, num_heads).transpose(2, 0, 1)  # (nh, N, N)
    return bias.astype(jnp.float32)


def _select_window_size(H, W):              # mirrors GCViTBlock.forward
    if H == 8:
        return 8, 16
    if H == 6:
        return 6, 24
    if H == 5:
        return 5, 28
    if H == 4 and W == 32:
        return 4, 32
    if H == 4 and W > 32:
        return 4, 16
    raise ValueError(f"unsupported spatial size {(H, W)}")


def _choose_group(bw, target=8):
    """Windows per grid step: enough to amortize the ~0.35us per-step pipeline
    overhead (each window already carries ~40 MFLOP with head-stacked scores),
    capped so (a) there are >= 2 grid steps for v7x's two TensorCores and
    (b) the live score/prob tensors stay a few MiB on every generation."""
    return max(1, min(target, -(-bw // 2)))


def _prep_block_params(p, wh, ww, num_heads, scale, C):
    """Fold the qk scale into the first C output columns of the fused qkv/kv
    weight (q for block_1, k for block_2: (q*s)@k^T == q@(k*s)^T), pre-cast the
    matmul weights to bf16, pack all small 1-D parameters + per-head channel
    masks into one (R, Wpack) f32 array, and gather the relative-position bias
    as a lane-dense head-stacked (nh*N, N) bf16 table."""
    hd = C // num_heads
    hidden = p['mlp_w1'].shape[1]
    n_out = p['qkv_w'].shape[1]
    wpack = max(hidden, n_out, C)

    col_scale = jnp.concatenate([jnp.full((C,), scale, jnp.float32),
                                 jnp.ones((n_out - C,), jnp.float32)])
    wqkv = p['qkv_w'].astype(jnp.float32) * col_scale[None, :]
    bqkv = p['qkv_b'].reshape(-1).astype(jnp.float32) * col_scale

    def row(v):
        v = jnp.asarray(v, jnp.float32).reshape(-1)
        return jnp.pad(v, (0, wpack - v.shape[0]))

    head_of_chan = jnp.arange(C) // hd
    mask_rows = [row((head_of_chan == h).astype(jnp.float32))
                 for h in range(num_heads)]
    pack = jnp.stack([row(p['norm1_g']), row(p['norm1_b']), row(p['gamma1']),
                      row(p['norm2_g']), row(p['norm2_b']), row(p['gamma2']),
                      row(p['proj_b']), row(p['mlp_b2']), row(p['mlp_b1']),
                      row(bqkv)] + mask_rows)             # (10+nh, Wpack) f32

    bias = _relative_position_bias(p['rel_table'], wh, ww,
                                   p['max_window_size'], num_heads)
    bias2d = bias.reshape(num_heads * wh * ww, wh * ww).astype(jnp.bfloat16)

    weights = (wqkv.astype(jnp.bfloat16),
               p['proj_w'].astype(jnp.bfloat16),
               p['mlp_w1'].astype(jnp.bfloat16),
               p['mlp_w2'].astype(jnp.bfloat16))
    return pack, weights, bias2d


def gcvit_layer(x, sz, params, *, group_target=8):
    B, L, C = x.shape
    H, W = sz
    assert L == H * W
    num_heads = params['num_heads']
    assert C % num_heads == 0
    hd = C // num_heads
    scale = float(hd) ** -0.5

    wh, ww = _select_window_size(H, W)
    N = wh * ww
    if (H // wh) * (W // ww) != 1:
        # TODO(synk): multi-window / ratio>8 GlobalQueryGen downsampling path
        # (FeatExtract depthwise conv + SE + MaxPool + AdaptiveMaxPool2d) not
        # implemented in Pallas.
        raise NotImplementedError("only single-window (ratio <= 8) configs supported")

    # One window per image: window_partition / window_reverse and GlobalQueryGen
    # are pure reshapes -> no transpose copies, and no q_global operand at all.
    Bw = B
    xw = x.reshape(Bw, N, C).astype(jnp.float32)

    pk1, ws1, bias1 = _prep_block_params(params['block_1'], wh, ww, num_heads, scale, C)
    pk2, ws2, bias2 = _prep_block_params(params['block_2'], wh, ww, num_heads, scale, C)
    bias_stack = jnp.stack([bias1, bias2])                 # (2, nh*N, N) bf16
    consts = [pk1, *ws1, pk2, *ws2, bias_stack]

    G = _choose_group(Bw, group_target)
    steps = -(-Bw // G)
    bw_pad = steps * G
    if bw_pad != Bw:                                       # pad batch to G multiple
        xw = jnp.concatenate(
            [xw, jnp.zeros((bw_pad - Bw, N, C), jnp.float32)], axis=0)

    kernel = functools.partial(_gcvit_layer_kernel, G=G, N=N, C=C,
                               num_heads=num_heads)
    out = pl.pallas_call(
        kernel,
        out_shape=jax.ShapeDtypeStruct((bw_pad, N, C), jnp.float32),
        grid_spec=pltpu.PrefetchScalarGridSpec(
            num_scalar_prefetch=0,
            grid=(steps,),
            in_specs=([pl.BlockSpec((G, N, C), lambda b: (b, 0, 0))] +
                      [_const_spec(a) for a in consts]),
            out_specs=pl.BlockSpec((G, N, C), lambda b: (b, 0, 0)),
        ),
        compiler_params=pltpu.CompilerParams(
            dimension_semantics=("parallel",),             # shard windows across TCs
            vmem_limit_bytes=48 * 1024 * 1024),
    )(xw, *consts)

    return out[:Bw].reshape(B, H * W, C)


# ----------------------------------------------------------------------------
# Deterministic parameter initialization (shapes per the module's __init__,
# weights stored (in_features, out_features)).
# ----------------------------------------------------------------------------
def init_params(key, dim, num_heads=8, max_window_size=(8, 32),
                mlp_ratio=4.0, layer_scale=1e-5):
    def block(bkey, n_qkv):
        hidden = int(dim * mlp_ratio)
        ks = jax.random.split(bkey, 6)
        std = 0.02
        max_pos = (2 * max_window_size[0] - 1) * (2 * max_window_size[1] - 1)
        return {
            'norm1_g': jnp.ones((1, dim), jnp.float32),
            'norm1_b': jnp.zeros((1, dim), jnp.float32),
            'qkv_w': std * jax.random.normal(ks[0], (dim, n_qkv * dim), jnp.float32),
            'qkv_b': std * jax.random.normal(ks[1], (1, n_qkv * dim), jnp.float32),
            'rel_table': std * jax.random.normal(ks[2], (max_pos, num_heads), jnp.float32),
            'proj_w': std * jax.random.normal(ks[3], (dim, dim), jnp.float32),
            'proj_b': jnp.zeros((1, dim), jnp.float32),
            'gamma1': jnp.full((1, dim), layer_scale, jnp.float32),
            'norm2_g': jnp.ones((1, dim), jnp.float32),
            'norm2_b': jnp.zeros((1, dim), jnp.float32),
            'mlp_w1': std * jax.random.normal(ks[4], (dim, hidden), jnp.float32),
            'mlp_b1': jnp.zeros((1, hidden), jnp.float32),
            'mlp_w2': std * jax.random.normal(ks[5], (hidden, dim), jnp.float32),
            'mlp_b2': jnp.zeros((1, dim), jnp.float32),
            'gamma2': jnp.full((1, dim), layer_scale, jnp.float32),
            'max_window_size': tuple(max_window_size),
        }
    k1, k2 = jax.random.split(key)
    return {'num_heads': num_heads,
            'block_1': block(k1, 3),    # WindowAttention:       qkv = Linear(dim, 3*dim)
            'block_2': block(k2, 2)}    # WindowAttentionGlobal: kv  = Linear(dim, 2*dim)


# ----------------------------------------------------------------------------
# Pure-JAX reference (f32) of the same forward pass, for a correctness check.
# ----------------------------------------------------------------------------
def _reference_block(x2d, q_ext, p, bias, scale, G, N, C, nh):
    hd = C // nh

    def ln(v, g, b):
        mu = v.mean(-1, keepdims=True)
        var = ((v - mu) ** 2).mean(-1, keepdims=True)
        return (v - mu) / jnp.sqrt(var + 1e-5) * g.reshape(-1) + b.reshape(-1)

    xn = ln(x2d, p['norm1_g'], p['norm1_b'])
    qkv = xn @ p['qkv_w'] + p['qkv_b'].reshape(-1)
    if q_ext is None:
        q, k, v = qkv[:, :C], qkv[:, C:2 * C], qkv[:, 2 * C:]
    else:
        q, k, v = q_ext, qkv[:, :C], qkv[:, C:]

    def heads(t):
        return t.reshape(G, N, nh, hd).transpose(0, 2, 1, 3)   # (G, nh, N, hd)

    qh, kh, vh = heads(q) * scale, heads(k), heads(v)
    s = jnp.einsum('ghnd,ghmd->ghnm', qh, kh) + bias[None]
    a = jax.nn.softmax(s, axis=-1)
    ctx = jnp.einsum('ghnm,ghmd->ghnd', a, vh).transpose(0, 2, 1, 3).reshape(G * N, C)
    attn = ctx @ p['proj_w'] + p['proj_b'].reshape(-1)
    y = xn + p['gamma1'].reshape(-1) * attn
    yn = ln(y, p['norm2_g'], p['norm2_b'])
    h1 = jax.nn.gelu(yn @ p['mlp_w1'] + p['mlp_b1'].reshape(-1), approximate=False)
    m = h1 @ p['mlp_w2'] + p['mlp_b2'].reshape(-1)
    return y + p['gamma2'].reshape(-1) * m


def gcvit_layer_reference(x, sz, params):
    B, L, C = x.shape
    H, W = sz
    nh = params['num_heads']
    scale = float(C // nh) ** -0.5
    wh, ww = _select_window_size(H, W)
    N = wh * ww
    x2d = x.reshape(B * N, C).astype(jnp.float32)
    b1 = _relative_position_bias(params['block_1']['rel_table'], wh, ww,
                                 params['block_1']['max_window_size'], nh)
    b2 = _relative_position_bias(params['block_2']['rel_table'], wh, ww,
                                 params['block_2']['max_window_size'], nh)
    y1 = _reference_block(x2d, None, params['block_1'], b1, scale, B, N, C, nh)
    y2 = _reference_block(y1, x2d, params['block_2'], b2, scale, B, N, C, nh)
    return y2.reshape(B, L, C)


if __name__ == "__main__":
    key = jax.random.PRNGKey(0)
    kx, kp = jax.random.split(key)

    # Shapes consistent with the module: dim=32, 8 heads, H=4, W=32
    # (ratio == 8 -> single (4,32) window; GlobalQueryGen is an identity reshape).
    B, C, H, W = 2, 32, 4, 32
    x = jax.random.normal(kx, (B, H * W, C), jnp.float32)
    params = init_params(kp, dim=C, num_heads=8)

    out = jax.block_until_ready(gcvit_layer(x, (H, W), params))
    assert out.shape == (B, H * W, C), out.shape
    assert bool(jnp.all(jnp.isfinite(out)))

    # Pure-JAX f32 reference; kernel's bf16 operands / approx reciprocal are
    # layer_scale(1e-5)-gated, so agreement is tight -- loose tolerance used.
    ref = jax.block_until_ready(gcvit_layer_reference(x, (H, W), params))
    max_err = float(jnp.max(jnp.abs(out - ref)))
    assert max_err < 2e-2, f"kernel vs reference mismatch: {max_err}"

    print("KERNEL_OK")
</pallas_src>

<mosaic_0001>
module attributes {stable_mosaic.version = 11 : i64} {
  func.func @_gcvit_layer_kernel(%arg0: i32, %arg1: memref<1x128x32xf32, #tpu.memory_space<vmem>>, %arg2: memref<18x128xf32, #tpu.memory_space<vmem>>, %arg3: memref<32x96xbf16, #tpu.memory_space<vmem>>, %arg4: memref<32x32xbf16, #tpu.memory_space<vmem>>, %arg5: memref<32x128xbf16, #tpu.memory_space<vmem>>, %arg6: memref<128x32xbf16, #tpu.memory_space<vmem>>, %arg7: memref<18x128xf32, #tpu.memory_space<vmem>>, %arg8: memref<32x64xbf16, #tpu.memory_space<vmem>>, %arg9: memref<32x32xbf16, #tpu.memory_space<vmem>>, %arg10: memref<32x128xbf16, #tpu.memory_space<vmem>>, %arg11: memref<128x32xbf16, #tpu.memory_space<vmem>>, %arg12: memref<2x1024x128xbf16, #tpu.memory_space<vmem>>, %arg13: memref<1x128x32xf32, #tpu.memory_space<vmem>>) attributes {dimension_semantics = [#tpu.dimension_semantics<parallel>], iteration_bounds = array<i64: 2>, scalar_prefetch = 0 : i64, scratch_operands = 0 : i64, tpu.core_type = #tpu.core_type<tc>, window_params = [{transform_indices = @transform_0, window_bounds = array<i64: 1, 128, 32>}, {pipeline_mode = #tpu.pipeline_mode<synchronous>, transform_indices = @transform_1, window_bounds = array<i64: 18, 128>}, {pipeline_mode = #tpu.pipeline_mode<synchronous>, transform_indices = @transform_2, window_bounds = array<i64: 32, 96>}, {pipeline_mode = #tpu.pipeline_mode<synchronous>, transform_indices = @transform_3, window_bounds = array<i64: 32, 32>}, {pipeline_mode = #tpu.pipeline_mode<synchronous>, transform_indices = @transform_4, window_bounds = array<i64: 32, 128>}, {pipeline_mode = #tpu.pipeline_mode<synchronous>, transform_indices = @transform_5, window_bounds = array<i64: 128, 32>}, {pipeline_mode = #tpu.pipeline_mode<synchronous>, transform_indices = @transform_6, window_bounds = array<i64: 18, 128>}, {pipeline_mode = #tpu.pipeline_mode<synchronous>, transform_indices = @transform_7, window_bounds = array<i64: 32, 64>}, {pipeline_mode = #tpu.pipeline_mode<synchronous>, transform_indices = @transform_8, window_bounds = array<i64: 32, 32>}, {pipeline_mode = #tpu.pipeline_mode<synchronous>, transform_indices = @transform_9, window_bounds = array<i64: 32, 128>}, {pipeline_mode = #tpu.pipeline_mode<synchronous>, transform_indices = @transform_10, window_bounds = array<i64: 128, 32>}, {pipeline_mode = #tpu.pipeline_mode<synchronous>, transform_indices = @transform_11, window_bounds = array<i64: 2, 1024, 128>}, {transform_indices = @transform_12, window_bounds = array<i64: 1, 128, 32>}]} {
    %c0 = arith.constant 0 : index
    %c0_0 = arith.constant 0 : index
    %c0_1 = arith.constant 0 : index
    %0 = vector.load %arg1[%c0, %c0_0, %c0_1] : memref<1x128x32xf32, #tpu.memory_space<vmem>>, vector<1x128x32xf32>
    %1 = vector.shape_cast %0 : vector<1x128x32xf32> to vector<128x32xf32>
    %c0_2 = arith.constant 0 : index
    %c0_3 = arith.constant 0 : index
    %c0_4 = arith.constant 0 : index
    %2 = vector.load %arg12[%c0_2, %c0_3, %c0_4] : memref<2x1024x128xbf16, #tpu.memory_space<vmem>>, vector<1x1024x128xbf16>
    %3 = vector.shape_cast %2 : vector<1x1024x128xbf16> to vector<1024x128xbf16>
    %c0_5 = arith.constant 0 : index
    %c0_6 = arith.constant 0 : index
    %4 = vector.load %arg2[%c0_5, %c0_6] : memref<18x128xf32, #tpu.memory_space<vmem>>, vector<18x128xf32>
    %5 = vector.extract_strided_slice %4 {offsets = [0, 0], sizes = [1, 32], strides = [1, 1]} : vector<18x128xf32> to vector<1x32xf32>
    %6 = vector.shape_cast %5 : vector<1x32xf32> to vector<32xf32>
    %7 = vector.extract_strided_slice %4 {offsets = [1, 0], sizes = [1, 32], strides = [1, 1]} : vector<18x128xf32> to vector<1x32xf32>
    %8 = vector.shape_cast %7 : vector<1x32xf32> to vector<32xf32>
    %9 = vector.extract_strided_slice %4 {offsets = [3, 0], sizes = [1, 32], strides = [1, 1]} : vector<18x128xf32> to vector<1x32xf32>
    %10 = vector.shape_cast %9 : vector<1x32xf32> to vector<32xf32>
    %11 = vector.extract_strided_slice %4 {offsets = [4, 0], sizes = [1, 32], strides = [1, 1]} : vector<18x128xf32> to vector<1x32xf32>
    %12 = vector.shape_cast %11 : vector<1x32xf32> to vector<32xf32>
    %13 = vector.extract_strided_slice %4 {offsets = [2, 0], sizes = [1, 32], strides = [1, 1]} : vector<18x128xf32> to vector<1x32xf32>
    %14 = vector.shape_cast %13 : vector<1x32xf32> to vector<32xf32>
    %15 = vector.extract_strided_slice %4 {offsets = [5, 0], sizes = [1, 32], strides = [1, 1]} : vector<18x128xf32> to vector<1x32xf32>
    %16 = vector.shape_cast %15 : vector<1x32xf32> to vector<32xf32>
    %17 = vector.extract_strided_slice %4 {offsets = [6, 0], sizes = [1, 32], strides = [1, 1]} : vector<18x128xf32> to vector<1x32xf32>
    %18 = vector.shape_cast %17 : vector<1x32xf32> to vector<32xf32>
    %19 = vector.extract_strided_slice %4 {offsets = [7, 0], sizes = [1, 32], strides = [1, 1]} : vector<18x128xf32> to vector<1x32xf32>
    %20 = vector.shape_cast %19 : vector<1x32xf32> to vector<32xf32>
    %21 = vector.extract_strided_slice %4 {offsets = [8, 0], sizes = [1, 128], strides = [1, 1]} : vector<18x128xf32> to vector<1x128xf32>
    %22 = vector.shape_cast %21 : vector<1x128xf32> to vector<128xf32>
    %23 = vector.extract_strided_slice %4 {offsets = [9, 0], sizes = [1, 96], strides = [1, 1]} : vector<18x128xf32> to vector<1x96xf32>
    %24 = vector.shape_cast %23 : vector<1x96xf32> to vector<96xf32>
    %25 = vector.extract_strided_slice %4 {offsets = [10, 0], sizes = [1, 32], strides = [1, 1]} : vector<18x128xf32> to vector<1x32xf32>
    %26 = vector.shape_cast %25 : vector<1x32xf32> to vector<32xf32>
    %27 = vector.extract_strided_slice %4 {offsets = [11, 0], sizes = [1, 32], strides = [1, 1]} : vector<18x128xf32> to vector<1x32xf32>
    %28 = vector.shape_cast %27 : vector<1x32xf32> to vector<32xf32>
    %29 = vector.extract_strided_slice %4 {offsets = [12, 0], sizes = [1, 32], strides = [1, 1]} : vector<18x128xf32> to vector<1x32xf32>
    %30 = vector.shape_cast %29 : vector<1x32xf32> to vector<32xf32>
    %31 = vector.extract_strided_slice %4 {offsets = [13, 0], sizes = [1, 32], strides = [1, 1]} : vector<18x128xf32> to vector<1x32xf32>
    %32 = vector.shape_cast %31 : vector<1x32xf32> to vector<32xf32>
    %33 = vector.extract_strided_slice %4 {offsets = [14, 0], sizes = [1, 32], strides = [1, 1]} : vector<18x128xf32> to vector<1x32xf32>
    %34 = vector.shape_cast %33 : vector<1x32xf32> to vector<32xf32>
    %35 = vector.extract_strided_slice %4 {offsets = [15, 0], sizes = [1, 32], strides = [1, 1]} : vector<18x128xf32> to vector<1x32xf32>
    %36 = vector.shape_cast %35 : vector<1x32xf32> to vector<32xf32>
    %37 = vector.extract_strided_slice %4 {offsets = [16, 0], sizes = [1, 32], strides = [1, 1]} : vector<18x128xf32> to vector<1x32xf32>
    %38 = vector.shape_cast %37 : vector<1x32xf32> to vector<32xf32>
    %39 = vector.extract_strided_slice %4 {offsets = [17, 0], sizes = [1, 32], strides = [1, 1]} : vector<18x128xf32> to vector<1x32xf32>
    %40 = vector.shape_cast %39 : vector<1x32xf32> to vector<32xf32>
    %41 = arith.truncf %26 : vector<32xf32> to vector<32xbf16>
    %42 = arith.truncf %28 : vector<32xf32> to vector<32xbf16>
    %43 = arith.truncf %30 : vector<32xf32> to vector<32xbf16>
    %44 = arith.truncf %32 : vector<32xf32> to vector<32xbf16>
    %45 = arith.truncf %34 : vector<32xf32> to vector<32xbf16>
    %46 = arith.truncf %36 : vector<32xf32> to vector<32xbf16>
    %47 = arith.truncf %38 : vector<32xf32> to vector<32xbf16>
    %48 = arith.truncf %40 : vector<32xf32> to vector<32xbf16>
    %cst = arith.constant dense<0.000000e+00> : vector<128xf32>
    %49 = vector.multi_reduction <add>, %1, %cst [1] : vector<128x32xf32> to vector<128xf32>
    %50 = vector.shape_cast %49 : vector<128xf32> to vector<128x1xf32>
    %cst_7 = arith.constant 3.200000e+01 : f32
    %51 = vector.broadcast %cst_7 : f32 to vector<128x1xf32>
    %52 = arith.divf %50, %51 : vector<128x1xf32>
    %53 = vector.broadcast %52 : vector<128x1xf32> to vector<128x32xf32>
    %54 = arith.subf %1, %53 : vector<128x32xf32>
    %55 = arith.mulf %54, %54 : vector<128x32xf32>
    %cst_8 = arith.constant dense<0.000000e+00> : vector<128xf32>
    %56 = vector.multi_reduction <add>, %55, %cst_8 [1] : vector<128x32xf32> to vector<128xf32>
    %57 = vector.shape_cast %56 : vector<128xf32> to vector<128x1xf32>
    %cst_9 = arith.constant 3.200000e+01 : f32
    %58 = vector.broadcast %cst_9 : f32 to vector<128x1xf32>
    %59 = arith.divf %57, %58 : vector<128x1xf32>
    %60 = vector.broadcast %52 : vector<128x1xf32> to vector<128x32xf32>
    %61 = arith.subf %1, %60 : vector<128x32xf32>
    %cst_10 = arith.constant 9.99999974E-6 : f32
    %62 = vector.broadcast %cst_10 : f32 to vector<128x1xf32>
    %63 = arith.addf %59, %62 : vector<128x1xf32>
    %64 = math.rsqrt %63 : vector<128x1xf32>
    %65 = vector.broadcast %64 : vector<128x1xf32> to vector<128x32xf32>
    %66 = arith.mulf %61, %65 : vector<128x32xf32>
    %67 = vector.shape_cast %6 : vector<32xf32> to vector<1x32xf32>
    %68 = vector.broadcast %67 : vector<1x32xf32> to vector<128x32xf32>
    %69 = arith.mulf %66, %68 : vector<128x32xf32>
    %70 = vector.shape_cast %8 : vector<32xf32> to vector<1x32xf32>
    %71 = vector.broadcast %70 : vector<1x32xf32> to vector<128x32xf32>
    %72 = arith.addf %69, %71 : vector<128x32xf32>
    %73 = arith.truncf %72 : vector<128x32xf32> to vector<128x32xbf16>
    %c0_11 = arith.constant 0 : index
    %c0_12 = arith.constant 0 : index
    %74 = vector.load %arg3[%c0_11, %c0_12] : memref<32x96xbf16, #tpu.memory_space<vmem>>, vector<32x96xbf16>
    %cst_13 = arith.constant dense<0.000000e+00> : vector<128x96xf32>
    %75 = tpu.matmul %73, %74, %cst_13 {dimension_numbers = #tpu.dot_dimension_numbers<[1], [0], [0], [1], [0, 0, 1, 1], [], []>} : vector<128x32xbf16>, vector<32x96xbf16>, vector<128x96xf32> -> vector<128x96xf32>
    %76 = vector.shape_cast %24 : vector<96xf32> to vector<1x96xf32>
    %77 = vector.broadcast %76 : vector<1x96xf32> to vector<128x96xf32>
    %78 = arith.addf %75, %77 : vector<128x96xf32>
    %79 = vector.extract_strided_slice %78 {offsets = [0, 0], sizes = [128, 32], strides = [1, 1]} : vector<128x96xf32> to vector<128x32xf32>
    %80 = vector.shape_cast %79 : vector<128x32xf32> to vector<1x128x32xf32>
    %81 = vector.extract_strided_slice %78 {offsets = [0, 32], sizes = [128, 32], strides = [1, 1]} : vector<128x96xf32> to vector<128x32xf32>
    %82 = vector.shape_cast %81 : vector<128x32xf32> to vector<1x128x32xf32>
    %83 = vector.extract_strided_slice %78 {offsets = [0, 64], sizes = [128, 32], strides = [1, 1]} : vector<128x96xf32> to vector<128x32xf32>
    %84 = vector.shape_cast %83 : vector<128x32xf32> to vector<1x128x32xf32>
    %85 = arith.truncf %80 : vector<1x128x32xf32> to vector<1x128x32xbf16>
    %86 = arith.truncf %82 : vector<1x128x32xf32> to vector<1x128x32xbf16>
    %87 = arith.truncf %84 : vector<1x128x32xf32> to vector<1x128x32xbf16>
    %88 = vector.shape_cast %41 : vector<32xbf16> to vector<1x1x32xbf16>
    %89 = vector.broadcast %88 : vector<1x1x32xbf16> to vector<1x128x32xbf16>
    %90 = arith.mulf %85, %89 : vector<1x128x32xbf16>
    %91 = vector.shape_cast %42 : vector<32xbf16> to vector<1x1x32xbf16>
    %92 = vector.broadcast %91 : vector<1x1x32xbf16> to vector<1x128x32xbf16>
    %93 = arith.mulf %85, %92 : vector<1x128x32xbf16>
    %94 = vector.shape_cast %43 : vector<32xbf16> to vector<1x1x32xbf16>
    %95 = vector.broadcast %94 : vector<1x1x32xbf16> to vector<1x128x32xbf16>
    %96 = arith.mulf %85, %95 : vector<1x128x32xbf16>
    %97 = vector.shape_cast %44 : vector<32xbf16> to vector<1x1x32xbf16>
    %98 = vector.broadcast %97 : vector<1x1x32xbf16> to vector<1x128x32xbf16>
    %99 = arith.mulf %85, %98 : vector<1x128x32xbf16>
    %100 = vector.shape_cast %45 : vector<32xbf16> to vector<1x1x32xbf16>
    %101 = vector.broadcast %100 : vector<1x1x32xbf16> to vector<1x128x32xbf16>
    %102 = arith.mulf %85, %101 : vector<1x128x32xbf16>
    %103 = vector.shape_cast %46 : vector<32xbf16> to vector<1x1x32xbf16>
    %104 = vector.broadcast %103 : vector<1x1x32xbf16> to vector<1x128x32xbf16>
    %105 = arith.mulf %85, %104 : vector<1x128x32xbf16>
    %106 = vector.shape_cast %47 : vector<32xbf16> to vector<1x1x32xbf16>
    %107 = vector.broadcast %106 : vector<1x1x32xbf16> to vector<1x128x32xbf16>
    %108 = arith.mulf %85, %107 : vector<1x128x32xbf16>
    %109 = vector.shape_cast %48 : vector<32xbf16> to vector<1x1x32xbf16>
    %110 = vector.broadcast %109 : vector<1x1x32xbf16> to vector<1x128x32xbf16>
    %111 = arith.mulf %85, %110 : vector<1x128x32xbf16>
    %112 = tpu.concatenate %90, %93, %96, %99, %102, %105, %108, %111 in 1 : vector<1x128x32xbf16>, vector<1x128x32xbf16>, vector<1x128x32xbf16>, vector<1x128x32xbf16>, vector<1x128x32xbf16>, vector<1x128x32xbf16>, vector<1x128x32xbf16>, vector<1x128x32xbf16> -> vector<1x1024x32xbf16>
    "tpu.trace_start"() <{level = 10 : i32, message = "gnc,gmc->gnm"}> : () -> ()
    %cst_14 = arith.constant dense<0.000000e+00> : vector<1x1024x128xf32>
    %113 = tpu.matmul %112, %86, %cst_14 {dimension_numbers = #tpu.dot_dimension_numbers<[2], [2], [1], [1], [0, 0, 0, 1, 1, 1], [0], [0]>} : vector<1x1024x32xbf16>, vector<1x128x32xbf16>, vector<1x1024x128xf32> -> vector<1x1024x128xf32>
    "tpu.trace_stop"() : () -> ()
    %114 = arith.extf %3 : vector<1024x128xbf16> to vector<1024x128xf32>
    %115 = vector.shape_cast %114 : vector<1024x128xf32> to vector<1x1024x128xf32>
    %116 = arith.addf %113, %115 : vector<1x1024x128xf32>
    %cst_15 = arith.constant dense<0xFF800000> : vector<1x1024xf32>
    %117 = vector.multi_reduction <maximumf>, %116, %cst_15 [2] : vector<1x1024x128xf32> to vector<1x1024xf32>
    %118 = vector.shape_cast %117 : vector<1x1024xf32> to vector<1x1024x1xf32>
    %119 = vector.broadcast %118 : vector<1x1024x1xf32> to vector<1x1024x128xf32>
    %120 = arith.subf %116, %119 : vector<1x1024x128xf32>
    %121 = math.exp %120 : vector<1x1024x128xf32>
    %cst_16 = arith.constant dense<0.000000e+00> : vector<1x1024xf32>
    %122 = vector.multi_reduction <add>, %121, %cst_16 [2] : vector<1x1024x128xf32> to vector<1x1024xf32>
    %123 = vector.shape_cast %122 : vector<1x1024xf32> to vector<1x1024x1xf32>
    %124 = tpu.reciprocal %123 {approx = true} : vector<1x1024x1xf32> -> vector<1x1024x1xf32>
    %125 = vector.broadcast %124 : vector<1x1024x1xf32> to vector<1x1024x128xf32>
    %126 = arith.mulf %121, %125 : vector<1x1024x128xf32>
    %127 = arith.truncf %126 : vector<1x1024x128xf32> to vector<1x1024x128xbf16>
    "tpu.trace_start"() <{level = 10 : i32, message = "gnm,gmc->gnc"}> : () -> ()
    %cst_17 = arith.constant dense<0.000000e+00> : vector<1x1024x32xf32>
    %128 = tpu.matmul %127, %87, %cst_17 {dimension_numbers = #tpu.dot_dimension_numbers<[2], [1], [1], [2], [0, 0, 0, 1, 1, 2], [0], [0]>} : vector<1x1024x128xbf16>, vector<1x128x32xbf16>, vector<1x1024x32xf32> -> vector<1x1024x32xf32>
    "tpu.trace_stop"() : () -> ()
    %129 = vector.extract_strided_slice %128 {offsets = [0, 0, 0], sizes = [1, 128, 32], strides = [1, 1, 1]} : vector<1x1024x32xf32> to vector<1x128x32xf32>
    %130 = vector.shape_cast %26 : vector<32xf32> to vector<1x1x32xf32>
    %131 = vector.broadcast %130 : vector<1x1x32xf32> to vector<1x128x32xf32>
    %132 = arith.mulf %129, %131 : vector<1x128x32xf32>
    %133 = vector.extract_strided_slice %128 {offsets = [0, 128, 0], sizes = [1, 128, 32], strides = [1, 1, 1]} : vector<1x1024x32xf32> to vector<1x128x32xf32>
    %134 = vector.shape_cast %28 : vector<32xf32> to vector<1x1x32xf32>
    %135 = vector.broadcast %134 : vector<1x1x32xf32> to vector<1x128x32xf32>
    %136 = arith.mulf %133, %135 : vector<1x128x32xf32>
    %137 = arith.addf %132, %136 : vector<1x128x32xf32>
    %138 = vector.extract_strided_slice %128 {offsets = [0, 256, 0], sizes = [1, 128, 32], strides = [1, 1, 1]} : vector<1x1024x32xf32> to vector<1x128x32xf32>
    %139 = vector.shape_cast %30 : vector<32xf32> to vector<1x1x32xf32>
    %140 = vector.broadcast %139 : vector<1x1x32xf32> to vector<1x128x32xf32>
    %141 = arith.mulf %138, %140 : vector<1x128x32xf32>
    %142 = arith.addf %137, %141 : vector<1x128x32xf32>
    %143 = vector.extract_strided_slice %128 {offsets = [0, 384, 0], sizes = [1, 128, 32], strides = [1, 1, 1]} : vector<1x1024x32xf32> to vector<1x128x32xf32>
    %144 = vector.shape_cast %32 : vector<32xf32> to vector<1x1x32xf32>
    %145 = vector.broadcast %144 : vector<1x1x32xf32> to vector<1x128x32xf32>
    %146 = arith.mulf %143, %145 : vector<1x128x32xf32>
    %147 = arith.addf %142, %146 : vector<1x128x32xf32>
    %148 = vector.extract_strided_slice %128 {offsets = [0, 512, 0], sizes = [1, 128, 32], strides = [1, 1, 1]} : vector<1x1024x32xf32> to vector<1x128x32xf32>
    %149 = vector.shape_cast %34 : vector<32xf32> to vector<1x1x32xf32>
    %150 = vector.broadcast %149 : vector<1x1x32xf32> to vector<1x128x32xf32>
    %151 = arith.mulf %148, %150 : vector<1x128x32xf32>
    %152 = arith.addf %147, %151 : vector<1x128x32xf32>
    %153 = vector.extract_strided_slice %128 {offsets = [0, 640, 0], sizes = [1, 128, 32], strides = [1, 1, 1]} : vector<1x1024x32xf32> to vector<1x128x32xf32>
    %154 = vector.shape_cast %36 : vector<32xf32> to vector<1x1x32xf32>
    %155 = vector.broadcast %154 : vector<1x1x32xf32> to vector<1x128x32xf32>
    %156 = arith.mulf %153, %155 : vector<1x128x32xf32>
    %157 = arith.addf %152, %156 : vector<1x128x32xf32>
    %158 = vector.extract_strided_slice %128 {offsets = [0, 768, 0], sizes = [1, 128, 32], strides = [1, 1, 1]} : vector<1x1024x32xf32> to vector<1x128x32xf32>
    %159 = vector.shape_cast %38 : vector<32xf32> to vector<1x1x32xf32>
    %160 = vector.broadcast %159 : vector<1x1x32xf32> to vector<1x128x32xf32>
    %161 = arith.mulf %158, %160 : vector<1x128x32xf32>
    %162 = arith.addf %157, %161 : vector<1x128x32xf32>
    %163 = vector.extract_strided_slice %128 {offsets = [0, 896, 0], sizes = [1, 128, 32], strides = [1, 1, 1]} : vector<1x1024x32xf32> to vector<1x128x32xf32>
    %164 = vector.shape_cast %40 : vector<32xf32> to vector<1x1x32xf32>
    %165 = vector.broadcast %164 : vector<1x1x32xf32> to vector<1x128x32xf32>
    %166 = arith.mulf %163, %165 : vector<1x128x32xf32>
    %167 = arith.addf %162, %166 : vector<1x128x32xf32>
    %168 = vector.shape_cast %167 : vector<1x128x32xf32> to vector<128x32xf32>
    %169 = arith.truncf %168 : vector<128x32xf32> to vector<128x32xbf16>
    %c0_18 = arith.constant 0 : index
    %c0_19 = arith.constant 0 : index
    %170 = vector.load %arg4[%c0_18, %c0_19] : memref<32x32xbf16, #tpu.memory_space<vmem>>, vector<32x32xbf16>
    %cst_20 = arith.constant dense<0.000000e+00> : vector<128x32xf32>
    %171 = tpu.matmul %169, %170, %cst_20 {dimension_numbers = #tpu.dot_dimension_numbers<[1], [0], [0], [1], [0, 0, 1, 1], [], []>} : vector<128x32xbf16>, vector<32x32xbf16>, vector<128x32xf32> -> vector<128x32xf32>
    %172 = vector.shape_cast %18 : vector<32xf32> to vector<1x32xf32>
    %173 = vector.broadcast %172 : vector<1x32xf32> to vector<128x32xf32>
    %174 = arith.addf %171, %173 : vector<128x32xf32>
    %175 = vector.shape_cast %14 : vector<32xf32> to vector<1x32xf32>
    %176 = vector.broadcast %175 : vector<1x32xf32> to vector<128x32xf32>
    %177 = arith.mulf %176, %174 : vector<128x32xf32>
    %178 = arith.addf %72, %177 : vector<128x32xf32>
    %cst_21 = arith.constant dense<0.000000e+00> : vector<128xf32>
    %179 = vector.multi_reduction <add>, %178, %cst_21 [1] : vector<128x32xf32> to vector<128xf32>
    %180 = vector.shape_cast %179 : vector<128xf32> to vector<128x1xf32>
    %cst_22 = arith.constant 3.200000e+01 : f32
    %181 = vector.broadcast %cst_22 : f32 to vector<128x1xf32>
    %182 = arith.divf %180, %181 : vector<128x1xf32>
    %183 = vector.broadcast %182 : vector<128x1xf32> to vector<128x32xf32>
    %184 = arith.subf %178, %183 : vector<128x32xf32>
    %185 = arith.mulf %184, %184 : vector<128x32xf32>
    %cst_23 = arith.constant dense<0.000000e+00> : vector<128xf32>
    %186 = vector.multi_reduction <add>, %185, %cst_23 [1] : vector<128x32xf32> to vector<128xf32>
    %187 = vector.shape_cast %186 : vector<128xf32> to vector<128x1xf32>
    %cst_24 = arith.constant 3.200000e+01 : f32
    %188 = vector.broadcast %cst_24 : f32 to vector<128x1xf32>
    %189 = arith.divf %187, %188 : vector<128x1xf32>
    %190 = vector.broadcast %182 : vector<128x1xf32> to vector<128x32xf32>
    %191 = arith.subf %178, %190 : vector<128x32xf32>
    %cst_25 = arith.constant 9.99999974E-6 : f32
    %192 = vector.broadcast %cst_25 : f32 to vector<128x1xf32>
    %193 = arith.addf %189, %192 : vector<128x1xf32>
    %194 = math.rsqrt %193 : vector<128x1xf32>
    %195 = vector.broadcast %194 : vector<128x1xf32> to vector<128x32xf32>
    %196 = arith.mulf %191, %195 : vector<128x32xf32>
    %197 = vector.shape_cast %10 : vector<32xf32> to vector<1x32xf32>
    %198 = vector.broadcast %197 : vector<1x32xf32> to vector<128x32xf32>
    %199 = arith.mulf %196, %198 : vector<128x32xf32>
    %200 = vector.shape_cast %12 : vector<32xf32> to vector<1x32xf32>
    %201 = vector.broadcast %200 : vector<1x32xf32> to vector<128x32xf32>
    %202 = arith.addf %199, %201 : vector<128x32xf32>
    %203 = arith.truncf %202 : vector<128x32xf32> to vector<128x32xbf16>
    %c0_26 = arith.constant 0 : index
    %c0_27 = arith.constant 0 : index
    %204 = vector.load %arg5[%c0_26, %c0_27] : memref<32x128xbf16, #tpu.memory_space<vmem>>, vector<32x128xbf16>
    %cst_28 = arith.constant dense<0.000000e+00> : vector<128x128xf32>
    %205 = tpu.matmul %203, %204, %cst_28 {dimension_numbers = #tpu.dot_dimension_numbers<[1], [0], [0], [1], [0, 0, 1, 1], [], []>} : vector<128x32xbf16>, vector<32x128xbf16>, vector<128x128xf32> -> vector<128x128xf32>
    %206 = vector.shape_cast %22 : vector<128xf32> to vector<1x128xf32>
    %207 = vector.broadcast %206 : vector<1x128xf32> to vector<128x128xf32>
    %208 = arith.addf %205, %207 : vector<128x128xf32>
    %cst_29 = arith.constant 0.707106769 : f32
    %209 = vector.broadcast %cst_29 : f32 to vector<128x128xf32>
    %210 = arith.mulf %208, %209 : vector<128x128xf32>
    %211 = math.absf %210 : vector<128x128xf32>
    %cst_30 = arith.constant 0.327591091 : f32
    %212 = vector.broadcast %cst_30 : f32 to vector<128x128xf32>
    %213 = arith.mulf %212, %211 : vector<128x128xf32>
    %cst_31 = arith.constant 1.000000e+00 : f32
    %214 = vector.broadcast %cst_31 : f32 to vector<128x128xf32>
    %215 = arith.addf %214, %213 : vector<128x128xf32>
    %216 = tpu.reciprocal %215 : vector<128x128xf32> -> vector<128x128xf32>
    %cst_32 = arith.constant 1.06140542 : f32
    %217 = vector.broadcast %cst_32 : f32 to vector<128x128xf32>
    %218 = arith.mulf %217, %216 : vector<128x128xf32>
    %cst_33 = arith.constant 1.45315206 : f32
    %219 = vector.broadcast %cst_33 : f32 to vector<128x128xf32>
    %220 = arith.subf %218, %219 : vector<128x128xf32>
    %221 = arith.mulf %220, %216 : vector<128x128xf32>
    %cst_34 = arith.constant 1.42141378 : f32
    %222 = vector.broadcast %cst_34 : f32 to vector<128x128xf32>
    %223 = arith.addf %221, %222 : vector<128x128xf32>
    %224 = arith.mulf %223, %216 : vector<128x128xf32>
    %cst_35 = arith.constant 0.284496725 : f32
    %225 = vector.broadcast %cst_35 : f32 to vector<128x128xf32>
    %226 = arith.subf %224, %225 : vector<128x128xf32>
    %227 = arith.mulf %226, %216 : vector<128x128xf32>
    %cst_36 = arith.constant 0.254829586 : f32
    %228 = vector.broadcast %cst_36 : f32 to vector<128x128xf32>
    %229 = arith.addf %227, %228 : vector<128x128xf32>
    %230 = arith.mulf %229, %216 : vector<128x128xf32>
    %231 = arith.mulf %211, %211 : vector<128x128xf32>
    %cst_37 = arith.constant 0.000000e+00 : f32
    %232 = vector.broadcast %cst_37 : f32 to vector<128x128xf32>
    %233 = arith.subf %232, %231 : vector<128x128xf32>
    %234 = math.exp %233 : vector<128x128xf32>
    %235 = arith.mulf %230, %234 : vector<128x128xf32>
    %cst_38 = arith.constant 1.000000e+00 : f32
    %236 = vector.broadcast %cst_38 : f32 to vector<128x128xf32>
    %237 = arith.subf %236, %235 : vector<128x128xf32>
    %cst_39 = arith.constant 0.000000e+00 : f32
    %238 = vector.broadcast %cst_39 : f32 to vector<128x128xf32>
    %239 = arith.cmpf oge, %210, %238 : vector<128x128xf32>
    %cst_40 = arith.constant 0.000000e+00 : f32
    %240 = vector.broadcast %cst_40 : f32 to vector<128x128xf32>
    %241 = arith.subf %240, %237 : vector<128x128xf32>
    %242 = arith.select %239, %237, %241 : vector<128x128xi1>, vector<128x128xf32>
    %cst_41 = arith.constant 5.000000e-01 : f32
    %243 = vector.broadcast %cst_41 : f32 to vector<128x128xf32>
    %244 = arith.mulf %243, %208 : vector<128x128xf32>
    %cst_42 = arith.constant 1.000000e+00 : f32
    %245 = vector.broadcast %cst_42 : f32 to vector<128x128xf32>
    %246 = arith.addf %245, %242 : vector<128x128xf32>
    %247 = arith.mulf %244, %246 : vector<128x128xf32>
    %248 = arith.truncf %247 : vector<128x128xf32> to vector<128x128xbf16>
    %c0_43 = arith.constant 0 : index
    %c0_44 = arith.constant 0 : index
    %249 = vector.load %arg6[%c0_43, %c0_44] : memref<128x32xbf16, #tpu.memory_space<vmem>>, vector<128x32xbf16>
    %cst_45 = arith.constant dense<0.000000e+00> : vector<128x32xf32>
    %250 = tpu.matmul %248, %249, %cst_45 {dimension_numbers = #tpu.dot_dimension_numbers<[1], [0], [0], [1], [0, 0, 1, 1], [], []>} : vector<128x128xbf16>, vector<128x32xbf16>, vector<128x32xf32> -> vector<128x32xf32>
    %251 = vector.shape_cast %20 : vector<32xf32> to vector<1x32xf32>
    %252 = vector.broadcast %251 : vector<1x32xf32> to vector<128x32xf32>
    %253 = arith.addf %250, %252 : vector<128x32xf32>
    %254 = vector.shape_cast %16 : vector<32xf32> to vector<1x32xf32>
    %255 = vector.broadcast %254 : vector<1x32xf32> to vector<128x32xf32>
    %256 = arith.mulf %255, %253 : vector<128x32xf32>
    %257 = arith.addf %178, %256 : vector<128x32xf32>
    %c1 = arith.constant 1 : index
    %c0_46 = arith.constant 0 : index
    %c0_47 = arith.constant 0 : index
    %258 = vector.load %arg12[%c1, %c0_46, %c0_47] : memref<2x1024x128xbf16, #tpu.memory_space<vmem>>, vector<1x1024x128xbf16>
    %259 = vector.shape_cast %258 : vector<1x1024x128xbf16> to vector<1024x128xbf16>
    %c0_48 = arith.constant 0 : index
    %c0_49 = arith.constant 0 : index
    %260 = vector.load %arg7[%c0_48, %c0_49] : memref<18x128xf32, #tpu.memory_space<vmem>>, vector<18x128xf32>
    %261 = vector.extract_strided_slice %260 {offsets = [0, 0], sizes = [1, 32], strides = [1, 1]} : vector<18x128xf32> to vector<1x32xf32>
    %262 = vector.shape_cast %261 : vector<1x32xf32> to vector<32xf32>
    %263 = vector.extract_strided_slice %260 {offsets = [1, 0], sizes = [1, 32], strides = [1, 1]} : vector<18x128xf32> to vector<1x32xf32>
    %264 = vector.shape_cast %263 : vector<1x32xf32> to vector<32xf32>
    %265 = vector.extract_strided_slice %260 {offsets = [3, 0], sizes = [1, 32], strides = [1, 1]} : vector<18x128xf32> to vector<1x32xf32>
    %266 = vector.shape_cast %265 : vector<1x32xf32> to vector<32xf32>
    %267 = vector.extract_strided_slice %260 {offsets = [4, 0], sizes = [1, 32], strides = [1, 1]} : vector<18x128xf32> to vector<1x32xf32>
    %268 = vector.shape_cast %267 : vector<1x32xf32> to vector<32xf32>
    %269 = vector.extract_strided_slice %260 {offsets = [2, 0], sizes = [1, 32], strides = [1, 1]} : vector<18x128xf32> to vector<1x32xf32>
    %270 = vector.shape_cast %269 : vector<1x32xf32> to vector<32xf32>
    %271 = vector.extract_strided_slice %260 {offsets = [5, 0], sizes = [1, 32], strides = [1, 1]} : vector<18x128xf32> to vector<1x32xf32>
    %272 = vector.shape_cast %271 : vector<1x32xf32> to vector<32xf32>
    %273 = vector.extract_strided_slice %260 {offsets = [6, 0], sizes = [1, 32], strides = [1, 1]} : vector<18x128xf32> to vector<1x32xf32>
    %274 = vector.shape_cast %273 : vector<1x32xf32> to vector<32xf32>
    %275 = vector.extract_strided_slice %260 {offsets = [7, 0], sizes = [1, 32], strides = [1, 1]} : vector<18x128xf32> to vector<1x32xf32>
    %276 = vector.shape_cast %275 : vector<1x32xf32> to vector<32xf32>
    %277 = vector.extract_strided_slice %260 {offsets = [8, 0], sizes = [1, 128], strides = [1, 1]} : vector<18x128xf32> to vector<1x128xf32>
    %278 = vector.shape_cast %277 : vector<1x128xf32> to vector<128xf32>
    %279 = vector.extract_strided_slice %260 {offsets = [9, 0], sizes = [1, 64], strides = [1, 1]} : vector<18x128xf32> to vector<1x64xf32>
    %280 = vector.shape_cast %279 : vector<1x64xf32> to vector<64xf32>
    %281 = vector.extract_strided_slice %260 {offsets = [10, 0], sizes = [1, 32], strides = [1, 1]} : vector<18x128xf32> to vector<1x32xf32>
    %282 = vector.shape_cast %281 : vector<1x32xf32> to vector<32xf32>
    %283 = vector.extract_strided_slice %260 {offsets = [11, 0], sizes = [1, 32], strides = [1, 1]} : vector<18x128xf32> to vector<1x32xf32>
    %284 = vector.shape_cast %283 : vector<1x32xf32> to vector<32xf32>
    %285 = vector.extract_strided_slice %260 {offsets = [12, 0], sizes = [1, 32], strides = [1, 1]} : vector<18x128xf32> to vector<1x32xf32>
    %286 = vector.shape_cast %285 : vector<1x32xf32> to vector<32xf32>
    %287 = vector.extract_strided_slice %260 {offsets = [13, 0], sizes = [1, 32], strides = [1, 1]} : vector<18x128xf32> to vector<1x32xf32>
    %288 = vector.shape_cast %287 : vector<1x32xf32> to vector<32xf32>
    %289 = vector.extract_strided_slice %260 {offsets = [14, 0], sizes = [1, 32], strides = [1, 1]} : vector<18x128xf32> to vector<1x32xf32>
    %290 = vector.shape_cast %289 : vector<1x32xf32> to vector<32xf32>
    %291 = vector.extract_strided_slice %260 {offsets = [15, 0], sizes = [1, 32], strides = [1, 1]} : vector<18x128xf32> to vector<1x32xf32>
    %292 = vector.shape_cast %291 : vector<1x32xf32> to vector<32xf32>
    %293 = vector.extract_strided_slice %260 {offsets = [16, 0], sizes = [1, 32], strides = [1, 1]} : vector<18x128xf32> to vector<1x32xf32>
    %294 = vector.shape_cast %293 : vector<1x32xf32> to vector<32xf32>
    %295 = vector.extract_strided_slice %260 {offsets = [17, 0], sizes = [1, 32], strides = [1, 1]} : vector<18x128xf32> to vector<1x32xf32>
    %296 = vector.shape_cast %295 : vector<1x32xf32> to vector<32xf32>
    %297 = arith.truncf %282 : vector<32xf32> to vector<32xbf16>
    %298 = arith.truncf %284 : vector<32xf32> to vector<32xbf16>
    %299 = arith.truncf %286 : vector<32xf32> to vector<32xbf16>
    %300 = arith.truncf %288 : vector<32xf32> to vector<32xbf16>
    %301 = arith.truncf %290 : vector<32xf32> to vector<32xbf16>
    %302 = arith.truncf %292 : vector<32xf32> to vector<32xbf16>
    %303 = arith.truncf %294 : vector<32xf32> to vector<32xbf16>
    %304 = arith.truncf %296 : vector<32xf32> to vector<32xbf16>
    %cst_50 = arith.constant dense<0.000000e+00> : vector<128xf32>
    %305 = vector.multi_reduction <add>, %257, %cst_50 [1] : vector<128x32xf32> to vector<128xf32>
    %306 = vector.shape_cast %305 : vector<128xf32> to vector<128x1xf32>
    %cst_51 = arith.constant 3.200000e+01 : f32
    %307 = vector.broadcast %cst_51 : f32 to vector<128x1xf32>
    %308 = arith.divf %306, %307 : vector<128x1xf32>
    %309 = vector.broadcast %308 : vector<128x1xf32> to vector<128x32xf32>
    %310 = arith.subf %257, %309 : vector<128x32xf32>
    %311 = arith.mulf %310, %310 : vector<128x32xf32>
    %cst_52 = arith.constant dense<0.000000e+00> : vector<128xf32>
    %312 = vector.multi_reduction <add>, %311, %cst_52 [1] : vector<128x32xf32> to vector<128xf32>
    %313 = vector.shape_cast %312 : vector<128xf32> to vector<128x1xf32>
    %cst_53 = arith.constant 3.200000e+01 : f32
    %314 = vector.broadcast %cst_53 : f32 to vector<128x1xf32>
    %315 = arith.divf %313, %314 : vector<128x1xf32>
    %316 = vector.broadcast %308 : vector<128x1xf32> to vector<128x32xf32>
    %317 = arith.subf %257, %316 : vector<128x32xf32>
    %cst_54 = arith.constant 9.99999974E-6 : f32
    %318 = vector.broadcast %cst_54 : f32 to vector<128x1xf32>
    %319 = arith.addf %315, %318 : vector<128x1xf32>
    %320 = math.rsqrt %319 : vector<128x1xf32>
    %321 = vector.broadcast %320 : vector<128x1xf32> to vector<128x32xf32>
    %322 = arith.mulf %317, %321 : vector<128x32xf32>
    %323 = vector.shape_cast %262 : vector<32xf32> to vector<1x32xf32>
    %324 = vector.broadcast %323 : vector<1x32xf32> to vector<128x32xf32>
    %325 = arith.mulf %322, %324 : vector<128x32xf32>
    %326 = vector.shape_cast %264 : vector<32xf32> to vector<1x32xf32>
    %327 = vector.broadcast %326 : vector<1x32xf32> to vector<128x32xf32>
    %328 = arith.addf %325, %327 : vector<128x32xf32>
    %329 = arith.truncf %328 : vector<128x32xf32> to vector<128x32xbf16>
    %c0_55 = arith.constant 0 : index
    %c0_56 = arith.constant 0 : index
    %330 = vector.load %arg8[%c0_55, %c0_56] : memref<32x64xbf16, #tpu.memory_space<vmem>>, vector<32x64xbf16>
    %cst_57 = arith.constant dense<0.000000e+00> : vector<128x64xf32>
    %331 = tpu.matmul %329, %330, %cst_57 {dimension_numbers = #tpu.dot_dimension_numbers<[1], [0], [0], [1], [0, 0, 1, 1], [], []>} : vector<128x32xbf16>, vector<32x64xbf16>, vector<128x64xf32> -> vector<128x64xf32>
    %332 = vector.shape_cast %280 : vector<64xf32> to vector<1x64xf32>
    %333 = vector.broadcast %332 : vector<1x64xf32> to vector<128x64xf32>
    %334 = arith.addf %331, %333 : vector<128x64xf32>
    %335 = vector.extract_strided_slice %334 {offsets = [0, 0], sizes = [128, 32], strides = [1, 1]} : vector<128x64xf32> to vector<128x32xf32>
    %336 = vector.shape_cast %335 : vector<128x32xf32> to vector<1x128x32xf32>
    %337 = vector.extract_strided_slice %334 {offsets = [0, 32], sizes = [128, 32], strides = [1, 1]} : vector<128x64xf32> to vector<128x32xf32>
    %338 = vector.shape_cast %337 : vector<128x32xf32> to vector<1x128x32xf32>
    %339 = arith.truncf %0 : vector<1x128x32xf32> to vector<1x128x32xbf16>
    %340 = arith.truncf %336 : vector<1x128x32xf32> to vector<1x128x32xbf16>
    %341 = arith.truncf %338 : vector<1x128x32xf32> to vector<1x128x32xbf16>
    %342 = vector.shape_cast %297 : vector<32xbf16> to vector<1x1x32xbf16>
    %343 = vector.broadcast %342 : vector<1x1x32xbf16> to vector<1x128x32xbf16>
    %344 = arith.mulf %339, %343 : vector<1x128x32xbf16>
    %345 = vector.shape_cast %298 : vector<32xbf16> to vector<1x1x32xbf16>
    %346 = vector.broadcast %345 : vector<1x1x32xbf16> to vector<1x128x32xbf16>
    %347 = arith.mulf %339, %346 : vector<1x128x32xbf16>
    %348 = vector.shape_cast %299 : vector<32xbf16> to vector<1x1x32xbf16>
    %349 = vector.broadcast %348 : vector<1x1x32xbf16> to vector<1x128x32xbf16>
    %350 = arith.mulf %339, %349 : vector<1x128x32xbf16>
    %351 = vector.shape_cast %300 : vector<32xbf16> to vector<1x1x32xbf16>
    %352 = vector.broadcast %351 : vector<1x1x32xbf16> to vector<1x128x32xbf16>
    %353 = arith.mulf %339, %352 : vector<1x128x32xbf16>
    %354 = vector.shape_cast %301 : vector<32xbf16> to vector<1x1x32xbf16>
    %355 = vector.broadcast %354 : vector<1x1x32xbf16> to vector<1x128x32xbf16>
    %356 = arith.mulf %339, %355 : vector<1x128x32xbf16>
    %357 = vector.shape_cast %302 : vector<32xbf16> to vector<1x1x32xbf16>
    %358 = vector.broadcast %357 : vector<1x1x32xbf16> to vector<1x128x32xbf16>
    %359 = arith.mulf %339, %358 : vector<1x128x32xbf16>
    %360 = vector.shape_cast %303 : vector<32xbf16> to vector<1x1x32xbf16>
    %361 = vector.broadcast %360 : vector<1x1x32xbf16> to vector<1x128x32xbf16>
    %362 = arith.mulf %339, %361 : vector<1x128x32xbf16>
    %363 = vector.shape_cast %304 : vector<32xbf16> to vector<1x1x32xbf16>
    %364 = vector.broadcast %363 : vector<1x1x32xbf16> to vector<1x128x32xbf16>
    %365 = arith.mulf %339, %364 : vector<1x128x32xbf16>
    %366 = tpu.concatenate %344, %347, %350, %353, %356, %359, %362, %365 in 1 : vector<1x128x32xbf16>, vector<1x128x32xbf16>, vector<1x128x32xbf16>, vector<1x128x32xbf16>, vector<1x128x32xbf16>, vector<1x128x32xbf16>, vector<1x128x32xbf16>, vector<1x128x32xbf16> -> vector<1x1024x32xbf16>
    "tpu.trace_start"() <{level = 10 : i32, message = "gnc,gmc->gnm"}> : () -> ()
    %cst_58 = arith.constant dense<0.000000e+00> : vector<1x1024x128xf32>
    %367 = tpu.matmul %366, %340, %cst_58 {dimension_numbers = #tpu.dot_dimension_numbers<[2], [2], [1], [1], [0, 0, 0, 1, 1, 1], [0], [0]>} : vector<1x1024x32xbf16>, vector<1x128x32xbf16>, vector<1x1024x128xf32> -> vector<1x1024x128xf32>
    "tpu.trace_stop"() : () -> ()
    %368 = arith.extf %259 : vector<1024x128xbf16> to vector<1024x128xf32>
    %369 = vector.shape_cast %368 : vector<1024x128xf32> to vector<1x1024x128xf32>
    %370 = arith.addf %367, %369 : vector<1x1024x128xf32>
    %cst_59 = arith.constant dense<0xFF800000> : vector<1x1024xf32>
    %371 = vector.multi_reduction <maximumf>, %370, %cst_59 [2] : vector<1x1024x128xf32> to vector<1x1024xf32>
    %372 = vector.shape_cast %371 : vector<1x1024xf32> to vector<1x1024x1xf32>
    %373 = vector.broadcast %372 : vector<1x1024x1xf32> to vector<1x1024x128xf32>
    %374 = arith.subf %370, %373 : vector<1x1024x128xf32>
    %375 = math.exp %374 : vector<1x1024x128xf32>
    %cst_60 = arith.constant dense<0.000000e+00> : vector<1x1024xf32>
    %376 = vector.multi_reduction <add>, %375, %cst_60 [2] : vector<1x1024x128xf32> to vector<1x1024xf32>
    %377 = vector.shape_cast %376 : vector<1x1024xf32> to vector<1x1024x1xf32>
    %378 = tpu.reciprocal %377 {approx = true} : vector<1x1024x1xf32> -> vector<1x1024x1xf32>
    %379 = vector.broadcast %378 : vector<1x1024x1xf32> to vector<1x1024x128xf32>
    %380 = arith.mulf %375, %379 : vector<1x1024x128xf32>
    %381 = arith.truncf %380 : vector<1x1024x128xf32> to vector<1x1024x128xbf16>
    "tpu.trace_start"() <{level = 10 : i32, message = "gnm,gmc->gnc"}> : () -> ()
    %cst_61 = arith.constant dense<0.000000e+00> : vector<1x1024x32xf32>
    %382 = tpu.matmul %381, %341, %cst_61 {dimension_numbers = #tpu.dot_dimension_numbers<[2], [1], [1], [2], [0, 0, 0, 1, 1, 2], [0], [0]>} : vector<1x1024x128xbf16>, vector<1x128x32xbf16>, vector<1x1024x32xf32> -> vector<1x1024x32xf32>
    "tpu.trace_stop"() : () -> ()
    %383 = vector.extract_strided_slice %382 {offsets = [0, 0, 0], sizes = [1, 128, 32], strides = [1, 1, 1]} : vector<1x1024x32xf32> to vector<1x128x32xf32>
    %384 = vector.shape_cast %282 : vector<32xf32> to vector<1x1x32xf32>
    %385 = vector.broadcast %384 : vector<1x1x32xf32> to vector<1x128x32xf32>
    %386 = arith.mulf %383, %385 : vector<1x128x32xf32>
    %387 = vector.extract_strided_slice %382 {offsets = [0, 128, 0], sizes = [1, 128, 32], strides = [1, 1, 1]} : vector<1x1024x32xf32> to vector<1x128x32xf32>
    %388 = vector.shape_cast %284 : vector<32xf32> to vector<1x1x32xf32>
    %389 = vector.broadcast %388 : vector<1x1x32xf32> to vector<1x128x32xf32>
    %390 = arith.mulf %387, %389 : vector<1x128x32xf32>
    %391 = arith.addf %386, %390 : vector<1x128x32xf32>
    %392 = vector.extract_strided_slice %382 {offsets = [0, 256, 0], sizes = [1, 128, 32], strides = [1, 1, 1]} : vector<1x1024x32xf32> to vector<1x128x32xf32>
    %393 = vector.shape_cast %286 : vector<32xf32> to vector<1x1x32xf32>
    %394 = vector.broadcast %393 : vector<1x1x32xf32> to vector<1x128x32xf32>
    %395 = arith.mulf %392, %394 : vector<1x128x32xf32>
    %396 = arith.addf %391, %395 : vector<1x128x32xf32>
    %397 = vector.extract_strided_slice %382 {offsets = [0, 384, 0], sizes = [1, 128, 32], strides = [1, 1, 1]} : vector<1x1024x32xf32> to vector<1x128x32xf32>
    %398 = vector.shape_cast %288 : vector<32xf32> to vector<1x1x32xf32>
    %399 = vector.broadcast %398 : vector<1x1x32xf32> to vector<1x128x32xf32>
    %400 = arith.mulf %397, %399 : vector<1x128x32xf32>
    %401 = arith.addf %396, %400 : vector<1x128x32xf32>
    %402 = vector.extract_strided_slice %382 {offsets = [0, 512, 0], sizes = [1, 128, 32], strides = [1, 1, 1]} : vector<1x1024x32xf32> to vector<1x128x32xf32>
    %403 = vector.shape_cast %290 : vector<32xf32> to vector<1x1x32xf32>
    %404 = vector.broadcast %403 : vector<1x1x32xf32> to vector<1x128x32xf32>
    %405 = arith.mulf %402, %404 : vector<1x128x32xf32>
    %406 = arith.addf %401, %405 : vector<1x128x32xf32>
    %407 = vector.extract_strided_slice %382 {offsets = [0, 640, 0], sizes = [1, 128, 32], strides = [1, 1, 1]} : vector<1x1024x32xf32> to vector<1x128x32xf32>
    %408 = vector.shape_cast %292 : vector<32xf32> to vector<1x1x32xf32>
    %409 = vector.broadcast %408 : vector<1x1x32xf32> to vector<1x128x32xf32>
    %410 = arith.mulf %407, %409 : vector<1x128x32xf32>
    %411 = arith.addf %406, %410 : vector<1x128x32xf32>
    %412 = vector.extract_strided_slice %382 {offsets = [0, 768, 0], sizes = [1, 128, 32], strides = [1, 1, 1]} : vector<1x1024x32xf32> to vector<1x128x32xf32>
    %413 = vector.shape_cast %294 : vector<32xf32> to vector<1x1x32xf32>
    %414 = vector.broadcast %413 : vector<1x1x32xf32> to vector<1x128x32xf32>
    %415 = arith.mulf %412, %414 : vector<1x128x32xf32>
    %416 = arith.addf %411, %415 : vector<1x128x32xf32>
    %417 = vector.extract_strided_slice %382 {offsets = [0, 896, 0], sizes = [1, 128, 32], strides = [1, 1, 1]} : vector<1x1024x32xf32> to vector<1x128x32xf32>
    %418 = vector.shape_cast %296 : vector<32xf32> to vector<1x1x32xf32>
    %419 = vector.broadcast %418 : vector<1x1x32xf32> to vector<1x128x32xf32>
    %420 = arith.mulf %417, %419 : vector<1x128x32xf32>
    %421 = arith.addf %416, %420 : vector<1x128x32xf32>
    %422 = vector.shape_cast %421 : vector<1x128x32xf32> to vector<128x32xf32>
    %423 = arith.truncf %422 : vector<128x32xf32> to vector<128x32xbf16>
    %c0_62 = arith.constant 0 : index
    %c0_63 = arith.constant 0 : index
    %424 = vector.load %arg9[%c0_62, %c0_63] : memref<32x32xbf16, #tpu.memory_space<vmem>>, vector<32x32xbf16>
    %cst_64 = arith.constant dense<0.000000e+00> : vector<128x32xf32>
    %425 = tpu.matmul %423, %424, %cst_64 {dimension_numbers = #tpu.dot_dimension_numbers<[1], [0], [0], [1], [0, 0, 1, 1], [], []>} : vector<128x32xbf16>, vector<32x32xbf16>, vector<128x32xf32> -> vector<128x32xf32>
    %426 = vector.shape_cast %274 : vector<32xf32> to vector<1x32xf32>
    %427 = vector.broadcast %426 : vector<1x32xf32> to vector<128x32xf32>
    %428 = arith.addf %425, %427 : vector<128x32xf32>
    %429 = vector.shape_cast %270 : vector<32xf32> to vector<1x32xf32>
    %430 = vector.broadcast %429 : vector<1x32xf32> to vector<128x32xf32>
    %431 = arith.mulf %430, %428 : vector<128x32xf32>
    %432 = arith.addf %328, %431 : vector<128x32xf32>
    %cst_65 = arith.constant dense<0.000000e+00> : vector<128xf32>
    %433 = vector.multi_reduction <add>, %432, %cst_65 [1] : vector<128x32xf32> to vector<128xf32>
    %434 = vector.shape_cast %433 : vector<128xf32> to vector<128x1xf32>
    %cst_66 = arith.constant 3.200000e+01 : f32
    %435 = vector.broadcast %cst_66 : f32 to vector<128x1xf32>
    %436 = arith.divf %434, %435 : vector<128x1xf32>
    %437 = vector.broadcast %436 : vector<128x1xf32> to vector<128x32xf32>
    %438 = arith.subf %432, %437 : vector<128x32xf32>
    %439 = arith.mulf %438, %438 : vector<128x32xf32>
    %cst_67 = arith.constant dense<0.000000e+00> : vector<128xf32>
    %440 = vector.multi_reduction <add>, %439, %cst_67 [1] : vector<128x32xf32> to vector<128xf32>
    %441 = vector.shape_cast %440 : vector<128xf32> to vector<128x1xf32>
    %cst_68 = arith.constant 3.200000e+01 : f32
    %442 = vector.broadcast %cst_68 : f32 to vector<128x1xf32>
    %443 = arith.divf %441, %442 : vector<128x1xf32>
    %444 = vector.broadcast %436 : vector<128x1xf32> to vector<128x32xf32>
    %445 = arith.subf %432, %444 : vector<128x32xf32>
    %cst_69 = arith.constant 9.99999974E-6 : f32
    %446 = vector.broadcast %cst_69 : f32 to vector<128x1xf32>
    %447 = arith.addf %443, %446 : vector<128x1xf32>
    %448 = math.rsqrt %447 : vector<128x1xf32>
    %449 = vector.broadcast %448 : vector<128x1xf32> to vector<128x32xf32>
    %450 = arith.mulf %445, %449 : vector<128x32xf32>
    %451 = vector.shape_cast %266 : vector<32xf32> to vector<1x32xf32>
    %452 = vector.broadcast %451 : vector<1x32xf32> to vector<128x32xf32>
    %453 = arith.mulf %450, %452 : vector<128x32xf32>
    %454 = vector.shape_cast %268 : vector<32xf32> to vector<1x32xf32>
    %455 = vector.broadcast %454 : vector<1x32xf32> to vector<128x32xf32>
    %456 = arith.addf %453, %455 : vector<128x32xf32>
    %457 = arith.truncf %456 : vector<128x32xf32> to vector<128x32xbf16>
    %c0_70 = arith.constant 0 : index
    %c0_71 = arith.constant 0 : index
    %458 = vector.load %arg10[%c0_70, %c0_71] : memref<32x128xbf16, #tpu.memory_space<vmem>>, vector<32x128xbf16>
    %cst_72 = arith.constant dense<0.000000e+00> : vector<128x128xf32>
    %459 = tpu.matmul %457, %458, %cst_72 {dimension_numbers = #tpu.dot_dimension_numbers<[1], [0], [0], [1], [0, 0, 1, 1], [], []>} : vector<128x32xbf16>, vector<32x128xbf16>, vector<128x128xf32> -> vector<128x128xf32>
    %460 = vector.shape_cast %278 : vector<128xf32> to vector<1x128xf32>
    %461 = vector.broadcast %460 : vector<1x128xf32> to vector<128x128xf32>
    %462 = arith.addf %459, %461 : vector<128x128xf32>
    %cst_73 = arith.constant 0.707106769 : f32
    %463 = vector.broadcast %cst_73 : f32 to vector<128x128xf32>
    %464 = arith.mulf %462, %463 : vector<128x128xf32>
    %465 = math.absf %464 : vector<128x128xf32>
    %cst_74 = arith.constant 0.327591091 : f32
    %466 = vector.broadcast %cst_74 : f32 to vector<128x128xf32>
    %467 = arith.mulf %466, %465 : vector<128x128xf32>
    %cst_75 = arith.constant 1.000000e+00 : f32
    %468 = vector.broadcast %cst_75 : f32 to vector<128x128xf32>
    %469 = arith.addf %468, %467 : vector<128x128xf32>
    %470 = tpu.reciprocal %469 : vector<128x128xf32> -> vector<128x128xf32>
    %cst_76 = arith.constant 1.06140542 : f32
    %471 = vector.broadcast %cst_76 : f32 to vector<128x128xf32>
    %472 = arith.mulf %471, %470 : vector<128x128xf32>
    %cst_77 = arith.constant 1.45315206 : f32
    %473 = vector.broadcast %cst_77 : f32 to vector<128x128xf32>
    %474 = arith.subf %472, %473 : vector<128x128xf32>
    %475 = arith.mulf %474, %470 : vector<128x128xf32>
    %cst_78 = arith.constant 1.42141378 : f32
    %476 = vector.broadcast %cst_78 : f32 to vector<128x128xf32>
    %477 = arith.addf %475, %476 : vector<128x128xf32>
    %478 = arith.mulf %477, %470 : vector<128x128xf32>
    %cst_79 = arith.constant 0.284496725 : f32
    %479 = vector.broadcast %cst_79 : f32 to vector<128x128xf32>
    %480 = arith.subf %478, %479 : vector<128x128xf32>
    %481 = arith.mulf %480, %470 : vector<128x128xf32>
    %cst_80 = arith.constant 0.254829586 : f32
    %482 = vector.broadcast %cst_80 : f32 to vector<128x128xf32>
    %483 = arith.addf %481, %482 : vector<128x128xf32>
    %484 = arith.mulf %483, %470 : vector<128x128xf32>
    %485 = arith.mulf %465, %465 : vector<128x128xf32>
    %cst_81 = arith.constant 0.000000e+00 : f32
    %486 = vector.broadcast %cst_81 : f32 to vector<128x128xf32>
    %487 = arith.subf %486, %485 : vector<128x128xf32>
    %488 = math.exp %487 : vector<128x128xf32>
    %489 = arith.mulf %484, %488 : vector<128x128xf32>
    %cst_82 = arith.constant 1.000000e+00 : f32
    %490 = vector.broadcast %cst_82 : f32 to vector<128x128xf32>
    %491 = arith.subf %490, %489 : vector<128x128xf32>
    %cst_83 = arith.constant 0.000000e+00 : f32
    %492 = vector.broadcast %cst_83 : f32 to vector<128x128xf32>
    %493 = arith.cmpf oge, %464, %492 : vector<128x128xf32>
    %cst_84 = arith.constant 0.000000e+00 : f32
    %494 = vector.broadcast %cst_84 : f32 to vector<128x128xf32>
    %495 = arith.subf %494, %491 : vector<128x128xf32>
    %496 = arith.select %493, %491, %495 : vector<128x128xi1>, vector<128x128xf32>
    %cst_85 = arith.constant 5.000000e-01 : f32
    %497 = vector.broadcast %cst_85 : f32 to vector<128x128xf32>
    %498 = arith.mulf %497, %462 : vector<128x128xf32>
    %cst_86 = arith.constant 1.000000e+00 : f32
    %499 = vector.broadcast %cst_86 : f32 to vector<128x128xf32>
    %500 = arith.addf %499, %496 : vector<128x128xf32>
    %501 = arith.mulf %498, %500 : vector<128x128xf32>
    %502 = arith.truncf %501 : vector<128x128xf32> to vector<128x128xbf16>
    %c0_87 = arith.constant 0 : index
    %c0_88 = arith.constant 0 : index
    %503 = vector.load %arg11[%c0_87, %c0_88] : memref<128x32xbf16, #tpu.memory_space<vmem>>, vector<128x32xbf16>
    %cst_89 = arith.constant dense<0.000000e+00> : vector<128x32xf32>
    %504 = tpu.matmul %502, %503, %cst_89 {dimension_numbers = #tpu.dot_dimension_numbers<[1], [0], [0], [1], [0, 0, 1, 1], [], []>} : vector<128x128xbf16>, vector<128x32xbf16>, vector<128x32xf32> -> vector<128x32xf32>
    %505 = vector.shape_cast %276 : vector<32xf32> to vector<1x32xf32>
    %506 = vector.broadcast %505 : vector<1x32xf32> to vector<128x32xf32>
    %507 = arith.addf %504, %506 : vector<128x32xf32>
    %508 = vector.shape_cast %272 : vector<32xf32> to vector<1x32xf32>
    %509 = vector.broadcast %508 : vector<1x32xf32> to vector<128x32xf32>
    %510 = arith.mulf %509, %507 : vector<128x32xf32>
    %511 = arith.addf %432, %510 : vector<128x32xf32>
    %512 = vector.shape_cast %511 : vector<128x32xf32> to vector<1x128x32xf32>
    %c0_90 = arith.constant 0 : index
    %c0_91 = arith.constant 0 : index
    %c0_92 = arith.constant 0 : index
    %513 = vector.load %arg13[%c0_90, %c0_91, %c0_92] : memref<1x128x32xf32, #tpu.memory_space<vmem>>, vector<1x128x32xf32>
    tpu.vector_store %arg13[%c0_90, %c0_91, %c0_92], %512 {strides = array<i32>} : memref<1x128x32xf32, #tpu.memory_space<vmem>>, vector<1x128x32xf32>,
    return
  }
  func.func @transform_0(%arg0: i32) -> (i32, i32, i32) {
    %c0_i32 = arith.constant 0 : i32
    %c0_i32_0 = arith.constant 0 : i32
    %c0_i32_1 = arith.constant 0 : i32
    return %arg0, %c0_i32, %c0_i32_0 : i32, i32, i32
  }
  func.func @transform_1(%arg0: i32) -> (i32, i32) {
    %c0_i32 = arith.constant 0 : i32
    %c0_i32_0 = arith.constant 0 : i32
    %c0_i32_1 = arith.constant 0 : i32
    return %c0_i32, %c0_i32_0 : i32, i32
  }
  func.func @transform_2(%arg0: i32) -> (i32, i32) {
    %c0_i32 = arith.constant 0 : i32
    %c0_i32_0 = arith.constant 0 : i32
    %c0_i32_1 = arith.constant 0 : i32
    return %c0_i32, %c0_i32_0 : i32, i32
  }
  func.func @transform_3(%arg0: i32) -> (i32, i32) {
    %c0_i32 = arith.constant 0 : i32
    %c0_i32_0 = arith.constant 0 : i32
    %c0_i32_1 = arith.constant 0 : i32
    return %c0_i32, %c0_i32_0 : i32, i32
  }
  func.func @transform_4(%arg0: i32) -> (i32, i32) {
    %c0_i32 = arith.constant 0 : i32
    %c0_i32_0 = arith.constant 0 : i32
    %c0_i32_1 = arith.constant 0 : i32
    return %c0_i32, %c0_i32_0 : i32, i32
  }
  func.func @transform_5(%arg0: i32) -> (i32, i32) {
    %c0_i32 = arith.constant 0 : i32
    %c0_i32_0 = arith.constant 0 : i32
    %c0_i32_1 = arith.constant 0 : i32
    return %c0_i32, %c0_i32_0 : i32, i32
  }
  func.func @transform_6(%arg0: i32) -> (i32, i32) {
    %c0_i32 = arith.constant 0 : i32
    %c0_i32_0 = arith.constant 0 : i32
    %c0_i32_1 = arith.constant 0 : i32
    return %c0_i32, %c0_i32_0 : i32, i32
  }
  func.func @transform_7(%arg0: i32) -> (i32, i32) {
    %c0_i32 = arith.constant 0 : i32
    %c0_i32_0 = arith.constant 0 : i32
    %c0_i32_1 = arith.constant 0 : i32
    return %c0_i32, %c0_i32_0 : i32, i32
  }
  func.func @transform_8(%arg0: i32) -> (i32, i32) {
    %c0_i32 = arith.constant 0 : i32
    %c0_i32_0 = arith.constant 0 : i32
    %c0_i32_1 = arith.constant 0 : i32
    return %c0_i32, %c0_i32_0 : i32, i32
  }
  func.func @transform_9(%arg0: i32) -> (i32, i32) {
    %c0_i32 = arith.constant 0 : i32
    %c0_i32_0 = arith.constant 0 : i32
    %c0_i32_1 = arith.constant 0 : i32
    return %c0_i32, %c0_i32_0 : i32, i32
  }
  func.func @transform_10(%arg0: i32) -> (i32, i32) {
    %c0_i32 = arith.constant 0 : i32
    %c0_i32_0 = arith.constant 0 : i32
    %c0_i32_1 = arith.constant 0 : i32
    return %c0_i32, %c0_i32_0 : i32, i32
  }
  func.func @transform_11(%arg0: i32) -> (i32, i32, i32) {
    %c0_i32 = arith.constant 0 : i32
    %c0_i32_0 = arith.constant 0 : i32
    %c0_i32_1 = arith.constant 0 : i32
    %c0_i32_2 = arith.constant 0 : i32
    return %c0_i32, %c0_i32_0, %c0_i32_1 : i32, i32, i32
  }
  func.func @transform_12(%arg0: i32) -> (i32, i32, i32) {
    %c0_i32 = arith.constant 0 : i32
    %c0_i32_0 = arith.constant 0 : i32
    %c0_i32_1 = arith.constant 0 : i32
    return %arg0, %c0_i32, %c0_i32_0 : i32, i32, i32
  }
}

</mosaic_0001>

<llo_original>
// kernel: tpu_custom_call.1
$region0: #{tpu_custom_call.1}
  #allocation0 [shape = 'u32[]', space=smem, size = 0x4, offset = 0x4, fixed_abs, tag = 'smem constant byte address 0x4 - core index']
  #allocation1 [shape = 'u32[144,128]{1,0:T(1,128)}', space=vmem, size = 0x12000, scoped, tag = 'internal scratch']
  %s0 = inlined_call_operand.vmem [shape: f32[2,128,32], index: 0, kind: input, shape index: {}]
  %s1 = inlined_call_operand.vmem [shape: f32[18,128], index: 1, kind: input, shape index: {}]
  %s2 = inlined_call_operand.vmem [shape: bf16[32,96], index: 2, kind: input, shape index: {}]
  %s3 = inlined_call_operand.vmem [shape: bf16[32,32], index: 3, kind: input, shape index: {}]
  %s4 = inlined_call_operand.vmem [shape: bf16[32,128], index: 4, kind: input, shape index: {}]
  %s5 = inlined_call_operand.vmem [shape: bf16[128,32], index: 5, kind: input, shape index: {}]
  %s6 = inlined_call_operand.vmem [shape: f32[18,128], index: 6, kind: input, shape index: {}]
  %s7 = inlined_call_operand.vmem [shape: bf16[32,64], index: 7, kind: input, shape index: {}]
  %s8 = inlined_call_operand.vmem [shape: bf16[32,32], index: 8, kind: input, shape index: {}]
  %s9 = inlined_call_operand.vmem [shape: bf16[32,128], index: 9, kind: input, shape index: {}]
  %s10 = inlined_call_operand.vmem [shape: bf16[128,32], index: 10, kind: input, shape index: {}]
  %s11 = inlined_call_operand.hbm [shape: bf16[2,1024,128], index: 11, kind: input, shape index: {}]
  %s12 = inlined_call_operand.vmem [shape: f32[2,128,32], index: 12, kind: output, shape index: {}]
  %s13 = sld [smem:[#allocation0]]
  $region85: #{tpu_custom_call.1} parent=0
    _
  %s15 = ssub.s32 1, %s13
  %s16 = scalar_select 0, %s15, %s13
  $region1: #{tpu_custom_call.1} parent=0
    #allocation2 [shape = 'u8[524288]{0}', space=vmem, size = 0x80000, scoped, tag = 'input window, operand 11, single buffered']
    #allocation3 [shape = 's32[2]{0}', space=sflag, size = 0x8, scoped, tag = 'scoped memory for tpu_custom_call.1']
    %17 = vsyncpa [#allocation3], 0
    loop: start=0, step=1, limit=4
    $region2: #{tpu_custom_call.1} parent=1 // loop_pre_header
      _
    $region3: #{tpu_custom_call.1} parent=1 // loop_header
      %s19 = sphi 0, %s23
      %p20 = scmp.ge.s32.totalorder %s19, 4
      %s29 = sphi 0, %s31
      %s32 = sphi 0, %s29
      %s33 = sphi 0, %s32
      %s49 = sphi 0, %s33
      %s53 = sphi 0, %s53
      %s55 = sphi 0, %s53
      %s56 = sphi 0, %s55
      %s70 = sphi 0, %s56
      %s74 = sphi 0, %s74
      %s76 = sphi 0, %s74
      %s77 = sphi 0, %s76
      %s91 = sphi 0, %s77
      %s95 = sphi 0, %s95
      %s97 = sphi 0, %s95
      %s98 = sphi 0, %s97
      %s112 = sphi 0, %s98
      %s116 = sphi 0, %s116
      %s118 = sphi 0, %s116
      %s119 = sphi 0, %s118
      %s133 = sphi 0, %s119
      %s137 = sphi 0, %s137
      %s139 = sphi 0, %s137
      %s140 = sphi 0, %s139
      %s154 = sphi 0, %s140
      %s158 = sphi 0, %s158
      %s160 = sphi 0, %s158
      %s161 = sphi 0, %s160
      %s175 = sphi 0, %s161
      %s179 = sphi 0, %s179
      %s181 = sphi 0, %s179
      %s182 = sphi 0, %s181
      %s196 = sphi 0, %s182
      %s200 = sphi 0, %s200
      %s202 = sphi 0, %s200
      %s203 = sphi 0, %s202
      %s217 = sphi 0, %s203
      %s221 = sphi 0, %s221
      %s223 = sphi 0, %s221
      %s224 = sphi 0, %s223
      %s238 = sphi 0, %s224
      %s242 = sphi 0, %s242
      %s244 = sphi 0, %s242
      %s245 = sphi 0, %s244
      %s259 = sphi 0, %s245
      %s263 = sphi 0, %s263
      %s265 = sphi 0, %s263
      %s266 = sphi 0, %s265
      %s280 = sphi 0, %s266
      %s286 = sphi 0, %s288
      %s289 = sphi 0, %s286
      %s290 = sphi 0, %s289
      %s306 = sphi 0, %s290
    $region4: #{tpu_custom_call.1} parent=1 // loop_header_branch
      %22 = sbr.rel (%p20) target = $region8
    $region5: #{tpu_custom_call.1} parent=1 // loop_body
      %s24 = ssub.s32 %s19, 1
      %s25 = ssub.s32 %s19, 2
      %s26 = sadd.s32 %s19, 1
      %s27 = ssub.s32 %s19, %s26
      %p28 = scmp.eq.s32.totalorder %s27, 0
      %s30 = sadd.s32 %s29, 1
      %s31 = scalar_select %p28, %s29, %s30
      %p34 = pneg %p28
      %p35 = scmp.eq.s32.totalorder %s19, 1
      %p36 = por %p34, %p35
      %p37 = scmp.ne.s32.totalorder %s29, %s32
      %p38 = scmp.eq.s32.totalorder %s19, 0
      %p39 = por %p37, %p38
      %p40 = scmp.ne.s32.totalorder %s29, %s32
      %p41 = scmp.eq.s32.totalorder %s24, 1
      %p42 = por %p40, %p41
      %p43 = scmp.ne.s32.totalorder %s32, %s33
      %p44 = scmp.eq.s32.totalorder %s24, 0
      %p45 = por %p43, %p44
      %p46 = scmp.ne.s32.totalorder %s32, %s33
      %p47 = scmp.eq.s32.totalorder %s25, 1
      %p48 = por %p46, %p47
      %p50 = scmp.ne.s32.totalorder %s33, %s49
      %p51 = scmp.eq.s32.totalorder %s25, 0
      %p52 = por %p50, %p51
      %s54 = sadd.s32 %s53, 1
      %p57 = scmp.eq.s32.totalorder %s19, 1
      %p58 = scmp.ne.s32.totalorder %s53, %s55
      %p59 = scmp.eq.s32.totalorder %s19, 0
      %p60 = por %p58, %p59
      %p61 = scmp.ne.s32.totalorder %s53, %s55
      %p62 = scmp.eq.s32.totalorder %s24, 1
      %p63 = por %p61, %p62
      %p64 = scmp.ne.s32.totalorder %s55, %s56
      %p65 = scmp.eq.s32.totalorder %s24, 0
      %p66 = por %p64, %p65
      %p67 = scmp.ne.s32.totalorder %s55, %s56
      %p68 = scmp.eq.s32.totalorder %s25, 1
      %p69 = por %p67, %p68
      %p71 = scmp.ne.s32.totalorder %s56, %s70
      %p72 = scmp.eq.s32.totalorder %s25, 0
      %p73 = por %p71, %p72
      %s75 = sadd.s32 %s74, 1
      %p78 = scmp.eq.s32.totalorder %s19, 1
      %p79 = scmp.ne.s32.totalorder %s74, %s76
      %p80 = scmp.eq.s32.totalorder %s19, 0
      %p81 = por %p79, %p80
      %p82 = scmp.ne.s32.totalorder %s74, %s76
      %p83 = scmp.eq.s32.totalorder %s24, 1
      %p84 = por %p82, %p83
      %p85 = scmp.ne.s32.totalorder %s76, %s77
      %p86 = scmp.eq.s32.totalorder %s24, 0
      %p87 = por %p85, %p86
      %p88 = scmp.ne.s32.totalorder %s76, %s77
      %p89 = scmp.eq.s32.totalorder %s25, 1
      %p90 = por %p88, %p89
      %p92 = scmp.ne.s32.totalorder %s77, %s91
      %p93 = scmp.eq.s32.totalorder %s25, 0
      %p94 = por %p92, %p93
      %s96 = sadd.s32 %s95, 1
      %p99 = scmp.eq.s32.totalorder %s19, 1
      %p100 = scmp.ne.s32.totalorder %s95, %s97
      %p101 = scmp.eq.s32.totalorder %s19, 0
      %p102 = por %p100, %p101
      %p103 = scmp.ne.s32.totalorder %s95, %s97
      %p104 = scmp.eq.s32.totalorder %s24, 1
      %p105 = por %p103, %p104
      %p106 = scmp.ne.s32.totalorder %s97, %s98
      %p107 = scmp.eq.s32.totalorder %s24, 0
      %p108 = por %p106, %p107
      %p109 = scmp.ne.s32.totalorder %s97, %s98
      %p110 = scmp.eq.s32.totalorder %s25, 1
      %p111 = por %p109, %p110
      %p113 = scmp.ne.s32.totalorder %s98, %s112
      %p114 = scmp.eq.s32.totalorder %s25, 0
      %p115 = por %p113, %p114
      %s117 = sadd.s32 %s116, 1
      %p120 = scmp.eq.s32.totalorder %s19, 1
      %p121 = scmp.ne.s32.totalorder %s116, %s118
      %p122 = scmp.eq.s32.totalorder %s19, 0
      %p123 = por %p121, %p122
      %p124 = scmp.ne.s32.totalorder %s116, %s118
      %p125 = scmp.eq.s32.totalorder %s24, 1
      %p126 = por %p124, %p125
      %p127 = scmp.ne.s32.totalorder %s118, %s119
      %p128 = scmp.eq.s32.totalorder %s24, 0
      %p129 = por %p127, %p128
      %p130 = scmp.ne.s32.totalorder %s118, %s119
      %p131 = scmp.eq.s32.totalorder %s25, 1
      %p132 = por %p130, %p131
      %p134 = scmp.ne.s32.totalorder %s119, %s133
      %p135 = scmp.eq.s32.totalorder %s25, 0
      %p136 = por %p134, %p135
      %s138 = sadd.s32 %s137, 1
      %p141 = scmp.eq.s32.totalorder %s19, 1
      %p142 = scmp.ne.s32.totalorder %s137, %s139
      %p143 = scmp.eq.s32.totalorder %s19, 0
      %p144 = por %p142, %p143
      %p145 = scmp.ne.s32.totalorder %s137, %s139
      %p146 = scmp.eq.s32.totalorder %s24, 1
      %p147 = por %p145, %p146
      %p148 = scmp.ne.s32.totalorder %s139, %s140
      %p149 = scmp.eq.s32.totalorder %s24, 0
      %p150 = por %p148, %p149
      %p151 = scmp.ne.s32.totalorder %s139, %s140
      %p152 = scmp.eq.s32.totalorder %s25, 1
      %p153 = por %p151, %p152
      %p155 = scmp.ne.s32.totalorder %s140, %s154
      %p156 = scmp.eq.s32.totalorder %s25, 0
      %p157 = por %p155, %p156
      %s159 = sadd.s32 %s158, 1
      %p162 = scmp.eq.s32.totalorder %s19, 1
      %p163 = scmp.ne.s32.totalorder %s158, %s160
      %p164 = scmp.eq.s32.totalorder %s19, 0
      %p165 = por %p163, %p164
      %p166 = scmp.ne.s32.totalorder %s158, %s160
      %p167 = scmp.eq.s32.totalorder %s24, 1
      %p168 = por %p166, %p167
      %p169 = scmp.ne.s32.totalorder %s160, %s161
      %p170 = scmp.eq.s32.totalorder %s24, 0
      %p171 = por %p169, %p170
      %p172 = scmp.ne.s32.totalorder %s160, %s161
      %p173 = scmp.eq.s32.totalorder %s25, 1
      %p174 = por %p172, %p173
      %p176 = scmp.ne.s32.totalorder %s161, %s175
      %p177 = scmp.eq.s32.totalorder %s25, 0
      %p178 = por %p176, %p177
      %s180 = sadd.s32 %s179, 1
      %p183 = scmp.eq.s32.totalorder %s19, 1
      %p184 = scmp.ne.s32.totalorder %s179, %s181
      %p185 = scmp.eq.s32.totalorder %s19, 0
      %p186 = por %p184, %p185
      %p187 = scmp.ne.s32.totalorder %s179, %s181
      %p188 = scmp.eq.s32.totalorder %s24, 1
      %p189 = por %p187, %p188
      %p190 = scmp.ne.s32.totalorder %s181, %s182
      %p191 = scmp.eq.s32.totalorder %s24, 0
      %p192 = por %p190, %p191
      %p193 = scmp.ne.s32.totalorder %s181, %s182
      %p194 = scmp.eq.s32.totalorder %s25, 1
      %p195 = por %p193, %p194
      %p197 = scmp.ne.s32.totalorder %s182, %s196
      %p198 = scmp.eq.s32.totalorder %s25, 0
      %p199 = por %p197, %p198
      %s201 = sadd.s32 %s200, 1
      %p204 = scmp.eq.s32.totalorder %s19, 1
      %p205 = scmp.ne.s32.totalorder %s200, %s202
      %p206 = scmp.eq.s32.totalorder %s19, 0
      %p207 = por %p205, %p206
      %p208 = scmp.ne.s32.totalorder %s200, %s202
      %p209 = scmp.eq.s32.totalorder %s24, 1
      %p210 = por %p208, %p209
      %p211 = scmp.ne.s32.totalorder %s202, %s203
      %p212 = scmp.eq.s32.totalorder %s24, 0
      %p213 = por %p211, %p212
      %p214 = scmp.ne.s32.totalorder %s202, %s203
      %p215 = scmp.eq.s32.totalorder %s25, 1
      %p216 = por %p214, %p215
      %p218 = scmp.ne.s32.totalorder %s203, %s217
      %p219 = scmp.eq.s32.totalorder %s25, 0
      %p220 = por %p218, %p219
      %s222 = sadd.s32 %s221, 1
      %p225 = scmp.eq.s32.totalorder %s19, 1
      %p226 = scmp.ne.s32.totalorder %s221, %s223
      %p227 = scmp.eq.s32.totalorder %s19, 0
      %p228 = por %p226, %p227
      %p229 = scmp.ne.s32.totalorder %s221, %s223
      %p230 = scmp.eq.s32.totalorder %s24, 1
      %p231 = por %p229, %p230
      %p232 = scmp.ne.s32.totalorder %s223, %s224
      %p233 = scmp.eq.s32.totalorder %s24, 0
      %p234 = por %p232, %p233
      %p235 = scmp.ne.s32.totalorder %s223, %s224
      %p236 = scmp.eq.s32.totalorder %s25, 1
      %p237 = por %p235, %p236
      %p239 = scmp.ne.s32.totalorder %s224, %s238
      %p240 = scmp.eq.s32.totalorder %s25, 0
      %p241 = por %p239, %p240
      %s243 = sadd.s32 %s242, 1
      %p246 = scmp.eq.s32.totalorder %s19, 1
      %p247 = scmp.ne.s32.totalorder %s242, %s244
      %p248 = scmp.eq.s32.totalorder %s19, 0
      %p249 = por %p247, %p248
      %p250 = scmp.ne.s32.totalorder %s242, %s244
      %p251 = scmp.eq.s32.totalorder %s24, 1
      %p252 = por %p250, %p251
      %p253 = scmp.ne.s32.totalorder %s244, %s245
      %p254 = scmp.eq.s32.totalorder %s24, 0
      %p255 = por %p253, %p254
      %p256 = scmp.ne.s32.totalorder %s244, %s245
      %p257 = scmp.eq.s32.totalorder %s25, 1
      %p258 = por %p256, %p257
      %p260 = scmp.ne.s32.totalorder %s245, %s259
      %p261 = scmp.eq.s32.totalorder %s25, 0
      %p262 = por %p260, %p261
      %s264 = sadd.s32 %s263, 1
      %p267 = scmp.eq.s32.totalorder %s19, 1
      %p268 = scmp.ne.s32.totalorder %s263, %s265
      %p269 = scmp.eq.s32.totalorder %s19, 0
      %p270 = por %p268, %p269
      %p271 = scmp.ne.s32.totalorder %s263, %s265
      %p272 = scmp.eq.s32.totalorder %s24, 1
      %p273 = por %p271, %p272
      %p274 = scmp.ne.s32.totalorder %s265, %s266
      %p275 = scmp.eq.s32.totalorder %s24, 0
      %p276 = por %p274, %p275
      %p277 = scmp.ne.s32.totalorder %s265, %s266
      %p278 = scmp.eq.s32.totalorder %s25, 1
      %p279 = por %p277, %p278
      %p281 = scmp.ne.s32.totalorder %s266, %s280
      %p282 = scmp.eq.s32.totalorder %s25, 0
      %p283 = por %p281, %p282
      %s284 = ssub.s32 %s19, %s26
      %p285 = scmp.eq.s32.totalorder %s284, 0
      %s287 = sadd.s32 %s286, 1
      %s288 = scalar_select %p285, %s286, %s287
      %p291 = pneg %p285
      %p292 = scmp.eq.s32.totalorder %s19, 1
      %p293 = por %p291, %p292
      %p294 = scmp.ne.s32.totalorder %s286, %s289
      %p295 = scmp.eq.s32.totalorder %s19, 0
      %p296 = por %p294, %p295
      %p297 = scmp.ne.s32.totalorder %s286, %s289
      %p298 = scmp.eq.s32.totalorder %s24, 1
      %p299 = por %p297, %p298
      %p300 = scmp.ne.s32.totalorder %s289, %s290
      %p301 = scmp.eq.s32.totalorder %s24, 0
      %p302 = por %p300, %p301
      %p303 = scmp.ne.s32.totalorder %s289, %s290
      %p304 = scmp.eq.s32.totalorder %s25, 1
      %p305 = por %p303, %p304
      %p307 = scmp.ne.s32.totalorder %s290, %s306
      %p308 = scmp.eq.s32.totalorder %s25, 0
      %p309 = por %p307, %p308
      %p310 = scmp.le.s32.totalorder 1, %s19
      %p311 = scmp.lt.s32.totalorder %s19, 3
      %p312 = pnand %p310, %p311
      %p313 = pneg %p312
      // Predicated region
      $region9: #{tpu_custom_call.1} parent=5 // pred_check
        _
      $region10: #{tpu_custom_call.1} parent=5 // pred_check_branch
        %315 = sbr.rel (%p312) target = $region12
      $region11: #{tpu_custom_call.1} parent=5 // pred_region
        %s316 = ssub.s32 %s19, 1
        // Predicated region
        $region13: #{tpu_custom_call.1} parent=11 // pred_check
          %p317 = pneg %p66
        $region14: #{tpu_custom_call.1} parent=11 // pred_check_branch
          %319 = sbr.rel (%p317) target = $region16
        $region15: #{tpu_custom_call.1} parent=11 // pred_region
          _
        $region16: #{tpu_custom_call.1} parent=11 // pred_fallthru
          _
        // Predicated region
        $region17: #{tpu_custom_call.1} parent=11 // pred_check
          %p320 = pneg %p87
        $region18: #{tpu_custom_call.1} parent=11 // pred_check_branch
          %322 = sbr.rel (%p320) target = $region20
        $region19: #{tpu_custom_call.1} parent=11 // pred_region
          _
        $region20: #{tpu_custom_call.1} parent=11 // pred_fallthru
          _
        // Predicated region
        $region21: #{tpu_custom_call.1} parent=11 // pred_check
          %p323 = pneg %p108
        $region22: #{tpu_custom_call.1} parent=11 // pred_check_branch
          %325 = sbr.rel (%p323) target = $region24
        $region23: #{tpu_custom_call.1} parent=11 // pred_region
          _
        $region24: #{tpu_custom_call.1} parent=11 // pred_fallthru
          _
        // Predicated region
        $region25: #{tpu_custom_call.1} parent=11 // pred_check
          %p326 = pneg %p129
        $region26: #{tpu_custom_call.1} parent=11 // pred_check_branch
          %328 = sbr.rel (%p326) target = $region28
        $region27: #{tpu_custom_call.1} parent=11 // pred_region
          _
        $region28: #{tpu_custom_call.1} parent=11 // pred_fallthru
          _
        // Predicated region
        $region29: #{tpu_custom_call.1} parent=11 // pred_check
          %p329 = pneg %p150
        $region30: #{tpu_custom_call.1} parent=11 // pred_check_branch
          %331 = sbr.rel (%p329) target = $region32
        $region31: #{tpu_custom_call.1} parent=11 // pred_region
          _
        $region32: #{tpu_custom_call.1} parent=11 // pred_fallthru
          _
        // Predicated region
        $region33: #{tpu_custom_call.1} parent=11 // pred_check
          %p332 = pneg %p171
        $region34: #{tpu_custom_call.1} parent=11 // pred_check_branch
          %334 = sbr.rel (%p332) target = $region36
        $region35: #{tpu_custom_call.1} parent=11 // pred_region
          _
        $region36: #{tpu_custom_call.1} parent=11 // pred_fallthru
          _
        // Predicated region
        $region37: #{tpu_custom_call.1} parent=11 // pred_check
          %p335 = pneg %p192
        $region38: #{tpu_custom_call.1} parent=11 // pred_check_branch
          %337 = sbr.rel (%p335) target = $region40
        $region39: #{tpu_custom_call.1} parent=11 // pred_region
          _
        $region40: #{tpu_custom_call.1} parent=11 // pred_fallthru
          _
        // Predicated region
        $region41: #{tpu_custom_call.1} parent=11 // pred_check
          %p338 = pneg %p213
        $region42: #{tpu_custom_call.1} parent=11 // pred_check_branch
          %340 = sbr.rel (%p338) target = $region44
        $region43: #{tpu_custom_call.1} parent=11 // pred_region
          _
        $region44: #{tpu_custom_call.1} parent=11 // pred_fallthru
          _
        // Predicated region
        $region45: #{tpu_custom_call.1} parent=11 // pred_check
          %p341 = pneg %p234
        $region46: #{tpu_custom_call.1} parent=11 // pred_check_branch
          %343 = sbr.rel (%p341) target = $region48
        $region47: #{tpu_custom_call.1} parent=11 // pred_region
          _
        $region48: #{tpu_custom_call.1} parent=11 // pred_fallthru
          _
        // Predicated region
        $region49: #{tpu_custom_call.1} parent=11 // pred_check
          %p344 = pneg %p255
        $region50: #{tpu_custom_call.1} parent=11 // pred_check_branch
          %346 = sbr.rel (%p344) target = $region52
        $region51: #{tpu_custom_call.1} parent=11 // pred_region
          _
        $region52: #{tpu_custom_call.1} parent=11 // pred_fallthru
          _
        // Predicated region
        $region53: #{tpu_custom_call.1} parent=11 // pred_check
          %p347 = pneg %p276
        $region54: #{tpu_custom_call.1} parent=11 // pred_check_branch
          %349 = sbr.rel (%p347) target = $region56
        $region55: #{tpu_custom_call.1} parent=11 // pred_region
          %s351 = ssub.s32 16384, 16384
          %352 = vsyncadd [#allocation3], %s351
          %s353 = sshll.u32 [#allocation2], 4
          %s354 = int_to_ptr.vmem [resolvable:$true] %s353
          %359 = dma.hbm_to_vmem [thread:$0]  %s11, 16384, %s354, [#allocation3], 64, 64, 4
        $region56: #{tpu_custom_call.1} parent=11 // pred_fallthru
          _
      $region12: #{tpu_custom_call.1} parent=5 // pred_fallthru
        _
      %p360 = scmp.lt.s32.totalorder %s19, 2
      // Predicated region
      $region57: #{tpu_custom_call.1} parent=5 // pred_check
        %p361 = pneg %p360
      $region58: #{tpu_custom_call.1} parent=5 // pred_check_branch
        %363 = sbr.rel (%p361) target = $region60
      $region59: #{tpu_custom_call.1} parent=5 // pred_region
        // Predicated region
        $region61: #{tpu_custom_call.1} parent=59 // pred_check
          %p364 = pneg %p39
        $region62: #{tpu_custom_call.1} parent=59 // pred_check_branch
          %366 = sbr.rel (%p364) target = $region64
        $region63: #{tpu_custom_call.1} parent=59 // pred_region
          %p367 = scmp.lt.s32.totalorder %s19, 1
          %s368 = scalar_select %p367, %s19, 1
          %s369 = smul.addr %s368, 16
          %s370 = smul.addr %s369, 8
          %s371 = scalar_lea.vmem %s0, %s370
        $region64: #{tpu_custom_call.1} parent=59 // pred_fallthru
          _
      $region60: #{tpu_custom_call.1} parent=5 // pred_fallthru
        _
      %p372 = scmp.le.s32.totalorder 1, %s19
      %p373 = scmp.lt.s32.totalorder %s19, 3
      %p374 = pnand %p372, %p373
      %p375 = pneg %p374
      // Predicated region
      $region65: #{tpu_custom_call.1} parent=5 // pred_check
        _
      $region66: #{tpu_custom_call.1} parent=5 // pred_check_branch
        %377 = sbr.rel (%p374) target = $region68
      $region67: #{tpu_custom_call.1} parent=5 // pred_region
        %s378 = ssub.s32 %s19, 1
        // Predicated region
        $region69: #{tpu_custom_call.1} parent=67 // pred_check
          %p379 = pneg %p276
        $region70: #{tpu_custom_call.1} parent=67 // pred_check_branch
          %381 = sbr.rel (%p379) target = $region72
        $region71: #{tpu_custom_call.1} parent=67 // pred_region
          %382 = dma.done [#allocation3], 16384
        $region72: #{tpu_custom_call.1} parent=67 // pred_fallthru
          _
        %p383 = scmp.lt.s32.totalorder %s24, 1
        %s384 = scalar_select %p383, %s24, 1
        %s385 = smul.addr %s384, 16
        %s386 = smul.addr %s385, 8
        %s387 = scalar_lea.vmem %s0, %s386
        %p388 = pneg %p45
        %p389 = pneg %p42
        %p390 = pneg %p66
        %p391 = pneg %p63
        %p392 = pneg %p87
        %p393 = pneg %p84
        %p394 = pneg %p108
        %p395 = pneg %p105
        %p396 = pneg %p129
        %p397 = pneg %p126
        %p398 = pneg %p150
        %p399 = pneg %p147
        %p400 = pneg %p171
        %p401 = pneg %p168
        %p402 = pneg %p192
        %p403 = pneg %p189
        %p404 = pneg %p213
        %p405 = pneg %p210
        %p406 = pneg %p234
        %p407 = pneg %p231
        %p408 = pneg %p255
        %p409 = pneg %p252
        %p410 = pneg %p276
        %p411 = pneg %p273
        %p412 = pneg %p302
        %p413 = pneg %p299
        %p414 = scmp.lt.s32.totalorder %s24, 1
        %s415 = scalar_select %p414, %s24, 1
        %s416 = smul.addr %s415, 16
        %s417 = smul.addr %s416, 8
        %s418 = scalar_lea.vmem %s12, %s417
        %p419 = scmp.lt.s32.totalorder %s24, 1
        %s420 = scalar_select %p419, %s24, 1
        %s421 = smul.addr %s420, 16
        %s422 = smul.addr %s421, 8
        %s423 = scalar_lea.vmem %s0, %s422
        %p424 = scmp.lt.s32.totalorder %s24, 1
        %s425 = scalar_select %p424, %s24, 1
        %s426 = smul.addr %s425, 16
        %s427 = smul.addr %s426, 8
        %s428 = scalar_lea.vmem %s12, %s427
        %v430 = vld [vmem:[%s423] sm:$0xff]
        %v431 = vld [vmem:[%s423 + $0x8] sm:$0xff]
        %v432 = vld [vmem:[%s423 + $0x10] sm:$0xff]
        %v433 = vld [vmem:[%s423 + $0x18] sm:$0xff]
        %v434 = vld [vmem:[%s423 + $0x20] sm:$0xff]
        %v435 = vld [vmem:[%s423 + $0x28] sm:$0xff]
        %v436 = vld [vmem:[%s423 + $0x30] sm:$0xff]
        %v437 = vld [vmem:[%s423 + $0x38] sm:$0xff]
        %v438 = vld [vmem:[%s423 + $0x40] sm:$0xff]
        %v439 = vld [vmem:[%s423 + $0x48] sm:$0xff]
        %v440 = vld [vmem:[%s423 + $0x50] sm:$0xff]
        %v441 = vld [vmem:[%s423 + $0x58] sm:$0xff]
        %v442 = vld [vmem:[%s423 + $0x60] sm:$0xff]
        %v443 = vld [vmem:[%s423 + $0x68] sm:$0xff]
        %v444 = vld [vmem:[%s423 + $0x70] sm:$0xff]
        %v445 = vld [vmem:[%s423 + $0x78] sm:$0xff]
        %v446 = vld [vmem:[#allocation2] sm:$0xf]
        %v447 = vld [vmem:[#allocation2 + $0x4] sm:$0xf]
        %v448 = vld [vmem:[#allocation2 + $0x8] sm:$0xf]
        %v449 = vld [vmem:[#allocation2 + $0xc] sm:$0xf]
        %v450 = vld [vmem:[#allocation2 + $0x10] sm:$0xf]
        %v451 = vld [vmem:[#allocation2 + $0x14] sm:$0xf]
        %v452 = vld [vmem:[#allocation2 + $0x18] sm:$0xf]
        %v453 = vld [vmem:[#allocation2 + $0x1c] sm:$0xf]
        %v454 = vld [vmem:[#allocation2 + $0x20] sm:$0xf]
        %v455 = vld [vmem:[#allocation2 + $0x24] sm:$0xf]
        %v456 = vld [vmem:[#allocation2 + $0x28] sm:$0xf]
        %v457 = vld [vmem:[#allocation2 + $0x2c] sm:$0xf]
        %v458 = vld [vmem:[#allocation2 + $0x30] sm:$0xf]
        %v459 = vld [vmem:[#allocation2 + $0x34] sm:$0xf]
        %v460 = vld [vmem:[#allocation2 + $0x38] sm:$0xf]
        %v461 = vld [vmem:[#allocation2 + $0x3c] sm:$0xf]
        %v462 = vld [vmem:[#allocation2 + $0x40] sm:$0xf]
        %v463 = vld [vmem:[#allocation2 + $0x44] sm:$0xf]
        %v464 = vld [vmem:[#allocation2 + $0x48] sm:$0xf]
        %v465 = vld [vmem:[#allocation2 + $0x4c] sm:$0xf]
        %v466 = vld [vmem:[#allocation2 + $0x50] sm:$0xf]
        %v467 = vld [vmem:[#allocation2 + $0x54] sm:$0xf]
        %v468 = vld [vmem:[#allocation2 + $0x58] sm:$0xf]
        %v469 = vld [vmem:[#allocation2 + $0x5c] sm:$0xf]
        %v470 = vld [vmem:[#allocation2 + $0x60] sm:$0xf]
        %v471 = vld [vmem:[#allocation2 + $0x64] sm:$0xf]
        %v472 = vld [vmem:[#allocation2 + $0x68] sm:$0xf]
        %v473 = vld [vmem:[#allocation2 + $0x6c] sm:$0xf]
        %v474 = vld [vmem:[#allocation2 + $0x70] sm:$0xf]
        %v475 = vld [vmem:[#allocation2 + $0x74] sm:$0xf]
        %v476 = vld [vmem:[#allocation2 + $0x78] sm:$0xf]
        %v477 = vld [vmem:[#allocation2 + $0x7c] sm:$0xf]
        %v478 = vld [vmem:[#allocation2 + $0x80] sm:$0xf]
        %v479 = vld [vmem:[#allocation2 + $0x84] sm:$0xf]
        %v480 = vld [vmem:[#allocation2 + $0x88] sm:$0xf]
        %v481 = vld [vmem:[#allocation2 + $0x8c] sm:$0xf]
        %v482 = vld [vmem:[#allocation2 + $0x90] sm:$0xf]
        %v483 = vld [vmem:[#allocation2 + $0x94] sm:$0xf]
        %v484 = vld [vmem:[#allocation2 + $0x98] sm:$0xf]
        %v485 = vld [vmem:[#allocation2 + $0x9c] sm:$0xf]
        %v486 = vld [vmem:[#allocation2 + $0xa0] sm:$0xf]
        %v487 = vld [vmem:[#allocation2 + $0xa4] sm:$0xf]
        %v488 = vld [vmem:[#allocation2 + $0xa8] sm:$0xf]
        %v489 = vld [vmem:[#allocation2 + $0xac] sm:$0xf]
        %v490 = vld [vmem:[#allocation2 + $0xb0] sm:$0xf]
        %v491 = vld [vmem:[#allocation2 + $0xb4] sm:$0xf]
        %v492 = vld [vmem:[#allocation2 + $0xb8] sm:$0xf]
        %v493 = vld [vmem:[#allocation2 + $0xbc] sm:$0xf]
        %v494 = vld [vmem:[#allocation2 + $0xc0] sm:$0xf]
        %v495 = vld [vmem:[#allocation2 + $0xc4] sm:$0xf]
        %v496 = vld [vmem:[#allocation2 + $0xc8] sm:$0xf]
        %v497 = vld [vmem:[#allocation2 + $0xcc] sm:$0xf]
        %v498 = vld [vmem:[#allocation2 + $0xd0] sm:$0xf]
        %v499 = vld [vmem:[#allocation2 + $0xd4] sm:$0xf]
        %v500 = vld [vmem:[#allocation2 + $0xd8] sm:$0xf]
        %v501 = vld [vmem:[#allocation2 + $0xdc] sm:$0xf]
        %v502 = vld [vmem:[#allocation2 + $0xe0] sm:$0xf]
        %v503 = vld [vmem:[#allocation2 + $0xe4] sm:$0xf]
        %v504 = vld [vmem:[#allocation2 + $0xe8] sm:$0xf]
        %v505 = vld [vmem:[#allocation2 + $0xec] sm:$0xf]
        %v506 = vld [vmem:[#allocation2 + $0xf0] sm:$0xf]
        %v507 = vld [vmem:[#allocation2 + $0xf4] sm:$0xf]
        %v508 = vld [vmem:[#allocation2 + $0xf8] sm:$0xf]
        %v509 = vld [vmem:[#allocation2 + $0xfc] sm:$0xf]
        %v510 = vld [vmem:[#allocation2 + $0x100] sm:$0xf]
        %v511 = vld [vmem:[#allocation2 + $0x104] sm:$0xf]
        %v512 = vld [vmem:[#allocation2 + $0x108] sm:$0xf]
        %v513 = vld [vmem:[#allocation2 + $0x10c] sm:$0xf]
        %v514 = vld [vmem:[#allocation2 + $0x110] sm:$0xf]
        %v515 = vld [vmem:[#allocation2 + $0x114] sm:$0xf]
        %v516 = vld [vmem:[#allocation2 + $0x118] sm:$0xf]
        %v517 = vld [vmem:[#allocation2 + $0x11c] sm:$0xf]
        %v518 = vld [vmem:[#allocation2 + $0x120] sm:$0xf]
        %v519 = vld [vmem:[#allocation2 + $0x124] sm:$0xf]
        %v520 = vld [vmem:[#allocation2 + $0x128] sm:$0xf]
        %v521 = vld [vmem:[#allocation2 + $0x12c] sm:$0xf]
        %v522 = vld [vmem:[#allocation2 + $0x130] sm:$0xf]
        %v523 = vld [vmem:[#allocation2 + $0x134] sm:$0xf]
        %v524 = vld [vmem:[#allocation2 + $0x138] sm:$0xf]
        %v525 = vld [vmem:[#allocation2 + $0x13c] sm:$0xf]
        %v526 = vld [vmem:[#allocation2 + $0x140] sm:$0xf]
        %v527 = vld [vmem:[#allocation2 + $0x144] sm:$0xf]
        %v528 = vld [vmem:[#allocation2 + $0x148] sm:$0xf]
        %v529 = vld [vmem:[#allocation2 + $0x14c] sm:$0xf]
        %v530 = vld [vmem:[#allocation2 + $0x150] sm:$0xf]
        %v531 = vld [vmem:[#allocation2 + $0x154] sm:$0xf]
        %v532 = vld [vmem:[#allocation2 + $0x158] sm:$0xf]
        %v533 = vld [vmem:[#allocation2 + $0x15c] sm:$0xf]
        %v534 = vld [vmem:[#allocation2 + $0x160] sm:$0xf]
        %v535 = vld [vmem:[#allocation2 + $0x164] sm:$0xf]
        %v536 = vld [vmem:[#allocation2 + $0x168] sm:$0xf]
        %v537 = vld [vmem:[#allocation2 + $0x16c] sm:$0xf]
        %v538 = vld [vmem:[#allocation2 + $0x170] sm:$0xf]
        %v539 = vld [vmem:[#allocation2 + $0x174] sm:$0xf]
        %v540 = vld [vmem:[#allocation2 + $0x178] sm:$0xf]
        %v541 = vld [vmem:[#allocation2 + $0x17c] sm:$0xf]
        %v542 = vld [vmem:[#allocation2 + $0x180] sm:$0xf]
        %v543 = vld [vmem:[#allocation2 + $0x184] sm:$0xf]
        %v544 = vld [vmem:[#allocation2 + $0x188] sm:$0xf]
        %v545 = vld [vmem:[#allocation2 + $0x18c] sm:$0xf]
        %v546 = vld [vmem:[#allocation2 + $0x190] sm:$0xf]
        %v547 = vld [vmem:[#allocation2 + $0x194] sm:$0xf]
        %v548 = vld [vmem:[#allocation2 + $0x198] sm:$0xf]
        %v549 = vld [vmem:[#allocation2 + $0x19c] sm:$0xf]
        %v550 = vld [vmem:[#allocation2 + $0x1a0] sm:$0xf]
        %v551 = vld [vmem:[#allocation2 + $0x1a4] sm:$0xf]
        %v552 = vld [vmem:[#allocation2 + $0x1a8] sm:$0xf]
        %v553 = vld [vmem:[#allocation2 + $0x1ac] sm:$0xf]
        %v554 = vld [vmem:[#allocation2 + $0x1b0] sm:$0xf]
        %v555 = vld [vmem:[#allocation2 + $0x1b4] sm:$0xf]
        %v556 = vld [vmem:[#allocation2 + $0x1b8] sm:$0xf]
        %v557 = vld [vmem:[#allocation2 + $0x1bc] sm:$0xf]
        %v558 = vld [vmem:[#allocation2 + $0x1c0] sm:$0xf]
        %v559 = vld [vmem:[#allocation2 + $0x1c4] sm:$0xf]
        %v560 = vld [vmem:[#allocation2 + $0x1c8] sm:$0xf]
        %v561 = vld [vmem:[#allocation2 + $0x1cc] sm:$0xf]
        %v562 = vld [vmem:[#allocation2 + $0x1d0] sm:$0xf]
        %v563 = vld [vmem:[#allocation2 + $0x1d4] sm:$0xf]
        %v564 = vld [vmem:[#allocation2 + $0x1d8] sm:$0xf]
        %v565 = vld [vmem:[#allocation2 + $0x1dc] sm:$0xf]
        %v566 = vld [vmem:[#allocation2 + $0x1e0] sm:$0xf]
        %v567 = vld [vmem:[#allocation2 + $0x1e4] sm:$0xf]
        %v568 = vld [vmem:[#allocation2 + $0x1e8] sm:$0xf]
        %v569 = vld [vmem:[#allocation2 + $0x1ec] sm:$0xf]
        %v570 = vld [vmem:[#allocation2 + $0x1f0] sm:$0xf]
        %v571 = vld [vmem:[#allocation2 + $0x1f4] sm:$0xf]
        %v572 = vld [vmem:[#allocation2 + $0x1f8] sm:$0xf]
        %v573 = vld [vmem:[#allocation2 + $0x1fc] sm:$0xf]
        %v574 = vld [vmem:[%s1] sm:$0xff]
        %v575 = vld [vmem:[%s1 + $0x8] sm:$0xff]
        %v576 = vld [vmem:[%s1 + $0x10] sm:$0x3]
        %v577 = vpack.c.bf16 %v575, %v575
        %v578 = vpack.c.bf16 %v576, %v576
        %vm579 = vcmask 261120
        %v580 = vsel %vm579, %v430, 0.0
        %581 = vadd.xlane.f32.xlu0 %v580
        %v582 = vpop.xlane.xlu0 %581
        %v583 = vsel %vm579, %v431, 0.0
        %584 = vadd.xlane.f32.xlu0 %v583
        %v585 = vpop.xlane.xlu0 %584
        %v586 = vsel %vm579, %v432, 0.0
        %587 = vadd.xlane.f32.xlu0 %v586
        %v588 = vpop.xlane.xlu0 %587
        %v589 = vsel %vm579, %v433, 0.0
        %590 = vadd.xlane.f32.xlu0 %v589
        %v591 = vpop.xlane.xlu0 %590
        %v592 = vsel %vm579, %v434, 0.0
        %593 = vadd.xlane.f32.xlu0 %v592
        %v594 = vpop.xlane.xlu0 %593
        %v595 = vsel %vm579, %v435, 0.0
        %596 = vadd.xlane.f32.xlu0 %v595
        %v597 = vpop.xlane.xlu0 %596
        %v598 = vsel %vm579, %v436, 0.0
        %599 = vadd.xlane.f32.xlu0 %v598
        %v600 = vpop.xlane.xlu0 %599
        %v601 = vsel %vm579, %v437, 0.0
        %602 = vadd.xlane.f32.xlu0 %v601
        %v603 = vpop.xlane.xlu0 %602
        %v604 = vsel %vm579, %v438, 0.0
        %605 = vadd.xlane.f32.xlu0 %v604
        %v606 = vpop.xlane.xlu0 %605
        %v607 = vsel %vm579, %v439, 0.0
        %608 = vadd.xlane.f32.xlu0 %v607
        %v609 = vpop.xlane.xlu0 %608
        %v610 = vsel %vm579, %v440, 0.0
        %611 = vadd.xlane.f32.xlu0 %v610
        %v612 = vpop.xlane.xlu0 %611
        %v613 = vsel %vm579, %v441, 0.0
        %614 = vadd.xlane.f32.xlu0 %v613
        %v615 = vpop.xlane.xlu0 %614
        %v616 = vsel %vm579, %v442, 0.0
        %617 = vadd.xlane.f32.xlu0 %v616
        %v618 = vpop.xlane.xlu0 %617
        %v619 = vsel %vm579, %v443, 0.0
        %620 = vadd.xlane.f32.xlu0 %v619
        %v621 = vpop.xlane.xlu0 %620
        %v622 = vsel %vm579, %v444, 0.0
        %623 = vadd.xlane.f32.xlu0 %v622
        %v624 = vpop.xlane.xlu0 %623
        %v625 = vsel %vm579, %v445, 0.0
        %626 = vadd.xlane.f32.xlu0 %v625
        %v627 = vpop.xlane.xlu0 %626
        %v628 = vrcp.pop 32.0
        %v629 = vmul.f32 %v582, %v628
        %v630 = vmul.f32 %v585, %v628
        %v631 = vmul.f32 %v588, %v628
        %v632 = vmul.f32 %v591, %v628
        %v633 = vmul.f32 %v594, %v628
        %v634 = vmul.f32 %v597, %v628
        %v635 = vmul.f32 %v600, %v628
        %v636 = vmul.f32 %v603, %v628
        %v637 = vmul.f32 %v606, %v628
        %v638 = vmul.f32 %v609, %v628
        %v639 = vmul.f32 %v612, %v628
        %v640 = vmul.f32 %v615, %v628
        %v641 = vmul.f32 %v618, %v628
        %v642 = vmul.f32 %v621, %v628
        %v643 = vmul.f32 %v624, %v628
        %v644 = vmul.f32 %v627, %v628
        %v645 = vsub.f32 %v430, %v629
        %v646 = vsub.f32 %v431, %v630
        %v647 = vsub.f32 %v432, %v631
        %v648 = vsub.f32 %v433, %v632
        %v649 = vsub.f32 %v434, %v633
        %v650 = vsub.f32 %v435, %v634
        %v651 = vsub.f32 %v436, %v635
        %v652 = vsub.f32 %v437, %v636
        %v653 = vsub.f32 %v438, %v637
        %v654 = vsub.f32 %v439, %v638
        %v655 = vsub.f32 %v440, %v639
        %v656 = vsub.f32 %v441, %v640
        %v657 = vsub.f32 %v442, %v641
        %v658 = vsub.f32 %v443, %v642
        %v659 = vsub.f32 %v444, %v643
        %v660 = vsub.f32 %v445, %v644
        %v661 = vmul.f32 %v645, %v645
        %v662 = vmul.f32 %v646, %v646
        %v663 = vmul.f32 %v647, %v647
        %v664 = vmul.f32 %v648, %v648
        %v665 = vmul.f32 %v649, %v649
        %v666 = vmul.f32 %v650, %v650
        %v667 = vmul.f32 %v651, %v651
        %v668 = vmul.f32 %v652, %v652
        %v669 = vmul.f32 %v653, %v653
        %v670 = vmul.f32 %v654, %v654
        %v671 = vmul.f32 %v655, %v655
        %v672 = vmul.f32 %v656, %v656
        %v673 = vmul.f32 %v657, %v657
        %v674 = vmul.f32 %v658, %v658
        %v675 = vmul.f32 %v659, %v659
        %v676 = vmul.f32 %v660, %v660
        %v677 = vsel %vm579, %v661, 0.0
        %678 = vadd.xlane.f32.xlu0 %v677
        %v679 = vpop.xlane.xlu0 %678
        %v680 = vsel %vm579, %v662, 0.0
        %681 = vadd.xlane.f32.xlu0 %v680
        %v682 = vpop.xlane.xlu0 %681
        %v683 = vsel %vm579, %v663, 0.0
        %684 = vadd.xlane.f32.xlu0 %v683
        %v685 = vpop.xlane.xlu0 %684
        %v686 = vsel %vm579, %v664, 0.0
        %687 = vadd.xlane.f32.xlu0 %v686
        %v688 = vpop.xlane.xlu0 %687
        %v689 = vsel %vm579, %v665, 0.0
        %690 = vadd.xlane.f32.xlu0 %v689
        %v691 = vpop.xlane.xlu0 %690
        %v692 = vsel %vm579, %v666, 0.0
        %693 = vadd.xlane.f32.xlu0 %v692
        %v694 = vpop.xlane.xlu0 %693
        %v695 = vsel %vm579, %v667, 0.0
        %696 = vadd.xlane.f32.xlu0 %v695
        %v697 = vpop.xlane.xlu0 %696
        %v698 = vsel %vm579, %v668, 0.0
        %699 = vadd.xlane.f32.xlu0 %v698
        %v700 = vpop.xlane.xlu0 %699
        %v701 = vsel %vm579, %v669, 0.0
        %702 = vadd.xlane.f32.xlu0 %v701
        %v703 = vpop.xlane.xlu0 %702
        %v704 = vsel %vm579, %v670, 0.0
        %705 = vadd.xlane.f32.xlu0 %v704
        %v706 = vpop.xlane.xlu0 %705
        %v707 = vsel %vm579, %v671, 0.0
        %708 = vadd.xlane.f32.xlu0 %v707
        %v709 = vpop.xlane.xlu0 %708
        %v710 = vsel %vm579, %v672, 0.0
        %711 = vadd.xlane.f32.xlu0 %v710
        %v712 = vpop.xlane.xlu0 %711
        %v713 = vsel %vm579, %v673, 0.0
        %714 = vadd.xlane.f32.xlu0 %v713
        %v715 = vpop.xlane.xlu0 %714
        %v716 = vsel %vm579, %v674, 0.0
        %717 = vadd.xlane.f32.xlu0 %v716
        %v718 = vpop.xlane.xlu0 %717
        %v719 = vsel %vm579, %v675, 0.0
        %720 = vadd.xlane.f32.xlu0 %v719
        %v721 = vpop.xlane.xlu0 %720
        %v722 = vsel %vm579, %v676, 0.0
        %723 = vadd.xlane.f32.xlu0 %v722
        %v724 = vpop.xlane.xlu0 %723
        %v725 = vmul.f32 %v679, %v628
        %v726 = vmul.f32 %v682, %v628
        %v727 = vmul.f32 %v685, %v628
        %v728 = vmul.f32 %v688, %v628
        %v729 = vmul.f32 %v691, %v628
        %v730 = vmul.f32 %v694, %v628
        %v731 = vmul.f32 %v697, %v628
        %v732 = vmul.f32 %v700, %v628
        %v733 = vmul.f32 %v703, %v628
        %v734 = vmul.f32 %v706, %v628
        %v735 = vmul.f32 %v709, %v628
        %v736 = vmul.f32 %v712, %v628
        %v737 = vmul.f32 %v715, %v628
        %v738 = vmul.f32 %v718, %v628
        %v739 = vmul.f32 %v721, %v628
        %v740 = vmul.f32 %v724, %v628
        %v741 = vadd.f32 %v725, 1e-05
        %v742 = vadd.f32 %v726, 1e-05
        %v743 = vadd.f32 %v727, 1e-05
        %v744 = vadd.f32 %v728, 1e-05
        %v745 = vadd.f32 %v729, 1e-05
        %v746 = vadd.f32 %v730, 1e-05
        %v747 = vadd.f32 %v731, 1e-05
        %v748 = vadd.f32 %v732, 1e-05
        %v749 = vadd.f32 %v733, 1e-05
        %v750 = vadd.f32 %v734, 1e-05
        %v751 = vadd.f32 %v735, 1e-05
        %v752 = vadd.f32 %v736, 1e-05
        %v753 = vadd.f32 %v737, 1e-05
        %v754 = vadd.f32 %v738, 1e-05
        %v755 = vadd.f32 %v739, 1e-05
        %v756 = vadd.f32 %v740, 1e-05
        %v757 = vrsqrt.pop %v741
        %v758 = vrsqrt.pop %v742
        %v759 = vrsqrt.pop %v743
        %v760 = vrsqrt.pop %v744
        %v761 = vrsqrt.pop %v745
        %v762 = vrsqrt.pop %v746
        %v763 = vrsqrt.pop %v747
        %v764 = vrsqrt.pop %v748
        %v765 = vrsqrt.pop %v749
        %v766 = vrsqrt.pop %v750
        %v767 = vrsqrt.pop %v751
        %v768 = vrsqrt.pop %v752
        %v769 = vrsqrt.pop %v753
        %v770 = vrsqrt.pop %v754
        %v771 = vrsqrt.pop %v755
        %v772 = vrsqrt.pop %v756
        %v773 = vmul.f32 %v645, %v757
        %v774 = vmul.f32 %v646, %v758
        %v775 = vmul.f32 %v647, %v759
        %v776 = vmul.f32 %v648, %v760
        %v777 = vmul.f32 %v649, %v761
        %v778 = vmul.f32 %v650, %v762
        %v779 = vmul.f32 %v651, %v763
        %v780 = vmul.f32 %v652, %v764
        %v781 = vmul.f32 %v653, %v765
        %v782 = vmul.f32 %v654, %v766
        %v783 = vmul.f32 %v655, %v767
        %v784 = vmul.f32 %v656, %v768
        %v785 = vmul.f32 %v657, %v769
        %v786 = vmul.f32 %v658, %v770
        %v787 = vmul.f32 %v659, %v771
        %v788 = vmul.f32 %v660, %v772
        %v789 = vlaneseq
        %v790 = vshrl.u32 %v789, 7
        %v791 = vsub.s32 0, %v790
        %v792 = vrot.slane %v574, %v791
        %v793 = vmul.f32 %v773, %v792
        %v794 = vmul.f32 %v774, %v792
        %v795 = vmul.f32 %v775, %v792
        %v796 = vmul.f32 %v776, %v792
        %v797 = vmul.f32 %v777, %v792
        %v798 = vmul.f32 %v778, %v792
        %v799 = vmul.f32 %v779, %v792
        %v800 = vmul.f32 %v780, %v792
        %v801 = vmul.f32 %v781, %v792
        %v802 = vmul.f32 %v782, %v792
        %v803 = vmul.f32 %v783, %v792
        %v804 = vmul.f32 %v784, %v792
        %v805 = vmul.f32 %v785, %v792
        %v806 = vmul.f32 %v786, %v792
        %v807 = vmul.f32 %v787, %v792
        %v808 = vmul.f32 %v788, %v792
        %v809 = vlaneseq
        %v810 = vshrl.u32 %v809, 7
        %v811 = vsub.s32 1, %v810
        %v812 = vrot.slane %v574, %v811
        %v813 = vadd.f32 %v793, %v812
        %v814 = vadd.f32 %v794, %v812
        %v815 = vadd.f32 %v795, %v812
        %v816 = vadd.f32 %v796, %v812
        %v817 = vadd.f32 %v797, %v812
        %v818 = vadd.f32 %v798, %v812
        %v819 = vadd.f32 %v799, %v812
        %v820 = vadd.f32 %v800, %v812
        %v821 = vadd.f32 %v801, %v812
        %v822 = vadd.f32 %v802, %v812
        %v823 = vadd.f32 %v803, %v812
        %v824 = vadd.f32 %v804, %v812
        %v825 = vadd.f32 %v805, %v812
        %v826 = vadd.f32 %v806, %v812
        %v827 = vadd.f32 %v807, %v812
        %v828 = vadd.f32 %v808, %v812
        %v829 = vpack.c.bf16 %v814, %v813
        %v830 = vpack.c.bf16 %v816, %v815
        %v831 = vpack.c.bf16 %v818, %v817
        %v832 = vpack.c.bf16 %v820, %v819
        %v833 = vpack.c.bf16 %v822, %v821
        %v834 = vpack.c.bf16 %v824, %v823
        %v835 = vpack.c.bf16 %v826, %v825
        %v836 = vpack.c.bf16 %v828, %v827
        %v837 = vld [vmem:[%s2] sm:$0xf]
        %v838 = vld [vmem:[%s2 + $0x4] sm:$0xf]
        %v839 = vld [vmem:[%s2 + $0x8] sm:$0xf]
        %v840 = vld [vmem:[%s2 + $0xc] sm:$0xf]
        %v841 = vlaneseq
        %v842 = vshrl.u32 %v841, 7
        %v843 = vsub.s32 1, %v842
        %v844 = vrot.slane %v575, %v843
        %v849 = vunpack.c.l.b16 %v837
        %v850 = vunpack.c.l.b16 %v838
        %v851 = vunpack.c.l.b16 %v839
        %v852 = vunpack.c.l.b16 %v840
        %v853 = vpack.c.b16 %v850, %v849
        %v854 = vpack.c.b16 %v852, %v851
        %v858 = vsel %vm579, %v829, 0
        %v861 = vsel %vm579, %v830, 0
        %v864 = vsel %vm579, %v831, 0
        %v867 = vsel %vm579, %v832, 0
        %v870 = vsel %vm579, %v833, 0
        %v873 = vsel %vm579, %v834, 0
        %v876 = vsel %vm579, %v835, 0
        %v879 = vsel %vm579, %v836, 0
        %881 = vmatprep.subr.bf16.mxu0 0
        %882 = vmatpush1.bf16.msra.mxu0 0
        %883 = vmatprep.subr.bf16.mxu0 0
        %884 = vmatpush1.bf16.msra.mxu0 0
        %885 = vmatprep.subr.bf16.mxu0 0
        %886 = vmatpush1.bf16.msra.mxu0 0
        %887 = vmatprep.subr.bf16.mxu0 0
        %888 = vmatpush1.bf16.msra.mxu0 0
        %889 = vmatprep.subr.bf16.mxu0 0
        %890 = vmatpush1.bf16.msra.mxu0 0
        %891 = vmatprep.subr.bf16.mxu0 0
        %892 = vmatpush1.bf16.msra.mxu0 0
        %893 = vmatprep.subr.bf16.mxu0 0
        %894 = vmatpush1.bf16.msra.mxu0 %v854
        %895 = vmatprep.subr.bf16.mxu0 0
        %896 = vmatpush1.bf16.msra.mxu0 %v853
        %897 = vmatprep.subr.bf16.mxu0 0
        %898 = vmatpush2.bf16.msra.mxu0 0
        %899 = vmatprep.subr.bf16.mxu0 0
        %900 = vmatpush2.bf16.msra.mxu0 0
        %901 = vmatprep.subr.bf16.mxu0 0
        %902 = vmatpush2.bf16.msra.mxu0 0
        %903 = vmatprep.subr.bf16.mxu0 0
        %904 = vmatpush2.bf16.msra.mxu0 0
        %905 = vmatprep.subr.bf16.mxu0 0
        %906 = vmatpush2.bf16.msra.mxu0 0
        %907 = vmatprep.subr.bf16.mxu0 0
        %908 = vmatpush2.bf16.msra.mxu0 0
        %909 = vmatprep.subr.bf16.mxu0 0
        %910 = vmatpush2.bf16.msra.mxu0 0
        %911 = vmatprep.subr.bf16.mxu0 0
        %912 = vmatpush2.bf16.msra.mxu0 0
        %913 = vmatprep.mubr.bf16.mxu0 0
        %914 = vmatmul.mubr.bf16.gmra.mxu0 %v858
        %v915 = vpop.f32.mrf.mxu0
        %v916 = vadd.f32 %v844, %v915
        %v917 = vpop.f32.mrf.mxu0
        %v918 = vpop.f32.mrf.mxu0
        %v919 = vadd.f32 %v844, %v918
        %v920 = vpop.f32.mrf.mxu0
        %921 = vmatprep.mubr.bf16.mxu0 0
        %922 = vmatmul.mubr.bf16.gmra.mxu0 %v861
        %v923 = vpop.f32.mrf.mxu0
        %v924 = vadd.f32 %v844, %v923
        %v925 = vpop.f32.mrf.mxu0
        %v926 = vpop.f32.mrf.mxu0
        %v927 = vadd.f32 %v844, %v926
        %v928 = vpop.f32.mrf.mxu0
        %929 = vmatprep.mubr.bf16.mxu0 0
        %930 = vmatmul.mubr.bf16.gmra.mxu0 %v864
        %v931 = vpop.f32.mrf.mxu0
        %v932 = vadd.f32 %v844, %v931
        %v933 = vpop.f32.mrf.mxu0
        %v934 = vpop.f32.mrf.mxu0
        %v935 = vadd.f32 %v844, %v934
        %v936 = vpop.f32.mrf.mxu0
        %937 = vmatprep.mubr.bf16.mxu0 0
        %938 = vmatmul.mubr.bf16.gmra.mxu0 %v867
        %v939 = vpop.f32.mrf.mxu0
        %v940 = vadd.f32 %v844, %v939
        %v941 = vpop.f32.mrf.mxu0
        %v942 = vpop.f32.mrf.mxu0
        %v943 = vadd.f32 %v844, %v942
        %v944 = vpop.f32.mrf.mxu0
        %945 = vmatprep.mubr.bf16.mxu0 0
        %946 = vmatmul.mubr.bf16.gmra.mxu0 %v870
        %v947 = vpop.f32.mrf.mxu0
        %v948 = vadd.f32 %v844, %v947
        %v949 = vpop.f32.mrf.mxu0
        %v950 = vpop.f32.mrf.mxu0
        %v951 = vadd.f32 %v844, %v950
        %v952 = vpop.f32.mrf.mxu0
        %953 = vmatprep.mubr.bf16.mxu0 0
        %954 = vmatmul.mubr.bf16.gmra.mxu0 %v873
        %v955 = vpop.f32.mrf.mxu0
        %v956 = vadd.f32 %v844, %v955
        %v957 = vpop.f32.mrf.mxu0
        %v958 = vpop.f32.mrf.mxu0
        %v959 = vadd.f32 %v844, %v958
        %v960 = vpop.f32.mrf.mxu0
        %961 = vmatprep.mubr.bf16.mxu0 0
        %962 = vmatmul.mubr.bf16.gmra.mxu0 %v876
        %v963 = vpop.f32.mrf.mxu0
        %v964 = vadd.f32 %v844, %v963
        %v965 = vpop.f32.mrf.mxu0
        %v966 = vpop.f32.mrf.mxu0
        %v967 = vadd.f32 %v844, %v966
        %v968 = vpop.f32.mrf.mxu0
        %969 = vmatprep.mubr.bf16.mxu0 0
        %970 = vmatmul.mubr.bf16.gmra.mxu0 %v879
        %v971 = vpop.f32.mrf.mxu0
        %v972 = vadd.f32 %v844, %v971
        %v973 = vpop.f32.mrf.mxu0
        %v974 = vpop.f32.mrf.mxu0
        %v975 = vadd.f32 %v844, %v974
        %v976 = vpop.f32.mrf.mxu0
        %977 = vdwg.mxu0
        %v978 = vpack.c.bf16 %v919, %v916
        %v979 = vpack.c.bf16 %v927, %v924
        %v980 = vpack.c.bf16 %v935, %v932
        %v981 = vpack.c.bf16 %v943, %v940
        %v982 = vpack.c.bf16 %v951, %v948
        %v983 = vpack.c.bf16 %v959, %v956
        %v984 = vpack.c.bf16 %v967, %v964
        %v985 = vpack.c.bf16 %v975, %v972
        %v987 = vpack.i.b16 %v577, %v577
        %v989 = vlaneseq
        %v990 = vshrl.u32 %v989, 7
        %v991 = vsub.s32 1, %v990
        %v992 = vrot.slane %v987, %v991
        %v993 = vmul.bf16 %v978, %v992
        %v994 = vmul.bf16 %v979, %v992
        %v995 = vmul.bf16 %v980, %v992
        %v996 = vmul.bf16 %v981, %v992
        %v997 = vmul.bf16 %v982, %v992
        %v998 = vmul.bf16 %v983, %v992
        %v999 = vmul.bf16 %v984, %v992
        %v1000 = vmul.bf16 %v985, %v992
        %v1001 = vshrl.u32 %v577, 16
        %v1002 = vpack.i.b16 %v1001, %v1001
        %v1004 = vlaneseq
        %v1005 = vshrl.u32 %v1004, 7
        %v1006 = vsub.s32 1, %v1005
        %v1007 = vrot.slane %v1002, %v1006
        %v1008 = vmul.bf16 %v978, %v1007
        %v1009 = vmul.bf16 %v979, %v1007
        %v1010 = vmul.bf16 %v980, %v1007
        %v1011 = vmul.bf16 %v981, %v1007
        %v1012 = vmul.bf16 %v982, %v1007
        %v1013 = vmul.bf16 %v983, %v1007
        %v1014 = vmul.bf16 %v984, %v1007
        %v1015 = vmul.bf16 %v985, %v1007
        %v1016 = vlaneseq
        %v1017 = vshrl.u32 %v1016, 7
        %v1018 = vsub.s32 2, %v1017
        %v1019 = vrot.slane %v987, %v1018
        %v1020 = vmul.bf16 %v978, %v1019
        %v1021 = vmul.bf16 %v979, %v1019
        %v1022 = vmul.bf16 %v980, %v1019
        %v1023 = vmul.bf16 %v981, %v1019
        %v1024 = vmul.bf16 %v982, %v1019
        %v1025 = vmul.bf16 %v983, %v1019
        %v1026 = vmul.bf16 %v984, %v1019
        %v1027 = vmul.bf16 %v985, %v1019
        %v1028 = vlaneseq
        %v1029 = vshrl.u32 %v1028, 7
        %v1030 = vsub.s32 2, %v1029
        %v1031 = vrot.slane %v1002, %v1030
        %v1032 = vmul.bf16 %v978, %v1031
        %v1033 = vmul.bf16 %v979, %v1031
        %v1034 = vmul.bf16 %v980, %v1031
        %v1035 = vmul.bf16 %v981, %v1031
        %v1036 = vmul.bf16 %v982, %v1031
        %v1037 = vmul.bf16 %v983, %v1031
        %v1038 = vmul.bf16 %v984, %v1031
        %v1039 = vmul.bf16 %v985, %v1031
        %v1040 = vlaneseq
        %v1041 = vshrl.u32 %v1040, 7
        %v1042 = vsub.s32 3, %v1041
        %v1043 = vrot.slane %v987, %v1042
        %v1044 = vmul.bf16 %v978, %v1043
        %v1045 = vmul.bf16 %v979, %v1043
        %v1046 = vmul.bf16 %v980, %v1043
        %v1047 = vmul.bf16 %v981, %v1043
        %v1048 = vmul.bf16 %v982, %v1043
        %v1049 = vmul.bf16 %v983, %v1043
        %v1050 = vmul.bf16 %v984, %v1043
        %v1051 = vmul.bf16 %v985, %v1043
        %v1052 = vlaneseq
        %v1053 = vshrl.u32 %v1052, 7
        %v1054 = vsub.s32 3, %v1053
        %v1055 = vrot.slane %v1002, %v1054
        %v1056 = vmul.bf16 %v978, %v1055
        %v1057 = vmul.bf16 %v979, %v1055
        %v1058 = vmul.bf16 %v980, %v1055
        %v1059 = vmul.bf16 %v981, %v1055
        %v1060 = vmul.bf16 %v982, %v1055
        %v1061 = vmul.bf16 %v983, %v1055
        %v1062 = vmul.bf16 %v984, %v1055
        %v1063 = vmul.bf16 %v985, %v1055
        %v1065 = vpack.i.b16 %v578, %v578
        %v1067 = vlaneseq
        %v1068 = vshrl.u32 %v1067, 7
        %v1069 = vsub.s32 0, %v1068
        %v1070 = vrot.slane %v1065, %v1069
        %v1071 = vmul.bf16 %v978, %v1070
        %v1072 = vmul.bf16 %v979, %v1070
        %v1073 = vmul.bf16 %v980, %v1070
        %v1074 = vmul.bf16 %v981, %v1070
        %v1075 = vmul.bf16 %v982, %v1070
        %v1076 = vmul.bf16 %v983, %v1070
        %v1077 = vmul.bf16 %v984, %v1070
        %v1078 = vmul.bf16 %v985, %v1070
        %v1079 = vshrl.u32 %v578, 16
        %v1080 = vpack.i.b16 %v1079, %v1079
        %v1082 = vlaneseq
        %v1083 = vshrl.u32 %v1082, 7
        %v1084 = vsub.s32 0, %v1083
        %v1085 = vrot.slane %v1080, %v1084
        %v1086 = vmul.bf16 %v978, %v1085
        %v1087 = vmul.bf16 %v979, %v1085
        %v1088 = vmul.bf16 %v980, %v1085
        %v1089 = vmul.bf16 %v981, %v1085
        %v1090 = vmul.bf16 %v982, %v1085
        %v1091 = vmul.bf16 %v983, %v1085
        %v1092 = vmul.bf16 %v984, %v1085
        %v1093 = vmul.bf16 %v985, %v1085
        %v1094 = vunpack.c.l.bf16 %v446
        %v1095 = vunpack.c.l.bf16 %v447
        %v1096 = vunpack.c.l.bf16 %v448
        %v1097 = vunpack.c.l.bf16 %v449
        %v1098 = vunpack.c.l.bf16 %v450
        %v1099 = vunpack.c.l.bf16 %v451
        %v1100 = vunpack.c.l.bf16 %v452
        %v1101 = vunpack.c.l.bf16 %v453
        %v1102 = vunpack.c.l.bf16 %v454
        %v1103 = vunpack.c.l.bf16 %v455
        %v1104 = vunpack.c.l.bf16 %v456
        %v1105 = vunpack.c.l.bf16 %v457
        %v1106 = vunpack.c.l.bf16 %v458
        %v1107 = vunpack.c.l.bf16 %v459
        %v1108 = vunpack.c.l.bf16 %v460
        %v1109 = vunpack.c.l.bf16 %v461
        %v1110 = vunpack.c.l.bf16 %v462
        %v1111 = vunpack.c.l.bf16 %v463
        %v1112 = vunpack.c.l.bf16 %v464
        %v1113 = vunpack.c.l.bf16 %v465
        %v1114 = vunpack.c.l.bf16 %v466
        %v1115 = vunpack.c.l.bf16 %v467
        %v1116 = vunpack.c.l.bf16 %v468
        %v1117 = vunpack.c.l.bf16 %v469
        %v1118 = vunpack.c.l.bf16 %v470
        %v1119 = vunpack.c.l.bf16 %v471
        %v1120 = vunpack.c.l.bf16 %v472
        %v1121 = vunpack.c.l.bf16 %v473
        %v1122 = vunpack.c.l.bf16 %v474
        %v1123 = vunpack.c.l.bf16 %v475
        %v1124 = vunpack.c.l.bf16 %v476
        %v1125 = vunpack.c.l.bf16 %v477
        %v1126 = vunpack.c.l.bf16 %v478
        %v1127 = vunpack.c.l.bf16 %v479
        %v1128 = vunpack.c.l.bf16 %v480
        %v1129 = vunpack.c.l.bf16 %v481
        %v1130 = vunpack.c.l.bf16 %v482
        %v1131 = vunpack.c.l.bf16 %v483
        %v1132 = vunpack.c.l.bf16 %v484
        %v1133 = vunpack.c.l.bf16 %v485
        %v1134 = vunpack.c.l.bf16 %v486
        %v1135 = vunpack.c.l.bf16 %v487
        %v1136 = vunpack.c.l.bf16 %v488
        %v1137 = vunpack.c.l.bf16 %v489
        %v1138 = vunpack.c.l.bf16 %v490
        %v1139 = vunpack.c.l.bf16 %v491
        %v1140 = vunpack.c.l.bf16 %v492
        %v1141 = vunpack.c.l.bf16 %v493
        %v1142 = vunpack.c.l.bf16 %v494
        %v1143 = vunpack.c.l.bf16 %v495
        %v1144 = vunpack.c.l.bf16 %v496
        %v1145 = vunpack.c.l.bf16 %v497
        %v1146 = vunpack.c.l.bf16 %v498
        %v1147 = vunpack.c.l.bf16 %v499
        %v1148 = vunpack.c.l.bf16 %v500
        %v1149 = vunpack.c.l.bf16 %v501
        %v1150 = vunpack.c.l.bf16 %v502
        %v1151 = vunpack.c.l.bf16 %v503
        %v1152 = vunpack.c.l.bf16 %v504
        %v1153 = vunpack.c.l.bf16 %v505
        %v1154 = vunpack.c.l.bf16 %v506
        %v1155 = vunpack.c.l.bf16 %v507
        %v1156 = vunpack.c.l.bf16 %v508
        %v1157 = vunpack.c.l.bf16 %v509
        %v1158 = vunpack.c.l.bf16 %v510
        %v1159 = vunpack.c.l.bf16 %v511
        %v1160 = vunpack.c.l.bf16 %v512
        %v1161 = vunpack.c.l.bf16 %v513
        %v1162 = vunpack.c.l.bf16 %v514
        %v1163 = vunpack.c.l.bf16 %v515
        %v1164 = vunpack.c.l.bf16 %v516
        %v1165 = vunpack.c.l.bf16 %v517
        %v1166 = vunpack.c.l.bf16 %v518
        %v1167 = vunpack.c.l.bf16 %v519
        %v1168 = vunpack.c.l.bf16 %v520
        %v1169 = vunpack.c.l.bf16 %v521
        %v1170 = vunpack.c.l.bf16 %v522
        %v1171 = vunpack.c.l.bf16 %v523
        %v1172 = vunpack.c.l.bf16 %v524
        %v1173 = vunpack.c.l.bf16 %v525
        %v1174 = vunpack.c.l.bf16 %v526
        %v1175 = vunpack.c.l.bf16 %v527
        %v1176 = vunpack.c.l.bf16 %v528
        %v1177 = vunpack.c.l.bf16 %v529
        %v1178 = vunpack.c.l.bf16 %v530
        %v1179 = vunpack.c.l.bf16 %v531
        %v1180 = vunpack.c.l.bf16 %v532
        %v1181 = vunpack.c.l.bf16 %v533
        %v1182 = vunpack.c.l.bf16 %v534
        %v1183 = vunpack.c.l.bf16 %v535
        %v1184 = vunpack.c.l.bf16 %v536
        %v1185 = vunpack.c.l.bf16 %v537
        %v1186 = vunpack.c.l.bf16 %v538
        %v1187 = vunpack.c.l.bf16 %v539
        %v1188 = vunpack.c.l.bf16 %v540
        %v1189 = vunpack.c.l.bf16 %v541
        %v1190 = vunpack.c.l.bf16 %v542
        %v1191 = vunpack.c.l.bf16 %v543
        %v1192 = vunpack.c.l.bf16 %v544
        %v1193 = vunpack.c.l.bf16 %v545
        %v1194 = vunpack.c.l.bf16 %v546
        %v1195 = vunpack.c.l.bf16 %v547
        %v1196 = vunpack.c.l.bf16 %v548
        %v1197 = vunpack.c.l.bf16 %v549
        %v1198 = vunpack.c.l.bf16 %v550
        %v1199 = vunpack.c.l.bf16 %v551
        %v1200 = vunpack.c.l.bf16 %v552
        %v1201 = vunpack.c.l.bf16 %v553
        %v1202 = vunpack.c.l.bf16 %v554
        %v1203 = vunpack.c.l.bf16 %v555
        %v1204 = vunpack.c.l.bf16 %v556
        %v1205 = vunpack.c.l.bf16 %v557
        %v1206 = vunpack.c.l.bf16 %v558
        %v1207 = vunpack.c.l.bf16 %v559
        %v1208 = vunpack.c.l.bf16 %v560
        %v1209 = vunpack.c.l.bf16 %v561
        %v1210 = vunpack.c.l.bf16 %v562
        %v1211 = vunpack.c.l.bf16 %v563
        %v1212 = vunpack.c.l.bf16 %v564
        %v1213 = vunpack.c.l.bf16 %v565
        %v1214 = vunpack.c.l.bf16 %v566
        %v1215 = vunpack.c.l.bf16 %v567
        %v1216 = vunpack.c.l.bf16 %v568
        %v1217 = vunpack.c.l.bf16 %v569
        %v1218 = vunpack.c.l.bf16 %v570
        %v1219 = vunpack.c.l.bf16 %v571
        %v1220 = vunpack.c.l.bf16 %v572
        %v1221 = vunpack.c.l.bf16 %v573
        %1230 = vrot.lane.b32.xlu0 %v978, 96
        %v1231 = vpop.permute.xlu0 %1230
        %1232 = vrot.lane.b32.xlu0 %v979, 96
        %v1233 = vpop.permute.xlu0 %1232
        %1234 = vrot.lane.b32.xlu0 %v980, 96
        %v1235 = vpop.permute.xlu0 %1234
        %1236 = vrot.lane.b32.xlu0 %v981, 96
        %v1237 = vpop.permute.xlu0 %1236
        %1238 = vrot.lane.b32.xlu0 %v982, 96
        %v1239 = vpop.permute.xlu0 %1238
        %1240 = vrot.lane.b32.xlu0 %v983, 96
        %v1241 = vpop.permute.xlu0 %1240
        %1242 = vrot.lane.b32.xlu0 %v984, 96
        %v1243 = vpop.permute.xlu0 %1242
        %1244 = vrot.lane.b32.xlu0 %v985, 96
        %v1245 = vpop.permute.xlu0 %1244
        %v1247 = vsel %vm579, %v993, 0
        %v1250 = vsel %vm579, %v994, 0
        %v1253 = vsel %vm579, %v995, 0
        %v1256 = vsel %vm579, %v996, 0
        %v1259 = vsel %vm579, %v997, 0
        %v1262 = vsel %vm579, %v998, 0
        %v1265 = vsel %vm579, %v999, 0
        %v1268 = vsel %vm579, %v1000, 0
        %v1271 = vsel %vm579, %v1008, 0
        %v1274 = vsel %vm579, %v1009, 0
        %v1277 = vsel %vm579, %v1010, 0
        %v1280 = vsel %vm579, %v1011, 0
        %v1283 = vsel %vm579, %v1012, 0
        %v1286 = vsel %vm579, %v1013, 0
        %v1289 = vsel %vm579, %v1014, 0
        %v1292 = vsel %vm579, %v1015, 0
        %v1295 = vsel %vm579, %v1020, 0
        %v1298 = vsel %vm579, %v1021, 0
        %v1301 = vsel %vm579, %v1022, 0
        %v1304 = vsel %vm579, %v1023, 0
        %v1307 = vsel %vm579, %v1024, 0
        %v1310 = vsel %vm579, %v1025, 0
        %v1313 = vsel %vm579, %v1026, 0
        %v1316 = vsel %vm579, %v1027, 0
        %v1319 = vsel %vm579, %v1032, 0
        %v1322 = vsel %vm579, %v1033, 0
        %v1325 = vsel %vm579, %v1034, 0
        %v1328 = vsel %vm579, %v1035, 0
        %v1331 = vsel %vm579, %v1036, 0
        %v1334 = vsel %vm579, %v1037, 0
        %v1337 = vsel %vm579, %v1038, 0
        %v1340 = vsel %vm579, %v1039, 0
        %v1343 = vsel %vm579, %v1044, 0
        %v1346 = vsel %vm579, %v1045, 0
        %v1349 = vsel %vm579, %v1046, 0
        %v1352 = vsel %vm579, %v1047, 0
        %v1355 = vsel %vm579, %v1048, 0
        %v1358 = vsel %vm579, %v1049, 0
        %v1361 = vsel %vm579, %v1050, 0
        %v1364 = vsel %vm579, %v1051, 0
        %v1367 = vsel %vm579, %v1056, 0
        %v1370 = vsel %vm579, %v1057, 0
        %v1373 = vsel %vm579, %v1058, 0
        %v1376 = vsel %vm579, %v1059, 0
        %v1379 = vsel %vm579, %v1060, 0
        %v1382 = vsel %vm579, %v1061, 0
        %v1385 = vsel %vm579, %v1062, 0
        %v1388 = vsel %vm579, %v1063, 0
        %v1391 = vsel %vm579, %v1071, 0
        %v1394 = vsel %vm579, %v1072, 0
        %v1397 = vsel %vm579, %v1073, 0
        %v1400 = vsel %vm579, %v1074, 0
        %v1403 = vsel %vm579, %v1075, 0
        %v1406 = vsel %vm579, %v1076, 0
        %v1409 = vsel %vm579, %v1077, 0
        %v1412 = vsel %vm579, %v1078, 0
        %v1415 = vsel %vm579, %v1086, 0
        %v1418 = vsel %vm579, %v1087, 0
        %v1421 = vsel %vm579, %v1088, 0
        %v1424 = vsel %vm579, %v1089, 0
        %v1427 = vsel %vm579, %v1090, 0
        %v1430 = vsel %vm579, %v1091, 0
        %v1433 = vsel %vm579, %v1092, 0
        %v1436 = vsel %vm579, %v1093, 0
        %v1439 = vsel %vm579, %v1231, 0
        %v1442 = vsel %vm579, %v1233, 0
        %v1445 = vsel %vm579, %v1235, 0
        %v1448 = vsel %vm579, %v1237, 0
        %v1451 = vsel %vm579, %v1239, 0
        %v1454 = vsel %vm579, %v1241, 0
        %v1457 = vsel %vm579, %v1243, 0
        %v1460 = vsel %vm579, %v1245, 0
        %1462 = vmatprep.subr.bf16.mxu0 0
        %1463 = vmatpush1.bf16.xpose.msra.mxu0 %v1460
        %1464 = vmatprep.subr.bf16.mxu0 0
        %1465 = vmatpush1.bf16.xpose.msra.mxu0 %v1457
        %1466 = vmatprep.subr.bf16.mxu0 0
        %1467 = vmatpush1.bf16.xpose.msra.mxu0 %v1454
        %1468 = vmatprep.subr.bf16.mxu0 0
        %1469 = vmatpush1.bf16.xpose.msra.mxu0 %v1451
        %1470 = vmatprep.subr.bf16.mxu0 0
        %1471 = vmatpush1.bf16.xpose.msra.mxu0 %v1448
        %1472 = vmatprep.subr.bf16.mxu0 0
        %1473 = vmatpush1.bf16.xpose.msra.mxu0 %v1445
        %1474 = vmatprep.subr.bf16.mxu0 0
        %1475 = vmatpush1.bf16.xpose.msra.mxu0 %v1442
        %1476 = vmatprep.subr.bf16.mxu0 0
        %1477 = vmatpush1.bf16.xpose.msra.mxu0 %v1439
        %1478 = vmatprep.subr.bf16.mxu0 0
        %1479 = vmatpush2.bf16.xpose.msra.mxu0 0
        %1480 = vmatprep.subr.bf16.mxu0 0
        %1481 = vmatpush2.bf16.xpose.msra.mxu0 0
        %1482 = vmatprep.subr.bf16.mxu0 0
        %1483 = vmatpush2.bf16.xpose.msra.mxu0 0
        %1484 = vmatprep.subr.bf16.mxu0 0
        %1485 = vmatpush2.bf16.xpose.msra.mxu0 0
        %1486 = vmatprep.subr.bf16.mxu0 0
        %1487 = vmatpush2.bf16.xpose.msra.mxu0 0
        %1488 = vmatprep.subr.bf16.mxu0 0
        %1489 = vmatpush2.bf16.xpose.msra.mxu0 0
        %1490 = vmatprep.subr.bf16.mxu0 0
        %1491 = vmatpush2.bf16.xpose.msra.mxu0 0
        %1492 = vmatprep.subr.bf16.mxu0 0
        %1493 = vmatpush2.bf16.xpose.msra.mxu0 0
        %1494 = vmatprep.mubr.bf16.mxu0 0
        %1495 = vmatmul.mubr.bf16.gmra.mxu0 %v1247
        %v1496 = vpop.f32.mrf.mxu0
        %v1497 = vadd.f32 %v1094, %v1496
        %v1498 = vpop.f32.mrf.mxu0
        %v1499 = vpop.f32.mrf.mxu0
        %v1500 = vadd.f32 %v1095, %v1499
        %v1501 = vpop.f32.mrf.mxu0
        %1502 = vmatprep.mubr.bf16.mxu0 0
        %1503 = vmatmul.mubr.bf16.gmra.mxu0 %v1250
        %v1504 = vpop.f32.mrf.mxu0
        %v1505 = vadd.f32 %v1096, %v1504
        %v1506 = vpop.f32.mrf.mxu0
        %v1507 = vpop.f32.mrf.mxu0
        %v1508 = vadd.f32 %v1097, %v1507
        %v1509 = vpop.f32.mrf.mxu0
        %1510 = vmatprep.mubr.bf16.mxu0 0
        %1511 = vmatmul.mubr.bf16.gmra.mxu0 %v1253
        %v1512 = vpop.f32.mrf.mxu0
        %v1513 = vadd.f32 %v1098, %v1512
        %v1514 = vpop.f32.mrf.mxu0
        %v1515 = vpop.f32.mrf.mxu0
        %v1516 = vadd.f32 %v1099, %v1515
        %v1517 = vpop.f32.mrf.mxu0
        %1518 = vmatprep.mubr.bf16.mxu0 0
        %1519 = vmatmul.mubr.bf16.gmra.mxu0 %v1256
        %v1520 = vpop.f32.mrf.mxu0
        %v1521 = vadd.f32 %v1100, %v1520
        %v1522 = vpop.f32.mrf.mxu0
        %v1523 = vpop.f32.mrf.mxu0
        %v1524 = vadd.f32 %v1101, %v1523
        %v1525 = vpop.f32.mrf.mxu0
        %1526 = vmatprep.mubr.bf16.mxu0 0
        %1527 = vmatmul.mubr.bf16.gmra.mxu0 %v1259
        %v1528 = vpop.f32.mrf.mxu0
        %v1529 = vadd.f32 %v1102, %v1528
        %v1530 = vpop.f32.mrf.mxu0
        %v1531 = vpop.f32.mrf.mxu0
        %v1532 = vadd.f32 %v1103, %v1531
        %v1533 = vpop.f32.mrf.mxu0
        %1534 = vmatprep.mubr.bf16.mxu0 0
        %1535 = vmatmul.mubr.bf16.gmra.mxu0 %v1262
        %v1536 = vpop.f32.mrf.mxu0
        %v1537 = vadd.f32 %v1104, %v1536
        %v1538 = vpop.f32.mrf.mxu0
        %v1539 = vpop.f32.mrf.mxu0
        %v1540 = vadd.f32 %v1105, %v1539
        %v1541 = vpop.f32.mrf.mxu0
        %1542 = vmatprep.mubr.bf16.mxu0 0
        %1543 = vmatmul.mubr.bf16.gmra.mxu0 %v1265
        %v1544 = vpop.f32.mrf.mxu0
        %v1545 = vadd.f32 %v1106, %v1544
        %v1546 = vpop.f32.mrf.mxu0
        %v1547 = vpop.f32.mrf.mxu0
        %v1548 = vadd.f32 %v1107, %v1547
        %v1549 = vpop.f32.mrf.mxu0
        %1550 = vmatprep.mubr.bf16.mxu0 0
        %1551 = vmatmul.mubr.bf16.gmra.mxu0 %v1268
        %v1552 = vpop.f32.mrf.mxu0
        %v1553 = vadd.f32 %v1108, %v1552
        %v1554 = vpop.f32.mrf.mxu0
        %v1555 = vpop.f32.mrf.mxu0
        %v1556 = vadd.f32 %v1109, %v1555
        %v1557 = vpop.f32.mrf.mxu0
        %1558 = vmatprep.mubr.bf16.mxu0 0
        %1559 = vmatmul.mubr.bf16.gmra.mxu0 %v1271
        %v1560 = vpop.f32.mrf.mxu0
        %v1561 = vadd.f32 %v1110, %v1560
        %v1562 = vpop.f32.mrf.mxu0
        %v1563 = vpop.f32.mrf.mxu0
        %v1564 = vadd.f32 %v1111, %v1563
        %v1565 = vpop.f32.mrf.mxu0
        %1566 = vmatprep.mubr.bf16.mxu0 0
        %1567 = vmatmul.mubr.bf16.gmra.mxu0 %v1274
        %v1568 = vpop.f32.mrf.mxu0
        %v1569 = vadd.f32 %v1112, %v1568
        %v1570 = vpop.f32.mrf.mxu0
        %v1571 = vpop.f32.mrf.mxu0
        %v1572 = vadd.f32 %v1113, %v1571
        %v1573 = vpop.f32.mrf.mxu0
        %1574 = vmatprep.mubr.bf16.mxu0 0
        %1575 = vmatmul.mubr.bf16.gmra.mxu0 %v1277
        %v1576 = vpop.f32.mrf.mxu0
        %v1577 = vadd.f32 %v1114, %v1576
        %v1578 = vpop.f32.mrf.mxu0
        %v1579 = vpop.f32.mrf.mxu0
        %v1580 = vadd.f32 %v1115, %v1579
        %v1581 = vpop.f32.mrf.mxu0
        %1582 = vmatprep.mubr.bf16.mxu0 0
        %1583 = vmatmul.mubr.bf16.gmra.mxu0 %v1280
        %v1584 = vpop.f32.mrf.mxu0
        %v1585 = vadd.f32 %v1116, %v1584
        %v1586 = vpop.f32.mrf.mxu0
        %v1587 = vpop.f32.mrf.mxu0
        %v1588 = vadd.f32 %v1117, %v1587
        %v1589 = vpop.f32.mrf.mxu0
        %1590 = vmatprep.mubr.bf16.mxu0 0
        %1591 = vmatmul.mubr.bf16.gmra.mxu0 %v1283
        %v1592 = vpop.f32.mrf.mxu0
        %v1593 = vadd.f32 %v1118, %v1592
        %v1594 = vpop.f32.mrf.mxu0
        %v1595 = vpop.f32.mrf.mxu0
        %v1596 = vadd.f32 %v1119, %v1595
        %v1597 = vpop.f32.mrf.mxu0
        %1598 = vmatprep.mubr.bf16.mxu0 0
        %1599 = vmatmul.mubr.bf16.gmra.mxu0 %v1286
        %v1600 = vpop.f32.mrf.mxu0
        %v1601 = vadd.f32 %v1120, %v1600
        %v1602 = vpop.f32.mrf.mxu0
        %v1603 = vpop.f32.mrf.mxu0
        %v1604 = vadd.f32 %v1121, %v1603
        %v1605 = vpop.f32.mrf.mxu0
        %1606 = vmatprep.mubr.bf16.mxu0 0
        %1607 = vmatmul.mubr.bf16.gmra.mxu0 %v1289
        %v1608 = vpop.f32.mrf.mxu0
        %v1609 = vadd.f32 %v1122, %v1608
        %v1610 = vpop.f32.mrf.mxu0
        %v1611 = vpop.f32.mrf.mxu0
        %v1612 = vadd.f32 %v1123, %v1611
        %v1613 = vpop.f32.mrf.mxu0
        %1614 = vmatprep.mubr.bf16.mxu0 0
        %1615 = vmatmul.mubr.bf16.gmra.mxu0 %v1292
        %v1616 = vpop.f32.mrf.mxu0
        %v1617 = vadd.f32 %v1124, %v1616
        %v1618 = vpop.f32.mrf.mxu0
        %v1619 = vpop.f32.mrf.mxu0
        %v1620 = vadd.f32 %v1125, %v1619
        %v1621 = vpop.f32.mrf.mxu0
        %1622 = vmatprep.mubr.bf16.mxu0 0
        %1623 = vmatmul.mubr.bf16.gmra.mxu0 %v1295
        %v1624 = vpop.f32.mrf.mxu0
        %v1625 = vadd.f32 %v1126, %v1624
        %v1626 = vpop.f32.mrf.mxu0
        %v1627 = vpop.f32.mrf.mxu0
        %v1628 = vadd.f32 %v1127, %v1627
        %v1629 = vpop.f32.mrf.mxu0
        %1630 = vmatprep.mubr.bf16.mxu0 0
        %1631 = vmatmul.mubr.bf16.gmra.mxu0 %v1298
        %v1632 = vpop.f32.mrf.mxu0
        %v1633 = vadd.f32 %v1128, %v1632
        %v1634 = vpop.f32.mrf.mxu0
        %v1635 = vpop.f32.mrf.mxu0
        %v1636 = vadd.f32 %v1129, %v1635
        %v1637 = vpop.f32.mrf.mxu0
        %1638 = vmatprep.mubr.bf16.mxu0 0
        %1639 = vmatmul.mubr.bf16.gmra.mxu0 %v1301
        %v1640 = vpop.f32.mrf.mxu0
        %v1641 = vadd.f32 %v1130, %v1640
        %v1642 = vpop.f32.mrf.mxu0
        %v1643 = vpop.f32.mrf.mxu0
        %v1644 = vadd.f32 %v1131, %v1643
        %v1645 = vpop.f32.mrf.mxu0
        %1646 = vmatprep.mubr.bf16.mxu0 0
        %1647 = vmatmul.mubr.bf16.gmra.mxu0 %v1304
        %v1648 = vpop.f32.mrf.mxu0
        %v1649 = vadd.f32 %v1132, %v1648
        %v1650 = vpop.f32.mrf.mxu0
        %v1651 = vpop.f32.mrf.mxu0
        %v1652 = vadd.f32 %v1133, %v1651
        %v1653 = vpop.f32.mrf.mxu0
        %1654 = vmatprep.mubr.bf16.mxu0 0
        %1655 = vmatmul.mubr.bf16.gmra.mxu0 %v1307
        %v1656 = vpop.f32.mrf.mxu0
        %v1657 = vadd.f32 %v1134, %v1656
        %v1658 = vpop.f32.mrf.mxu0
        %v1659 = vpop.f32.mrf.mxu0
        %v1660 = vadd.f32 %v1135, %v1659
        %v1661 = vpop.f32.mrf.mxu0
        %1662 = vmatprep.mubr.bf16.mxu0 0
        %1663 = vmatmul.mubr.bf16.gmra.mxu0 %v1310
        %v1664 = vpop.f32.mrf.mxu0
        %v1665 = vadd.f32 %v1136, %v1664
        %v1666 = vpop.f32.mrf.mxu0
        %v1667 = vpop.f32.mrf.mxu0
        %v1668 = vadd.f32 %v1137, %v1667
        %v1669 = vpop.f32.mrf.mxu0
        %1670 = vmatprep.mubr.bf16.mxu0 0
        %1671 = vmatmul.mubr.bf16.gmra.mxu0 %v1313
        %v1672 = vpop.f32.mrf.mxu0
        %v1673 = vadd.f32 %v1138, %v1672
        %v1674 = vpop.f32.mrf.mxu0
        %v1675 = vpop.f32.mrf.mxu0
        %v1676 = vadd.f32 %v1139, %v1675
        %v1677 = vpop.f32.mrf.mxu0
        %1678 = vmatprep.mubr.bf16.mxu0 0
        %1679 = vmatmul.mubr.bf16.gmra.mxu0 %v1316
        %v1680 = vpop.f32.mrf.mxu0
        %v1681 = vadd.f32 %v1140, %v1680
        %v1682 = vpop.f32.mrf.mxu0
        %v1683 = vpop.f32.mrf.mxu0
        %v1684 = vadd.f32 %v1141, %v1683
        %v1685 = vpop.f32.mrf.mxu0
        %1686 = vmatprep.mubr.bf16.mxu0 0
        %1687 = vmatmul.mubr.bf16.gmra.mxu0 %v1319
        %v1688 = vpop.f32.mrf.mxu0
        %v1689 = vadd.f32 %v1142, %v1688
        %v1690 = vpop.f32.mrf.mxu0
        %v1691 = vpop.f32.mrf.mxu0
        %v1692 = vadd.f32 %v1143, %v1691
        %v1693 = vpop.f32.mrf.mxu0
        %1694 = vmatprep.mubr.bf16.mxu0 0
        %1695 = vmatmul.mubr.bf16.gmra.mxu0 %v1322
        %v1696 = vpop.f32.mrf.mxu0
        %v1697 = vadd.f32 %v1144, %v1696
        %v1698 = vpop.f32.mrf.mxu0
        %v1699 = vpop.f32.mrf.mxu0
        %v1700 = vadd.f32 %v1145, %v1699
        %v1701 = vpop.f32.mrf.mxu0
        %1702 = vmatprep.mubr.bf16.mxu0 0
        %1703 = vmatmul.mubr.bf16.gmra.mxu0 %v1325
        %v1704 = vpop.f32.mrf.mxu0
        %v1705 = vadd.f32 %v1146, %v1704
        %v1706 = vpop.f32.mrf.mxu0
        %v1707 = vpop.f32.mrf.mxu0
        %v1708 = vadd.f32 %v1147, %v1707
        %v1709 = vpop.f32.mrf.mxu0
        %1710 = vmatprep.mubr.bf16.mxu0 0
        %1711 = vmatmul.mubr.bf16.gmra.mxu0 %v1328
        %v1712 = vpop.f32.mrf.mxu0
        %v1713 = vadd.f32 %v1148, %v1712
        %v1714 = vpop.f32.mrf.mxu0
        %v1715 = vpop.f32.mrf.mxu0
        %v1716 = vadd.f32 %v1149, %v1715
        %v1717 = vpop.f32.mrf.mxu0
        %1718 = vmatprep.mubr.bf16.mxu0 0
        %1719 = vmatmul.mubr.bf16.gmra.mxu0 %v1331
        %v1720 = vpop.f32.mrf.mxu0
        %v1721 = vadd.f32 %v1150, %v1720
        %v1722 = vpop.f32.mrf.mxu0
        %v1723 = vpop.f32.mrf.mxu0
        %v1724 = vadd.f32 %v1151, %v1723
        %v1725 = vpop.f32.mrf.mxu0
        %1726 = vmatprep.mubr.bf16.mxu0 0
        %1727 = vmatmul.mubr.bf16.gmra.mxu0 %v1334
        %v1728 = vpop.f32.mrf.mxu0
        %v1729 = vadd.f32 %v1152, %v1728
        %v1730 = vpop.f32.mrf.mxu0
        %v1731 = vpop.f32.mrf.mxu0
        %v1732 = vadd.f32 %v1153, %v1731
        %v1733 = vpop.f32.mrf.mxu0
        %1734 = vmatprep.mubr.bf16.mxu0 0
        %1735 = vmatmul.mubr.bf16.gmra.mxu0 %v1337
        %v1736 = vpop.f32.mrf.mxu0
        %v1737 = vadd.f32 %v1154, %v1736
        %v1738 = vpop.f32.mrf.mxu0
        %v1739 = vpop.f32.mrf.mxu0
        %v1740 = vadd.f32 %v1155, %v1739
        %v1741 = vpop.f32.mrf.mxu0
        %1742 = vmatprep.mubr.bf16.mxu0 0
        %1743 = vmatmul.mubr.bf16.gmra.mxu0 %v1340
        %v1744 = vpop.f32.mrf.mxu0
        %v1745 = vadd.f32 %v1156, %v1744
        %v1746 = vpop.f32.mrf.mxu0
        %v1747 = vpop.f32.mrf.mxu0
        %v1748 = vadd.f32 %v1157, %v1747
        %v1749 = vpop.f32.mrf.mxu0
        %1750 = vmatprep.mubr.bf16.mxu0 0
        %1751 = vmatmul.mubr.bf16.gmra.mxu0 %v1343
        %v1752 = vpop.f32.mrf.mxu0
        %v1753 = vadd.f32 %v1158, %v1752
        %v1754 = vpop.f32.mrf.mxu0
        %v1755 = vpop.f32.mrf.mxu0
        %v1756 = vadd.f32 %v1159, %v1755
        %v1757 = vpop.f32.mrf.mxu0
        %1758 = vmatprep.mubr.bf16.mxu0 0
        %1759 = vmatmul.mubr.bf16.gmra.mxu0 %v1346
        %v1760 = vpop.f32.mrf.mxu0
        %v1761 = vadd.f32 %v1160, %v1760
        %v1762 = vpop.f32.mrf.mxu0
        %v1763 = vpop.f32.mrf.mxu0
        %v1764 = vadd.f32 %v1161, %v1763
        %v1765 = vpop.f32.mrf.mxu0
        %1766 = vmatprep.mubr.bf16.mxu0 0
        %1767 = vmatmul.mubr.bf16.gmra.mxu0 %v1349
        %v1768 = vpop.f32.mrf.mxu0
        %v1769 = vadd.f32 %v1162, %v1768
        %v1770 = vpop.f32.mrf.mxu0
        %v1771 = vpop.f32.mrf.mxu0
        %v1772 = vadd.f32 %v1163, %v1771
        %v1773 = vpop.f32.mrf.mxu0
        %1774 = vmatprep.mubr.bf16.mxu0 0
        %1775 = vmatmul.mubr.bf16.gmra.mxu0 %v1352
        %v1776 = vpop.f32.mrf.mxu0
        %v1777 = vadd.f32 %v1164, %v1776
        %v1778 = vpop.f32.mrf.mxu0
        %v1779 = vpop.f32.mrf.mxu0
        %v1780 = vadd.f32 %v1165, %v1779
        %v1781 = vpop.f32.mrf.mxu0
        %1782 = vmatprep.mubr.bf16.mxu0 0
        %1783 = vmatmul.mubr.bf16.gmra.mxu0 %v1355
        %v1784 = vpop.f32.mrf.mxu0
        %v1785 = vadd.f32 %v1166, %v1784
        %v1786 = vpop.f32.mrf.mxu0
        %v1787 = vpop.f32.mrf.mxu0
        %v1788 = vadd.f32 %v1167, %v1787
        %v1789 = vpop.f32.mrf.mxu0
        %1790 = vmatprep.mubr.bf16.mxu0 0
        %1791 = vmatmul.mubr.bf16.gmra.mxu0 %v1358
        %v1792 = vpop.f32.mrf.mxu0
        %v1793 = vadd.f32 %v1168, %v1792
        %v1794 = vpop.f32.mrf.mxu0
        %v1795 = vpop.f32.mrf.mxu0
        %v1796 = vadd.f32 %v1169, %v1795
        %v1797 = vpop.f32.mrf.mxu0
        %1798 = vmatprep.mubr.bf16.mxu0 0
        %1799 = vmatmul.mubr.bf16.gmra.mxu0 %v1361
        %v1800 = vpop.f32.mrf.mxu0
        %v1801 = vadd.f32 %v1170, %v1800
        %v1802 = vpop.f32.mrf.mxu0
        %v1803 = vpop.f32.mrf.mxu0
        %v1804 = vadd.f32 %v1171, %v1803
        %v1805 = vpop.f32.mrf.mxu0
        %1806 = vmatprep.mubr.bf16.mxu0 0
        %1807 = vmatmul.mubr.bf16.gmra.mxu0 %v1364
        %v1808 = vpop.f32.mrf.mxu0
        %v1809 = vadd.f32 %v1172, %v1808
        %v1810 = vpop.f32.mrf.mxu0
        %v1811 = vpop.f32.mrf.mxu0
        %v1812 = vadd.f32 %v1173, %v1811
        %v1813 = vpop.f32.mrf.mxu0
        %1814 = vmatprep.mubr.bf16.mxu0 0
        %1815 = vmatmul.mubr.bf16.gmra.mxu0 %v1367
        %v1816 = vpop.f32.mrf.mxu0
        %v1817 = vadd.f32 %v1174, %v1816
        %v1818 = vpop.f32.mrf.mxu0
        %v1819 = vpop.f32.mrf.mxu0
        %v1820 = vadd.f32 %v1175, %v1819
        %v1821 = vpop.f32.mrf.mxu0
        %1822 = vmatprep.mubr.bf16.mxu0 0
        %1823 = vmatmul.mubr.bf16.gmra.mxu0 %v1370
        %v1824 = vpop.f32.mrf.mxu0
        %v1825 = vadd.f32 %v1176, %v1824
        %v1826 = vpop.f32.mrf.mxu0
        %v1827 = vpop.f32.mrf.mxu0
        %v1828 = vadd.f32 %v1177, %v1827
        %v1829 = vpop.f32.mrf.mxu0
        %1830 = vmatprep.mubr.bf16.mxu0 0
        %1831 = vmatmul.mubr.bf16.gmra.mxu0 %v1373
        %v1832 = vpop.f32.mrf.mxu0
        %v1833 = vadd.f32 %v1178, %v1832
        %v1834 = vpop.f32.mrf.mxu0
        %v1835 = vpop.f32.mrf.mxu0
        %v1836 = vadd.f32 %v1179, %v1835
        %v1837 = vpop.f32.mrf.mxu0
        %1838 = vmatprep.mubr.bf16.mxu0 0
        %1839 = vmatmul.mubr.bf16.gmra.mxu0 %v1376
        %v1840 = vpop.f32.mrf.mxu0
        %v1841 = vadd.f32 %v1180, %v1840
        %v1842 = vpop.f32.mrf.mxu0
        %v1843 = vpop.f32.mrf.mxu0
        %v1844 = vadd.f32 %v1181, %v1843
        %v1845 = vpop.f32.mrf.mxu0
        %1846 = vmatprep.mubr.bf16.mxu0 0
        %1847 = vmatmul.mubr.bf16.gmra.mxu0 %v1379
        %v1848 = vpop.f32.mrf.mxu0
        %v1849 = vadd.f32 %v1182, %v1848
        %v1850 = vpop.f32.mrf.mxu0
        %v1851 = vpop.f32.mrf.mxu0
        %v1852 = vadd.f32 %v1183, %v1851
        %v1853 = vpop.f32.mrf.mxu0
        %1854 = vmatprep.mubr.bf16.mxu0 0
        %1855 = vmatmul.mubr.bf16.gmra.mxu0 %v1382
        %v1856 = vpop.f32.mrf.mxu0
        %v1857 = vadd.f32 %v1184, %v1856
        %v1858 = vpop.f32.mrf.mxu0
        %v1859 = vpop.f32.mrf.mxu0
        %v1860 = vadd.f32 %v1185, %v1859
        %v1861 = vpop.f32.mrf.mxu0
        %1862 = vmatprep.mubr.bf16.mxu0 0
        %1863 = vmatmul.mubr.bf16.gmra.mxu0 %v1385
        %v1864 = vpop.f32.mrf.mxu0
        %v1865 = vadd.f32 %v1186, %v1864
        %v1866 = vpop.f32.mrf.mxu0
        %v1867 = vpop.f32.mrf.mxu0
        %v1868 = vadd.f32 %v1187, %v1867
        %v1869 = vpop.f32.mrf.mxu0
        %1870 = vmatprep.mubr.bf16.mxu0 0
        %1871 = vmatmul.mubr.bf16.gmra.mxu0 %v1388
        %v1872 = vpop.f32.mrf.mxu0
        %v1873 = vadd.f32 %v1188, %v1872
        %v1874 = vpop.f32.mrf.mxu0
        %v1875 = vpop.f32.mrf.mxu0
        %v1876 = vadd.f32 %v1189, %v1875
        %v1877 = vpop.f32.mrf.mxu0
        %1878 = vmatprep.mubr.bf16.mxu0 0
        %1879 = vmatmul.mubr.bf16.gmra.mxu0 %v1391
        %v1880 = vpop.f32.mrf.mxu0
        %v1881 = vadd.f32 %v1190, %v1880
        %v1882 = vpop.f32.mrf.mxu0
        %v1883 = vpop.f32.mrf.mxu0
        %v1884 = vadd.f32 %v1191, %v1883
        %v1885 = vpop.f32.mrf.mxu0
        %1886 = vmatprep.mubr.bf16.mxu0 0
        %1887 = vmatmul.mubr.bf16.gmra.mxu0 %v1394
        %v1888 = vpop.f32.mrf.mxu0
        %v1889 = vadd.f32 %v1192, %v1888
        %v1890 = vpop.f32.mrf.mxu0
        %v1891 = vpop.f32.mrf.mxu0
        %v1892 = vadd.f32 %v1193, %v1891
        %v1893 = vpop.f32.mrf.mxu0
        %1894 = vmatprep.mubr.bf16.mxu0 0
        %1895 = vmatmul.mubr.bf16.gmra.mxu0 %v1397
        %v1896 = vpop.f32.mrf.mxu0
        %v1897 = vadd.f32 %v1194, %v1896
        %v1898 = vpop.f32.mrf.mxu0
        %v1899 = vpop.f32.mrf.mxu0
        %v1900 = vadd.f32 %v1195, %v1899
        %v1901 = vpop.f32.mrf.mxu0
        %1902 = vmatprep.mubr.bf16.mxu0 0
        %1903 = vmatmul.mubr.bf16.gmra.mxu0 %v1400
        %v1904 = vpop.f32.mrf.mxu0
        %v1905 = vadd.f32 %v1196, %v1904
        %v1906 = vpop.f32.mrf.mxu0
        %v1907 = vpop.f32.mrf.mxu0
        %v1908 = vadd.f32 %v1197, %v1907
        %v1909 = vpop.f32.mrf.mxu0
        %1910 = vmatprep.mubr.bf16.mxu0 0
        %1911 = vmatmul.mubr.bf16.gmra.mxu0 %v1403
        %v1912 = vpop.f32.mrf.mxu0
        %v1913 = vadd.f32 %v1198, %v1912
        %v1914 = vpop.f32.mrf.mxu0
        %v1915 = vpop.f32.mrf.mxu0
        %v1916 = vadd.f32 %v1199, %v1915
        %v1917 = vpop.f32.mrf.mxu0
        %1918 = vmatprep.mubr.bf16.mxu0 0
        %1919 = vmatmul.mubr.bf16.gmra.mxu0 %v1406
        %v1920 = vpop.f32.mrf.mxu0
        %v1921 = vadd.f32 %v1200, %v1920
        %v1922 = vpop.f32.mrf.mxu0
        %v1923 = vpop.f32.mrf.mxu0
        %v1924 = vadd.f32 %v1201, %v1923
        %v1925 = vpop.f32.mrf.mxu0
        %1926 = vmatprep.mubr.bf16.mxu0 0
        %1927 = vmatmul.mubr.bf16.gmra.mxu0 %v1409
        %v1928 = vpop.f32.mrf.mxu0
        %v1929 = vadd.f32 %v1202, %v1928
        %v1930 = vpop.f32.mrf.mxu0
        %v1931 = vpop.f32.mrf.mxu0
        %v1932 = vadd.f32 %v1203, %v1931
        %v1933 = vpop.f32.mrf.mxu0
        %1934 = vmatprep.mubr.bf16.mxu0 0
        %1935 = vmatmul.mubr.bf16.gmra.mxu0 %v1412
        %v1936 = vpop.f32.mrf.mxu0
        %v1937 = vadd.f32 %v1204, %v1936
        %v1938 = vpop.f32.mrf.mxu0
        %v1939 = vpop.f32.mrf.mxu0
        %v1940 = vadd.f32 %v1205, %v1939
        %v1941 = vpop.f32.mrf.mxu0
        %1942 = vmatprep.mubr.bf16.mxu0 0
        %1943 = vmatmul.mubr.bf16.gmra.mxu0 %v1415
        %v1944 = vpop.f32.mrf.mxu0
        %v1945 = vadd.f32 %v1206, %v1944
        %v1946 = vpop.f32.mrf.mxu0
        %v1947 = vpop.f32.mrf.mxu0
        %v1948 = vadd.f32 %v1207, %v1947
        %v1949 = vpop.f32.mrf.mxu0
        %1950 = vmatprep.mubr.bf16.mxu0 0
        %1951 = vmatmul.mubr.bf16.gmra.mxu0 %v1418
        %v1952 = vpop.f32.mrf.mxu0
        %v1953 = vadd.f32 %v1208, %v1952
        %v1954 = vpop.f32.mrf.mxu0
        %v1955 = vpop.f32.mrf.mxu0
        %v1956 = vadd.f32 %v1209, %v1955
        %v1957 = vpop.f32.mrf.mxu0
        %1958 = vmatprep.mubr.bf16.mxu0 0
        %1959 = vmatmul.mubr.bf16.gmra.mxu0 %v1421
        %v1960 = vpop.f32.mrf.mxu0
        %v1961 = vadd.f32 %v1210, %v1960
        %v1962 = vpop.f32.mrf.mxu0
        %v1963 = vpop.f32.mrf.mxu0
        %v1964 = vadd.f32 %v1211, %v1963
        %v1965 = vpop.f32.mrf.mxu0
        %1966 = vmatprep.mubr.bf16.mxu0 0
        %1967 = vmatmul.mubr.bf16.gmra.mxu0 %v1424
        %v1968 = vpop.f32.mrf.mxu0
        %v1969 = vadd.f32 %v1212, %v1968
        %v1970 = vpop.f32.mrf.mxu0
        %v1971 = vpop.f32.mrf.mxu0
        %v1972 = vadd.f32 %v1213, %v1971
        %v1973 = vpop.f32.mrf.mxu0
        %1974 = vmatprep.mubr.bf16.mxu0 0
        %1975 = vmatmul.mubr.bf16.gmra.mxu0 %v1427
        %v1976 = vpop.f32.mrf.mxu0
        %v1977 = vadd.f32 %v1214, %v1976
        %v1978 = vpop.f32.mrf.mxu0
        %v1979 = vpop.f32.mrf.mxu0
        %v1980 = vadd.f32 %v1215, %v1979
        %v1981 = vpop.f32.mrf.mxu0
        %1982 = vmatprep.mubr.bf16.mxu0 0
        %1983 = vmatmul.mubr.bf16.gmra.mxu0 %v1430
        %v1984 = vpop.f32.mrf.mxu0
        %v1985 = vadd.f32 %v1216, %v1984
        %v1986 = vpop.f32.mrf.mxu0
        %v1987 = vpop.f32.mrf.mxu0
        %v1988 = vadd.f32 %v1217, %v1987
        %v1989 = vpop.f32.mrf.mxu0
        %1990 = vmatprep.mubr.bf16.mxu0 0
        %1991 = vmatmul.mubr.bf16.gmra.mxu0 %v1433
        %v1992 = vpop.f32.mrf.mxu0
        %v1993 = vadd.f32 %v1218, %v1992
        %v1994 = vpop.f32.mrf.mxu0
        %v1995 = vpop.f32.mrf.mxu0
        %v1996 = vadd.f32 %v1219, %v1995
        %v1997 = vpop.f32.mrf.mxu0
        %1998 = vmatprep.mubr.bf16.mxu0 0
        %1999 = vmatmul.mubr.bf16.gmra.mxu0 %v1436
        %v2000 = vpop.f32.mrf.mxu0
        %v2001 = vadd.f32 %v1220, %v2000
        %v2002 = vpop.f32.mrf.mxu0
        %v2003 = vpop.f32.mrf.mxu0
        %v2004 = vadd.f32 %v1221, %v2003
        %v2005 = vpop.f32.mrf.mxu0
        %2006 = vdwg.mxu0
        %2007 = vmax.xlane.f32.xlu0 %v1497
        %v2008 = vpop.xlane.xlu0 %2007
        %2009 = vmax.xlane.f32.xlu0 %v1500
        %v2010 = vpop.xlane.xlu0 %2009
        %2011 = vmax.xlane.f32.xlu0 %v1505
        %v2012 = vpop.xlane.xlu0 %2011
        %2013 = vmax.xlane.f32.xlu0 %v1508
        %v2014 = vpop.xlane.xlu0 %2013
        %2015 = vmax.xlane.f32.xlu0 %v1513
        %v2016 = vpop.xlane.xlu0 %2015
        %2017 = vmax.xlane.f32.xlu0 %v1516
        %v2018 = vpop.xlane.xlu0 %2017
        %2019 = vmax.xlane.f32.xlu0 %v1521
        %v2020 = vpop.xlane.xlu0 %2019
        %2021 = vmax.xlane.f32.xlu0 %v1524
        %v2022 = vpop.xlane.xlu0 %2021
        %2023 = vmax.xlane.f32.xlu0 %v1529
        %v2024 = vpop.xlane.xlu0 %2023
        %2025 = vmax.xlane.f32.xlu0 %v1532
        %v2026 = vpop.xlane.xlu0 %2025
        %2027 = vmax.xlane.f32.xlu0 %v1537
        %v2028 = vpop.xlane.xlu0 %2027
        %2029 = vmax.xlane.f32.xlu0 %v1540
        %v2030 = vpop.xlane.xlu0 %2029
        %2031 = vmax.xlane.f32.xlu0 %v1545
        %v2032 = vpop.xlane.xlu0 %2031
        %2033 = vmax.xlane.f32.xlu0 %v1548
        %v2034 = vpop.xlane.xlu0 %2033
        %2035 = vmax.xlane.f32.xlu0 %v1553
        %v2036 = vpop.xlane.xlu0 %2035
        %2037 = vmax.xlane.f32.xlu0 %v1556
        %v2038 = vpop.xlane.xlu0 %2037
        %2039 = vmax.xlane.f32.xlu0 %v1561
        %v2040 = vpop.xlane.xlu0 %2039
        %2041 = vmax.xlane.f32.xlu0 %v1564
        %v2042 = vpop.xlane.xlu0 %2041
        %2043 = vmax.xlane.f32.xlu0 %v1569
        %v2044 = vpop.xlane.xlu0 %2043
        %2045 = vmax.xlane.f32.xlu0 %v1572
        %v2046 = vpop.xlane.xlu0 %2045
        %2047 = vmax.xlane.f32.xlu0 %v1577
        %v2048 = vpop.xlane.xlu0 %2047
        %2049 = vmax.xlane.f32.xlu0 %v1580
        %v2050 = vpop.xlane.xlu0 %2049
        %2051 = vmax.xlane.f32.xlu0 %v1585
        %v2052 = vpop.xlane.xlu0 %2051
        %2053 = vmax.xlane.f32.xlu0 %v1588
        %v2054 = vpop.xlane.xlu0 %2053
        %2055 = vmax.xlane.f32.xlu0 %v1593
        %v2056 = vpop.xlane.xlu0 %2055
        %2057 = vmax.xlane.f32.xlu0 %v1596
        %v2058 = vpop.xlane.xlu0 %2057
        %2059 = vmax.xlane.f32.xlu0 %v1601
        %v2060 = vpop.xlane.xlu0 %2059
        %2061 = vmax.xlane.f32.xlu0 %v1604
        %v2062 = vpop.xlane.xlu0 %2061
        %2063 = vmax.xlane.f32.xlu0 %v1609
        %v2064 = vpop.xlane.xlu0 %2063
        %2065 = vmax.xlane.f32.xlu0 %v1612
        %v2066 = vpop.xlane.xlu0 %2065
        %2067 = vmax.xlane.f32.xlu0 %v1617
        %v2068 = vpop.xlane.xlu0 %2067
        %2069 = vmax.xlane.f32.xlu0 %v1620
        %v2070 = vpop.xlane.xlu0 %2069
        %2071 = vmax.xlane.f32.xlu0 %v1625
        %v2072 = vpop.xlane.xlu0 %2071
        %2073 = vmax.xlane.f32.xlu0 %v1628
        %v2074 = vpop.xlane.xlu0 %2073
        %2075 = vmax.xlane.f32.xlu0 %v1633
        %v2076 = vpop.xlane.xlu0 %2075
        %2077 = vmax.xlane.f32.xlu0 %v1636
        %v2078 = vpop.xlane.xlu0 %2077
        %2079 = vmax.xlane.f32.xlu0 %v1641
        %v2080 = vpop.xlane.xlu0 %2079
        %2081 = vmax.xlane.f32.xlu0 %v1644
        %v2082 = vpop.xlane.xlu0 %2081
        %2083 = vmax.xlane.f32.xlu0 %v1649
        %v2084 = vpop.xlane.xlu0 %2083
        %2085 = vmax.xlane.f32.xlu0 %v1652
        %v2086 = vpop.xlane.xlu0 %2085
        %2087 = vmax.xlane.f32.xlu0 %v1657
        %v2088 = vpop.xlane.xlu0 %2087
        %2089 = vmax.xlane.f32.xlu0 %v1660
        %v2090 = vpop.xlane.xlu0 %2089
        %2091 = vmax.xlane.f32.xlu0 %v1665
        %v2092 = vpop.xlane.xlu0 %2091
        %2093 = vmax.xlane.f32.xlu0 %v1668
        %v2094 = vpop.xlane.xlu0 %2093
        %2095 = vmax.xlane.f32.xlu0 %v1673
        %v2096 = vpop.xlane.xlu0 %2095
        %2097 = vmax.xlane.f32.xlu0 %v1676
        %v2098 = vpop.xlane.xlu0 %2097
        %2099 = vmax.xlane.f32.xlu0 %v1681
        %v2100 = vpop.xlane.xlu0 %2099
        %2101 = vmax.xlane.f32.xlu0 %v1684
        %v2102 = vpop.xlane.xlu0 %2101
        %2103 = vmax.xlane.f32.xlu0 %v1689
        %v2104 = vpop.xlane.xlu0 %2103
        %2105 = vmax.xlane.f32.xlu0 %v1692
        %v2106 = vpop.xlane.xlu0 %2105
        %2107 = vmax.xlane.f32.xlu0 %v1697
        %v2108 = vpop.xlane.xlu0 %2107
        %2109 = vmax.xlane.f32.xlu0 %v1700
        %v2110 = vpop.xlane.xlu0 %2109
        %2111 = vmax.xlane.f32.xlu0 %v1705
        %v2112 = vpop.xlane.xlu0 %2111
        %2113 = vmax.xlane.f32.xlu0 %v1708
        %v2114 = vpop.xlane.xlu0 %2113
        %2115 = vmax.xlane.f32.xlu0 %v1713
        %v2116 = vpop.xlane.xlu0 %2115
        %2117 = vmax.xlane.f32.xlu0 %v1716
        %v2118 = vpop.xlane.xlu0 %2117
        %2119 = vmax.xlane.f32.xlu0 %v1721
        %v2120 = vpop.xlane.xlu0 %2119
        %2121 = vmax.xlane.f32.xlu0 %v1724
        %v2122 = vpop.xlane.xlu0 %2121
        %2123 = vmax.xlane.f32.xlu0 %v1729
        %v2124 = vpop.xlane.xlu0 %2123
        %2125 = vmax.xlane.f32.xlu0 %v1732
        %v2126 = vpop.xlane.xlu0 %2125
        %2127 = vmax.xlane.f32.xlu0 %v1737
        %v2128 = vpop.xlane.xlu0 %2127
        %2129 = vmax.xlane.f32.xlu0 %v1740
        %v2130 = vpop.xlane.xlu0 %2129
        %2131 = vmax.xlane.f32.xlu0 %v1745
        %v2132 = vpop.xlane.xlu0 %2131
        %2133 = vmax.xlane.f32.xlu0 %v1748
        %v2134 = vpop.xlane.xlu0 %2133
        %2135 = vmax.xlane.f32.xlu0 %v1753
        %v2136 = vpop.xlane.xlu0 %2135
        %2137 = vmax.xlane.f32.xlu0 %v1756
        %v2138 = vpop.xlane.xlu0 %2137
        %2139 = vmax.xlane.f32.xlu0 %v1761
        %v2140 = vpop.xlane.xlu0 %2139
        %2141 = vmax.xlane.f32.xlu0 %v1764
        %v2142 = vpop.xlane.xlu0 %2141
        %2143 = vmax.xlane.f32.xlu0 %v1769
        %v2144 = vpop.xlane.xlu0 %2143
        %2145 = vmax.xlane.f32.xlu0 %v1772
        %v2146 = vpop.xlane.xlu0 %2145
        %2147 = vmax.xlane.f32.xlu0 %v1777
        %v2148 = vpop.xlane.xlu0 %2147
        %2149 = vmax.xlane.f32.xlu0 %v1780
        %v2150 = vpop.xlane.xlu0 %2149
        %2151 = vmax.xlane.f32.xlu0 %v1785
        %v2152 = vpop.xlane.xlu0 %2151
        %2153 = vmax.xlane.f32.xlu0 %v1788
        %v2154 = vpop.xlane.xlu0 %2153
        %2155 = vmax.xlane.f32.xlu0 %v1793
        %v2156 = vpop.xlane.xlu0 %2155
        %2157 = vmax.xlane.f32.xlu0 %v1796
        %v2158 = vpop.xlane.xlu0 %2157
        %2159 = vmax.xlane.f32.xlu0 %v1801
        %v2160 = vpop.xlane.xlu0 %2159
        %2161 = vmax.xlane.f32.xlu0 %v1804
        %v2162 = vpop.xlane.xlu0 %2161
        %2163 = vmax.xlane.f32.xlu0 %v1809
        %v2164 = vpop.xlane.xlu0 %2163
        %2165 = vmax.xlane.f32.xlu0 %v1812
        %v2166 = vpop.xlane.xlu0 %2165
        %2167 = vmax.xlane.f32.xlu0 %v1817
        %v2168 = vpop.xlane.xlu0 %2167
        %2169 = vmax.xlane.f32.xlu0 %v1820
        %v2170 = vpop.xlane.xlu0 %2169
        %2171 = vmax.xlane.f32.xlu0 %v1825
        %v2172 = vpop.xlane.xlu0 %2171
        %2173 = vmax.xlane.f32.xlu0 %v1828
        %v2174 = vpop.xlane.xlu0 %2173
        %2175 = vmax.xlane.f32.xlu0 %v1833
        %v2176 = vpop.xlane.xlu0 %2175
        %2177 = vmax.xlane.f32.xlu0 %v1836
        %v2178 = vpop.xlane.xlu0 %2177
        %2179 = vmax.xlane.f32.xlu0 %v1841
        %v2180 = vpop.xlane.xlu0 %2179
        %2181 = vmax.xlane.f32.xlu0 %v1844
        %v2182 = vpop.xlane.xlu0 %2181
        %2183 = vmax.xlane.f32.xlu0 %v1849
        %v2184 = vpop.xlane.xlu0 %2183
        %2185 = vmax.xlane.f32.xlu0 %v1852
        %v2186 = vpop.xlane.xlu0 %2185
        %2187 = vmax.xlane.f32.xlu0 %v1857
        %v2188 = vpop.xlane.xlu0 %2187
        %2189 = vmax.xlane.f32.xlu0 %v1860
        %v2190 = vpop.xlane.xlu0 %2189
        %2191 = vmax.xlane.f32.xlu0 %v1865
        %v2192 = vpop.xlane.xlu0 %2191
        %2193 = vmax.xlane.f32.xlu0 %v1868
        %v2194 = vpop.xlane.xlu0 %2193
        %2195 = vmax.xlane.f32.xlu0 %v1873
        %v2196 = vpop.xlane.xlu0 %2195
        %2197 = vmax.xlane.f32.xlu0 %v1876
        %v2198 = vpop.xlane.xlu0 %2197
        %2199 = vmax.xlane.f32.xlu0 %v1881
        %v2200 = vpop.xlane.xlu0 %2199
        %2201 = vmax.xlane.f32.xlu0 %v1884
        %v2202 = vpop.xlane.xlu0 %2201
        %2203 = vmax.xlane.f32.xlu0 %v1889
        %v2204 = vpop.xlane.xlu0 %2203
        %2205 = vmax.xlane.f32.xlu0 %v1892
        %v2206 = vpop.xlane.xlu0 %2205
        %2207 = vmax.xlane.f32.xlu0 %v1897
        %v2208 = vpop.xlane.xlu0 %2207
        %2209 = vmax.xlane.f32.xlu0 %v1900
        %v2210 = vpop.xlane.xlu0 %2209
        %2211 = vmax.xlane.f32.xlu0 %v1905
        %v2212 = vpop.xlane.xlu0 %2211
        %2213 = vmax.xlane.f32.xlu0 %v1908
        %v2214 = vpop.xlane.xlu0 %2213
        %2215 = vmax.xlane.f32.xlu0 %v1913
        %v2216 = vpop.xlane.xlu0 %2215
        %2217 = vmax.xlane.f32.xlu0 %v1916
        %v2218 = vpop.xlane.xlu0 %2217
        %2219 = vmax.xlane.f32.xlu0 %v1921
        %v2220 = vpop.xlane.xlu0 %2219
        %2221 = vmax.xlane.f32.xlu0 %v1924
        %v2222 = vpop.xlane.xlu0 %2221
        %2223 = vmax.xlane.f32.xlu0 %v1929
        %v2224 = vpop.xlane.xlu0 %2223
        %2225 = vmax.xlane.f32.xlu0 %v1932
        %v2226 = vpop.xlane.xlu0 %2225
        %2227 = vmax.xlane.f32.xlu0 %v1937
        %v2228 = vpop.xlane.xlu0 %2227
        %2229 = vmax.xlane.f32.xlu0 %v1940
        %v2230 = vpop.xlane.xlu0 %2229
        %2231 = vmax.xlane.f32.xlu0 %v1945
        %v2232 = vpop.xlane.xlu0 %2231
        %2233 = vmax.xlane.f32.xlu0 %v1948
        %v2234 = vpop.xlane.xlu0 %2233
        %2235 = vmax.xlane.f32.xlu0 %v1953
        %v2236 = vpop.xlane.xlu0 %2235
        %2237 = vmax.xlane.f32.xlu0 %v1956
        %v2238 = vpop.xlane.xlu0 %2237
        %2239 = vmax.xlane.f32.xlu0 %v1961
        %v2240 = vpop.xlane.xlu0 %2239
        %2241 = vmax.xlane.f32.xlu0 %v1964
        %v2242 = vpop.xlane.xlu0 %2241
        %2243 = vmax.xlane.f32.xlu0 %v1969
        %v2244 = vpop.xlane.xlu0 %2243
        %2245 = vmax.xlane.f32.xlu0 %v1972
        %v2246 = vpop.xlane.xlu0 %2245
        %2247 = vmax.xlane.f32.xlu0 %v1977
        %v2248 = vpop.xlane.xlu0 %2247
        %2249 = vmax.xlane.f32.xlu0 %v1980
        %v2250 = vpop.xlane.xlu0 %2249
        %2251 = vmax.xlane.f32.xlu0 %v1985
        %v2252 = vpop.xlane.xlu0 %2251
        %2253 = vmax.xlane.f32.xlu0 %v1988
        %v2254 = vpop.xlane.xlu0 %2253
        %2255 = vmax.xlane.f32.xlu0 %v1993
        %v2256 = vpop.xlane.xlu0 %2255
        %2257 = vmax.xlane.f32.xlu0 %v1996
        %v2258 = vpop.xlane.xlu0 %2257
        %2259 = vmax.xlane.f32.xlu0 %v2001
        %v2260 = vpop.xlane.xlu0 %2259
        %2261 = vmax.xlane.f32.xlu0 %v2004
        %v2262 = vpop.xlane.xlu0 %2261
        %v2263 = vsub.f32 %v1497, %v2008
        %v2264 = vsub.f32 %v1500, %v2010
        %v2265 = vsub.f32 %v1505, %v2012
        %v2266 = vsub.f32 %v1508, %v2014
        %v2267 = vsub.f32 %v1513, %v2016
        %v2268 = vsub.f32 %v1516, %v2018
        %v2269 = vsub.f32 %v1521, %v2020
        %v2270 = vsub.f32 %v1524, %v2022
        %v2271 = vsub.f32 %v1529, %v2024
        %v2272 = vsub.f32 %v1532, %v2026
        %v2273 = vsub.f32 %v1537, %v2028
        %v2274 = vsub.f32 %v1540, %v2030
        %v2275 = vsub.f32 %v1545, %v2032
        %v2276 = vsub.f32 %v1548, %v2034
        %v2277 = vsub.f32 %v1553, %v2036
        %v2278 = vsub.f32 %v1556, %v2038
        %v2279 = vsub.f32 %v1561, %v2040
        %v2280 = vsub.f32 %v1564, %v2042
        %v2281 = vsub.f32 %v1569, %v2044
        %v2282 = vsub.f32 %v1572, %v2046
        %v2283 = vsub.f32 %v1577, %v2048
        %v2284 = vsub.f32 %v1580, %v2050
        %v2285 = vsub.f32 %v1585, %v2052
        %v2286 = vsub.f32 %v1588, %v2054
        %v2287 = vsub.f32 %v1593, %v2056
        %v2288 = vsub.f32 %v1596, %v2058
        %v2289 = vsub.f32 %v1601, %v2060
        %v2290 = vsub.f32 %v1604, %v2062
        %v2291 = vsub.f32 %v1609, %v2064
        %v2292 = vsub.f32 %v1612, %v2066
        %v2293 = vsub.f32 %v1617, %v2068
        %v2294 = vsub.f32 %v1620, %v2070
        %v2295 = vsub.f32 %v1625, %v2072
        %v2296 = vsub.f32 %v1628, %v2074
        %v2297 = vsub.f32 %v1633, %v2076
        %v2298 = vsub.f32 %v1636, %v2078
        %v2299 = vsub.f32 %v1641, %v2080
        %v2300 = vsub.f32 %v1644, %v2082
        %v2301 = vsub.f32 %v1649, %v2084
        %v2302 = vsub.f32 %v1652, %v2086
        %v2303 = vsub.f32 %v1657, %v2088
        %v2304 = vsub.f32 %v1660, %v2090
        %v2305 = vsub.f32 %v1665, %v2092
        %v2306 = vsub.f32 %v1668, %v2094
        %v2307 = vsub.f32 %v1673, %v2096
        %v2308 = vsub.f32 %v1676, %v2098
        %v2309 = vsub.f32 %v1681, %v2100
        %v2310 = vsub.f32 %v1684, %v2102
        %v2311 = vsub.f32 %v1689, %v2104
        %v2312 = vsub.f32 %v1692, %v2106
        %v2313 = vsub.f32 %v1697, %v2108
        %v2314 = vsub.f32 %v1700, %v2110
        %v2315 = vsub.f32 %v1705, %v2112
        %v2316 = vsub.f32 %v1708, %v2114
        %v2317 = vsub.f32 %v1713, %v2116
        %v2318 = vsub.f32 %v1716, %v2118
        %v2319 = vsub.f32 %v1721, %v2120
        %v2320 = vsub.f32 %v1724, %v2122
        %v2321 = vsub.f32 %v1729, %v2124
        %v2322 = vsub.f32 %v1732, %v2126
        %v2323 = vsub.f32 %v1737, %v2128
        %v2324 = vsub.f32 %v1740, %v2130
        %v2325 = vsub.f32 %v1745, %v2132
        %v2326 = vsub.f32 %v1748, %v2134
        %v2327 = vsub.f32 %v1753, %v2136
        %v2328 = vsub.f32 %v1756, %v2138
        %v2329 = vsub.f32 %v1761, %v2140
        %v2330 = vsub.f32 %v1764, %v2142
        %v2331 = vsub.f32 %v1769, %v2144
        %v2332 = vsub.f32 %v1772, %v2146
        %v2333 = vsub.f32 %v1777, %v2148
        %v2334 = vsub.f32 %v1780, %v2150
        %v2335 = vsub.f32 %v1785, %v2152
        %v2336 = vsub.f32 %v1788, %v2154
        %v2337 = vsub.f32 %v1793, %v2156
        %v2338 = vsub.f32 %v1796, %v2158
        %v2339 = vsub.f32 %v1801, %v2160
        %v2340 = vsub.f32 %v1804, %v2162
        %v2341 = vsub.f32 %v1809, %v2164
        %v2342 = vsub.f32 %v1812, %v2166
        %v2343 = vsub.f32 %v1817, %v2168
        %v2344 = vsub.f32 %v1820, %v2170
        %v2345 = vsub.f32 %v1825, %v2172
        %v2346 = vsub.f32 %v1828, %v2174
        %v2347 = vsub.f32 %v1833, %v2176
        %v2348 = vsub.f32 %v1836, %v2178
        %v2349 = vsub.f32 %v1841, %v2180
        %v2350 = vsub.f32 %v1844, %v2182
        %v2351 = vsub.f32 %v1849, %v2184
        %v2352 = vsub.f32 %v1852, %v2186
        %v2353 = vsub.f32 %v1857, %v2188
        %v2354 = vsub.f32 %v1860, %v2190
        %v2355 = vsub.f32 %v1865, %v2192
        %v2356 = vsub.f32 %v1868, %v2194
        %v2357 = vsub.f32 %v1873, %v2196
        %v2358 = vsub.f32 %v1876, %v2198
        %v2359 = vsub.f32 %v1881, %v2200
        %v2360 = vsub.f32 %v1884, %v2202
        %v2361 = vsub.f32 %v1889, %v2204
        %v2362 = vsub.f32 %v1892, %v2206
        %v2363 = vsub.f32 %v1897, %v2208
        %v2364 = vsub.f32 %v1900, %v2210
        %v2365 = vsub.f32 %v1905, %v2212
        %v2366 = vsub.f32 %v1908, %v2214
        %v2367 = vsub.f32 %v1913, %v2216
        %v2368 = vsub.f32 %v1916, %v2218
        %v2369 = vsub.f32 %v1921, %v2220
        %v2370 = vsub.f32 %v1924, %v2222
        %v2371 = vsub.f32 %v1929, %v2224
        %v2372 = vsub.f32 %v1932, %v2226
        %v2373 = vsub.f32 %v1937, %v2228
        %v2374 = vsub.f32 %v1940, %v2230
        %v2375 = vsub.f32 %v1945, %v2232
        %v2376 = vsub.f32 %v1948, %v2234
        %v2377 = vsub.f32 %v1953, %v2236
        %v2378 = vsub.f32 %v1956, %v2238
        %v2379 = vsub.f32 %v1961, %v2240
        %v2380 = vsub.f32 %v1964, %v2242
        %v2381 = vsub.f32 %v1969, %v2244
        %v2382 = vsub.f32 %v1972, %v2246
        %v2383 = vsub.f32 %v1977, %v2248
        %v2384 = vsub.f32 %v1980, %v2250
        %v2385 = vsub.f32 %v1985, %v2252
        %v2386 = vsub.f32 %v1988, %v2254
        %v2387 = vsub.f32 %v1993, %v2256
        %v2388 = vsub.f32 %v1996, %v2258
        %v2389 = vsub.f32 %v2001, %v2260
        %v2390 = vsub.f32 %v2004, %v2262
        %v2391 = vmul.f32 %v2263, 1.442695
        %v2392 = vpow.pop %v2391
        %v2393 = vmul.f32 %v2264, 1.442695
        %v2394 = vpow.pop %v2393
        %v2395 = vmul.f32 %v2265, 1.442695
        %v2396 = vpow.pop %v2395
        %v2397 = vmul.f32 %v2266, 1.442695
        %v2398 = vpow.pop %v2397
        %v2399 = vmul.f32 %v2267, 1.442695
        %v2400 = vpow.pop %v2399
        %v2401 = vmul.f32 %v2268, 1.442695
        %v2402 = vpow.pop %v2401
        %v2403 = vmul.f32 %v2269, 1.442695
        %v2404 = vpow.pop %v2403
        %v2405 = vmul.f32 %v2270, 1.442695
        %v2406 = vpow.pop %v2405
        %v2407 = vmul.f32 %v2271, 1.442695
        %v2408 = vpow.pop %v2407
        %v2409 = vmul.f32 %v2272, 1.442695
        %v2410 = vpow.pop %v2409
        %v2411 = vmul.f32 %v2273, 1.442695
        %v2412 = vpow.pop %v2411
        %v2413 = vmul.f32 %v2274, 1.442695
        %v2414 = vpow.pop %v2413
        %v2415 = vmul.f32 %v2275, 1.442695
        %v2416 = vpow.pop %v2415
        %v2417 = vmul.f32 %v2276, 1.442695
        %v2418 = vpow.pop %v2417
        %v2419 = vmul.f32 %v2277, 1.442695
        %v2420 = vpow.pop %v2419
        %v2421 = vmul.f32 %v2278, 1.442695
        %v2422 = vpow.pop %v2421
        %v2423 = vmul.f32 %v2279, 1.442695
        %v2424 = vpow.pop %v2423
        %v2425 = vmul.f32 %v2280, 1.442695
        %v2426 = vpow.pop %v2425
        %v2427 = vmul.f32 %v2281, 1.442695
        %v2428 = vpow.pop %v2427
        %v2429 = vmul.f32 %v2282, 1.442695
        %v2430 = vpow.pop %v2429
        %v2431 = vmul.f32 %v2283, 1.442695
        %v2432 = vpow.pop %v2431
        %v2433 = vmul.f32 %v2284, 1.442695
        %v2434 = vpow.pop %v2433
        %v2435 = vmul.f32 %v2285, 1.442695
        %v2436 = vpow.pop %v2435
        %v2437 = vmul.f32 %v2286, 1.442695
        %v2438 = vpow.pop %v2437
        %v2439 = vmul.f32 %v2287, 1.442695
        %v2440 = vpow.pop %v2439
        %v2441 = vmul.f32 %v2288, 1.442695
        %v2442 = vpow.pop %v2441
        %v2443 = vmul.f32 %v2289, 1.442695
        %v2444 = vpow.pop %v2443
        %v2445 = vmul.f32 %v2290, 1.442695
        %v2446 = vpow.pop %v2445
        %v2447 = vmul.f32 %v2291, 1.442695
        %v2448 = vpow.pop %v2447
        %v2449 = vmul.f32 %v2292, 1.442695
        %v2450 = vpow.pop %v2449
        %v2451 = vmul.f32 %v2293, 1.442695
        %v2452 = vpow.pop %v2451
        %v2453 = vmul.f32 %v2294, 1.442695
        %v2454 = vpow.pop %v2453
        %v2455 = vmul.f32 %v2295, 1.442695
        %v2456 = vpow.pop %v2455
        %v2457 = vmul.f32 %v2296, 1.442695
        %v2458 = vpow.pop %v2457
        %v2459 = vmul.f32 %v2297, 1.442695
        %v2460 = vpow.pop %v2459
        %v2461 = vmul.f32 %v2298, 1.442695
        %v2462 = vpow.pop %v2461
        %v2463 = vmul.f32 %v2299, 1.442695
        %v2464 = vpow.pop %v2463
        %v2465 = vmul.f32 %v2300, 1.442695
        %v2466 = vpow.pop %v2465
        %v2467 = vmul.f32 %v2301, 1.442695
        %v2468 = vpow.pop %v2467
        %v2469 = vmul.f32 %v2302, 1.442695
        %v2470 = vpow.pop %v2469
        %v2471 = vmul.f32 %v2303, 1.442695
        %v2472 = vpow.pop %v2471
        %v2473 = vmul.f32 %v2304, 1.442695
        %v2474 = vpow.pop %v2473
        %v2475 = vmul.f32 %v2305, 1.442695
        %v2476 = vpow.pop %v2475
        %v2477 = vmul.f32 %v2306, 1.442695
        %v2478 = vpow.pop %v2477
        %v2479 = vmul.f32 %v2307, 1.442695
        %v2480 = vpow.pop %v2479
        %v2481 = vmul.f32 %v2308, 1.442695
        %v2482 = vpow.pop %v2481
        %v2483 = vmul.f32 %v2309, 1.442695
        %v2484 = vpow.pop %v2483
        %v2485 = vmul.f32 %v2310, 1.442695
        %v2486 = vpow.pop %v2485
        %v2487 = vmul.f32 %v2311, 1.442695
        %v2488 = vpow.pop %v2487
        %v2489 = vmul.f32 %v2312, 1.442695
        %v2490 = vpow.pop %v2489
        %v2491 = vmul.f32 %v2313, 1.442695
        %v2492 = vpow.pop %v2491
        %v2493 = vmul.f32 %v2314, 1.442695
        %v2494 = vpow.pop %v2493
        %v2495 = vmul.f32 %v2315, 1.442695
        %v2496 = vpow.pop %v2495
        %v2497 = vmul.f32 %v2316, 1.442695
        %v2498 = vpow.pop %v2497
        %v2499 = vmul.f32 %v2317, 1.442695
        %v2500 = vpow.pop %v2499
        %v2501 = vmul.f32 %v2318, 1.442695
        %v2502 = vpow.pop %v2501
        %v2503 = vmul.f32 %v2319, 1.442695
        %v2504 = vpow.pop %v2503
        %v2505 = vmul.f32 %v2320, 1.442695
        %v2506 = vpow.pop %v2505
        %v2507 = vmul.f32 %v2321, 1.442695
        %v2508 = vpow.pop %v2507
        %v2509 = vmul.f32 %v2322, 1.442695
        %v2510 = vpow.pop %v2509
        %v2511 = vmul.f32 %v2323, 1.442695
        %v2512 = vpow.pop %v2511
        %v2513 = vmul.f32 %v2324, 1.442695
        %v2514 = vpow.pop %v2513
        %v2515 = vmul.f32 %v2325, 1.442695
        %v2516 = vpow.pop %v2515
        %v2517 = vmul.f32 %v2326, 1.442695
        %v2518 = vpow.pop %v2517
        %v2519 = vmul.f32 %v2327, 1.442695
        %v2520 = vpow.pop %v2519
        %v2521 = vmul.f32 %v2328, 1.442695
        %v2522 = vpow.pop %v2521
        %v2523 = vmul.f32 %v2329, 1.442695
        %v2524 = vpow.pop %v2523
        %v2525 = vmul.f32 %v2330, 1.442695
        %v2526 = vpow.pop %v2525
        %v2527 = vmul.f32 %v2331, 1.442695
        %v2528 = vpow.pop %v2527
        %v2529 = vmul.f32 %v2332, 1.442695
        %v2530 = vpow.pop %v2529
        %v2531 = vmul.f32 %v2333, 1.442695
        %v2532 = vpow.pop %v2531
        %v2533 = vmul.f32 %v2334, 1.442695
        %v2534 = vpow.pop %v2533
        %v2535 = vmul.f32 %v2335, 1.442695
        %v2536 = vpow.pop %v2535
        %v2537 = vmul.f32 %v2336, 1.442695
        %v2538 = vpow.pop %v2537
        %v2539 = vmul.f32 %v2337, 1.442695
        %v2540 = vpow.pop %v2539
        %v2541 = vmul.f32 %v2338, 1.442695
        %v2542 = vpow.pop %v2541
        %v2543 = vmul.f32 %v2339, 1.442695
        %v2544 = vpow.pop %v2543
        %v2545 = vmul.f32 %v2340, 1.442695
        %v2546 = vpow.pop %v2545
        %v2547 = vmul.f32 %v2341, 1.442695
        %v2548 = vpow.pop %v2547
        %v2549 = vmul.f32 %v2342, 1.442695
        %v2550 = vpow.pop %v2549
        %v2551 = vmul.f32 %v2343, 1.442695
        %v2552 = vpow.pop %v2551
        %v2553 = vmul.f32 %v2344, 1.442695
        %v2554 = vpow.pop %v2553
        %v2555 = vmul.f32 %v2345, 1.442695
        %v2556 = vpow.pop %v2555
        %v2557 = vmul.f32 %v2346, 1.442695
        %v2558 = vpow.pop %v2557
        %v2559 = vmul.f32 %v2347, 1.442695
        %v2560 = vpow.pop %v2559
        %v2561 = vmul.f32 %v2348, 1.442695
        %v2562 = vpow.pop %v2561
        %v2563 = vmul.f32 %v2349, 1.442695
        %v2564 = vpow.pop %v2563
        %v2565 = vmul.f32 %v2350, 1.442695
        %v2566 = vpow.pop %v2565
        %v2567 = vmul.f32 %v2351, 1.442695
        %v2568 = vpow.pop %v2567
        %v2569 = vmul.f32 %v2352, 1.442695
        %v2570 = vpow.pop %v2569
        %v2571 = vmul.f32 %v2353, 1.442695
        %v2572 = vpow.pop %v2571
        %v2573 = vmul.f32 %v2354, 1.442695
        %v2574 = vpow.pop %v2573
        %v2575 = vmul.f32 %v2355, 1.442695
        %v2576 = vpow.pop %v2575
        %v2577 = vmul.f32 %v2356, 1.442695
        %v2578 = vpow.pop %v2577
        %v2579 = vmul.f32 %v2357, 1.442695
        %v2580 = vpow.pop %v2579
        %v2581 = vmul.f32 %v2358, 1.442695
        %v2582 = vpow.pop %v2581
        %v2583 = vmul.f32 %v2359, 1.442695
        %v2584 = vpow.pop %v2583
        %v2585 = vmul.f32 %v2360, 1.442695
        %v2586 = vpow.pop %v2585
        %v2587 = vmul.f32 %v2361, 1.442695
        %v2588 = vpow.pop %v2587
        %v2589 = vmul.f32 %v2362, 1.442695
        %v2590 = vpow.pop %v2589
        %v2591 = vmul.f32 %v2363, 1.442695
        %v2592 = vpow.pop %v2591
        %v2593 = vmul.f32 %v2364, 1.442695
        %v2594 = vpow.pop %v2593
        %v2595 = vmul.f32 %v2365, 1.442695
        %v2596 = vpow.pop %v2595
        %v2597 = vmul.f32 %v2366, 1.442695
        %v2598 = vpow.pop %v2597
        %v2599 = vmul.f32 %v2367, 1.442695
        %v2600 = vpow.pop %v2599
        %v2601 = vmul.f32 %v2368, 1.442695
        %v2602 = vpow.pop %v2601
        %v2603 = vmul.f32 %v2369, 1.442695
        %v2604 = vpow.pop %v2603
        %v2605 = vmul.f32 %v2370, 1.442695
        %v2606 = vpow.pop %v2605
        %v2607 = vmul.f32 %v2371, 1.442695
        %v2608 = vpow.pop %v2607
        %v2609 = vmul.f32 %v2372, 1.442695
        %v2610 = vpow.pop %v2609
        %v2611 = vmul.f32 %v2373, 1.442695
        %v2612 = vpow.pop %v2611
        %v2613 = vmul.f32 %v2374, 1.442695
        %v2614 = vpow.pop %v2613
        %v2615 = vmul.f32 %v2375, 1.442695
        %v2616 = vpow.pop %v2615
        %v2617 = vmul.f32 %v2376, 1.442695
        %v2618 = vpow.pop %v2617
        %v2619 = vmul.f32 %v2377, 1.442695
        %v2620 = vpow.pop %v2619
        %v2621 = vmul.f32 %v2378, 1.442695
        %v2622 = vpow.pop %v2621
        %v2623 = vmul.f32 %v2379, 1.442695
        %v2624 = vpow.pop %v2623
        %v2625 = vmul.f32 %v2380, 1.442695
        %v2626 = vpow.pop %v2625
        %v2627 = vmul.f32 %v2381, 1.442695
        %v2628 = vpow.pop %v2627
        %v2629 = vmul.f32 %v2382, 1.442695
        %v2630 = vpow.pop %v2629
        %v2631 = vmul.f32 %v2383, 1.442695
        %v2632 = vpow.pop %v2631
        %v2633 = vmul.f32 %v2384, 1.442695
        %v2634 = vpow.pop %v2633
        %v2635 = vmul.f32 %v2385, 1.442695
        %v2636 = vpow.pop %v2635
        %v2637 = vmul.f32 %v2386, 1.442695
        %v2638 = vpow.pop %v2637
        %v2639 = vmul.f32 %v2387, 1.442695
        %v2640 = vpow.pop %v2639
        %v2641 = vmul.f32 %v2388, 1.442695
        %v2642 = vpow.pop %v2641
        %v2643 = vmul.f32 %v2389, 1.442695
        %v2644 = vpow.pop %v2643
        %v2645 = vmul.f32 %v2390, 1.442695
        %v2646 = vpow.pop %v2645
        %2647 = vadd.xlane.f32.xlu0 %v2392
        %v2648 = vpop.xlane.xlu0 %2647
        %2649 = vadd.xlane.f32.xlu0 %v2394
        %v2650 = vpop.xlane.xlu0 %2649
        %2651 = vadd.xlane.f32.xlu0 %v2396
        %v2652 = vpop.xlane.xlu0 %2651
        %2653 = vadd.xlane.f32.xlu0 %v2398
        %v2654 = vpop.xlane.xlu0 %2653
        %2655 = vadd.xlane.f32.xlu0 %v2400
        %v2656 = vpop.xlane.xlu0 %2655
        %2657 = vadd.xlane.f32.xlu0 %v2402
        %v2658 = vpop.xlane.xlu0 %2657
        %2659 = vadd.xlane.f32.xlu0 %v2404
        %v2660 = vpop.xlane.xlu0 %2659
        %2661 = vadd.xlane.f32.xlu0 %v2406
        %v2662 = vpop.xlane.xlu0 %2661
        %2663 = vadd.xlane.f32.xlu0 %v2408
        %v2664 = vpop.xlane.xlu0 %2663
        %2665 = vadd.xlane.f32.xlu0 %v2410
        %v2666 = vpop.xlane.xlu0 %2665
        %2667 = vadd.xlane.f32.xlu0 %v2412
        %v2668 = vpop.xlane.xlu0 %2667
        %2669 = vadd.xlane.f32.xlu0 %v2414
        %v2670 = vpop.xlane.xlu0 %2669
        %2671 = vadd.xlane.f32.xlu0 %v2416
        %v2672 = vpop.xlane.xlu0 %2671
        %2673 = vadd.xlane.f32.xlu0 %v2418
        %v2674 = vpop.xlane.xlu0 %2673
        %2675 = vadd.xlane.f32.xlu0 %v2420
        %v2676 = vpop.xlane.xlu0 %2675
        %2677 = vadd.xlane.f32.xlu0 %v2422
        %v2678 = vpop.xlane.xlu0 %2677
        %2679 = vadd.xlane.f32.xlu0 %v2424
        %v2680 = vpop.xlane.xlu0 %2679
        %2681 = vadd.xlane.f32.xlu0 %v2426
        %v2682 = vpop.xlane.xlu0 %2681
        %2683 = vadd.xlane.f32.xlu0 %v2428
        %v2684 = vpop.xlane.xlu0 %2683
        %2685 = vadd.xlane.f32.xlu0 %v2430
        %v2686 = vpop.xlane.xlu0 %2685
        %2687 = vadd.xlane.f32.xlu0 %v2432
        %v2688 = vpop.xlane.xlu0 %2687
        %2689 = vadd.xlane.f32.xlu0 %v2434
        %v2690 = vpop.xlane.xlu0 %2689
        %2691 = vadd.xlane.f32.xlu0 %v2436
        %v2692 = vpop.xlane.xlu0 %2691
        %2693 = vadd.xlane.f32.xlu0 %v2438
        %v2694 = vpop.xlane.xlu0 %2693
        %2695 = vadd.xlane.f32.xlu0 %v2440
        %v2696 = vpop.xlane.xlu0 %2695
        %2697 = vadd.xlane.f32.xlu0 %v2442
        %v2698 = vpop.xlane.xlu0 %2697
        %2699 = vadd.xlane.f32.xlu0 %v2444
        %v2700 = vpop.xlane.xlu0 %2699
        %2701 = vadd.xlane.f32.xlu0 %v2446
        %v2702 = vpop.xlane.xlu0 %2701
        %2703 = vadd.xlane.f32.xlu0 %v2448
        %v2704 = vpop.xlane.xlu0 %2703
        %2705 = vadd.xlane.f32.xlu0 %v2450
        %v2706 = vpop.xlane.xlu0 %2705
        %2707 = vadd.xlane.f32.xlu0 %v2452
        %v2708 = vpop.xlane.xlu0 %2707
        %2709 = vadd.xlane.f32.xlu0 %v2454
        %v2710 = vpop.xlane.xlu0 %2709
        %2711 = vadd.xlane.f32.xlu0 %v2456
        %v2712 = vpop.xlane.xlu0 %2711
        %2713 = vadd.xlane.f32.xlu0 %v2458
        %v2714 = vpop.xlane.xlu0 %2713
        %2715 = vadd.xlane.f32.xlu0 %v2460
        %v2716 = vpop.xlane.xlu0 %2715
        %2717 = vadd.xlane.f32.xlu0 %v2462
        %v2718 = vpop.xlane.xlu0 %2717
        %2719 = vadd.xlane.f32.xlu0 %v2464
        %v2720 = vpop.xlane.xlu0 %2719
        %2721 = vadd.xlane.f32.xlu0 %v2466
        %v2722 = vpop.xlane.xlu0 %2721
        %2723 = vadd.xlane.f32.xlu0 %v2468
        %v2724 = vpop.xlane.xlu0 %2723
        %2725 = vadd.xlane.f32.xlu0 %v2470
        %v2726 = vpop.xlane.xlu0 %2725
        %2727 = vadd.xlane.f32.xlu0 %v2472
        %v2728 = vpop.xlane.xlu0 %2727
        %2729 = vadd.xlane.f32.xlu0 %v2474
        %v2730 = vpop.xlane.xlu0 %2729
        %2731 = vadd.xlane.f32.xlu0 %v2476
        %v2732 = vpop.xlane.xlu0 %2731
        %2733 = vadd.xlane.f32.xlu0 %v2478
        %v2734 = vpop.xlane.xlu0 %2733
        %2735 = vadd.xlane.f32.xlu0 %v2480
        %v2736 = vpop.xlane.xlu0 %2735
        %2737 = vadd.xlane.f32.xlu0 %v2482
        %v2738 = vpop.xlane.xlu0 %2737
        %2739 = vadd.xlane.f32.xlu0 %v2484
        %v2740 = vpop.xlane.xlu0 %2739
        %2741 = vadd.xlane.f32.xlu0 %v2486
        %v2742 = vpop.xlane.xlu0 %2741
        %2743 = vadd.xlane.f32.xlu0 %v2488
        %v2744 = vpop.xlane.xlu0 %2743
        %2745 = vadd.xlane.f32.xlu0 %v2490
        %v2746 = vpop.xlane.xlu0 %2745
        %2747 = vadd.xlane.f32.xlu0 %v2492
        %v2748 = vpop.xlane.xlu0 %2747
        %2749 = vadd.xlane.f32.xlu0 %v2494
        %v2750 = vpop.xlane.xlu0 %2749
        %2751 = vadd.xlane.f32.xlu0 %v2496
        %v2752 = vpop.xlane.xlu0 %2751
        %2753 = vadd.xlane.f32.xlu0 %v2498
        %v2754 = vpop.xlane.xlu0 %2753
        %2755 = vadd.xlane.f32.xlu0 %v2500
        %v2756 = vpop.xlane.xlu0 %2755
        %2757 = vadd.xlane.f32.xlu0 %v2502
        %v2758 = vpop.xlane.xlu0 %2757
        %2759 = vadd.xlane.f32.xlu0 %v2504
        %v2760 = vpop.xlane.xlu0 %2759
        %2761 = vadd.xlane.f32.xlu0 %v2506
        %v2762 = vpop.xlane.xlu0 %2761
        %2763 = vadd.xlane.f32.xlu0 %v2508
        %v2764 = vpop.xlane.xlu0 %2763
        %2765 = vadd.xlane.f32.xlu0 %v2510
        %v2766 = vpop.xlane.xlu0 %2765
        %2767 = vadd.xlane.f32.xlu0 %v2512
        %v2768 = vpop.xlane.xlu0 %2767
        %2769 = vadd.xlane.f32.xlu0 %v2514
        %v2770 = vpop.xlane.xlu0 %2769
        %2771 = vadd.xlane.f32.xlu0 %v2516
        %v2772 = vpop.xlane.xlu0 %2771
        %2773 = vadd.xlane.f32.xlu0 %v2518
        %v2774 = vpop.xlane.xlu0 %2773
        %2775 = vadd.xlane.f32.xlu0 %v2520
        %v2776 = vpop.xlane.xlu0 %2775
        %2777 = vadd.xlane.f32.xlu0 %v2522
        %v2778 = vpop.xlane.xlu0 %2777
        %2779 = vadd.xlane.f32.xlu0 %v2524
        %v2780 = vpop.xlane.xlu0 %2779
        %2781 = vadd.xlane.f32.xlu0 %v2526
        %v2782 = vpop.xlane.xlu0 %2781
        %2783 = vadd.xlane.f32.xlu0 %v2528
        %v2784 = vpop.xlane.xlu0 %2783
        %2785 = vadd.xlane.f32.xlu0 %v2530
        %v2786 = vpop.xlane.xlu0 %2785
        %2787 = vadd.xlane.f32.xlu0 %v2532
        %v2788 = vpop.xlane.xlu0 %2787
        %2789 = vadd.xlane.f32.xlu0 %v2534
        %v2790 = vpop.xlane.xlu0 %2789
        %2791 = vadd.xlane.f32.xlu0 %v2536
        %v2792 = vpop.xlane.xlu0 %2791
        %2793 = vadd.xlane.f32.xlu0 %v2538
        %v2794 = vpop.xlane.xlu0 %2793
        %2795 = vadd.xlane.f32.xlu0 %v2540
        %v2796 = vpop.xlane.xlu0 %2795
        %2797 = vadd.xlane.f32.xlu0 %v2542
        %v2798 = vpop.xlane.xlu0 %2797
        %2799 = vadd.xlane.f32.xlu0 %v2544
        %v2800 = vpop.xlane.xlu0 %2799
        %2801 = vadd.xlane.f32.xlu0 %v2546
        %v2802 = vpop.xlane.xlu0 %2801
        %2803 = vadd.xlane.f32.xlu0 %v2548
        %v2804 = vpop.xlane.xlu0 %2803
        %2805 = vadd.xlane.f32.xlu0 %v2550
        %v2806 = vpop.xlane.xlu0 %2805
        %2807 = vadd.xlane.f32.xlu0 %v2552
        %v2808 = vpop.xlane.xlu0 %2807
        %2809 = vadd.xlane.f32.xlu0 %v2554
        %v2810 = vpop.xlane.xlu0 %2809
        %2811 = vadd.xlane.f32.xlu0 %v2556
        %v2812 = vpop.xlane.xlu0 %2811
        %2813 = vadd.xlane.f32.xlu0 %v2558
        %v2814 = vpop.xlane.xlu0 %2813
        %2815 = vadd.xlane.f32.xlu0 %v2560
        %v2816 = vpop.xlane.xlu0 %2815
        %2817 = vadd.xlane.f32.xlu0 %v2562
        %v2818 = vpop.xlane.xlu0 %2817
        %2819 = vadd.xlane.f32.xlu0 %v2564
        %v2820 = vpop.xlane.xlu0 %2819
        %2821 = vadd.xlane.f32.xlu0 %v2566
        %v2822 = vpop.xlane.xlu0 %2821
        %2823 = vadd.xlane.f32.xlu0 %v2568
        %v2824 = vpop.xlane.xlu0 %2823
        %2825 = vadd.xlane.f32.xlu0 %v2570
        %v2826 = vpop.xlane.xlu0 %2825
        %2827 = vadd.xlane.f32.xlu0 %v2572
        %v2828 = vpop.xlane.xlu0 %2827
        %2829 = vadd.xlane.f32.xlu0 %v2574
        %v2830 = vpop.xlane.xlu0 %2829
        %2831 = vadd.xlane.f32.xlu0 %v2576
        %v2832 = vpop.xlane.xlu0 %2831
        %2833 = vadd.xlane.f32.xlu0 %v2578
        %v2834 = vpop.xlane.xlu0 %2833
        %2835 = vadd.xlane.f32.xlu0 %v2580
        %v2836 = vpop.xlane.xlu0 %2835
        %2837 = vadd.xlane.f32.xlu0 %v2582
        %v2838 = vpop.xlane.xlu0 %2837
        %2839 = vadd.xlane.f32.xlu0 %v2584
        %v2840 = vpop.xlane.xlu0 %2839
        %2841 = vadd.xlane.f32.xlu0 %v2586
        %v2842 = vpop.xlane.xlu0 %2841
        %2843 = vadd.xlane.f32.xlu0 %v2588
        %v2844 = vpop.xlane.xlu0 %2843
        %2845 = vadd.xlane.f32.xlu0 %v2590
        %v2846 = vpop.xlane.xlu0 %2845
        %2847 = vadd.xlane.f32.xlu0 %v2592
        %v2848 = vpop.xlane.xlu0 %2847
        %2849 = vadd.xlane.f32.xlu0 %v2594
        %v2850 = vpop.xlane.xlu0 %2849
        %2851 = vadd.xlane.f32.xlu0 %v2596
        %v2852 = vpop.xlane.xlu0 %2851
        %2853 = vadd.xlane.f32.xlu0 %v2598
        %v2854 = vpop.xlane.xlu0 %2853
        %2855 = vadd.xlane.f32.xlu0 %v2600
        %v2856 = vpop.xlane.xlu0 %2855
        %2857 = vadd.xlane.f32.xlu0 %v2602
        %v2858 = vpop.xlane.xlu0 %2857
        %2859 = vadd.xlane.f32.xlu0 %v2604
        %v2860 = vpop.xlane.xlu0 %2859
        %2861 = vadd.xlane.f32.xlu0 %v2606
        %v2862 = vpop.xlane.xlu0 %2861
        %2863 = vadd.xlane.f32.xlu0 %v2608
        %v2864 = vpop.xlane.xlu0 %2863
        %2865 = vadd.xlane.f32.xlu0 %v2610
        %v2866 = vpop.xlane.xlu0 %2865
        %2867 = vadd.xlane.f32.xlu0 %v2612
        %v2868 = vpop.xlane.xlu0 %2867
        %2869 = vadd.xlane.f32.xlu0 %v2614
        %v2870 = vpop.xlane.xlu0 %2869
        %2871 = vadd.xlane.f32.xlu0 %v2616
        %v2872 = vpop.xlane.xlu0 %2871
        %2873 = vadd.xlane.f32.xlu0 %v2618
        %v2874 = vpop.xlane.xlu0 %2873
        %2875 = vadd.xlane.f32.xlu0 %v2620
        %v2876 = vpop.xlane.xlu0 %2875
        %2877 = vadd.xlane.f32.xlu0 %v2622
        %v2878 = vpop.xlane.xlu0 %2877
        %2879 = vadd.xlane.f32.xlu0 %v2624
        %v2880 = vpop.xlane.xlu0 %2879
        %2881 = vadd.xlane.f32.xlu0 %v2626
        %v2882 = vpop.xlane.xlu0 %2881
        %2883 = vadd.xlane.f32.xlu0 %v2628
        %v2884 = vpop.xlane.xlu0 %2883
        %2885 = vadd.xlane.f32.xlu0 %v2630
        %v2886 = vpop.xlane.xlu0 %2885
        %2887 = vadd.xlane.f32.xlu0 %v2632
        %v2888 = vpop.xlane.xlu0 %2887
        %2889 = vadd.xlane.f32.xlu0 %v2634
        %v2890 = vpop.xlane.xlu0 %2889
        %2891 = vadd.xlane.f32.xlu0 %v2636
        %v2892 = vpop.xlane.xlu0 %2891
        %2893 = vadd.xlane.f32.xlu0 %v2638
        %v2894 = vpop.xlane.xlu0 %2893
        %2895 = vadd.xlane.f32.xlu0 %v2640
        %v2896 = vpop.xlane.xlu0 %2895
        %2897 = vadd.xlane.f32.xlu0 %v2642
        %v2898 = vpop.xlane.xlu0 %2897
        %2899 = vadd.xlane.f32.xlu0 %v2644
        %v2900 = vpop.xlane.xlu0 %2899
        %2901 = vadd.xlane.f32.xlu0 %v2646
        %v2902 = vpop.xlane.xlu0 %2901
        %v2903 = vrcp.pop %v2648
        %v2904 = vrcp.pop %v2650
        %v2905 = vrcp.pop %v2652
        %v2906 = vrcp.pop %v2654
        %v2907 = vrcp.pop %v2656
        %v2908 = vrcp.pop %v2658
        %v2909 = vrcp.pop %v2660
        %v2910 = vrcp.pop %v2662
        %v2911 = vrcp.pop %v2664
        %v2912 = vrcp.pop %v2666
        %v2913 = vrcp.pop %v2668
        %v2914 = vrcp.pop %v2670
        %v2915 = vrcp.pop %v2672
        %v2916 = vrcp.pop %v2674
        %v2917 = vrcp.pop %v2676
        %v2918 = vrcp.pop %v2678
        %v2919 = vrcp.pop %v2680
        %v2920 = vrcp.pop %v2682
        %v2921 = vrcp.pop %v2684
        %v2922 = vrcp.pop %v2686
        %v2923 = vrcp.pop %v2688
        %v2924 = vrcp.pop %v2690
        %v2925 = vrcp.pop %v2692
        %v2926 = vrcp.pop %v2694
        %v2927 = vrcp.pop %v2696
        %v2928 = vrcp.pop %v2698
        %v2929 = vrcp.pop %v2700
        %v2930 = vrcp.pop %v2702
        %v2931 = vrcp.pop %v2704
        %v2932 = vrcp.pop %v2706
        %v2933 = vrcp.pop %v2708
        %v2934 = vrcp.pop %v2710
        %v2935 = vrcp.pop %v2712
        %v2936 = vrcp.pop %v2714
        %v2937 = vrcp.pop %v2716
        %v2938 = vrcp.pop %v2718
        %v2939 = vrcp.pop %v2720
        %v2940 = vrcp.pop %v2722
        %v2941 = vrcp.pop %v2724
        %v2942 = vrcp.pop %v2726
        %v2943 = vrcp.pop %v2728
        %v2944 = vrcp.pop %v2730
        %v2945 = vrcp.pop %v2732
        %v2946 = vrcp.pop %v2734
        %v2947 = vrcp.pop %v2736
        %v2948 = vrcp.pop %v2738
        %v2949 = vrcp.pop %v2740
        %v2950 = vrcp.pop %v2742
        %v2951 = vrcp.pop %v2744
        %v2952 = vrcp.pop %v2746
        %v2953 = vrcp.pop %v2748
        %v2954 = vrcp.pop %v2750
        %v2955 = vrcp.pop %v2752
        %v2956 = vrcp.pop %v2754
        %v2957 = vrcp.pop %v2756
        %v2958 = vrcp.pop %v2758
        %v2959 = vrcp.pop %v2760
        %v2960 = vrcp.pop %v2762
        %v2961 = vrcp.pop %v2764
        %v2962 = vrcp.pop %v2766
        %v2963 = vrcp.pop %v2768
        %v2964 = vrcp.pop %v2770
        %v2965 = vrcp.pop %v2772
        %v2966 = vrcp.pop %v2774
        %v2967 = vrcp.pop %v2776
        %v2968 = vrcp.pop %v2778
        %v2969 = vrcp.pop %v2780
        %v2970 = vrcp.pop %v2782
        %v2971 = vrcp.pop %v2784
        %v2972 = vrcp.pop %v2786
        %v2973 = vrcp.pop %v2788
        %v2974 = vrcp.pop %v2790
        %v2975 = vrcp.pop %v2792
        %v2976 = vrcp.pop %v2794
        %v2977 = vrcp.pop %v2796
        %v2978 = vrcp.pop %v2798
        %v2979 = vrcp.pop %v2800
        %v2980 = vrcp.pop %v2802
        %v2981 = vrcp.pop %v2804
        %v2982 = vrcp.pop %v2806
        %v2983 = vrcp.pop %v2808
        %v2984 = vrcp.pop %v2810
        %v2985 = vrcp.pop %v2812
        %v2986 = vrcp.pop %v2814
        %v2987 = vrcp.pop %v2816
        %v2988 = vrcp.pop %v2818
        %v2989 = vrcp.pop %v2820
        %v2990 = vrcp.pop %v2822
        %v2991 = vrcp.pop %v2824
        %v2992 = vrcp.pop %v2826
        %v2993 = vrcp.pop %v2828
        %v2994 = vrcp.pop %v2830
        %v2995 = vrcp.pop %v2832
        %v2996 = vrcp.pop %v2834
        %v2997 = vrcp.pop %v2836
        %v2998 = vrcp.pop %v2838
        %v2999 = vrcp.pop %v2840
        %v3000 = vrcp.pop %v2842
        %v3001 = vrcp.pop %v2844
        %v3002 = vrcp.pop %v2846
        %v3003 = vrcp.pop %v2848
        %v3004 = vrcp.pop %v2850
        %v3005 = vrcp.pop %v2852
        %v3006 = vrcp.pop %v2854
        %v3007 = vrcp.pop %v2856
        %v3008 = vrcp.pop %v2858
        %v3009 = vrcp.pop %v2860
        %v3010 = vrcp.pop %v2862
        %v3011 = vrcp.pop %v2864
        %v3012 = vrcp.pop %v2866
        %v3013 = vrcp.pop %v2868
        %v3014 = vrcp.pop %v2870
        %v3015 = vrcp.pop %v2872
        %v3016 = vrcp.pop %v2874
        %v3017 = vrcp.pop %v2876
        %v3018 = vrcp.pop %v2878
        %v3019 = vrcp.pop %v2880
        %v3020 = vrcp.pop %v2882
        %v3021 = vrcp.pop %v2884
        %v3022 = vrcp.pop %v2886
        %v3023 = vrcp.pop %v2888
        %v3024 = vrcp.pop %v2890
        %v3025 = vrcp.pop %v2892
        %v3026 = vrcp.pop %v2894
        %v3027 = vrcp.pop %v2896
        %v3028 = vrcp.pop %v2898
        %v3029 = vrcp.pop %v2900
        %v3030 = vrcp.pop %v2902
        %v3031 = vmul.f32 %v2392, %v2903
        %v3032 = vmul.f32 %v2394, %v2904
        %v3033 = vmul.f32 %v2396, %v2905
        %v3034 = vmul.f32 %v2398, %v2906
        %v3035 = vmul.f32 %v2400, %v2907
        %v3036 = vmul.f32 %v2402, %v2908
        %v3037 = vmul.f32 %v2404, %v2909
        %v3038 = vmul.f32 %v2406, %v2910
        %v3039 = vmul.f32 %v2408, %v2911
        %v3040 = vmul.f32 %v2410, %v2912
        %v3041 = vmul.f32 %v2412, %v2913
        %v3042 = vmul.f32 %v2414, %v2914
        %v3043 = vmul.f32 %v2416, %v2915
        %v3044 = vmul.f32 %v2418, %v2916
        %v3045 = vmul.f32 %v2420, %v2917
        %v3046 = vmul.f32 %v2422, %v2918
        %v3047 = vmul.f32 %v2424, %v2919
        %v3048 = vmul.f32 %v2426, %v2920
        %v3049 = vmul.f32 %v2428, %v2921
        %v3050 = vmul.f32 %v2430, %v2922
        %v3051 = vmul.f32 %v2432, %v2923
        %v3052 = vmul.f32 %v2434, %v2924
        %v3053 = vmul.f32 %v2436, %v2925
        %v3054 = vmul.f32 %v2438, %v2926
        %v3055 = vmul.f32 %v2440, %v2927
        %v3056 = vmul.f32 %v2442, %v2928
        %v3057 = vmul.f32 %v2444, %v2929
        %v3058 = vmul.f32 %v2446, %v2930
        %v3059 = vmul.f32 %v2448, %v2931
        %v3060 = vmul.f32 %v2450, %v2932
        %v3061 = vmul.f32 %v2452, %v2933
        %v3062 = vmul.f32 %v2454, %v2934
        %v3063 = vmul.f32 %v2456, %v2935
        %v3064 = vmul.f32 %v2458, %v2936
        %v3065 = vmul.f32 %v2460, %v2937
        %v3066 = vmul.f32 %v2462, %v2938
        %v3067 = vmul.f32 %v2464, %v2939
        %v3068 = vmul.f32 %v2466, %v2940
        %v3069 = vmul.f32 %v2468, %v2941
        %v3070 = vmul.f32 %v2470, %v2942
        %v3071 = vmul.f32 %v2472, %v2943
        %v3072 = vmul.f32 %v2474, %v2944
        %v3073 = vmul.f32 %v2476, %v2945
        %v3074 = vmul.f32 %v2478, %v2946
        %v3075 = vmul.f32 %v2480, %v2947
        %v3076 = vmul.f32 %v2482, %v2948
        %v3077 = vmul.f32 %v2484, %v2949
        %v3078 = vmul.f32 %v2486, %v2950
        %v3079 = vmul.f32 %v2488, %v2951
        %v3080 = vmul.f32 %v2490, %v2952
        %v3081 = vmul.f32 %v2492, %v2953
        %v3082 = vmul.f32 %v2494, %v2954
        %v3083 = vmul.f32 %v2496, %v2955
        %v3084 = vmul.f32 %v2498, %v2956
        %v3085 = vmul.f32 %v2500, %v2957
        %v3086 = vmul.f32 %v2502, %v2958
        %v3087 = vmul.f32 %v2504, %v2959
        %v3088 = vmul.f32 %v2506, %v2960
        %v3089 = vmul.f32 %v2508, %v2961
        %v3090 = vmul.f32 %v2510, %v2962
        %v3091 = vmul.f32 %v2512, %v2963
        %v3092 = vmul.f32 %v2514, %v2964
        %v3093 = vmul.f32 %v2516, %v2965
        %v3094 = vmul.f32 %v2518, %v2966
        %v3095 = vmul.f32 %v2520, %v2967
        %v3096 = vmul.f32 %v2522, %v2968
        %v3097 = vmul.f32 %v2524, %v2969
        %v3098 = vmul.f32 %v2526, %v2970
        %v3099 = vmul.f32 %v2528, %v2971
        %v3100 = vmul.f32 %v2530, %v2972
        %v3101 = vmul.f32 %v2532, %v2973
        %v3102 = vmul.f32 %v2534, %v2974
        %v3103 = vmul.f32 %v2536, %v2975
        %v3104 = vmul.f32 %v2538, %v2976
        %v3105 = vmul.f32 %v2540, %v2977
        %v3106 = vmul.f32 %v2542, %v2978
        %v3107 = vmul.f32 %v2544, %v2979
        %v3108 = vmul.f32 %v2546, %v2980
        %v3109 = vmul.f32 %v2548, %v2981
        %v3110 = vmul.f32 %v2550, %v2982
        %v3111 = vmul.f32 %v2552, %v2983
        %v3112 = vmul.f32 %v2554, %v2984
        %v3113 = vmul.f32 %v2556, %v2985
        %v3114 = vmul.f32 %v2558, %v2986
        %v3115 = vmul.f32 %v2560, %v2987
        %v3116 = vmul.f32 %v2562, %v2988
        %v3117 = vmul.f32 %v2564, %v2989
        %v3118 = vmul.f32 %v2566, %v2990
        %v3119 = vmul.f32 %v2568, %v2991
        %v3120 = vmul.f32 %v2570, %v2992
        %v3121 = vmul.f32 %v2572, %v2993
        %v3122 = vmul.f32 %v2574, %v2994
        %v3123 = vmul.f32 %v2576, %v2995
        %v3124 = vmul.f32 %v2578, %v2996
        %v3125 = vmul.f32 %v2580, %v2997
        %v3126 = vmul.f32 %v2582, %v2998
        %v3127 = vmul.f32 %v2584, %v2999
        %v3128 = vmul.f32 %v2586, %v3000
        %v3129 = vmul.f32 %v2588, %v3001
        %v3130 = vmul.f32 %v2590, %v3002
        %v3131 = vmul.f32 %v2592, %v3003
        %v3132 = vmul.f32 %v2594, %v3004
        %v3133 = vmul.f32 %v2596, %v3005
        %v3134 = vmul.f32 %v2598, %v3006
        %v3135 = vmul.f32 %v2600, %v3007
        %v3136 = vmul.f32 %v2602, %v3008
        %v3137 = vmul.f32 %v2604, %v3009
        %v3138 = vmul.f32 %v2606, %v3010
        %v3139 = vmul.f32 %v2608, %v3011
        %v3140 = vmul.f32 %v2610, %v3012
        %v3141 = vmul.f32 %v2612, %v3013
        %v3142 = vmul.f32 %v2614, %v3014
        %v3143 = vmul.f32 %v2616, %v3015
        %v3144 = vmul.f32 %v2618, %v3016
        %v3145 = vmul.f32 %v2620, %v3017
        %v3146 = vmul.f32 %v2622, %v3018
        %v3147 = vmul.f32 %v2624, %v3019
        %v3148 = vmul.f32 %v2626, %v3020
        %v3149 = vmul.f32 %v2628, %v3021
        %v3150 = vmul.f32 %v2630, %v3022
        %v3151 = vmul.f32 %v2632, %v3023
        %v3152 = vmul.f32 %v2634, %v3024
        %v3153 = vmul.f32 %v2636, %v3025
        %v3154 = vmul.f32 %v2638, %v3026
        %v3155 = vmul.f32 %v2640, %v3027
        %v3156 = vmul.f32 %v2642, %v3028
        %v3157 = vmul.f32 %v2644, %v3029
        %v3158 = vmul.f32 %v2646, %v3030
        %v3159 = vpack.c.bf16 %v3032, %v3031
        %v3160 = vpack.c.bf16 %v3034, %v3033
        %v3161 = vpack.c.bf16 %v3036, %v3035
        %v3162 = vpack.c.bf16 %v3038, %v3037
        %v3163 = vpack.c.bf16 %v3040, %v3039
        %v3164 = vpack.c.bf16 %v3042, %v3041
        %v3165 = vpack.c.bf16 %v3044, %v3043
        %v3166 = vpack.c.bf16 %v3046, %v3045
        %v3167 = vpack.c.bf16 %v3048, %v3047
        %v3168 = vpack.c.bf16 %v3050, %v3049
        %v3169 = vpack.c.bf16 %v3052, %v3051
        %v3170 = vpack.c.bf16 %v3054, %v3053
        %v3171 = vpack.c.bf16 %v3056, %v3055
        %v3172 = vpack.c.bf16 %v3058, %v3057
        %v3173 = vpack.c.bf16 %v3060, %v3059
        %v3174 = vpack.c.bf16 %v3062, %v3061
        %v3175 = vpack.c.bf16 %v3064, %v3063
        %v3176 = vpack.c.bf16 %v3066, %v3065
        %v3177 = vpack.c.bf16 %v3068, %v3067
        %v3178 = vpack.c.bf16 %v3070, %v3069
        %v3179 = vpack.c.bf16 %v3072, %v3071
        %v3180 = vpack.c.bf16 %v3074, %v3073
        %v3181 = vpack.c.bf16 %v3076, %v3075
        %v3182 = vpack.c.bf16 %v3078, %v3077
        %v3183 = vpack.c.bf16 %v3080, %v3079
        %v3184 = vpack.c.bf16 %v3082, %v3081
        %v3185 = vpack.c.bf16 %v3084, %v3083
        %v3186 = vpack.c.bf16 %v3086, %v3085
        %v3187 = vpack.c.bf16 %v3088, %v3087
        %v3188 = vpack.c.bf16 %v3090, %v3089
        %v3189 = vpack.c.bf16 %v3092, %v3091
        %v3190 = vpack.c.bf16 %v3094, %v3093
        %v3191 = vpack.c.bf16 %v3096, %v3095
        %v3192 = vpack.c.bf16 %v3098, %v3097
        %v3193 = vpack.c.bf16 %v3100, %v3099
        %v3194 = vpack.c.bf16 %v3102, %v3101
        %v3195 = vpack.c.bf16 %v3104, %v3103
        %v3196 = vpack.c.bf16 %v3106, %v3105
        %v3197 = vpack.c.bf16 %v3108, %v3107
        %v3198 = vpack.c.bf16 %v3110, %v3109
        %v3199 = vpack.c.bf16 %v3112, %v3111
        %v3200 = vpack.c.bf16 %v3114, %v3113
        %v3201 = vpack.c.bf16 %v3116, %v3115
        %v3202 = vpack.c.bf16 %v3118, %v3117
        %v3203 = vpack.c.bf16 %v3120, %v3119
        %v3204 = vpack.c.bf16 %v3122, %v3121
        %v3205 = vpack.c.bf16 %v3124, %v3123
        %v3206 = vpack.c.bf16 %v3126, %v3125
        %v3207 = vpack.c.bf16 %v3128, %v3127
        %v3208 = vpack.c.bf16 %v3130, %v3129
        %v3209 = vpack.c.bf16 %v3132, %v3131
        %v3210 = vpack.c.bf16 %v3134, %v3133
        %v3211 = vpack.c.bf16 %v3136, %v3135
        %v3212 = vpack.c.bf16 %v3138, %v3137
        %v3213 = vpack.c.bf16 %v3140, %v3139
        %v3214 = vpack.c.bf16 %v3142, %v3141
        %v3215 = vpack.c.bf16 %v3144, %v3143
        %v3216 = vpack.c.bf16 %v3146, %v3145
        %v3217 = vpack.c.bf16 %v3148, %v3147
        %v3218 = vpack.c.bf16 %v3150, %v3149
        %v3219 = vpack.c.bf16 %v3152, %v3151
        %v3220 = vpack.c.bf16 %v3154, %v3153
        %v3221 = vpack.c.bf16 %v3156, %v3155
        %v3222 = vpack.c.bf16 %v3158, %v3157
        %3223 = vrot.lane.b32.xlu0 %v978, 64
        %v3224 = vpop.permute.xlu0 %3223
        %3225 = vrot.lane.b32.xlu0 %v979, 64
        %v3226 = vpop.permute.xlu0 %3225
        %3227 = vrot.lane.b32.xlu0 %v980, 64
        %v3228 = vpop.permute.xlu0 %3227
        %3229 = vrot.lane.b32.xlu0 %v981, 64
        %v3230 = vpop.permute.xlu0 %3229
        %3231 = vrot.lane.b32.xlu0 %v982, 64
        %v3232 = vpop.permute.xlu0 %3231
        %3233 = vrot.lane.b32.xlu0 %v983, 64
        %v3234 = vpop.permute.xlu0 %3233
        %3235 = vrot.lane.b32.xlu0 %v984, 64
        %v3236 = vpop.permute.xlu0 %3235
        %3237 = vrot.lane.b32.xlu0 %v985, 64
        %v3238 = vpop.permute.xlu0 %3237
        %3247 = vmatprep.subr.bf16.mxu0 0
        %3248 = vmatpush1.bf16.msra.mxu0 %v3238
        %3249 = vmatprep.subr.bf16.mxu0 0
        %3250 = vmatpush1.bf16.msra.mxu0 %v3236
        %3251 = vmatprep.subr.bf16.mxu0 0
        %3252 = vmatpush1.bf16.msra.mxu0 %v3234
        %3253 = vmatprep.subr.bf16.mxu0 0
        %3254 = vmatpush1.bf16.msra.mxu0 %v3232
        %3255 = vmatprep.subr.bf16.mxu0 0
        %3256 = vmatpush1.bf16.msra.mxu0 %v3230
        %3257 = vmatprep.subr.bf16.mxu0 0
        %3258 = vmatpush1.bf16.msra.mxu0 %v3228
        %3259 = vmatprep.subr.bf16.mxu0 0
        %3260 = vmatpush1.bf16.msra.mxu0 %v3226
        %3261 = vmatprep.subr.bf16.mxu0 0
        %3262 = vmatpush1.bf16.msra.mxu0 %v3224
        %3263 = vmatprep.subr.bf16.mxu0 0
        %3264 = vmatpush2.bf16.msra.mxu0 0
        %3265 = vmatprep.subr.bf16.mxu0 0
        %3266 = vmatpush2.bf16.msra.mxu0 0
        %3267 = vmatprep.subr.bf16.mxu0 0
        %3268 = vmatpush2.bf16.msra.mxu0 0
        %3269 = vmatprep.subr.bf16.mxu0 0
        %3270 = vmatpush2.bf16.msra.mxu0 0
        %3271 = vmatprep.subr.bf16.mxu0 0
        %3272 = vmatpush2.bf16.msra.mxu0 0
        %3273 = vmatprep.subr.bf16.mxu0 0
        %3274 = vmatpush2.bf16.msra.mxu0 0
        %3275 = vmatprep.subr.bf16.mxu0 0
        %3276 = vmatpush2.bf16.msra.mxu0 0
        %3277 = vmatprep.subr.bf16.mxu0 0
        %3278 = vmatpush2.bf16.msra.mxu0 0
        %3279 = vmatprep.mubr.bf16.mxu0 0
        %3280 = vmatmul.mubr.bf16.gmra.mxu0 %v3159
        %v3281 = vpop.f32.mrf.mxu0
        %v3282 = vadd.f32 0.0, %v3281
        %v3283 = vpop.f32.mrf.mxu0
        %v3284 = vpop.f32.mrf.mxu0
        %v3285 = vadd.f32 0.0, %v3284
        %v3286 = vpop.f32.mrf.mxu0
        %3287 = vmatprep.mubr.bf16.mxu0 0
        %3288 = vmatmul.mubr.bf16.gmra.mxu0 %v3160
        %v3289 = vpop.f32.mrf.mxu0
        %v3290 = vadd.f32 0.0, %v3289
        %v3291 = vpop.f32.mrf.mxu0
        %v3292 = vpop.f32.mrf.mxu0
        %v3293 = vadd.f32 0.0, %v3292
        %v3294 = vpop.f32.mrf.mxu0
        %3295 = vmatprep.mubr.bf16.mxu0 0
        %3296 = vmatmul.mubr.bf16.gmra.mxu0 %v3161
        %v3297 = vpop.f32.mrf.mxu0
        %v3298 = vadd.f32 0.0, %v3297
        %v3299 = vpop.f32.mrf.mxu0
        %v3300 = vpop.f32.mrf.mxu0
        %v3301 = vadd.f32 0.0, %v3300
        %v3302 = vpop.f32.mrf.mxu0
        %3303 = vmatprep.mubr.bf16.mxu0 0
        %3304 = vmatmul.mubr.bf16.gmra.mxu0 %v3162
        %v3305 = vpop.f32.mrf.mxu0
        %v3306 = vadd.f32 0.0, %v3305
        %v3307 = vpop.f32.mrf.mxu0
        %v3308 = vpop.f32.mrf.mxu0
        %v3309 = vadd.f32 0.0, %v3308
        %v3310 = vpop.f32.mrf.mxu0
        %3311 = vmatprep.mubr.bf16.mxu0 0
        %3312 = vmatmul.mubr.bf16.gmra.mxu0 %v3163
        %v3313 = vpop.f32.mrf.mxu0
        %v3314 = vadd.f32 0.0, %v3313
        %v3315 = vpop.f32.mrf.mxu0
        %v3316 = vpop.f32.mrf.mxu0
        %v3317 = vadd.f32 0.0, %v3316
        %v3318 = vpop.f32.mrf.mxu0
        %3319 = vmatprep.mubr.bf16.mxu0 0
        %3320 = vmatmul.mubr.bf16.gmra.mxu0 %v3164
        %v3321 = vpop.f32.mrf.mxu0
        %v3322 = vadd.f32 0.0, %v3321
        %v3323 = vpop.f32.mrf.mxu0
        %v3324 = vpop.f32.mrf.mxu0
        %v3325 = vadd.f32 0.0, %v3324
        %v3326 = vpop.f32.mrf.mxu0
        %3327 = vmatprep.mubr.bf16.mxu0 0
        %3328 = vmatmul.mubr.bf16.gmra.mxu0 %v3165
        %v3329 = vpop.f32.mrf.mxu0
        %v3330 = vadd.f32 0.0, %v3329
        %v3331 = vpop.f32.mrf.mxu0
        %v3332 = vpop.f32.mrf.mxu0
        %v3333 = vadd.f32 0.0, %v3332
        %v3334 = vpop.f32.mrf.mxu0
        %3335 = vmatprep.mubr.bf16.mxu0 0
        %3336 = vmatmul.mubr.bf16.gmra.mxu0 %v3166
        %v3337 = vpop.f32.mrf.mxu0
        %v3338 = vadd.f32 0.0, %v3337
        %v3339 = vpop.f32.mrf.mxu0
        %v3340 = vpop.f32.mrf.mxu0
        %v3341 = vadd.f32 0.0, %v3340
        %v3342 = vpop.f32.mrf.mxu0
        %3343 = vmatprep.mubr.bf16.mxu0 0
        %3344 = vmatmul.mubr.bf16.gmra.mxu0 %v3167
        %v3345 = vpop.f32.mrf.mxu0
        %v3346 = vadd.f32 0.0, %v3345
        %v3347 = vpop.f32.mrf.mxu0
        %v3348 = vpop.f32.mrf.mxu0
        %v3349 = vadd.f32 0.0, %v3348
        %v3350 = vpop.f32.mrf.mxu0
        %3351 = vmatprep.mubr.bf16.mxu0 0
        %3352 = vmatmul.mubr.bf16.gmra.mxu0 %v3168
        %v3353 = vpop.f32.mrf.mxu0
        %v3354 = vadd.f32 0.0, %v3353
        %v3355 = vpop.f32.mrf.mxu0
        %v3356 = vpop.f32.mrf.mxu0
        %v3357 = vadd.f32 0.0, %v3356
        %v3358 = vpop.f32.mrf.mxu0
        %3359 = vmatprep.mubr.bf16.mxu0 0
        %3360 = vmatmul.mubr.bf16.gmra.mxu0 %v3169
        %v3361 = vpop.f32.mrf.mxu0
        %v3362 = vadd.f32 0.0, %v3361
        %v3363 = vpop.f32.mrf.mxu0
        %v3364 = vpop.f32.mrf.mxu0
        %v3365 = vadd.f32 0.0, %v3364
        %v3366 = vpop.f32.mrf.mxu0
        %3367 = vmatprep.mubr.bf16.mxu0 0
        %3368 = vmatmul.mubr.bf16.gmra.mxu0 %v3170
        %v3369 = vpop.f32.mrf.mxu0
        %v3370 = vadd.f32 0.0, %v3369
        %v3371 = vpop.f32.mrf.mxu0
        %v3372 = vpop.f32.mrf.mxu0
        %v3373 = vadd.f32 0.0, %v3372
        %v3374 = vpop.f32.mrf.mxu0
        %3375 = vmatprep.mubr.bf16.mxu0 0
        %3376 = vmatmul.mubr.bf16.gmra.mxu0 %v3171
        %v3377 = vpop.f32.mrf.mxu0
        %v3378 = vadd.f32 0.0, %v3377
        %v3379 = vpop.f32.mrf.mxu0
        %v3380 = vpop.f32.mrf.mxu0
        %v3381 = vadd.f32 0.0, %v3380
        %v3382 = vpop.f32.mrf.mxu0
        %3383 = vmatprep.mubr.bf16.mxu0 0
        %3384 = vmatmul.mubr.bf16.gmra.mxu0 %v3172
        %v3385 = vpop.f32.mrf.mxu0
        %v3386 = vadd.f32 0.0, %v3385
        %v3387 = vpop.f32.mrf.mxu0
        %v3388 = vpop.f32.mrf.mxu0
        %v3389 = vadd.f32 0.0, %v3388
        %v3390 = vpop.f32.mrf.mxu0
        %3391 = vmatprep.mubr.bf16.mxu0 0
        %3392 = vmatmul.mubr.bf16.gmra.mxu0 %v3173
        %v3393 = vpop.f32.mrf.mxu0
        %v3394 = vadd.f32 0.0, %v3393
        %v3395 = vpop.f32.mrf.mxu0
        %v3396 = vpop.f32.mrf.mxu0
        %v3397 = vadd.f32 0.0, %v3396
        %v3398 = vpop.f32.mrf.mxu0
        %3399 = vmatprep.mubr.bf16.mxu0 0
        %3400 = vmatmul.mubr.bf16.gmra.mxu0 %v3174
        %v3401 = vpop.f32.mrf.mxu0
        %v3402 = vadd.f32 0.0, %v3401
        %v3403 = vpop.f32.mrf.mxu0
        %v3404 = vpop.f32.mrf.mxu0
        %v3405 = vadd.f32 0.0, %v3404
        %v3406 = vpop.f32.mrf.mxu0
        %3407 = vmatprep.mubr.bf16.mxu0 0
        %3408 = vmatmul.mubr.bf16.gmra.mxu0 %v3175
        %v3409 = vpop.f32.mrf.mxu0
        %v3410 = vadd.f32 0.0, %v3409
        %v3411 = vpop.f32.mrf.mxu0
        %v3412 = vpop.f32.mrf.mxu0
        %v3413 = vadd.f32 0.0, %v3412
        %v3414 = vpop.f32.mrf.mxu0
        %3415 = vmatprep.mubr.bf16.mxu0 0
        %3416 = vmatmul.mubr.bf16.gmra.mxu0 %v3176
        %v3417 = vpop.f32.mrf.mxu0
        %v3418 = vadd.f32 0.0, %v3417
        %v3419 = vpop.f32.mrf.mxu0
        %v3420 = vpop.f32.mrf.mxu0
        %v3421 = vadd.f32 0.0, %v3420
        %v3422 = vpop.f32.mrf.mxu0
        %3423 = vmatprep.mubr.bf16.mxu0 0
        %3424 = vmatmul.mubr.bf16.gmra.mxu0 %v3177
        %v3425 = vpop.f32.mrf.mxu0
        %v3426 = vadd.f32 0.0, %v3425
        %v3427 = vpop.f32.mrf.mxu0
        %v3428 = vpop.f32.mrf.mxu0
        %v3429 = vadd.f32 0.0, %v3428
        %v3430 = vpop.f32.mrf.mxu0
        %3431 = vmatprep.mubr.bf16.mxu0 0
        %3432 = vmatmul.mubr.bf16.gmra.mxu0 %v3178
        %v3433 = vpop.f32.mrf.mxu0
        %v3434 = vadd.f32 0.0, %v3433
        %v3435 = vpop.f32.mrf.mxu0
        %v3436 = vpop.f32.mrf.mxu0
        %v3437 = vadd.f32 0.0, %v3436
        %v3438 = vpop.f32.mrf.mxu0
        %3439 = vmatprep.mubr.bf16.mxu0 0
        %3440 = vmatmul.mubr.bf16.gmra.mxu0 %v3179
        %v3441 = vpop.f32.mrf.mxu0
        %v3442 = vadd.f32 0.0, %v3441
        %v3443 = vpop.f32.mrf.mxu0
        %v3444 = vpop.f32.mrf.mxu0
        %v3445 = vadd.f32 0.0, %v3444
        %v3446 = vpop.f32.mrf.mxu0
        %3447 = vmatprep.mubr.bf16.mxu0 0
        %3448 = vmatmul.mubr.bf16.gmra.mxu0 %v3180
        %v3449 = vpop.f32.mrf.mxu0
        %v3450 = vadd.f32 0.0, %v3449
        %v3451 = vpop.f32.mrf.mxu0
        %v3452 = vpop.f32.mrf.mxu0
        %v3453 = vadd.f32 0.0, %v3452
        %v3454 = vpop.f32.mrf.mxu0
        %3455 = vmatprep.mubr.bf16.mxu0 0
        %3456 = vmatmul.mubr.bf16.gmra.mxu0 %v3181
        %v3457 = vpop.f32.mrf.mxu0
        %v3458 = vadd.f32 0.0, %v3457
        %v3459 = vpop.f32.mrf.mxu0
        %v3460 = vpop.f32.mrf.mxu0
        %v3461 = vadd.f32 0.0, %v3460
        %v3462 = vpop.f32.mrf.mxu0
        %3463 = vmatprep.mubr.bf16.mxu0 0
        %3464 = vmatmul.mubr.bf16.gmra.mxu0 %v3182
        %v3465 = vpop.f32.mrf.mxu0
        %v3466 = vadd.f32 0.0, %v3465
        %v3467 = vpop.f32.mrf.mxu0
        %v3468 = vpop.f32.mrf.mxu0
        %v3469 = vadd.f32 0.0, %v3468
        %v3470 = vpop.f32.mrf.mxu0
        %3471 = vmatprep.mubr.bf16.mxu0 0
        %3472 = vmatmul.mubr.bf16.gmra.mxu0 %v3183
        %v3473 = vpop.f32.mrf.mxu0
        %v3474 = vadd.f32 0.0, %v3473
        %v3475 = vpop.f32.mrf.mxu0
        %v3476 = vpop.f32.mrf.mxu0
        %v3477 = vadd.f32 0.0, %v3476
        %v3478 = vpop.f32.mrf.mxu0
        %3479 = vmatprep.mubr.bf16.mxu0 0
        %3480 = vmatmul.mubr.bf16.gmra.mxu0 %v3184
        %v3481 = vpop.f32.mrf.mxu0
        %v3482 = vadd.f32 0.0, %v3481
        %v3483 = vpop.f32.mrf.mxu0
        %v3484 = vpop.f32.mrf.mxu0
        %v3485 = vadd.f32 0.0, %v3484
        %v3486 = vpop.f32.mrf.mxu0
        %3487 = vmatprep.mubr.bf16.mxu0 0
        %3488 = vmatmul.mubr.bf16.gmra.mxu0 %v3185
        %v3489 = vpop.f32.mrf.mxu0
        %v3490 = vadd.f32 0.0, %v3489
        %v3491 = vpop.f32.mrf.mxu0
        %v3492 = vpop.f32.mrf.mxu0
        %v3493 = vadd.f32 0.0, %v3492
        %v3494 = vpop.f32.mrf.mxu0
        %3495 = vmatprep.mubr.bf16.mxu0 0
        %3496 = vmatmul.mubr.bf16.gmra.mxu0 %v3186
        %v3497 = vpop.f32.mrf.mxu0
        %v3498 = vadd.f32 0.0, %v3497
        %v3499 = vpop.f32.mrf.mxu0
        %v3500 = vpop.f32.mrf.mxu0
        %v3501 = vadd.f32 0.0, %v3500
        %v3502 = vpop.f32.mrf.mxu0
        %3503 = vmatprep.mubr.bf16.mxu0 0
        %3504 = vmatmul.mubr.bf16.gmra.mxu0 %v3187
        %v3505 = vpop.f32.mrf.mxu0
        %v3506 = vadd.f32 0.0, %v3505
        %v3507 = vpop.f32.mrf.mxu0
        %v3508 = vpop.f32.mrf.mxu0
        %v3509 = vadd.f32 0.0, %v3508
        %v3510 = vpop.f32.mrf.mxu0
        %3511 = vmatprep.mubr.bf16.mxu0 0
        %3512 = vmatmul.mubr.bf16.gmra.mxu0 %v3188
        %v3513 = vpop.f32.mrf.mxu0
        %v3514 = vadd.f32 0.0, %v3513
        %v3515 = vpop.f32.mrf.mxu0
        %v3516 = vpop.f32.mrf.mxu0
        %v3517 = vadd.f32 0.0, %v3516
        %v3518 = vpop.f32.mrf.mxu0
        %3519 = vmatprep.mubr.bf16.mxu0 0
        %3520 = vmatmul.mubr.bf16.gmra.mxu0 %v3189
        %v3521 = vpop.f32.mrf.mxu0
        %v3522 = vadd.f32 0.0, %v3521
        %v3523 = vpop.f32.mrf.mxu0
        %v3524 = vpop.f32.mrf.mxu0
        %v3525 = vadd.f32 0.0, %v3524
        %v3526 = vpop.f32.mrf.mxu0
        %3527 = vmatprep.mubr.bf16.mxu0 0
        %3528 = vmatmul.mubr.bf16.gmra.mxu0 %v3190
        %v3529 = vpop.f32.mrf.mxu0
        %v3530 = vadd.f32 0.0, %v3529
        %v3531 = vpop.f32.mrf.mxu0
        %v3532 = vpop.f32.mrf.mxu0
        %v3533 = vadd.f32 0.0, %v3532
        %v3534 = vpop.f32.mrf.mxu0
        %3535 = vmatprep.mubr.bf16.mxu0 0
        %3536 = vmatmul.mubr.bf16.gmra.mxu0 %v3191
        %v3537 = vpop.f32.mrf.mxu0
        %v3538 = vadd.f32 0.0, %v3537
        %v3539 = vpop.f32.mrf.mxu0
        %v3540 = vpop.f32.mrf.mxu0
        %v3541 = vadd.f32 0.0, %v3540
        %v3542 = vpop.f32.mrf.mxu0
        %3543 = vmatprep.mubr.bf16.mxu0 0
        %3544 = vmatmul.mubr.bf16.gmra.mxu0 %v3192
        %v3545 = vpop.f32.mrf.mxu0
        %v3546 = vadd.f32 0.0, %v3545
        %v3547 = vpop.f32.mrf.mxu0
        %v3548 = vpop.f32.mrf.mxu0
        %v3549 = vadd.f32 0.0, %v3548
        %v3550 = vpop.f32.mrf.mxu0
        %3551 = vmatprep.mubr.bf16.mxu0 0
        %3552 = vmatmul.mubr.bf16.gmra.mxu0 %v3193
        %v3553 = vpop.f32.mrf.mxu0
        %v3554 = vadd.f32 0.0, %v3553
        %v3555 = vpop.f32.mrf.mxu0
        %v3556 = vpop.f32.mrf.mxu0
        %v3557 = vadd.f32 0.0, %v3556
        %v3558 = vpop.f32.mrf.mxu0
        %3559 = vmatprep.mubr.bf16.mxu0 0
        %3560 = vmatmul.mubr.bf16.gmra.mxu0 %v3194
        %v3561 = vpop.f32.mrf.mxu0
        %v3562 = vadd.f32 0.0, %v3561
        %v3563 = vpop.f32.mrf.mxu0
        %v3564 = vpop.f32.mrf.mxu0
        %v3565 = vadd.f32 0.0, %v3564
        %v3566 = vpop.f32.mrf.mxu0
        %3567 = vmatprep.mubr.bf16.mxu0 0
        %3568 = vmatmul.mubr.bf16.gmra.mxu0 %v3195
        %v3569 = vpop.f32.mrf.mxu0
        %v3570 = vadd.f32 0.0, %v3569
        %v3571 = vpop.f32.mrf.mxu0
        %v3572 = vpop.f32.mrf.mxu0
        %v3573 = vadd.f32 0.0, %v3572
        %v3574 = vpop.f32.mrf.mxu0
        %3575 = vmatprep.mubr.bf16.mxu0 0
        %3576 = vmatmul.mubr.bf16.gmra.mxu0 %v3196
        %v3577 = vpop.f32.mrf.mxu0
        %v3578 = vadd.f32 0.0, %v3577
        %v3579 = vpop.f32.mrf.mxu0
        %v3580 = vpop.f32.mrf.mxu0
        %v3581 = vadd.f32 0.0, %v3580
        %v3582 = vpop.f32.mrf.mxu0
        %3583 = vmatprep.mubr.bf16.mxu0 0
        %3584 = vmatmul.mubr.bf16.gmra.mxu0 %v3197
        %v3585 = vpop.f32.mrf.mxu0
        %v3586 = vadd.f32 0.0, %v3585
        %v3587 = vpop.f32.mrf.mxu0
        %v3588 = vpop.f32.mrf.mxu0
        %v3589 = vadd.f32 0.0, %v3588
        %v3590 = vpop.f32.mrf.mxu0
        %3591 = vmatprep.mubr.bf16.mxu0 0
        %3592 = vmatmul.mubr.bf16.gmra.mxu0 %v3198
        %v3593 = vpop.f32.mrf.mxu0
        %v3594 = vadd.f32 0.0, %v3593
        %v3595 = vpop.f32.mrf.mxu0
        %v3596 = vpop.f32.mrf.mxu0
        %v3597 = vadd.f32 0.0, %v3596
        %v3598 = vpop.f32.mrf.mxu0
        %3599 = vmatprep.mubr.bf16.mxu0 0
        %3600 = vmatmul.mubr.bf16.gmra.mxu0 %v3199
        %v3601 = vpop.f32.mrf.mxu0
        %v3602 = vadd.f32 0.0, %v3601
        %v3603 = vpop.f32.mrf.mxu0
        %v3604 = vpop.f32.mrf.mxu0
        %v3605 = vadd.f32 0.0, %v3604
        %v3606 = vpop.f32.mrf.mxu0
        %3607 = vmatprep.mubr.bf16.mxu0 0
        %3608 = vmatmul.mubr.bf16.gmra.mxu0 %v3200
        %v3609 = vpop.f32.mrf.mxu0
        %v3610 = vadd.f32 0.0, %v3609
        %v3611 = vpop.f32.mrf.mxu0
        %v3612 = vpop.f32.mrf.mxu0
        %v3613 = vadd.f32 0.0, %v3612
        %v3614 = vpop.f32.mrf.mxu0
        %3615 = vmatprep.mubr.bf16.mxu0 0
        %3616 = vmatmul.mubr.bf16.gmra.mxu0 %v3201
        %v3617 = vpop.f32.mrf.mxu0
        %v3618 = vadd.f32 0.0, %v3617
        %v3619 = vpop.f32.mrf.mxu0
        %v3620 = vpop.f32.mrf.mxu0
        %v3621 = vadd.f32 0.0, %v3620
        %v3622 = vpop.f32.mrf.mxu0
        %3623 = vmatprep.mubr.bf16.mxu0 0
        %3624 = vmatmul.mubr.bf16.gmra.mxu0 %v3202
        %v3625 = vpop.f32.mrf.mxu0
        %v3626 = vadd.f32 0.0, %v3625
        %v3627 = vpop.f32.mrf.mxu0
        %v3628 = vpop.f32.mrf.mxu0
        %v3629 = vadd.f32 0.0, %v3628
        %v3630 = vpop.f32.mrf.mxu0
        %3631 = vmatprep.mubr.bf16.mxu0 0
        %3632 = vmatmul.mubr.bf16.gmra.mxu0 %v3203
        %v3633 = vpop.f32.mrf.mxu0
        %v3634 = vadd.f32 0.0, %v3633
        %v3635 = vpop.f32.mrf.mxu0
        %v3636 = vpop.f32.mrf.mxu0
        %v3637 = vadd.f32 0.0, %v3636
        %v3638 = vpop.f32.mrf.mxu0
        %3639 = vmatprep.mubr.bf16.mxu0 0
        %3640 = vmatmul.mubr.bf16.gmra.mxu0 %v3204
        %v3641 = vpop.f32.mrf.mxu0
        %v3642 = vadd.f32 0.0, %v3641
        %v3643 = vpop.f32.mrf.mxu0
        %v3644 = vpop.f32.mrf.mxu0
        %v3645 = vadd.f32 0.0, %v3644
        %v3646 = vpop.f32.mrf.mxu0
        %3647 = vmatprep.mubr.bf16.mxu0 0
        %3648 = vmatmul.mubr.bf16.gmra.mxu0 %v3205
        %v3649 = vpop.f32.mrf.mxu0
        %v3650 = vadd.f32 0.0, %v3649
        %v3651 = vpop.f32.mrf.mxu0
        %v3652 = vpop.f32.mrf.mxu0
        %v3653 = vadd.f32 0.0, %v3652
        %v3654 = vpop.f32.mrf.mxu0
        %3655 = vmatprep.mubr.bf16.mxu0 0
        %3656 = vmatmul.mubr.bf16.gmra.mxu0 %v3206
        %v3657 = vpop.f32.mrf.mxu0
        %v3658 = vadd.f32 0.0, %v3657
        %v3659 = vpop.f32.mrf.mxu0
        %v3660 = vpop.f32.mrf.mxu0
        %v3661 = vadd.f32 0.0, %v3660
        %v3662 = vpop.f32.mrf.mxu0
        %3663 = vmatprep.mubr.bf16.mxu0 0
        %3664 = vmatmul.mubr.bf16.gmra.mxu0 %v3207
        %v3665 = vpop.f32.mrf.mxu0
        %v3666 = vadd.f32 0.0, %v3665
        %v3667 = vpop.f32.mrf.mxu0
        %v3668 = vpop.f32.mrf.mxu0
        %v3669 = vadd.f32 0.0, %v3668
        %v3670 = vpop.f32.mrf.mxu0
        %3671 = vmatprep.mubr.bf16.mxu0 0
        %3672 = vmatmul.mubr.bf16.gmra.mxu0 %v3208
        %v3673 = vpop.f32.mrf.mxu0
        %v3674 = vadd.f32 0.0, %v3673
        %v3675 = vpop.f32.mrf.mxu0
        %v3676 = vpop.f32.mrf.mxu0
        %v3677 = vadd.f32 0.0, %v3676
        %v3678 = vpop.f32.mrf.mxu0
        %3679 = vmatprep.mubr.bf16.mxu0 0
        %3680 = vmatmul.mubr.bf16.gmra.mxu0 %v3209
        %v3681 = vpop.f32.mrf.mxu0
        %v3682 = vadd.f32 0.0, %v3681
        %v3683 = vpop.f32.mrf.mxu0
        %v3684 = vpop.f32.mrf.mxu0
        %v3685 = vadd.f32 0.0, %v3684
        %v3686 = vpop.f32.mrf.mxu0
        %3687 = vmatprep.mubr.bf16.mxu0 0
        %3688 = vmatmul.mubr.bf16.gmra.mxu0 %v3210
        %v3689 = vpop.f32.mrf.mxu0
        %v3690 = vadd.f32 0.0, %v3689
        %v3691 = vpop.f32.mrf.mxu0
        %v3692 = vpop.f32.mrf.mxu0
        %v3693 = vadd.f32 0.0, %v3692
        %v3694 = vpop.f32.mrf.mxu0
        %3695 = vmatprep.mubr.bf16.mxu0 0
        %3696 = vmatmul.mubr.bf16.gmra.mxu0 %v3211
        %v3697 = vpop.f32.mrf.mxu0
        %v3698 = vadd.f32 0.0, %v3697
        %v3699 = vpop.f32.mrf.mxu0
        %v3700 = vpop.f32.mrf.mxu0
        %v3701 = vadd.f32 0.0, %v3700
        %v3702 = vpop.f32.mrf.mxu0
        %3703 = vmatprep.mubr.bf16.mxu0 0
        %3704 = vmatmul.mubr.bf16.gmra.mxu0 %v3212
        %v3705 = vpop.f32.mrf.mxu0
        %v3706 = vadd.f32 0.0, %v3705
        %v3707 = vpop.f32.mrf.mxu0
        %v3708 = vpop.f32.mrf.mxu0
        %v3709 = vadd.f32 0.0, %v3708
        %v3710 = vpop.f32.mrf.mxu0
        %3711 = vmatprep.mubr.bf16.mxu0 0
        %3712 = vmatmul.mubr.bf16.gmra.mxu0 %v3213
        %v3713 = vpop.f32.mrf.mxu0
        %v3714 = vadd.f32 0.0, %v3713
        %v3715 = vpop.f32.mrf.mxu0
        %v3716 = vpop.f32.mrf.mxu0
        %v3717 = vadd.f32 0.0, %v3716
        %v3718 = vpop.f32.mrf.mxu0
        %3719 = vmatprep.mubr.bf16.mxu0 0
        %3720 = vmatmul.mubr.bf16.gmra.mxu0 %v3214
        %v3721 = vpop.f32.mrf.mxu0
        %v3722 = vadd.f32 0.0, %v3721
        %v3723 = vpop.f32.mrf.mxu0
        %v3724 = vpop.f32.mrf.mxu0
        %v3725 = vadd.f32 0.0, %v3724
        %v3726 = vpop.f32.mrf.mxu0
        %3727 = vmatprep.mubr.bf16.mxu0 0
        %3728 = vmatmul.mubr.bf16.gmra.mxu0 %v3215
        %v3729 = vpop.f32.mrf.mxu0
        %v3730 = vadd.f32 0.0, %v3729
        %v3731 = vpop.f32.mrf.mxu0
        %v3732 = vpop.f32.mrf.mxu0
        %v3733 = vadd.f32 0.0, %v3732
        %v3734 = vpop.f32.mrf.mxu0
        %3735 = vmatprep.mubr.bf16.mxu0 0
        %3736 = vmatmul.mubr.bf16.gmra.mxu0 %v3216
        %v3737 = vpop.f32.mrf.mxu0
        %v3738 = vadd.f32 0.0, %v3737
        %v3739 = vpop.f32.mrf.mxu0
        %v3740 = vpop.f32.mrf.mxu0
        %v3741 = vadd.f32 0.0, %v3740
        %v3742 = vpop.f32.mrf.mxu0
        %3743 = vmatprep.mubr.bf16.mxu0 0
        %3744 = vmatmul.mubr.bf16.gmra.mxu0 %v3217
        %v3745 = vpop.f32.mrf.mxu0
        %v3746 = vadd.f32 0.0, %v3745
        %v3747 = vpop.f32.mrf.mxu0
        %v3748 = vpop.f32.mrf.mxu0
        %v3749 = vadd.f32 0.0, %v3748
        %v3750 = vpop.f32.mrf.mxu0
        %3751 = vmatprep.mubr.bf16.mxu0 0
        %3752 = vmatmul.mubr.bf16.gmra.mxu0 %v3218
        %v3753 = vpop.f32.mrf.mxu0
        %v3754 = vadd.f32 0.0, %v3753
        %v3755 = vpop.f32.mrf.mxu0
        %v3756 = vpop.f32.mrf.mxu0
        %v3757 = vadd.f32 0.0, %v3756
        %v3758 = vpop.f32.mrf.mxu0
        %3759 = vmatprep.mubr.bf16.mxu0 0
        %3760 = vmatmul.mubr.bf16.gmra.mxu0 %v3219
        %v3761 = vpop.f32.mrf.mxu0
        %v3762 = vadd.f32 0.0, %v3761
        %v3763 = vpop.f32.mrf.mxu0
        %v3764 = vpop.f32.mrf.mxu0
        %v3765 = vadd.f32 0.0, %v3764
        %v3766 = vpop.f32.mrf.mxu0
        %3767 = vmatprep.mubr.bf16.mxu0 0
        %3768 = vmatmul.mubr.bf16.gmra.mxu0 %v3220
        %v3769 = vpop.f32.mrf.mxu0
        %v3770 = vadd.f32 0.0, %v3769
        %v3771 = vpop.f32.mrf.mxu0
        %v3772 = vpop.f32.mrf.mxu0
        %v3773 = vadd.f32 0.0, %v3772
        %v3774 = vpop.f32.mrf.mxu0
        %3775 = vmatprep.mubr.bf16.mxu0 0
        %3776 = vmatmul.mubr.bf16.gmra.mxu0 %v3221
        %v3777 = vpop.f32.mrf.mxu0
        %v3778 = vadd.f32 0.0, %v3777
        %v3779 = vpop.f32.mrf.mxu0
        %v3780 = vpop.f32.mrf.mxu0
        %v3781 = vadd.f32 0.0, %v3780
        %v3782 = vpop.f32.mrf.mxu0
        %3783 = vmatprep.mubr.bf16.mxu0 0
        %3784 = vmatmul.mubr.bf16.gmra.mxu0 %v3222
        %v3785 = vpop.f32.mrf.mxu0
        %v3786 = vadd.f32 0.0, %v3785
        %v3787 = vpop.f32.mrf.mxu0
        %v3788 = vpop.f32.mrf.mxu0
        %v3789 = vadd.f32 0.0, %v3788
        %v3790 = vpop.f32.mrf.mxu0
        %3791 = vdwg.mxu0
        %v3792 = vlaneseq
        %v3793 = vshrl.u32 %v3792, 7
        %v3794 = vsub.s32 2, %v3793
        %v3795 = vrot.slane %v575, %v3794
        %v3796 = vmul.f32 %v3282, %v3795
        %v3797 = vmul.f32 %v3285, %v3795
        %v3798 = vmul.f32 %v3290, %v3795
        %v3799 = vmul.f32 %v3293, %v3795
        %v3800 = vmul.f32 %v3298, %v3795
        %v3801 = vmul.f32 %v3301, %v3795
        %v3802 = vmul.f32 %v3306, %v3795
        %v3803 = vmul.f32 %v3309, %v3795
        %v3804 = vmul.f32 %v3314, %v3795
        %v3805 = vmul.f32 %v3317, %v3795
        %v3806 = vmul.f32 %v3322, %v3795
        %v3807 = vmul.f32 %v3325, %v3795
        %v3808 = vmul.f32 %v3330, %v3795
        %v3809 = vmul.f32 %v3333, %v3795
        %v3810 = vmul.f32 %v3338, %v3795
        %v3811 = vmul.f32 %v3341, %v3795
        %v3812 = vlaneseq
        %v3813 = vshrl.u32 %v3812, 7
        %v3814 = vsub.s32 3, %v3813
        %v3815 = vrot.slane %v575, %v3814
        %v3816 = vmul.f32 %v3346, %v3815
        %v3817 = vmul.f32 %v3349, %v3815
        %v3818 = vmul.f32 %v3354, %v3815
        %v3819 = vmul.f32 %v3357, %v3815
        %v3820 = vmul.f32 %v3362, %v3815
        %v3821 = vmul.f32 %v3365, %v3815
        %v3822 = vmul.f32 %v3370, %v3815
        %v3823 = vmul.f32 %v3373, %v3815
        %v3824 = vmul.f32 %v3378, %v3815
        %v3825 = vmul.f32 %v3381, %v3815
        %v3826 = vmul.f32 %v3386, %v3815
        %v3827 = vmul.f32 %v3389, %v3815
        %v3828 = vmul.f32 %v3394, %v3815
        %v3829 = vmul.f32 %v3397, %v3815
        %v3830 = vmul.f32 %v3402, %v3815
        %v3831 = vmul.f32 %v3405, %v3815
        %v3832 = vadd.f32 %v3796, %v3816
        %v3833 = vadd.f32 %v3797, %v3817
        %v3834 = vadd.f32 %v3798, %v3818
        %v3835 = vadd.f32 %v3799, %v3819
        %v3836 = vadd.f32 %v3800, %v3820
        %v3837 = vadd.f32 %v3801, %v3821
        %v3838 = vadd.f32 %v3802, %v3822
        %v3839 = vadd.f32 %v3803, %v3823
        %v3840 = vadd.f32 %v3804, %v3824
        %v3841 = vadd.f32 %v3805, %v3825
        %v3842 = vadd.f32 %v3806, %v3826
        %v3843 = vadd.f32 %v3807, %v3827
        %v3844 = vadd.f32 %v3808, %v3828
        %v3845 = vadd.f32 %v3809, %v3829
        %v3846 = vadd.f32 %v3810, %v3830
        %v3847 = vadd.f32 %v3811, %v3831
        %v3848 = vlaneseq
        %v3849 = vshrl.u32 %v3848, 7
        %v3850 = vsub.s32 4, %v3849
        %v3851 = vrot.slane %v575, %v3850
        %v3852 = vmul.f32 %v3410, %v3851
        %v3853 = vmul.f32 %v3413, %v3851
        %v3854 = vmul.f32 %v3418, %v3851
        %v3855 = vmul.f32 %v3421, %v3851
        %v3856 = vmul.f32 %v3426, %v3851
        %v3857 = vmul.f32 %v3429, %v3851
        %v3858 = vmul.f32 %v3434, %v3851
        %v3859 = vmul.f32 %v3437, %v3851
        %v3860 = vmul.f32 %v3442, %v3851
        %v3861 = vmul.f32 %v3445, %v3851
        %v3862 = vmul.f32 %v3450, %v3851
        %v3863 = vmul.f32 %v3453, %v3851
        %v3864 = vmul.f32 %v3458, %v3851
        %v3865 = vmul.f32 %v3461, %v3851
        %v3866 = vmul.f32 %v3466, %v3851
        %v3867 = vmul.f32 %v3469, %v3851
        %v3868 = vadd.f32 %v3832, %v3852
        %v3869 = vadd.f32 %v3833, %v3853
        %v3870 = vadd.f32 %v3834, %v3854
        %v3871 = vadd.f32 %v3835, %v3855
        %v3872 = vadd.f32 %v3836, %v3856
        %v3873 = vadd.f32 %v3837, %v3857
        %v3874 = vadd.f32 %v3838, %v3858
        %v3875 = vadd.f32 %v3839, %v3859
        %v3876 = vadd.f32 %v3840, %v3860
        %v3877 = vadd.f32 %v3841, %v3861
        %v3878 = vadd.f32 %v3842, %v3862
        %v3879 = vadd.f32 %v3843, %v3863
        %v3880 = vadd.f32 %v3844, %v3864
        %v3881 = vadd.f32 %v3845, %v3865
        %v3882 = vadd.f32 %v3846, %v3866
        %v3883 = vadd.f32 %v3847, %v3867
        %v3884 = vlaneseq
        %v3885 = vshrl.u32 %v3884, 7
        %v3886 = vsub.s32 5, %v3885
        %v3887 = vrot.slane %v575, %v3886
        %v3888 = vmul.f32 %v3474, %v3887
        %v3889 = vmul.f32 %v3477, %v3887
        %v3890 = vmul.f32 %v3482, %v3887
        %v3891 = vmul.f32 %v3485, %v3887
        %v3892 = vmul.f32 %v3490, %v3887
        %v3893 = vmul.f32 %v3493, %v3887
        %v3894 = vmul.f32 %v3498, %v3887
        %v3895 = vmul.f32 %v3501, %v3887
        %v3896 = vmul.f32 %v3506, %v3887
        %v3897 = vmul.f32 %v3509, %v3887
        %v3898 = vmul.f32 %v3514, %v3887
        %v3899 = vmul.f32 %v3517, %v3887
        %v3900 = vmul.f32 %v3522, %v3887
        %v3901 = vmul.f32 %v3525, %v3887
        %v3902 = vmul.f32 %v3530, %v3887
        %v3903 = vmul.f32 %v3533, %v3887
        %v3904 = vadd.f32 %v3868, %v3888
        %v3905 = vadd.f32 %v3869, %v3889
        %v3906 = vadd.f32 %v3870, %v3890
        %v3907 = vadd.f32 %v3871, %v3891
        %v3908 = vadd.f32 %v3872, %v3892
        %v3909 = vadd.f32 %v3873, %v3893
        %v3910 = vadd.f32 %v3874, %v3894
        %v3911 = vadd.f32 %v3875, %v3895
        %v3912 = vadd.f32 %v3876, %v3896
        %v3913 = vadd.f32 %v3877, %v3897
        %v3914 = vadd.f32 %v3878, %v3898
        %v3915 = vadd.f32 %v3879, %v3899
        %v3916 = vadd.f32 %v3880, %v3900
        %v3917 = vadd.f32 %v3881, %v3901
        %v3918 = vadd.f32 %v3882, %v3902
        %v3919 = vadd.f32 %v3883, %v3903
        %v3920 = vlaneseq
        %v3921 = vshrl.u32 %v3920, 7
        %v3922 = vsub.s32 6, %v3921
        %v3923 = vrot.slane %v575, %v3922
        %v3924 = vmul.f32 %v3538, %v3923
        %v3925 = vmul.f32 %v3541, %v3923
        %v3926 = vmul.f32 %v3546, %v3923
        %v3927 = vmul.f32 %v3549, %v3923
        %v3928 = vmul.f32 %v3554, %v3923
        %v3929 = vmul.f32 %v3557, %v3923
        %v3930 = vmul.f32 %v3562, %v3923
        %v3931 = vmul.f32 %v3565, %v3923
        %v3932 = vmul.f32 %v3570, %v3923
        %v3933 = vmul.f32 %v3573, %v3923
        %v3934 = vmul.f32 %v3578, %v3923
        %v3935 = vmul.f32 %v3581, %v3923
        %v3936 = vmul.f32 %v3586, %v3923
        %v3937 = vmul.f32 %v3589, %v3923
        %v3938 = vmul.f32 %v3594, %v3923
        %v3939 = vmul.f32 %v3597, %v3923
        %v3940 = vadd.f32 %v3904, %v3924
        %v3941 = vadd.f32 %v3905, %v3925
        %v3942 = vadd.f32 %v3906, %v3926
        %v3943 = vadd.f32 %v3907, %v3927
        %v3944 = vadd.f32 %v3908, %v3928
        %v3945 = vadd.f32 %v3909, %v3929
        %v3946 = vadd.f32 %v3910, %v3930
        %v3947 = vadd.f32 %v3911, %v3931
        %v3948 = vadd.f32 %v3912, %v3932
        %v3949 = vadd.f32 %v3913, %v3933
        %v3950 = vadd.f32 %v3914, %v3934
        %v3951 = vadd.f32 %v3915, %v3935
        %v3952 = vadd.f32 %v3916, %v3936
        %v3953 = vadd.f32 %v3917, %v3937
        %v3954 = vadd.f32 %v3918, %v3938
        %v3955 = vadd.f32 %v3919, %v3939
        %v3956 = vlaneseq
        %v3957 = vshrl.u32 %v3956, 7
        %v3958 = vsub.s32 7, %v3957
        %v3959 = vrot.slane %v575, %v3958
        %v3960 = vmul.f32 %v3602, %v3959
        %v3961 = vmul.f32 %v3605, %v3959
        %v3962 = vmul.f32 %v3610, %v3959
        %v3963 = vmul.f32 %v3613, %v3959
        %v3964 = vmul.f32 %v3618, %v3959
        %v3965 = vmul.f32 %v3621, %v3959
        %v3966 = vmul.f32 %v3626, %v3959
        %v3967 = vmul.f32 %v3629, %v3959
        %v3968 = vmul.f32 %v3634, %v3959
        %v3969 = vmul.f32 %v3637, %v3959
        %v3970 = vmul.f32 %v3642, %v3959
        %v3971 = vmul.f32 %v3645, %v3959
        %v3972 = vmul.f32 %v3650, %v3959
        %v3973 = vmul.f32 %v3653, %v3959
        %v3974 = vmul.f32 %v3658, %v3959
        %v3975 = vmul.f32 %v3661, %v3959
        %v3976 = vadd.f32 %v3940, %v3960
        %v3977 = vadd.f32 %v3941, %v3961
        %v3978 = vadd.f32 %v3942, %v3962
        %v3979 = vadd.f32 %v3943, %v3963
        %v3980 = vadd.f32 %v3944, %v3964
        %v3981 = vadd.f32 %v3945, %v3965
        %v3982 = vadd.f32 %v3946, %v3966
        %v3983 = vadd.f32 %v3947, %v3967
        %v3984 = vadd.f32 %v3948, %v3968
        %v3985 = vadd.f32 %v3949, %v3969
        %v3986 = vadd.f32 %v3950, %v3970
        %v3987 = vadd.f32 %v3951, %v3971
        %v3988 = vadd.f32 %v3952, %v3972
        %v3989 = vadd.f32 %v3953, %v3973
        %v3990 = vadd.f32 %v3954, %v3974
        %v3991 = vadd.f32 %v3955, %v3975
        %v3992 = vlaneseq
        %v3993 = vshrl.u32 %v3992, 7
        %v3994 = vsub.s32 0, %v3993
        %v3995 = vrot.slane %v576, %v3994
        %v3996 = vmul.f32 %v3666, %v3995
        %v3997 = vmul.f32 %v3669, %v3995
        %v3998 = vmul.f32 %v3674, %v3995
        %v3999 = vmul.f32 %v3677, %v3995
        %v4000 = vmul.f32 %v3682, %v3995
        %v4001 = vmul.f32 %v3685, %v3995
        %v4002 = vmul.f32 %v3690, %v3995
        %v4003 = vmul.f32 %v3693, %v3995
        %v4004 = vmul.f32 %v3698, %v3995
        %v4005 = vmul.f32 %v3701, %v3995
        %v4006 = vmul.f32 %v3706, %v3995
        %v4007 = vmul.f32 %v3709, %v3995
        %v4008 = vmul.f32 %v3714, %v3995
        %v4009 = vmul.f32 %v3717, %v3995
        %v4010 = vmul.f32 %v3722, %v3995
        %v4011 = vmul.f32 %v3725, %v3995
        %v4012 = vadd.f32 %v3976, %v3996
        %v4013 = vadd.f32 %v3977, %v3997
        %v4014 = vadd.f32 %v3978, %v3998
        %v4015 = vadd.f32 %v3979, %v3999
        %v4016 = vadd.f32 %v3980, %v4000
        %v4017 = vadd.f32 %v3981, %v4001
        %v4018 = vadd.f32 %v3982, %v4002
        %v4019 = vadd.f32 %v3983, %v4003
        %v4020 = vadd.f32 %v3984, %v4004
        %v4021 = vadd.f32 %v3985, %v4005
        %v4022 = vadd.f32 %v3986, %v4006
        %v4023 = vadd.f32 %v3987, %v4007
        %v4024 = vadd.f32 %v3988, %v4008
        %v4025 = vadd.f32 %v3989, %v4009
        %v4026 = vadd.f32 %v3990, %v4010
        %v4027 = vadd.f32 %v3991, %v4011
        %v4028 = vlaneseq
        %v4029 = vshrl.u32 %v4028, 7
        %v4030 = vsub.s32 1, %v4029
        %v4031 = vrot.slane %v576, %v4030
        %v4032 = vmul.f32 %v3730, %v4031
        %v4033 = vmul.f32 %v3733, %v4031
        %v4034 = vmul.f32 %v3738, %v4031
        %v4035 = vmul.f32 %v3741, %v4031
        %v4036 = vmul.f32 %v3746, %v4031
        %v4037 = vmul.f32 %v3749, %v4031
        %v4038 = vmul.f32 %v3754, %v4031
        %v4039 = vmul.f32 %v3757, %v4031
        %v4040 = vmul.f32 %v3762, %v4031
        %v4041 = vmul.f32 %v3765, %v4031
        %v4042 = vmul.f32 %v3770, %v4031
        %v4043 = vmul.f32 %v3773, %v4031
        %v4044 = vmul.f32 %v3778, %v4031
        %v4045 = vmul.f32 %v3781, %v4031
        %v4046 = vmul.f32 %v3786, %v4031
        %v4047 = vmul.f32 %v3789, %v4031
        %v4048 = vadd.f32 %v4012, %v4032
        %v4049 = vadd.f32 %v4013, %v4033
        %v4050 = vadd.f32 %v4014, %v4034
        %v4051 = vadd.f32 %v4015, %v4035
        %v4052 = vadd.f32 %v4016, %v4036
        %v4053 = vadd.f32 %v4017, %v4037
        %v4054 = vadd.f32 %v4018, %v4038
        %v4055 = vadd.f32 %v4019, %v4039
        %v4056 = vadd.f32 %v4020, %v4040
        %v4057 = vadd.f32 %v4021, %v4041
        %v4058 = vadd.f32 %v4022, %v4042
        %v4059 = vadd.f32 %v4023, %v4043
        %v4060 = vadd.f32 %v4024, %v4044
        %v4061 = vadd.f32 %v4025, %v4045
        %v4062 = vadd.f32 %v4026, %v4046
        %v4063 = vadd.f32 %v4027, %v4047
        %v4064 = vpack.c.bf16 %v4049, %v4048
        %v4065 = vpack.c.bf16 %v4051, %v4050
        %v4066 = vpack.c.bf16 %v4053, %v4052
        %v4067 = vpack.c.bf16 %v4055, %v4054
        %v4068 = vpack.c.bf16 %v4057, %v4056
        %v4069 = vpack.c.bf16 %v4059, %v4058
        %v4070 = vpack.c.bf16 %v4061, %v4060
        %v4071 = vpack.c.bf16 %v4063, %v4062
        %v4072 = vld [vmem:[%s3] sm:$0xf]
        %v4073 = vld [vmem:[%s3 + $0x4] sm:$0xf]
        %v4074 = vld [vmem:[%s3 + $0x8] sm:$0xf]
        %v4075 = vld [vmem:[%s3 + $0xc] sm:$0xf]
        %v4076 = vlaneseq
        %v4077 = vshrl.u32 %v4076, 7
        %v4078 = vsub.s32 6, %v4077
        %v4079 = vrot.slane %v574, %v4078
        %v4084 = vunpack.c.l.b16 %v4072
        %v4085 = vunpack.c.l.b16 %v4073
        %v4086 = vunpack.c.l.b16 %v4074
        %v4087 = vunpack.c.l.b16 %v4075
        %v4088 = vpack.c.b16 %v4085, %v4084
        %v4089 = vpack.c.b16 %v4087, %v4086
        %v4093 = vsel %vm579, %v4064, 0
        %v4096 = vsel %vm579, %v4065, 0
        %v4099 = vsel %vm579, %v4066, 0
        %v4102 = vsel %vm579, %v4067, 0
        %v4105 = vsel %vm579, %v4068, 0
        %v4108 = vsel %vm579, %v4069, 0
        %v4111 = vsel %vm579, %v4070, 0
        %v4114 = vsel %vm579, %v4071, 0
        %4116 = vmatprep.subr.bf16.mxu0 0
        %4117 = vmatpush1.bf16.msra.mxu0 0
        %4118 = vmatprep.subr.bf16.mxu0 0
        %4119 = vmatpush1.bf16.msra.mxu0 0
        %4120 = vmatprep.subr.bf16.mxu0 0
        %4121 = vmatpush1.bf16.msra.mxu0 0
        %4122 = vmatprep.subr.bf16.mxu0 0
        %4123 = vmatpush1.bf16.msra.mxu0 0
        %4124 = vmatprep.subr.bf16.mxu0 0
        %4125 = vmatpush1.bf16.msra.mxu0 0
        %4126 = vmatprep.subr.bf16.mxu0 0
        %4127 = vmatpush1.bf16.msra.mxu0 0
        %4128 = vmatprep.subr.bf16.mxu0 0
        %4129 = vmatpush1.bf16.msra.mxu0 %v4089
        %4130 = vmatprep.subr.bf16.mxu0 0
        %4131 = vmatpush1.bf16.msra.mxu0 %v4088
        %4132 = vmatprep.subr.bf16.mxu0 0
        %4133 = vmatpush2.bf16.msra.mxu0 0
        %4134 = vmatprep.subr.bf16.mxu0 0
        %4135 = vmatpush2.bf16.msra.mxu0 0
        %4136 = vmatprep.subr.bf16.mxu0 0
        %4137 = vmatpush2.bf16.msra.mxu0 0
        %4138 = vmatprep.subr.bf16.mxu0 0
        %4139 = vmatpush2.bf16.msra.mxu0 0
        %4140 = vmatprep.subr.bf16.mxu0 0
        %4141 = vmatpush2.bf16.msra.mxu0 0
        %4142 = vmatprep.subr.bf16.mxu0 0
        %4143 = vmatpush2.bf16.msra.mxu0 0
        %4144 = vmatprep.subr.bf16.mxu0 0
        %4145 = vmatpush2.bf16.msra.mxu0 0
        %4146 = vmatprep.subr.bf16.mxu0 0
        %4147 = vmatpush2.bf16.msra.mxu0 0
        %4148 = vmatprep.mubr.bf16.mxu0 0
        %4149 = vmatmul.mubr.bf16.gmra.mxu0 %v4093
        %v4150 = vpop.f32.mrf.mxu0
        %v4151 = vadd.f32 %v4079, %v4150
        %v4152 = vpop.f32.mrf.mxu0
        %v4153 = vpop.f32.mrf.mxu0
        %v4154 = vadd.f32 %v4079, %v4153
        %v4155 = vpop.f32.mrf.mxu0
        %4156 = vmatprep.mubr.bf16.mxu0 0
        %4157 = vmatmul.mubr.bf16.gmra.mxu0 %v4096
        %v4158 = vpop.f32.mrf.mxu0
        %v4159 = vadd.f32 %v4079, %v4158
        %v4160 = vpop.f32.mrf.mxu0
        %v4161 = vpop.f32.mrf.mxu0
        %v4162 = vadd.f32 %v4079, %v4161
        %v4163 = vpop.f32.mrf.mxu0
        %4164 = vmatprep.mubr.bf16.mxu0 0
        %4165 = vmatmul.mubr.bf16.gmra.mxu0 %v4099
        %v4166 = vpop.f32.mrf.mxu0
        %v4167 = vadd.f32 %v4079, %v4166
        %v4168 = vpop.f32.mrf.mxu0
        %v4169 = vpop.f32.mrf.mxu0
        %v4170 = vadd.f32 %v4079, %v4169
        %v4171 = vpop.f32.mrf.mxu0
        %4172 = vmatprep.mubr.bf16.mxu0 0
        %4173 = vmatmul.mubr.bf16.gmra.mxu0 %v4102
        %v4174 = vpop.f32.mrf.mxu0
        %v4175 = vadd.f32 %v4079, %v4174
        %v4176 = vpop.f32.mrf.mxu0
        %v4177 = vpop.f32.mrf.mxu0
        %v4178 = vadd.f32 %v4079, %v4177
        %v4179 = vpop.f32.mrf.mxu0
        %4180 = vmatprep.mubr.bf16.mxu0 0
        %4181 = vmatmul.mubr.bf16.gmra.mxu0 %v4105
        %v4182 = vpop.f32.mrf.mxu0
        %v4183 = vadd.f32 %v4079, %v4182
        %v4184 = vpop.f32.mrf.mxu0
        %v4185 = vpop.f32.mrf.mxu0
        %v4186 = vadd.f32 %v4079, %v4185
        %v4187 = vpop.f32.mrf.mxu0
        %4188 = vmatprep.mubr.bf16.mxu0 0
        %4189 = vmatmul.mubr.bf16.gmra.mxu0 %v4108
        %v4190 = vpop.f32.mrf.mxu0
        %v4191 = vadd.f32 %v4079, %v4190
        %v4192 = vpop.f32.mrf.mxu0
        %v4193 = vpop.f32.mrf.mxu0
        %v4194 = vadd.f32 %v4079, %v4193
        %v4195 = vpop.f32.mrf.mxu0
        %4196 = vmatprep.mubr.bf16.mxu0 0
        %4197 = vmatmul.mubr.bf16.gmra.mxu0 %v4111
        %v4198 = vpop.f32.mrf.mxu0
        %v4199 = vadd.f32 %v4079, %v4198
        %v4200 = vpop.f32.mrf.mxu0
        %v4201 = vpop.f32.mrf.mxu0
        %v4202 = vadd.f32 %v4079, %v4201
        %v4203 = vpop.f32.mrf.mxu0
        %4204 = vmatprep.mubr.bf16.mxu0 0
        %4205 = vmatmul.mubr.bf16.gmra.mxu0 %v4114
        %v4206 = vpop.f32.mrf.mxu0
        %v4207 = vadd.f32 %v4079, %v4206
        %v4208 = vpop.f32.mrf.mxu0
        %v4209 = vpop.f32.mrf.mxu0
        %v4210 = vadd.f32 %v4079, %v4209
        %v4211 = vpop.f32.mrf.mxu0
        %4212 = vdwg.mxu0
        %v4213 = vlaneseq
        %v4214 = vshrl.u32 %v4213, 7
        %v4215 = vsub.s32 2, %v4214
        %v4216 = vrot.slane %v574, %v4215
        %v4217 = vmul.f32 %v4216, %v4151
        %v4218 = vmul.f32 %v4216, %v4154
        %v4219 = vmul.f32 %v4216, %v4159
        %v4220 = vmul.f32 %v4216, %v4162
        %v4221 = vmul.f32 %v4216, %v4167
        %v4222 = vmul.f32 %v4216, %v4170
        %v4223 = vmul.f32 %v4216, %v4175
        %v4224 = vmul.f32 %v4216, %v4178
        %v4225 = vmul.f32 %v4216, %v4183
        %v4226 = vmul.f32 %v4216, %v4186
        %v4227 = vmul.f32 %v4216, %v4191
        %v4228 = vmul.f32 %v4216, %v4194
        %v4229 = vmul.f32 %v4216, %v4199
        %v4230 = vmul.f32 %v4216, %v4202
        %v4231 = vmul.f32 %v4216, %v4207
        %v4232 = vmul.f32 %v4216, %v4210
        %v4233 = vadd.f32 %v813, %v4217
        %v4234 = vadd.f32 %v814, %v4218
        %v4235 = vadd.f32 %v815, %v4219
        %v4236 = vadd.f32 %v816, %v4220
        %v4237 = vadd.f32 %v817, %v4221
        %v4238 = vadd.f32 %v818, %v4222
        %v4239 = vadd.f32 %v819, %v4223
        %v4240 = vadd.f32 %v820, %v4224
        %v4241 = vadd.f32 %v821, %v4225
        %v4242 = vadd.f32 %v822, %v4226
        %v4243 = vadd.f32 %v823, %v4227
        %v4244 = vadd.f32 %v824, %v4228
        %v4245 = vadd.f32 %v825, %v4229
        %v4246 = vadd.f32 %v826, %v4230
        %v4247 = vadd.f32 %v827, %v4231
        %v4248 = vadd.f32 %v828, %v4232
        %v4249 = vsel %vm579, %v4233, 0.0
        %4250 = vadd.xlane.f32.xlu0 %v4249
        %v4251 = vpop.xlane.xlu0 %4250
        %v4252 = vsel %vm579, %v4234, 0.0
        %4253 = vadd.xlane.f32.xlu0 %v4252
        %v4254 = vpop.xlane.xlu0 %4253
        %v4255 = vsel %vm579, %v4235, 0.0
        %4256 = vadd.xlane.f32.xlu0 %v4255
        %v4257 = vpop.xlane.xlu0 %4256
        %v4258 = vsel %vm579, %v4236, 0.0
        %4259 = vadd.xlane.f32.xlu0 %v4258
        %v4260 = vpop.xlane.xlu0 %4259
        %v4261 = vsel %vm579, %v4237, 0.0
        %4262 = vadd.xlane.f32.xlu0 %v4261
        %v4263 = vpop.xlane.xlu0 %4262
        %v4264 = vsel %vm579, %v4238, 0.0
        %4265 = vadd.xlane.f32.xlu0 %v4264
        %v4266 = vpop.xlane.xlu0 %4265
        %v4267 = vsel %vm579, %v4239, 0.0
        %4268 = vadd.xlane.f32.xlu0 %v4267
        %v4269 = vpop.xlane.xlu0 %4268
        %v4270 = vsel %vm579, %v4240, 0.0
        %4271 = vadd.xlane.f32.xlu0 %v4270
        %v4272 = vpop.xlane.xlu0 %4271
        %v4273 = vsel %vm579, %v4241, 0.0
        %4274 = vadd.xlane.f32.xlu0 %v4273
        %v4275 = vpop.xlane.xlu0 %4274
        %v4276 = vsel %vm579, %v4242, 0.0
        %4277 = vadd.xlane.f32.xlu0 %v4276
        %v4278 = vpop.xlane.xlu0 %4277
        %v4279 = vsel %vm579, %v4243, 0.0
        %4280 = vadd.xlane.f32.xlu0 %v4279
        %v4281 = vpop.xlane.xlu0 %4280
        %v4282 = vsel %vm579, %v4244, 0.0
        %4283 = vadd.xlane.f32.xlu0 %v4282
        %v4284 = vpop.xlane.xlu0 %4283
        %v4285 = vsel %vm579, %v4245, 0.0
        %4286 = vadd.xlane.f32.xlu0 %v4285
        %v4287 = vpop.xlane.xlu0 %4286
        %v4288 = vsel %vm579, %v4246, 0.0
        %4289 = vadd.xlane.f32.xlu0 %v4288
        %v4290 = vpop.xlane.xlu0 %4289
        %v4291 = vsel %vm579, %v4247, 0.0
        %4292 = vadd.xlane.f32.xlu0 %v4291
        %v4293 = vpop.xlane.xlu0 %4292
        %v4294 = vsel %vm579, %v4248, 0.0
        %4295 = vadd.xlane.f32.xlu0 %v4294
        %v4296 = vpop.xlane.xlu0 %4295
        %v4297 = vmul.f32 %v4251, %v628
        %v4298 = vmul.f32 %v4254, %v628
        %v4299 = vmul.f32 %v4257, %v628
        %v4300 = vmul.f32 %v4260, %v628
        %v4301 = vmul.f32 %v4263, %v628
        %v4302 = vmul.f32 %v4266, %v628
        %v4303 = vmul.f32 %v4269, %v628
        %v4304 = vmul.f32 %v4272, %v628
        %v4305 = vmul.f32 %v4275, %v628
        %v4306 = vmul.f32 %v4278, %v628
        %v4307 = vmul.f32 %v4281, %v628
        %v4308 = vmul.f32 %v4284, %v628
        %v4309 = vmul.f32 %v4287, %v628
        %v4310 = vmul.f32 %v4290, %v628
        %v4311 = vmul.f32 %v4293, %v628
        %v4312 = vmul.f32 %v4296, %v628
        %v4313 = vsub.f32 %v4233, %v4297
        %v4314 = vsub.f32 %v4234, %v4298
        %v4315 = vsub.f32 %v4235, %v4299
        %v4316 = vsub.f32 %v4236, %v4300
        %v4317 = vsub.f32 %v4237, %v4301
        %v4318 = vsub.f32 %v4238, %v4302
        %v4319 = vsub.f32 %v4239, %v4303
        %v4320 = vsub.f32 %v4240, %v4304
        %v4321 = vsub.f32 %v4241, %v4305
        %v4322 = vsub.f32 %v4242, %v4306
        %v4323 = vsub.f32 %v4243, %v4307
        %v4324 = vsub.f32 %v4244, %v4308
        %v4325 = vsub.f32 %v4245, %v4309
        %v4326 = vsub.f32 %v4246, %v4310
        %v4327 = vsub.f32 %v4247, %v4311
        %v4328 = vsub.f32 %v4248, %v4312
        %v4329 = vmul.f32 %v4313, %v4313
        %v4330 = vmul.f32 %v4314, %v4314
        %v4331 = vmul.f32 %v4315, %v4315
        %v4332 = vmul.f32 %v4316, %v4316
        %v4333 = vmul.f32 %v4317, %v4317
        %v4334 = vmul.f32 %v4318, %v4318
        %v4335 = vmul.f32 %v4319, %v4319
        %v4336 = vmul.f32 %v4320, %v4320
        %v4337 = vmul.f32 %v4321, %v4321
        %v4338 = vmul.f32 %v4322, %v4322
        %v4339 = vmul.f32 %v4323, %v4323
        %v4340 = vmul.f32 %v4324, %v4324
        %v4341 = vmul.f32 %v4325, %v4325
        %v4342 = vmul.f32 %v4326, %v4326
        %v4343 = vmul.f32 %v4327, %v4327
        %v4344 = vmul.f32 %v4328, %v4328
        %v4345 = vsel %vm579, %v4329, 0.0
        %4346 = vadd.xlane.f32.xlu0 %v4345
        %v4347 = vpop.xlane.xlu0 %4346
        %v4348 = vsel %vm579, %v4330, 0.0
        %4349 = vadd.xlane.f32.xlu0 %v4348
        %v4350 = vpop.xlane.xlu0 %4349
        %v4351 = vsel %vm579, %v4331, 0.0
        %4352 = vadd.xlane.f32.xlu0 %v4351
        %v4353 = vpop.xlane.xlu0 %4352
        %v4354 = vsel %vm579, %v4332, 0.0
        %4355 = vadd.xlane.f32.xlu0 %v4354
        %v4356 = vpop.xlane.xlu0 %4355
        %v4357 = vsel %vm579, %v4333, 0.0
        %4358 = vadd.xlane.f32.xlu0 %v4357
        %v4359 = vpop.xlane.xlu0 %4358
        %v4360 = vsel %vm579, %v4334, 0.0
        %4361 = vadd.xlane.f32.xlu0 %v4360
        %v4362 = vpop.xlane.xlu0 %4361
        %v4363 = vsel %vm579, %v4335, 0.0
        %4364 = vadd.xlane.f32.xlu0 %v4363
        %v4365 = vpop.xlane.xlu0 %4364
        %v4366 = vsel %vm579, %v4336, 0.0
        %4367 = vadd.xlane.f32.xlu0 %v4366
        %v4368 = vpop.xlane.xlu0 %4367
        %v4369 = vsel %vm579, %v4337, 0.0
        %4370 = vadd.xlane.f32.xlu0 %v4369
        %v4371 = vpop.xlane.xlu0 %4370
        %v4372 = vsel %vm579, %v4338, 0.0
        %4373 = vadd.xlane.f32.xlu0 %v4372
        %v4374 = vpop.xlane.xlu0 %4373
        %v4375 = vsel %vm579, %v4339, 0.0
        %4376 = vadd.xlane.f32.xlu0 %v4375
        %v4377 = vpop.xlane.xlu0 %4376
        %v4378 = vsel %vm579, %v4340, 0.0
        %4379 = vadd.xlane.f32.xlu0 %v4378
        %v4380 = vpop.xlane.xlu0 %4379
        %v4381 = vsel %vm579, %v4341, 0.0
        %4382 = vadd.xlane.f32.xlu0 %v4381
        %v4383 = vpop.xlane.xlu0 %4382
        %v4384 = vsel %vm579, %v4342, 0.0
        %4385 = vadd.xlane.f32.xlu0 %v4384
        %v4386 = vpop.xlane.xlu0 %4385
        %v4387 = vsel %vm579, %v4343, 0.0
        %4388 = vadd.xlane.f32.xlu0 %v4387
        %v4389 = vpop.xlane.xlu0 %4388
        %v4390 = vsel %vm579, %v4344, 0.0
        %4391 = vadd.xlane.f32.xlu0 %v4390
        %v4392 = vpop.xlane.xlu0 %4391
        %v4393 = vmul.f32 %v4347, %v628
        %v4394 = vmul.f32 %v4350, %v628
        %v4395 = vmul.f32 %v4353, %v628
        %v4396 = vmul.f32 %v4356, %v628
        %v4397 = vmul.f32 %v4359, %v628
        %v4398 = vmul.f32 %v4362, %v628
        %v4399 = vmul.f32 %v4365, %v628
        %v4400 = vmul.f32 %v4368, %v628
        %v4401 = vmul.f32 %v4371, %v628
        %v4402 = vmul.f32 %v4374, %v628
        %v4403 = vmul.f32 %v4377, %v628
        %v4404 = vmul.f32 %v4380, %v628
        %v4405 = vmul.f32 %v4383, %v628
        %v4406 = vmul.f32 %v4386, %v628
        %v4407 = vmul.f32 %v4389, %v628
        %v4408 = vmul.f32 %v4392, %v628
        %v4409 = vadd.f32 %v4393, 1e-05
        %v4410 = vadd.f32 %v4394, 1e-05
        %v4411 = vadd.f32 %v4395, 1e-05
        %v4412 = vadd.f32 %v4396, 1e-05
        %v4413 = vadd.f32 %v4397, 1e-05
        %v4414 = vadd.f32 %v4398, 1e-05
        %v4415 = vadd.f32 %v4399, 1e-05
        %v4416 = vadd.f32 %v4400, 1e-05
        %v4417 = vadd.f32 %v4401, 1e-05
        %v4418 = vadd.f32 %v4402, 1e-05
        %v4419 = vadd.f32 %v4403, 1e-05
        %v4420 = vadd.f32 %v4404, 1e-05
        %v4421 = vadd.f32 %v4405, 1e-05
        %v4422 = vadd.f32 %v4406, 1e-05
        %v4423 = vadd.f32 %v4407, 1e-05
        %v4424 = vadd.f32 %v4408, 1e-05
        %v4425 = vrsqrt.pop %v4409
        %v4426 = vrsqrt.pop %v4410
        %v4427 = vrsqrt.pop %v4411
        %v4428 = vrsqrt.pop %v4412
        %v4429 = vrsqrt.pop %v4413
        %v4430 = vrsqrt.pop %v4414
        %v4431 = vrsqrt.pop %v4415
        %v4432 = vrsqrt.pop %v4416
        %v4433 = vrsqrt.pop %v4417
        %v4434 = vrsqrt.pop %v4418
        %v4435 = vrsqrt.pop %v4419
        %v4436 = vrsqrt.pop %v4420
        %v4437 = vrsqrt.pop %v4421
        %v4438 = vrsqrt.pop %v4422
        %v4439 = vrsqrt.pop %v4423
        %v4440 = vrsqrt.pop %v4424
        %v4441 = vmul.f32 %v4313, %v4425
        %v4442 = vmul.f32 %v4314, %v4426
        %v4443 = vmul.f32 %v4315, %v4427
        %v4444 = vmul.f32 %v4316, %v4428
        %v4445 = vmul.f32 %v4317, %v4429
        %v4446 = vmul.f32 %v4318, %v4430
        %v4447 = vmul.f32 %v4319, %v4431
        %v4448 = vmul.f32 %v4320, %v4432
        %v4449 = vmul.f32 %v4321, %v4433
        %v4450 = vmul.f32 %v4322, %v4434
        %v4451 = vmul.f32 %v4323, %v4435
        %v4452 = vmul.f32 %v4324, %v4436
        %v4453 = vmul.f32 %v4325, %v4437
        %v4454 = vmul.f32 %v4326, %v4438
        %v4455 = vmul.f32 %v4327, %v4439
        %v4456 = vmul.f32 %v4328, %v4440
        %v4457 = vlaneseq
        %v4458 = vshrl.u32 %v4457, 7
        %v4459 = vsub.s32 3, %v4458
        %v4460 = vrot.slane %v574, %v4459
        %v4461 = vmul.f32 %v4441, %v4460
        %v4462 = vmul.f32 %v4442, %v4460
        %v4463 = vmul.f32 %v4443, %v4460
        %v4464 = vmul.f32 %v4444, %v4460
        %v4465 = vmul.f32 %v4445, %v4460
        %v4466 = vmul.f32 %v4446, %v4460
        %v4467 = vmul.f32 %v4447, %v4460
        %v4468 = vmul.f32 %v4448, %v4460
        %v4469 = vmul.f32 %v4449, %v4460
        %v4470 = vmul.f32 %v4450, %v4460
        %v4471 = vmul.f32 %v4451, %v4460
        %v4472 = vmul.f32 %v4452, %v4460
        %v4473 = vmul.f32 %v4453, %v4460
        %v4474 = vmul.f32 %v4454, %v4460
        %v4475 = vmul.f32 %v4455, %v4460
        %v4476 = vmul.f32 %v4456, %v4460
        %v4477 = vlaneseq
        %v4478 = vshrl.u32 %v4477, 7
        %v4479 = vsub.s32 4, %v4478
        %v4480 = vrot.slane %v574, %v4479
        %v4481 = vadd.f32 %v4461, %v4480
        %v4482 = vadd.f32 %v4462, %v4480
        %v4483 = vadd.f32 %v4463, %v4480
        %v4484 = vadd.f32 %v4464, %v4480
        %v4485 = vadd.f32 %v4465, %v4480
        %v4486 = vadd.f32 %v4466, %v4480
        %v4487 = vadd.f32 %v4467, %v4480
        %v4488 = vadd.f32 %v4468, %v4480
        %v4489 = vadd.f32 %v4469, %v4480
        %v4490 = vadd.f32 %v4470, %v4480
        %v4491 = vadd.f32 %v4471, %v4480
        %v4492 = vadd.f32 %v4472, %v4480
        %v4493 = vadd.f32 %v4473, %v4480
        %v4494 = vadd.f32 %v4474, %v4480
        %v4495 = vadd.f32 %v4475, %v4480
        %v4496 = vadd.f32 %v4476, %v4480
        %v4497 = vpack.c.bf16 %v4482, %v4481
        %v4498 = vpack.c.bf16 %v4484, %v4483
        %v4499 = vpack.c.bf16 %v4486, %v4485
        %v4500 = vpack.c.bf16 %v4488, %v4487
        %v4501 = vpack.c.bf16 %v4490, %v4489
        %v4502 = vpack.c.bf16 %v4492, %v4491
        %v4503 = vpack.c.bf16 %v4494, %v4493
        %v4504 = vpack.c.bf16 %v4496, %v4495
        %v4505 = vld [vmem:[%s4] sm:$0xf]
        %v4506 = vld [vmem:[%s4 + $0x4] sm:$0xf]
        %v4507 = vld [vmem:[%s4 + $0x8] sm:$0xf]
        %v4508 = vld [vmem:[%s4 + $0xc] sm:$0xf]
        %v4509 = vlaneseq
        %v4510 = vshrl.u32 %v4509, 7
        %v4511 = vsub.s32 0, %v4510
        %v4512 = vrot.slane %v575, %v4511
        %v4517 = vunpack.c.l.b16 %v4505
        %v4518 = vunpack.c.l.b16 %v4506
        %v4519 = vunpack.c.l.b16 %v4507
        %v4520 = vunpack.c.l.b16 %v4508
        %v4521 = vpack.c.b16 %v4518, %v4517
        %v4522 = vpack.c.b16 %v4520, %v4519
        %v4526 = vsel %vm579, %v4497, 0
        %v4529 = vsel %vm579, %v4498, 0
        %v4532 = vsel %vm579, %v4499, 0
        %v4535 = vsel %vm579, %v4500, 0
        %v4538 = vsel %vm579, %v4501, 0
        %v4541 = vsel %vm579, %v4502, 0
        %v4544 = vsel %vm579, %v4503, 0
        %v4547 = vsel %vm579, %v4504, 0
        %4549 = vmatprep.subr.bf16.mxu0 0
        %4550 = vmatpush1.bf16.msra.mxu0 0
        %4551 = vmatprep.subr.bf16.mxu0 0
        %4552 = vmatpush1.bf16.msra.mxu0 0
        %4553 = vmatprep.subr.bf16.mxu0 0
        %4554 = vmatpush1.bf16.msra.mxu0 0
        %4555 = vmatprep.subr.bf16.mxu0 0
        %4556 = vmatpush1.bf16.msra.mxu0 0
        %4557 = vmatprep.subr.bf16.mxu0 0
        %4558 = vmatpush1.bf16.msra.mxu0 0
        %4559 = vmatprep.subr.bf16.mxu0 0
        %4560 = vmatpush1.bf16.msra.mxu0 0
        %4561 = vmatprep.subr.bf16.mxu0 0
        %4562 = vmatpush1.bf16.msra.mxu0 %v4522
        %4563 = vmatprep.subr.bf16.mxu0 0
        %4564 = vmatpush1.bf16.msra.mxu0 %v4521
        %4565 = vmatprep.subr.bf16.mxu0 0
        %4566 = vmatpush2.bf16.msra.mxu0 0
        %4567 = vmatprep.subr.bf16.mxu0 0
        %4568 = vmatpush2.bf16.msra.mxu0 0
        %4569 = vmatprep.subr.bf16.mxu0 0
        %4570 = vmatpush2.bf16.msra.mxu0 0
        %4571 = vmatprep.subr.bf16.mxu0 0
        %4572 = vmatpush2.bf16.msra.mxu0 0
        %4573 = vmatprep.subr.bf16.mxu0 0
        %4574 = vmatpush2.bf16.msra.mxu0 0
        %4575 = vmatprep.subr.bf16.mxu0 0
        %4576 = vmatpush2.bf16.msra.mxu0 0
        %4577 = vmatprep.subr.bf16.mxu0 0
        %4578 = vmatpush2.bf16.msra.mxu0 0
        %4579 = vmatprep.subr.bf16.mxu0 0
        %4580 = vmatpush2.bf16.msra.mxu0 0
        %4581 = vmatprep.mubr.bf16.mxu0 0
        %4582 = vmatmul.mubr.bf16.gmra.mxu0 %v4526
        %v4583 = vpop.f32.mrf.mxu0
        %v4584 = vadd.f32 %v4512, %v4583
        %v4585 = vpop.f32.mrf.mxu0
        %v4586 = vpop.f32.mrf.mxu0
        %v4587 = vadd.f32 %v4512, %v4586
        %v4588 = vpop.f32.mrf.mxu0
        %4589 = vmatprep.mubr.bf16.mxu0 0
        %4590 = vmatmul.mubr.bf16.gmra.mxu0 %v4529
        %v4591 = vpop.f32.mrf.mxu0
        %v4592 = vadd.f32 %v4512, %v4591
        %v4593 = vpop.f32.mrf.mxu0
        %v4594 = vpop.f32.mrf.mxu0
        %v4595 = vadd.f32 %v4512, %v4594
        %v4596 = vpop.f32.mrf.mxu0
        %4597 = vmatprep.mubr.bf16.mxu0 0
        %4598 = vmatmul.mubr.bf16.gmra.mxu0 %v4532
        %v4599 = vpop.f32.mrf.mxu0
        %v4600 = vadd.f32 %v4512, %v4599
        %v4601 = vpop.f32.mrf.mxu0
        %v4602 = vpop.f32.mrf.mxu0
        %v4603 = vadd.f32 %v4512, %v4602
        %v4604 = vpop.f32.mrf.mxu0
        %4605 = vmatprep.mubr.bf16.mxu0 0
        %4606 = vmatmul.mubr.bf16.gmra.mxu0 %v4535
        %v4607 = vpop.f32.mrf.mxu0
        %v4608 = vadd.f32 %v4512, %v4607
        %v4609 = vpop.f32.mrf.mxu0
        %v4610 = vpop.f32.mrf.mxu0
        %v4611 = vadd.f32 %v4512, %v4610
        %v4612 = vpop.f32.mrf.mxu0
        %4613 = vmatprep.mubr.bf16.mxu0 0
        %4614 = vmatmul.mubr.bf16.gmra.mxu0 %v4538
        %v4615 = vpop.f32.mrf.mxu0
        %v4616 = vadd.f32 %v4512, %v4615
        %v4617 = vpop.f32.mrf.mxu0
        %v4618 = vpop.f32.mrf.mxu0
        %v4619 = vadd.f32 %v4512, %v4618
        %v4620 = vpop.f32.mrf.mxu0
        %4621 = vmatprep.mubr.bf16.mxu0 0
        %4622 = vmatmul.mubr.bf16.gmra.mxu0 %v4541
        %v4623 = vpop.f32.mrf.mxu0
        %v4624 = vadd.f32 %v4512, %v4623
        %v4625 = vpop.f32.mrf.mxu0
        %v4626 = vpop.f32.mrf.mxu0
        %v4627 = vadd.f32 %v4512, %v4626
        %v4628 = vpop.f32.mrf.mxu0
        %4629 = vmatprep.mubr.bf16.mxu0 0
        %4630 = vmatmul.mubr.bf16.gmra.mxu0 %v4544
        %v4631 = vpop.f32.mrf.mxu0
        %v4632 = vadd.f32 %v4512, %v4631
        %v4633 = vpop.f32.mrf.mxu0
        %v4634 = vpop.f32.mrf.mxu0
        %v4635 = vadd.f32 %v4512, %v4634
        %v4636 = vpop.f32.mrf.mxu0
        %4637 = vmatprep.mubr.bf16.mxu0 0
        %4638 = vmatmul.mubr.bf16.gmra.mxu0 %v4547
        %v4639 = vpop.f32.mrf.mxu0
        %v4640 = vadd.f32 %v4512, %v4639
        %v4641 = vpop.f32.mrf.mxu0
        %v4642 = vpop.f32.mrf.mxu0
        %v4643 = vadd.f32 %v4512, %v4642
        %v4644 = vpop.f32.mrf.mxu0
        %4645 = vdwg.mxu0
        %v4646 = vmul.f32 %v4584, 0.70710677
        %v4647 = vmul.f32 %v4587, 0.70710677
        %v4648 = vmul.f32 %v4592, 0.70710677
        %v4649 = vmul.f32 %v4595, 0.70710677
        %v4650 = vmul.f32 %v4600, 0.70710677
        %v4651 = vmul.f32 %v4603, 0.70710677
        %v4652 = vmul.f32 %v4608, 0.70710677
        %v4653 = vmul.f32 %v4611, 0.70710677
        %v4654 = vmul.f32 %v4616, 0.70710677
        %v4655 = vmul.f32 %v4619, 0.70710677
        %v4656 = vmul.f32 %v4624, 0.70710677
        %v4657 = vmul.f32 %v4627, 0.70710677
        %v4658 = vmul.f32 %v4632, 0.70710677
        %v4659 = vmul.f32 %v4635, 0.70710677
        %v4660 = vmul.f32 %v4640, 0.70710677
        %v4661 = vmul.f32 %v4643, 0.70710677
        %v4662 = vand.u32 2147483647, %v4646
        %v4663 = vand.u32 2147483647, %v4647
        %v4664 = vand.u32 2147483647, %v4648
        %v4665 = vand.u32 2147483647, %v4649
        %v4666 = vand.u32 2147483647, %v4650
        %v4667 = vand.u32 2147483647, %v4651
        %v4668 = vand.u32 2147483647, %v4652
        %v4669 = vand.u32 2147483647, %v4653
        %v4670 = vand.u32 2147483647, %v4654
        %v4671 = vand.u32 2147483647, %v4655
        %v4672 = vand.u32 2147483647, %v4656
        %v4673 = vand.u32 2147483647, %v4657
        %v4674 = vand.u32 2147483647, %v4658
        %v4675 = vand.u32 2147483647, %v4659
        %v4676 = vand.u32 2147483647, %v4660
        %v4677 = vand.u32 2147483647, %v4661
        %v4678 = vmul.f32 %v4662, 0.3275911
        %v4679 = vmul.f32 %v4663, 0.3275911
        %v4680 = vmul.f32 %v4664, 0.3275911
        %v4681 = vmul.f32 %v4665, 0.3275911
        %v4682 = vmul.f32 %v4666, 0.3275911
        %v4683 = vmul.f32 %v4667, 0.3275911
        %v4684 = vmul.f32 %v4668, 0.3275911
        %v4685 = vmul.f32 %v4669, 0.3275911
        %v4686 = vmul.f32 %v4670, 0.3275911
        %v4687 = vmul.f32 %v4671, 0.3275911
        %v4688 = vmul.f32 %v4672, 0.3275911
        %v4689 = vmul.f32 %v4673, 0.3275911
        %v4690 = vmul.f32 %v4674, 0.3275911
        %v4691 = vmul.f32 %v4675, 0.3275911
        %v4692 = vmul.f32 %v4676, 0.3275911
        %v4693 = vmul.f32 %v4677, 0.3275911
        %v4694 = vadd.f32 %v4678, 1.0
        %v4695 = vadd.f32 %v4679, 1.0
        %v4696 = vadd.f32 %v4680, 1.0
        %v4697 = vadd.f32 %v4681, 1.0
        %v4698 = vadd.f32 %v4682, 1.0
        %v4699 = vadd.f32 %v4683, 1.0
        %v4700 = vadd.f32 %v4684, 1.0
        %v4701 = vadd.f32 %v4685, 1.0
        %v4702 = vadd.f32 %v4686, 1.0
        %v4703 = vadd.f32 %v4687, 1.0
        %v4704 = vadd.f32 %v4688, 1.0
        %v4705 = vadd.f32 %v4689, 1.0
        %v4706 = vadd.f32 %v4690, 1.0
        %v4707 = vadd.f32 %v4691, 1.0
        %v4708 = vadd.f32 %v4692, 1.0
        %v4709 = vadd.f32 %v4693, 1.0
        %v4710 = vrcp.pop %v4694
        %v4711 = vrcp.pop %v4695
        %v4712 = vrcp.pop %v4696
        %v4713 = vrcp.pop %v4697
        %v4714 = vrcp.pop %v4698
        %v4715 = vrcp.pop %v4699
        %v4716 = vrcp.pop %v4700
        %v4717 = vrcp.pop %v4701
        %v4718 = vrcp.pop %v4702
        %v4719 = vrcp.pop %v4703
        %v4720 = vrcp.pop %v4704
        %v4721 = vrcp.pop %v4705
        %v4722 = vrcp.pop %v4706
        %v4723 = vrcp.pop %v4707
        %v4724 = vrcp.pop %v4708
        %v4725 = vrcp.pop %v4709
        %v4726 = vmul.f32 %v4710, 1.0614054
        %v4727 = vmul.f32 %v4711, 1.0614054
        %v4728 = vmul.f32 %v4712, 1.0614054
        %v4729 = vmul.f32 %v4713, 1.0614054
        %v4730 = vmul.f32 %v4714, 1.0614054
        %v4731 = vmul.f32 %v4715, 1.0614054
        %v4732 = vmul.f32 %v4716, 1.0614054
        %v4733 = vmul.f32 %v4717, 1.0614054
        %v4734 = vmul.f32 %v4718, 1.0614054
        %v4735 = vmul.f32 %v4719, 1.0614054
        %v4736 = vmul.f32 %v4720, 1.0614054
        %v4737 = vmul.f32 %v4721, 1.0614054
        %v4738 = vmul.f32 %v4722, 1.0614054
        %v4739 = vmul.f32 %v4723, 1.0614054
        %v4740 = vmul.f32 %v4724, 1.0614054
        %v4741 = vmul.f32 %v4725, 1.0614054
        %v4742 = vsub.f32 %v4726, 1.4531521
        %v4743 = vsub.f32 %v4727, 1.4531521
        %v4744 = vsub.f32 %v4728, 1.4531521
        %v4745 = vsub.f32 %v4729, 1.4531521
        %v4746 = vsub.f32 %v4730, 1.4531521
        %v4747 = vsub.f32 %v4731, 1.4531521
        %v4748 = vsub.f32 %v4732, 1.4531521
        %v4749 = vsub.f32 %v4733, 1.4531521
        %v4750 = vsub.f32 %v4734, 1.4531521
        %v4751 = vsub.f32 %v4735, 1.4531521
        %v4752 = vsub.f32 %v4736, 1.4531521
        %v4753 = vsub.f32 %v4737, 1.4531521
        %v4754 = vsub.f32 %v4738, 1.4531521
        %v4755 = vsub.f32 %v4739, 1.4531521
        %v4756 = vsub.f32 %v4740, 1.4531521
        %v4757 = vsub.f32 %v4741, 1.4531521
        %v4758 = vmul.f32 %v4742, %v4710
        %v4759 = vmul.f32 %v4743, %v4711
        %v4760 = vmul.f32 %v4744, %v4712
        %v4761 = vmul.f32 %v4745, %v4713
        %v4762 = vmul.f32 %v4746, %v4714
        %v4763 = vmul.f32 %v4747, %v4715
        %v4764 = vmul.f32 %v4748, %v4716
        %v4765 = vmul.f32 %v4749, %v4717
        %v4766 = vmul.f32 %v4750, %v4718
        %v4767 = vmul.f32 %v4751, %v4719
        %v4768 = vmul.f32 %v4752, %v4720
        %v4769 = vmul.f32 %v4753, %v4721
        %v4770 = vmul.f32 %v4754, %v4722
        %v4771 = vmul.f32 %v4755, %v4723
        %v4772 = vmul.f32 %v4756, %v4724
        %v4773 = vmul.f32 %v4757, %v4725
        %v4774 = vadd.f32 %v4758, 1.4214138
        %v4775 = vadd.f32 %v4759, 1.4214138
        %v4776 = vadd.f32 %v4760, 1.4214138
        %v4777 = vadd.f32 %v4761, 1.4214138
        %v4778 = vadd.f32 %v4762, 1.4214138
        %v4779 = vadd.f32 %v4763, 1.4214138
        %v4780 = vadd.f32 %v4764, 1.4214138
        %v4781 = vadd.f32 %v4765, 1.4214138
        %v4782 = vadd.f32 %v4766, 1.4214138
        %v4783 = vadd.f32 %v4767, 1.4214138
        %v4784 = vadd.f32 %v4768, 1.4214138
        %v4785 = vadd.f32 %v4769, 1.4214138
        %v4786 = vadd.f32 %v4770, 1.4214138
        %v4787 = vadd.f32 %v4771, 1.4214138
        %v4788 = vadd.f32 %v4772, 1.4214138
        %v4789 = vadd.f32 %v4773, 1.4214138
        %v4790 = vmul.f32 %v4774, %v4710
        %v4791 = vmul.f32 %v4775, %v4711
        %v4792 = vmul.f32 %v4776, %v4712
        %v4793 = vmul.f32 %v4777, %v4713
        %v4794 = vmul.f32 %v4778, %v4714
        %v4795 = vmul.f32 %v4779, %v4715
        %v4796 = vmul.f32 %v4780, %v4716
        %v4797 = vmul.f32 %v4781, %v4717
        %v4798 = vmul.f32 %v4782, %v4718
        %v4799 = vmul.f32 %v4783, %v4719
        %v4800 = vmul.f32 %v4784, %v4720
        %v4801 = vmul.f32 %v4785, %v4721
        %v4802 = vmul.f32 %v4786, %v4722
        %v4803 = vmul.f32 %v4787, %v4723
        %v4804 = vmul.f32 %v4788, %v4724
        %v4805 = vmul.f32 %v4789, %v4725
        %v4806 = vsub.f32 %v4790, 0.28449672
        %v4807 = vsub.f32 %v4791, 0.28449672
        %v4808 = vsub.f32 %v4792, 0.28449672
        %v4809 = vsub.f32 %v4793, 0.28449672
        %v4810 = vsub.f32 %v4794, 0.28449672
        %v4811 = vsub.f32 %v4795, 0.28449672
        %v4812 = vsub.f32 %v4796, 0.28449672
        %v4813 = vsub.f32 %v4797, 0.28449672
        %v4814 = vsub.f32 %v4798, 0.28449672
        %v4815 = vsub.f32 %v4799, 0.28449672
        %v4816 = vsub.f32 %v4800, 0.28449672
        %v4817 = vsub.f32 %v4801, 0.28449672
        %v4818 = vsub.f32 %v4802, 0.28449672
        %v4819 = vsub.f32 %v4803, 0.28449672
        %v4820 = vsub.f32 %v4804, 0.28449672
        %v4821 = vsub.f32 %v4805, 0.28449672
        %v4822 = vmul.f32 %v4806, %v4710
        %v4823 = vmul.f32 %v4807, %v4711
        %v4824 = vmul.f32 %v4808, %v4712
        %v4825 = vmul.f32 %v4809, %v4713
        %v4826 = vmul.f32 %v4810, %v4714
        %v4827 = vmul.f32 %v4811, %v4715
        %v4828 = vmul.f32 %v4812, %v4716
        %v4829 = vmul.f32 %v4813, %v4717
        %v4830 = vmul.f32 %v4814, %v4718
        %v4831 = vmul.f32 %v4815, %v4719
        %v4832 = vmul.f32 %v4816, %v4720
        %v4833 = vmul.f32 %v4817, %v4721
        %v4834 = vmul.f32 %v4818, %v4722
        %v4835 = vmul.f32 %v4819, %v4723
        %v4836 = vmul.f32 %v4820, %v4724
        %v4837 = vmul.f32 %v4821, %v4725
        %v4838 = vadd.f32 %v4822, 0.2548296
        %v4839 = vadd.f32 %v4823, 0.2548296
        %v4840 = vadd.f32 %v4824, 0.2548296
        %v4841 = vadd.f32 %v4825, 0.2548296
        %v4842 = vadd.f32 %v4826, 0.2548296
        %v4843 = vadd.f32 %v4827, 0.2548296
        %v4844 = vadd.f32 %v4828, 0.2548296
        %v4845 = vadd.f32 %v4829, 0.2548296
        %v4846 = vadd.f32 %v4830, 0.2548296
        %v4847 = vadd.f32 %v4831, 0.2548296
        %v4848 = vadd.f32 %v4832, 0.2548296
        %v4849 = vadd.f32 %v4833, 0.2548296
        %v4850 = vadd.f32 %v4834, 0.2548296
        %v4851 = vadd.f32 %v4835, 0.2548296
        %v4852 = vadd.f32 %v4836, 0.2548296
        %v4853 = vadd.f32 %v4837, 0.2548296
        %v4854 = vmul.f32 %v4838, %v4710
        %v4855 = vmul.f32 %v4839, %v4711
        %v4856 = vmul.f32 %v4840, %v4712
        %v4857 = vmul.f32 %v4841, %v4713
        %v4858 = vmul.f32 %v4842, %v4714
        %v4859 = vmul.f32 %v4843, %v4715
        %v4860 = vmul.f32 %v4844, %v4716
        %v4861 = vmul.f32 %v4845, %v4717
        %v4862 = vmul.f32 %v4846, %v4718
        %v4863 = vmul.f32 %v4847, %v4719
        %v4864 = vmul.f32 %v4848, %v4720
        %v4865 = vmul.f32 %v4849, %v4721
        %v4866 = vmul.f32 %v4850, %v4722
        %v4867 = vmul.f32 %v4851, %v4723
        %v4868 = vmul.f32 %v4852, %v4724
        %v4869 = vmul.f32 %v4853, %v4725
        %v4870 = vmul.f32 %v4662, %v4662
        %v4871 = vmul.f32 %v4663, %v4663
        %v4872 = vmul.f32 %v4664, %v4664
        %v4873 = vmul.f32 %v4665, %v4665
        %v4874 = vmul.f32 %v4666, %v4666
        %v4875 = vmul.f32 %v4667, %v4667
        %v4876 = vmul.f32 %v4668, %v4668
        %v4877 = vmul.f32 %v4669, %v4669
        %v4878 = vmul.f32 %v4670, %v4670
        %v4879 = vmul.f32 %v4671, %v4671
        %v4880 = vmul.f32 %v4672, %v4672
        %v4881 = vmul.f32 %v4673, %v4673
        %v4882 = vmul.f32 %v4674, %v4674
        %v4883 = vmul.f32 %v4675, %v4675
        %v4884 = vmul.f32 %v4676, %v4676
        %v4885 = vmul.f32 %v4677, %v4677
        %v4886 = vsub.f32 0.0, %v4870
        %v4887 = vsub.f32 0.0, %v4871
        %v4888 = vsub.f32 0.0, %v4872
        %v4889 = vsub.f32 0.0, %v4873
        %v4890 = vsub.f32 0.0, %v4874
        %v4891 = vsub.f32 0.0, %v4875
        %v4892 = vsub.f32 0.0, %v4876
        %v4893 = vsub.f32 0.0, %v4877
        %v4894 = vsub.f32 0.0, %v4878
        %v4895 = vsub.f32 0.0, %v4879
        %v4896 = vsub.f32 0.0, %v4880
        %v4897 = vsub.f32 0.0, %v4881
        %v4898 = vsub.f32 0.0, %v4882
        %v4899 = vsub.f32 0.0, %v4883
        %v4900 = vsub.f32 0.0, %v4884
        %v4901 = vsub.f32 0.0, %v4885
        %v4902 = vmul.f32 %v4886, 1.442695
        %v4903 = vpow.pop %v4902
        %v4904 = vmul.f32 %v4887, 1.442695
        %v4905 = vpow.pop %v4904
        %v4906 = vmul.f32 %v4888, 1.442695
        %v4907 = vpow.pop %v4906
        %v4908 = vmul.f32 %v4889, 1.442695
        %v4909 = vpow.pop %v4908
        %v4910 = vmul.f32 %v4890, 1.442695
        %v4911 = vpow.pop %v4910
        %v4912 = vmul.f32 %v4891, 1.442695
        %v4913 = vpow.pop %v4912
        %v4914 = vmul.f32 %v4892, 1.442695
        %v4915 = vpow.pop %v4914
        %v4916 = vmul.f32 %v4893, 1.442695
        %v4917 = vpow.pop %v4916
        %v4918 = vmul.f32 %v4894, 1.442695
        %v4919 = vpow.pop %v4918
        %v4920 = vmul.f32 %v4895, 1.442695
        %v4921 = vpow.pop %v4920
        %v4922 = vmul.f32 %v4896, 1.442695
        %v4923 = vpow.pop %v4922
        %v4924 = vmul.f32 %v4897, 1.442695
        %v4925 = vpow.pop %v4924
        %v4926 = vmul.f32 %v4898, 1.442695
        %v4927 = vpow.pop %v4926
        %v4928 = vmul.f32 %v4899, 1.442695
        %v4929 = vpow.pop %v4928
        %v4930 = vmul.f32 %v4900, 1.442695
        %v4931 = vpow.pop %v4930
        %v4932 = vmul.f32 %v4901, 1.442695
        %v4933 = vpow.pop %v4932
        %v4934 = vmul.f32 %v4854, %v4903
        %v4935 = vmul.f32 %v4855, %v4905
        %v4936 = vmul.f32 %v4856, %v4907
        %v4937 = vmul.f32 %v4857, %v4909
        %v4938 = vmul.f32 %v4858, %v4911
        %v4939 = vmul.f32 %v4859, %v4913
        %v4940 = vmul.f32 %v4860, %v4915
        %v4941 = vmul.f32 %v4861, %v4917
        %v4942 = vmul.f32 %v4862, %v4919
        %v4943 = vmul.f32 %v4863, %v4921
        %v4944 = vmul.f32 %v4864, %v4923
        %v4945 = vmul.f32 %v4865, %v4925
        %v4946 = vmul.f32 %v4866, %v4927
        %v4947 = vmul.f32 %v4867, %v4929
        %v4948 = vmul.f32 %v4868, %v4931
        %v4949 = vmul.f32 %v4869, %v4933
        %v4950 = vsub.f32 1.0, %v4934
        %v4951 = vsub.f32 1.0, %v4935
        %v4952 = vsub.f32 1.0, %v4936
        %v4953 = vsub.f32 1.0, %v4937
        %v4954 = vsub.f32 1.0, %v4938
        %v4955 = vsub.f32 1.0, %v4939
        %v4956 = vsub.f32 1.0, %v4940
        %v4957 = vsub.f32 1.0, %v4941
        %v4958 = vsub.f32 1.0, %v4942
        %v4959 = vsub.f32 1.0, %v4943
        %v4960 = vsub.f32 1.0, %v4944
        %v4961 = vsub.f32 1.0, %v4945
        %v4962 = vsub.f32 1.0, %v4946
        %v4963 = vsub.f32 1.0, %v4947
        %v4964 = vsub.f32 1.0, %v4948
        %v4965 = vsub.f32 1.0, %v4949
        %vm4966 = vcmp.ge.f32.partialorder %v4646, 0.0
        %vm4967 = vcmp.ge.f32.partialorder %v4647, 0.0
        %vm4968 = vcmp.ge.f32.partialorder %v4648, 0.0
        %vm4969 = vcmp.ge.f32.partialorder %v4649, 0.0
        %vm4970 = vcmp.ge.f32.partialorder %v4650, 0.0
        %vm4971 = vcmp.ge.f32.partialorder %v4651, 0.0
        %vm4972 = vcmp.ge.f32.partialorder %v4652, 0.0
        %vm4973 = vcmp.ge.f32.partialorder %v4653, 0.0
        %vm4974 = vcmp.ge.f32.partialorder %v4654, 0.0
        %vm4975 = vcmp.ge.f32.partialorder %v4655, 0.0
        %vm4976 = vcmp.ge.f32.partialorder %v4656, 0.0
        %vm4977 = vcmp.ge.f32.partialorder %v4657, 0.0
        %vm4978 = vcmp.ge.f32.partialorder %v4658, 0.0
        %vm4979 = vcmp.ge.f32.partialorder %v4659, 0.0
        %vm4980 = vcmp.ge.f32.partialorder %v4660, 0.0
        %vm4981 = vcmp.ge.f32.partialorder %v4661, 0.0
        %v4982 = vsub.f32 0.0, %v4950
        %v4983 = vsub.f32 0.0, %v4951
        %v4984 = vsub.f32 0.0, %v4952
        %v4985 = vsub.f32 0.0, %v4953
        %v4986 = vsub.f32 0.0, %v4954
        %v4987 = vsub.f32 0.0, %v4955
        %v4988 = vsub.f32 0.0, %v4956
        %v4989 = vsub.f32 0.0, %v4957
        %v4990 = vsub.f32 0.0, %v4958
        %v4991 = vsub.f32 0.0, %v4959
        %v4992 = vsub.f32 0.0, %v4960
        %v4993 = vsub.f32 0.0, %v4961
        %v4994 = vsub.f32 0.0, %v4962
        %v4995 = vsub.f32 0.0, %v4963
        %v4996 = vsub.f32 0.0, %v4964
        %v4997 = vsub.f32 0.0, %v4965
        %v4998 = vsel %vm4966, %v4950, %v4982
        %v4999 = vsel %vm4967, %v4951, %v4983
        %v5000 = vsel %vm4968, %v4952, %v4984
        %v5001 = vsel %vm4969, %v4953, %v4985
        %v5002 = vsel %vm4970, %v4954, %v4986
        %v5003 = vsel %vm4971, %v4955, %v4987
        %v5004 = vsel %vm4972, %v4956, %v4988
        %v5005 = vsel %vm4973, %v4957, %v4989
        %v5006 = vsel %vm4974, %v4958, %v4990
        %v5007 = vsel %vm4975, %v4959, %v4991
        %v5008 = vsel %vm4976, %v4960, %v4992
        %v5009 = vsel %vm4977, %v4961, %v4993
        %v5010 = vsel %vm4978, %v4962, %v4994
        %v5011 = vsel %vm4979, %v4963, %v4995
        %v5012 = vsel %vm4980, %v4964, %v4996
        %v5013 = vsel %vm4981, %v4965, %v4997
        %v5014 = vmul.f32 %v4584, 0.5
        %v5015 = vmul.f32 %v4587, 0.5
        %v5016 = vmul.f32 %v4592, 0.5
        %v5017 = vmul.f32 %v4595, 0.5
        %v5018 = vmul.f32 %v4600, 0.5
        %v5019 = vmul.f32 %v4603, 0.5
        %v5020 = vmul.f32 %v4608, 0.5
        %v5021 = vmul.f32 %v4611, 0.5
        %v5022 = vmul.f32 %v4616, 0.5
        %v5023 = vmul.f32 %v4619, 0.5
        %v5024 = vmul.f32 %v4624, 0.5
        %v5025 = vmul.f32 %v4627, 0.5
        %v5026 = vmul.f32 %v4632, 0.5
        %v5027 = vmul.f32 %v4635, 0.5
        %v5028 = vmul.f32 %v4640, 0.5
        %v5029 = vmul.f32 %v4643, 0.5
        %v5030 = vadd.f32 %v4998, 1.0
        %v5031 = vadd.f32 %v4999, 1.0
        %v5032 = vadd.f32 %v5000, 1.0
        %v5033 = vadd.f32 %v5001, 1.0
        %v5034 = vadd.f32 %v5002, 1.0
        %v5035 = vadd.f32 %v5003, 1.0
        %v5036 = vadd.f32 %v5004, 1.0
        %v5037 = vadd.f32 %v5005, 1.0
        %v5038 = vadd.f32 %v5006, 1.0
        %v5039 = vadd.f32 %v5007, 1.0
        %v5040 = vadd.f32 %v5008, 1.0
        %v5041 = vadd.f32 %v5009, 1.0
        %v5042 = vadd.f32 %v5010, 1.0
        %v5043 = vadd.f32 %v5011, 1.0
        %v5044 = vadd.f32 %v5012, 1.0
        %v5045 = vadd.f32 %v5013, 1.0
        %v5046 = vmul.f32 %v5014, %v5030
        %v5047 = vmul.f32 %v5015, %v5031
        %v5048 = vmul.f32 %v5016, %v5032
        %v5049 = vmul.f32 %v5017, %v5033
        %v5050 = vmul.f32 %v5018, %v5034
        %v5051 = vmul.f32 %v5019, %v5035
        %v5052 = vmul.f32 %v5020, %v5036
        %v5053 = vmul.f32 %v5021, %v5037
        %v5054 = vmul.f32 %v5022, %v5038
        %v5055 = vmul.f32 %v5023, %v5039
        %v5056 = vmul.f32 %v5024, %v5040
        %v5057 = vmul.f32 %v5025, %v5041
        %v5058 = vmul.f32 %v5026, %v5042
        %v5059 = vmul.f32 %v5027, %v5043
        %v5060 = vmul.f32 %v5028, %v5044
        %v5061 = vmul.f32 %v5029, %v5045
        %v5062 = vpack.c.bf16 %v5047, %v5046
        %v5063 = vpack.c.bf16 %v5049, %v5048
        %v5064 = vpack.c.bf16 %v5051, %v5050
        %v5065 = vpack.c.bf16 %v5053, %v5052
        %v5066 = vpack.c.bf16 %v5055, %v5054
        %v5067 = vpack.c.bf16 %v5057, %v5056
        %v5068 = vpack.c.bf16 %v5059, %v5058
        %v5069 = vpack.c.bf16 %v5061, %v5060
        %v5070 = vld [vmem:[%s5] sm:$0xf]
        %v5071 = vld [vmem:[%s5 + $0x4] sm:$0xf]
        %v5072 = vld [vmem:[%s5 + $0x8] sm:$0xf]
        %v5073 = vld [vmem:[%s5 + $0xc] sm:$0xf]
        %v5074 = vld [vmem:[%s5 + $0x10] sm:$0xf]
        %v5075 = vld [vmem:[%s5 + $0x14] sm:$0xf]
        %v5076 = vld [vmem:[%s5 + $0x18] sm:$0xf]
        %v5077 = vld [vmem:[%s5 + $0x1c] sm:$0xf]
        %v5078 = vld [vmem:[%s5 + $0x20] sm:$0xf]
        %v5079 = vld [vmem:[%s5 + $0x24] sm:$0xf]
        %v5080 = vld [vmem:[%s5 + $0x28] sm:$0xf]
        %v5081 = vld [vmem:[%s5 + $0x2c] sm:$0xf]
        %v5082 = vld [vmem:[%s5 + $0x30] sm:$0xf]
        %v5083 = vld [vmem:[%s5 + $0x34] sm:$0xf]
        %v5084 = vld [vmem:[%s5 + $0x38] sm:$0xf]
        %v5085 = vld [vmem:[%s5 + $0x3c] sm:$0xf]
        %v5086 = vlaneseq
        %v5087 = vshrl.u32 %v5086, 7
        %v5088 = vsub.s32 7, %v5087
        %v5089 = vrot.slane %v574, %v5088
        %v5106 = vunpack.c.l.b16 %v5070
        %v5107 = vunpack.c.l.b16 %v5071
        %v5108 = vunpack.c.l.b16 %v5072
        %v5109 = vunpack.c.l.b16 %v5073
        %v5110 = vunpack.c.l.b16 %v5074
        %v5111 = vunpack.c.l.b16 %v5075
        %v5112 = vunpack.c.l.b16 %v5076
        %v5113 = vunpack.c.l.b16 %v5077
        %v5114 = vunpack.c.l.b16 %v5078
        %v5115 = vunpack.c.l.b16 %v5079
        %v5116 = vunpack.c.l.b16 %v5080
        %v5117 = vunpack.c.l.b16 %v5081
        %v5118 = vunpack.c.l.b16 %v5082
        %v5119 = vunpack.c.l.b16 %v5083
        %v5120 = vunpack.c.l.b16 %v5084
        %v5121 = vunpack.c.l.b16 %v5085
        %v5122 = vpack.c.b16 %v5107, %v5106
        %v5123 = vpack.c.b16 %v5109, %v5108
        %v5124 = vpack.c.b16 %v5111, %v5110
        %v5125 = vpack.c.b16 %v5113, %v5112
        %v5126 = vpack.c.b16 %v5115, %v5114
        %v5127 = vpack.c.b16 %v5117, %v5116
        %v5128 = vpack.c.b16 %v5119, %v5118
        %v5129 = vpack.c.b16 %v5121, %v5120
        %5138 = vmatprep.subr.bf16.mxu0 0
        %5139 = vmatpush1.bf16.msra.mxu0 %v5129
        %5140 = vmatprep.subr.bf16.mxu0 0
        %5141 = vmatpush1.bf16.msra.mxu0 %v5128
        %5142 = vmatprep.subr.bf16.mxu0 0
        %5143 = vmatpush1.bf16.msra.mxu0 %v5127
        %5144 = vmatprep.subr.bf16.mxu0 0
        %5145 = vmatpush1.bf16.msra.mxu0 %v5126
        %5146 = vmatprep.subr.bf16.mxu0 0
        %5147 = vmatpush1.bf16.msra.mxu0 %v5125
        %5148 = vmatprep.subr.bf16.mxu0 0
        %5149 = vmatpush1.bf16.msra.mxu0 %v5124
        %5150 = vmatprep.subr.bf16.mxu0 0
        %5151 = vmatpush1.bf16.msra.mxu0 %v5123
        %5152 = vmatprep.subr.bf16.mxu0 0
        %5153 = vmatpush1.bf16.msra.mxu0 %v5122
        %5154 = vmatprep.subr.bf16.mxu0 0
        %5155 = vmatpush2.bf16.msra.mxu0 0
        %5156 = vmatprep.subr.bf16.mxu0 0
        %5157 = vmatpush2.bf16.msra.mxu0 0
        %5158 = vmatprep.subr.bf16.mxu0 0
        %5159 = vmatpush2.bf16.msra.mxu0 0
        %5160 = vmatprep.subr.bf16.mxu0 0
        %5161 = vmatpush2.bf16.msra.mxu0 0
        %5162 = vmatprep.subr.bf16.mxu0 0
        %5163 = vmatpush2.bf16.msra.mxu0 0
        %5164 = vmatprep.subr.bf16.mxu0 0
        %5165 = vmatpush2.bf16.msra.mxu0 0
        %5166 = vmatprep.subr.bf16.mxu0 0
        %5167 = vmatpush2.bf16.msra.mxu0 0
        %5168 = vmatprep.subr.bf16.mxu0 0
        %5169 = vmatpush2.bf16.msra.mxu0 0
        %5170 = vmatprep.mubr.bf16.mxu0 0
        %5171 = vmatmul.mubr.bf16.gmra.mxu0 %v5062
        %v5172 = vpop.f32.mrf.mxu0
        %v5173 = vadd.f32 %v5089, %v5172
        %v5174 = vpop.f32.mrf.mxu0
        %v5175 = vpop.f32.mrf.mxu0
        %v5176 = vadd.f32 %v5089, %v5175
        %v5177 = vpop.f32.mrf.mxu0
        %5178 = vmatprep.mubr.bf16.mxu0 0
        %5179 = vmatmul.mubr.bf16.gmra.mxu0 %v5063
        %v5180 = vpop.f32.mrf.mxu0
        %v5181 = vadd.f32 %v5089, %v5180
        %v5182 = vpop.f32.mrf.mxu0
        %v5183 = vpop.f32.mrf.mxu0
        %v5184 = vadd.f32 %v5089, %v5183
        %v5185 = vpop.f32.mrf.mxu0
        %5186 = vmatprep.mubr.bf16.mxu0 0
        %5187 = vmatmul.mubr.bf16.gmra.mxu0 %v5064
        %v5188 = vpop.f32.mrf.mxu0
        %v5189 = vadd.f32 %v5089, %v5188
        %v5190 = vpop.f32.mrf.mxu0
        %v5191 = vpop.f32.mrf.mxu0
        %v5192 = vadd.f32 %v5089, %v5191
        %v5193 = vpop.f32.mrf.mxu0
        %5194 = vmatprep.mubr.bf16.mxu0 0
        %5195 = vmatmul.mubr.bf16.gmra.mxu0 %v5065
        %v5196 = vpop.f32.mrf.mxu0
        %v5197 = vadd.f32 %v5089, %v5196
        %v5198 = vpop.f32.mrf.mxu0
        %v5199 = vpop.f32.mrf.mxu0
        %v5200 = vadd.f32 %v5089, %v5199
        %v5201 = vpop.f32.mrf.mxu0
        %5202 = vmatprep.mubr.bf16.mxu0 0
        %5203 = vmatmul.mubr.bf16.gmra.mxu0 %v5066
        %v5204 = vpop.f32.mrf.mxu0
        %v5205 = vadd.f32 %v5089, %v5204
        %v5206 = vpop.f32.mrf.mxu0
        %v5207 = vpop.f32.mrf.mxu0
        %v5208 = vadd.f32 %v5089, %v5207
        %v5209 = vpop.f32.mrf.mxu0
        %5210 = vmatprep.mubr.bf16.mxu0 0
        %5211 = vmatmul.mubr.bf16.gmra.mxu0 %v5067
        %v5212 = vpop.f32.mrf.mxu0
        %v5213 = vadd.f32 %v5089, %v5212
        %v5214 = vpop.f32.mrf.mxu0
        %v5215 = vpop.f32.mrf.mxu0
        %v5216 = vadd.f32 %v5089, %v5215
        %v5217 = vpop.f32.mrf.mxu0
        %5218 = vmatprep.mubr.bf16.mxu0 0
        %5219 = vmatmul.mubr.bf16.gmra.mxu0 %v5068
        %v5220 = vpop.f32.mrf.mxu0
        %v5221 = vadd.f32 %v5089, %v5220
        %v5222 = vpop.f32.mrf.mxu0
        %v5223 = vpop.f32.mrf.mxu0
        %v5224 = vadd.f32 %v5089, %v5223
        %v5225 = vpop.f32.mrf.mxu0
        %5226 = vmatprep.mubr.bf16.mxu0 0
        %5227 = vmatmul.mubr.bf16.gmra.mxu0 %v5069
        %v5228 = vpop.f32.mrf.mxu0
        %v5229 = vadd.f32 %v5089, %v5228
        %v5230 = vpop.f32.mrf.mxu0
        %v5231 = vpop.f32.mrf.mxu0
        %v5232 = vadd.f32 %v5089, %v5231
        %v5233 = vpop.f32.mrf.mxu0
        %5234 = vdwg.mxu0
        %v5235 = vlaneseq
        %v5236 = vshrl.u32 %v5235, 7
        %v5237 = vsub.s32 5, %v5236
        %v5238 = vrot.slane %v574, %v5237
        %v5239 = vmul.f32 %v5238, %v5173
        %v5240 = vmul.f32 %v5238, %v5176
        %v5241 = vmul.f32 %v5238, %v5181
        %v5242 = vmul.f32 %v5238, %v5184
        %v5243 = vmul.f32 %v5238, %v5189
        %v5244 = vmul.f32 %v5238, %v5192
        %v5245 = vmul.f32 %v5238, %v5197
        %v5246 = vmul.f32 %v5238, %v5200
        %v5247 = vmul.f32 %v5238, %v5205
        %v5248 = vmul.f32 %v5238, %v5208
        %v5249 = vmul.f32 %v5238, %v5213
        %v5250 = vmul.f32 %v5238, %v5216
        %v5251 = vmul.f32 %v5238, %v5221
        %v5252 = vmul.f32 %v5238, %v5224
        %v5253 = vmul.f32 %v5238, %v5229
        %v5254 = vmul.f32 %v5238, %v5232
        %v5255 = vadd.f32 %v4233, %v5239
        %v5256 = vadd.f32 %v4234, %v5240
        %v5257 = vadd.f32 %v4235, %v5241
        %v5258 = vadd.f32 %v4236, %v5242
        %v5259 = vadd.f32 %v4237, %v5243
        %v5260 = vadd.f32 %v4238, %v5244
        %v5261 = vadd.f32 %v4239, %v5245
        %v5262 = vadd.f32 %v4240, %v5246
        %v5263 = vadd.f32 %v4241, %v5247
        %v5264 = vadd.f32 %v4242, %v5248
        %v5265 = vadd.f32 %v4243, %v5249
        %v5266 = vadd.f32 %v4244, %v5250
        %v5267 = vadd.f32 %v4245, %v5251
        %v5268 = vadd.f32 %v4246, %v5252
        %v5269 = vadd.f32 %v4247, %v5253
        %v5270 = vadd.f32 %v4248, %v5254
        %s5271 = scalar_lea.vmem [#allocation2], 512
        %v5272 = vld [vmem:[%s5271] sm:$0xf]
        %v5273 = vld [vmem:[%s5271 + $0x4] sm:$0xf]
        %v5274 = vld [vmem:[%s5271 + $0x8] sm:$0xf]
        %v5275 = vld [vmem:[%s5271 + $0xc] sm:$0xf]
        %v5276 = vld [vmem:[%s5271 + $0x10] sm:$0xf]
        %v5277 = vld [vmem:[%s5271 + $0x14] sm:$0xf]
        %v5278 = vld [vmem:[%s5271 + $0x18] sm:$0xf]
        %v5279 = vld [vmem:[%s5271 + $0x1c] sm:$0xf]
        %v5280 = vld [vmem:[%s5271 + $0x20] sm:$0xf]
        %v5281 = vld [vmem:[%s5271 + $0x24] sm:$0xf]
        %v5282 = vld [vmem:[%s5271 + $0x28] sm:$0xf]
        %v5283 = vld [vmem:[%s5271 + $0x2c] sm:$0xf]
        %v5284 = vld [vmem:[%s5271 + $0x30] sm:$0xf]
        %v5285 = vld [vmem:[%s5271 + $0x34] sm:$0xf]
        %v5286 = vld [vmem:[%s5271 + $0x38] sm:$0xf]
        %v5287 = vld [vmem:[%s5271 + $0x3c] sm:$0xf]
        %v5288 = vld [vmem:[%s5271 + $0x40] sm:$0xf]
        %v5289 = vld [vmem:[%s5271 + $0x44] sm:$0xf]
        %v5290 = vld [vmem:[%s5271 + $0x48] sm:$0xf]
        %v5291 = vld [vmem:[%s5271 + $0x4c] sm:$0xf]
        %v5292 = vld [vmem:[%s5271 + $0x50] sm:$0xf]
        %v5293 = vld [vmem:[%s5271 + $0x54] sm:$0xf]
        %v5294 = vld [vmem:[%s5271 + $0x58] sm:$0xf]
        %v5295 = vld [vmem:[%s5271 + $0x5c] sm:$0xf]
        %v5296 = vld [vmem:[%s5271 + $0x60] sm:$0xf]
        %v5297 = vld [vmem:[%s5271 + $0x64] sm:$0xf]
        %v5298 = vld [vmem:[%s5271 + $0x68] sm:$0xf]
        %v5299 = vld [vmem:[%s5271 + $0x6c] sm:$0xf]
        %v5300 = vld [vmem:[%s5271 + $0x70] sm:$0xf]
        %v5301 = vld [vmem:[%s5271 + $0x74] sm:$0xf]
        %v5302 = vld [vmem:[%s5271 + $0x78] sm:$0xf]
        %v5303 = vld [vmem:[%s5271 + $0x7c] sm:$0xf]
        %v5304 = vld [vmem:[%s5271 + $0x80] sm:$0xf]
        %v5305 = vld [vmem:[%s5271 + $0x84] sm:$0xf]
        %v5306 = vld [vmem:[%s5271 + $0x88] sm:$0xf]
        %v5307 = vld [vmem:[%s5271 + $0x8c] sm:$0xf]
        %v5308 = vld [vmem:[%s5271 + $0x90] sm:$0xf]
        %v5309 = vld [vmem:[%s5271 + $0x94] sm:$0xf]
        %v5310 = vld [vmem:[%s5271 + $0x98] sm:$0xf]
        %v5311 = vld [vmem:[%s5271 + $0x9c] sm:$0xf]
        %v5312 = vld [vmem:[%s5271 + $0xa0] sm:$0xf]
        %v5313 = vld [vmem:[%s5271 + $0xa4] sm:$0xf]
        %v5314 = vld [vmem:[%s5271 + $0xa8] sm:$0xf]
        %v5315 = vld [vmem:[%s5271 + $0xac] sm:$0xf]
        %v5316 = vld [vmem:[%s5271 + $0xb0] sm:$0xf]
        %v5317 = vld [vmem:[%s5271 + $0xb4] sm:$0xf]
        %v5318 = vld [vmem:[%s5271 + $0xb8] sm:$0xf]
        %v5319 = vld [vmem:[%s5271 + $0xbc] sm:$0xf]
        %v5320 = vld [vmem:[%s5271 + $0xc0] sm:$0xf]
        %v5321 = vld [vmem:[%s5271 + $0xc4] sm:$0xf]
        %v5322 = vld [vmem:[%s5271 + $0xc8] sm:$0xf]
        %v5323 = vld [vmem:[%s5271 + $0xcc] sm:$0xf]
        %v5324 = vld [vmem:[%s5271 + $0xd0] sm:$0xf]
        %v5325 = vld [vmem:[%s5271 + $0xd4] sm:$0xf]
        %v5326 = vld [vmem:[%s5271 + $0xd8] sm:$0xf]
        %v5327 = vld [vmem:[%s5271 + $0xdc] sm:$0xf]
        %v5328 = vld [vmem:[%s5271 + $0xe0] sm:$0xf]
        %v5329 = vld [vmem:[%s5271 + $0xe4] sm:$0xf]
        %v5330 = vld [vmem:[%s5271 + $0xe8] sm:$0xf]
        %v5331 = vld [vmem:[%s5271 + $0xec] sm:$0xf]
        %v5332 = vld [vmem:[%s5271 + $0xf0] sm:$0xf]
        %v5333 = vld [vmem:[%s5271 + $0xf4] sm:$0xf]
        %v5334 = vld [vmem:[%s5271 + $0xf8] sm:$0xf]
        %v5335 = vld [vmem:[%s5271 + $0xfc] sm:$0xf]
        %v5336 = vld [vmem:[%s5271 + $0x100] sm:$0xf]
        %v5337 = vld [vmem:[%s5271 + $0x104] sm:$0xf]
        %v5338 = vld [vmem:[%s5271 + $0x108] sm:$0xf]
        %v5339 = vld [vmem:[%s5271 + $0x10c] sm:$0xf]
        %v5340 = vld [vmem:[%s5271 + $0x110] sm:$0xf]
        %v5341 = vld [vmem:[%s5271 + $0x114] sm:$0xf]
        %v5342 = vld [vmem:[%s5271 + $0x118] sm:$0xf]
        %v5343 = vld [vmem:[%s5271 + $0x11c] sm:$0xf]
        %v5344 = vld [vmem:[%s5271 + $0x120] sm:$0xf]
        %v5345 = vld [vmem:[%s5271 + $0x124] sm:$0xf]
        %v5346 = vld [vmem:[%s5271 + $0x128] sm:$0xf]
        %v5347 = vld [vmem:[%s5271 + $0x12c] sm:$0xf]
        %v5348 = vld [vmem:[%s5271 + $0x130] sm:$0xf]
        %v5349 = vld [vmem:[%s5271 + $0x134] sm:$0xf]
        %v5350 = vld [vmem:[%s5271 + $0x138] sm:$0xf]
        %v5351 = vld [vmem:[%s5271 + $0x13c] sm:$0xf]
        %v5352 = vld [vmem:[%s5271 + $0x140] sm:$0xf]
        %v5353 = vld [vmem:[%s5271 + $0x144] sm:$0xf]
        %v5354 = vld [vmem:[%s5271 + $0x148] sm:$0xf]
        %v5355 = vld [vmem:[%s5271 + $0x14c] sm:$0xf]
        %v5356 = vld [vmem:[%s5271 + $0x150] sm:$0xf]
        %v5357 = vld [vmem:[%s5271 + $0x154] sm:$0xf]
        %v5358 = vld [vmem:[%s5271 + $0x158] sm:$0xf]
        %v5359 = vld [vmem:[%s5271 + $0x15c] sm:$0xf]
        %v5360 = vld [vmem:[%s5271 + $0x160] sm:$0xf]
        %v5361 = vld [vmem:[%s5271 + $0x164] sm:$0xf]
        %v5362 = vld [vmem:[%s5271 + $0x168] sm:$0xf]
        %v5363 = vld [vmem:[%s5271 + $0x16c] sm:$0xf]
        %v5364 = vld [vmem:[%s5271 + $0x170] sm:$0xf]
        %v5365 = vld [vmem:[%s5271 + $0x174] sm:$0xf]
        %v5366 = vld [vmem:[%s5271 + $0x178] sm:$0xf]
        %v5367 = vld [vmem:[%s5271 + $0x17c] sm:$0xf]
        %v5368 = vld [vmem:[%s5271 + $0x180] sm:$0xf]
        %v5369 = vld [vmem:[%s5271 + $0x184] sm:$0xf]
        %v5370 = vld [vmem:[%s5271 + $0x188] sm:$0xf]
        %v5371 = vld [vmem:[%s5271 + $0x18c] sm:$0xf]
        %v5372 = vld [vmem:[%s5271 + $0x190] sm:$0xf]
        %v5373 = vld [vmem:[%s5271 + $0x194] sm:$0xf]
        %v5374 = vld [vmem:[%s5271 + $0x198] sm:$0xf]
        %v5375 = vld [vmem:[%s5271 + $0x19c] sm:$0xf]
        %v5376 = vld [vmem:[%s5271 + $0x1a0] sm:$0xf]
        %v5377 = vld [vmem:[%s5271 + $0x1a4] sm:$0xf]
        %v5378 = vld [vmem:[%s5271 + $0x1a8] sm:$0xf]
        %v5379 = vld [vmem:[%s5271 + $0x1ac] sm:$0xf]
        %v5380 = vld [vmem:[%s5271 + $0x1b0] sm:$0xf]
        %v5381 = vld [vmem:[%s5271 + $0x1b4] sm:$0xf]
        %v5382 = vld [vmem:[%s5271 + $0x1b8] sm:$0xf]
        %v5383 = vld [vmem:[%s5271 + $0x1bc] sm:$0xf]
        %v5384 = vld [vmem:[%s5271 + $0x1c0] sm:$0xf]
        %v5385 = vld [vmem:[%s5271 + $0x1c4] sm:$0xf]
        %v5386 = vld [vmem:[%s5271 + $0x1c8] sm:$0xf]
        %v5387 = vld [vmem:[%s5271 + $0x1cc] sm:$0xf]
        %v5388 = vld [vmem:[%s5271 + $0x1d0] sm:$0xf]
        %v5389 = vld [vmem:[%s5271 + $0x1d4] sm:$0xf]
        %v5390 = vld [vmem:[%s5271 + $0x1d8] sm:$0xf]
        %v5391 = vld [vmem:[%s5271 + $0x1dc] sm:$0xf]
        %v5392 = vld [vmem:[%s5271 + $0x1e0] sm:$0xf]
        %v5393 = vld [vmem:[%s5271 + $0x1e4] sm:$0xf]
        %v5394 = vld [vmem:[%s5271 + $0x1e8] sm:$0xf]
        %v5395 = vld [vmem:[%s5271 + $0x1ec] sm:$0xf]
        %v5396 = vld [vmem:[%s5271 + $0x1f0] sm:$0xf]
        %v5397 = vld [vmem:[%s5271 + $0x1f4] sm:$0xf]
        %v5398 = vld [vmem:[%s5271 + $0x1f8] sm:$0xf]
        %v5399 = vld [vmem:[%s5271 + $0x1fc] sm:$0xf]
        %v5400 = vld [vmem:[%s6] sm:$0xff]
        %v5401 = vld [vmem:[%s6 + $0x8] sm:$0xff]
        %v5402 = vld [vmem:[%s6 + $0x10] sm:$0x3]
        %v5403 = vpack.c.bf16 %v5401, %v5401
        %v5404 = vpack.c.bf16 %v5402, %v5402
        %v5405 = vsel %vm579, %v5255, 0.0
        %5406 = vadd.xlane.f32.xlu0 %v5405
        %v5407 = vpop.xlane.xlu0 %5406
        %v5408 = vsel %vm579, %v5256, 0.0
        %5409 = vadd.xlane.f32.xlu0 %v5408
        %v5410 = vpop.xlane.xlu0 %5409
        %v5411 = vsel %vm579, %v5257, 0.0
        %5412 = vadd.xlane.f32.xlu0 %v5411
        %v5413 = vpop.xlane.xlu0 %5412
        %v5414 = vsel %vm579, %v5258, 0.0
        %5415 = vadd.xlane.f32.xlu0 %v5414
        %v5416 = vpop.xlane.xlu0 %5415
        %v5417 = vsel %vm579, %v5259, 0.0
        %5418 = vadd.xlane.f32.xlu0 %v5417
        %v5419 = vpop.xlane.xlu0 %5418
        %v5420 = vsel %vm579, %v5260, 0.0
        %5421 = vadd.xlane.f32.xlu0 %v5420
        %v5422 = vpop.xlane.xlu0 %5421
        %v5423 = vsel %vm579, %v5261, 0.0
        %5424 = vadd.xlane.f32.xlu0 %v5423
        %v5425 = vpop.xlane.xlu0 %5424
        %v5426 = vsel %vm579, %v5262, 0.0
        %5427 = vadd.xlane.f32.xlu0 %v5426
        %v5428 = vpop.xlane.xlu0 %5427
        %v5429 = vsel %vm579, %v5263, 0.0
        %5430 = vadd.xlane.f32.xlu0 %v5429
        %v5431 = vpop.xlane.xlu0 %5430
        %v5432 = vsel %vm579, %v5264, 0.0
        %5433 = vadd.xlane.f32.xlu0 %v5432
        %v5434 = vpop.xlane.xlu0 %5433
        %v5435 = vsel %vm579, %v5265, 0.0
        %5436 = vadd.xlane.f32.xlu0 %v5435
        %v5437 = vpop.xlane.xlu0 %5436
        %v5438 = vsel %vm579, %v5266, 0.0
        %5439 = vadd.xlane.f32.xlu0 %v5438
        %v5440 = vpop.xlane.xlu0 %5439
        %v5441 = vsel %vm579, %v5267, 0.0
        %5442 = vadd.xlane.f32.xlu0 %v5441
        %v5443 = vpop.xlane.xlu0 %5442
        %v5444 = vsel %vm579, %v5268, 0.0
        %5445 = vadd.xlane.f32.xlu0 %v5444
        %v5446 = vpop.xlane.xlu0 %5445
        %v5447 = vsel %vm579, %v5269, 0.0
        %5448 = vadd.xlane.f32.xlu0 %v5447
        %v5449 = vpop.xlane.xlu0 %5448
        %v5450 = vsel %vm579, %v5270, 0.0
        %5451 = vadd.xlane.f32.xlu0 %v5450
        %v5452 = vpop.xlane.xlu0 %5451
        %v5453 = vmul.f32 %v5407, %v628
        %v5454 = vmul.f32 %v5410, %v628
        %v5455 = vmul.f32 %v5413, %v628
        %v5456 = vmul.f32 %v5416, %v628
        %v5457 = vmul.f32 %v5419, %v628
        %v5458 = vmul.f32 %v5422, %v628
        %v5459 = vmul.f32 %v5425, %v628
        %v5460 = vmul.f32 %v5428, %v628
        %v5461 = vmul.f32 %v5431, %v628
        %v5462 = vmul.f32 %v5434, %v628
        %v5463 = vmul.f32 %v5437, %v628
        %v5464 = vmul.f32 %v5440, %v628
        %v5465 = vmul.f32 %v5443, %v628
        %v5466 = vmul.f32 %v5446, %v628
        %v5467 = vmul.f32 %v5449, %v628
        %v5468 = vmul.f32 %v5452, %v628
        %v5469 = vsub.f32 %v5255, %v5453
        %v5470 = vsub.f32 %v5256, %v5454
        %v5471 = vsub.f32 %v5257, %v5455
        %v5472 = vsub.f32 %v5258, %v5456
        %v5473 = vsub.f32 %v5259, %v5457
        %v5474 = vsub.f32 %v5260, %v5458
        %v5475 = vsub.f32 %v5261, %v5459
        %v5476 = vsub.f32 %v5262, %v5460
        %v5477 = vsub.f32 %v5263, %v5461
        %v5478 = vsub.f32 %v5264, %v5462
        %v5479 = vsub.f32 %v5265, %v5463
        %v5480 = vsub.f32 %v5266, %v5464
        %v5481 = vsub.f32 %v5267, %v5465
        %v5482 = vsub.f32 %v5268, %v5466
        %v5483 = vsub.f32 %v5269, %v5467
        %v5484 = vsub.f32 %v5270, %v5468
        %v5485 = vmul.f32 %v5469, %v5469
        %v5486 = vmul.f32 %v5470, %v5470
        %v5487 = vmul.f32 %v5471, %v5471
        %v5488 = vmul.f32 %v5472, %v5472
        %v5489 = vmul.f32 %v5473, %v5473
        %v5490 = vmul.f32 %v5474, %v5474
        %v5491 = vmul.f32 %v5475, %v5475
        %v5492 = vmul.f32 %v5476, %v5476
        %v5493 = vmul.f32 %v5477, %v5477
        %v5494 = vmul.f32 %v5478, %v5478
        %v5495 = vmul.f32 %v5479, %v5479
        %v5496 = vmul.f32 %v5480, %v5480
        %v5497 = vmul.f32 %v5481, %v5481
        %v5498 = vmul.f32 %v5482, %v5482
        %v5499 = vmul.f32 %v5483, %v5483
        %v5500 = vmul.f32 %v5484, %v5484
        %v5501 = vsel %vm579, %v5485, 0.0
        %5502 = vadd.xlane.f32.xlu0 %v5501
        %v5503 = vpop.xlane.xlu0 %5502
        %v5504 = vsel %vm579, %v5486, 0.0
        %5505 = vadd.xlane.f32.xlu0 %v5504
        %v5506 = vpop.xlane.xlu0 %5505
        %v5507 = vsel %vm579, %v5487, 0.0
        %5508 = vadd.xlane.f32.xlu0 %v5507
        %v5509 = vpop.xlane.xlu0 %5508
        %v5510 = vsel %vm579, %v5488, 0.0
        %5511 = vadd.xlane.f32.xlu0 %v5510
        %v5512 = vpop.xlane.xlu0 %5511
        %v5513 = vsel %vm579, %v5489, 0.0
        %5514 = vadd.xlane.f32.xlu0 %v5513
        %v5515 = vpop.xlane.xlu0 %5514
        %v5516 = vsel %vm579, %v5490, 0.0
        %5517 = vadd.xlane.f32.xlu0 %v5516
        %v5518 = vpop.xlane.xlu0 %5517
        %v5519 = vsel %vm579, %v5491, 0.0
        %5520 = vadd.xlane.f32.xlu0 %v5519
        %v5521 = vpop.xlane.xlu0 %5520
        %v5522 = vsel %vm579, %v5492, 0.0
        %5523 = vadd.xlane.f32.xlu0 %v5522
        %v5524 = vpop.xlane.xlu0 %5523
        %v5525 = vsel %vm579, %v5493, 0.0
        %5526 = vadd.xlane.f32.xlu0 %v5525
        %v5527 = vpop.xlane.xlu0 %5526
        %v5528 = vsel %vm579, %v5494, 0.0
        %5529 = vadd.xlane.f32.xlu0 %v5528
        %v5530 = vpop.xlane.xlu0 %5529
        %v5531 = vsel %vm579, %v5495, 0.0
        %5532 = vadd.xlane.f32.xlu0 %v5531
        %v5533 = vpop.xlane.xlu0 %5532
        %v5534 = vsel %vm579, %v5496, 0.0
        %5535 = vadd.xlane.f32.xlu0 %v5534
        %v5536 = vpop.xlane.xlu0 %5535
        %v5537 = vsel %vm579, %v5497, 0.0
        %5538 = vadd.xlane.f32.xlu0 %v5537
        %v5539 = vpop.xlane.xlu0 %5538
        %v5540 = vsel %vm579, %v5498, 0.0
        %5541 = vadd.xlane.f32.xlu0 %v5540
        %v5542 = vpop.xlane.xlu0 %5541
        %v5543 = vsel %vm579, %v5499, 0.0
        %5544 = vadd.xlane.f32.xlu0 %v5543
        %v5545 = vpop.xlane.xlu0 %5544
        %v5546 = vsel %vm579, %v5500, 0.0
        %5547 = vadd.xlane.f32.xlu0 %v5546
        %v5548 = vpop.xlane.xlu0 %5547
        %v5549 = vmul.f32 %v5503, %v628
        %v5550 = vmul.f32 %v5506, %v628
        %v5551 = vmul.f32 %v5509, %v628
        %v5552 = vmul.f32 %v5512, %v628
        %v5553 = vmul.f32 %v5515, %v628
        %v5554 = vmul.f32 %v5518, %v628
        %v5555 = vmul.f32 %v5521, %v628
        %v5556 = vmul.f32 %v5524, %v628
        %v5557 = vmul.f32 %v5527, %v628
        %v5558 = vmul.f32 %v5530, %v628
        %v5559 = vmul.f32 %v5533, %v628
        %v5560 = vmul.f32 %v5536, %v628
        %v5561 = vmul.f32 %v5539, %v628
        %v5562 = vmul.f32 %v5542, %v628
        %v5563 = vmul.f32 %v5545, %v628
        %v5564 = vmul.f32 %v5548, %v628
        %v5565 = vadd.f32 %v5549, 1e-05
        %v5566 = vadd.f32 %v5550, 1e-05
        %v5567 = vadd.f32 %v5551, 1e-05
        %v5568 = vadd.f32 %v5552, 1e-05
        %v5569 = vadd.f32 %v5553, 1e-05
        %v5570 = vadd.f32 %v5554, 1e-05
        %v5571 = vadd.f32 %v5555, 1e-05
        %v5572 = vadd.f32 %v5556, 1e-05
        %v5573 = vadd.f32 %v5557, 1e-05
        %v5574 = vadd.f32 %v5558, 1e-05
        %v5575 = vadd.f32 %v5559, 1e-05
        %v5576 = vadd.f32 %v5560, 1e-05
        %v5577 = vadd.f32 %v5561, 1e-05
        %v5578 = vadd.f32 %v5562, 1e-05
        %v5579 = vadd.f32 %v5563, 1e-05
        %v5580 = vadd.f32 %v5564, 1e-05
        %v5581 = vrsqrt.pop %v5565
        %v5582 = vrsqrt.pop %v5566
        %v5583 = vrsqrt.pop %v5567
        %v5584 = vrsqrt.pop %v5568
        %v5585 = vrsqrt.pop %v5569
        %v5586 = vrsqrt.pop %v5570
        %v5587 = vrsqrt.pop %v5571
        %v5588 = vrsqrt.pop %v5572
        %v5589 = vrsqrt.pop %v5573
        %v5590 = vrsqrt.pop %v5574
        %v5591 = vrsqrt.pop %v5575
        %v5592 = vrsqrt.pop %v5576
        %v5593 = vrsqrt.pop %v5577
        %v5594 = vrsqrt.pop %v5578
        %v5595 = vrsqrt.pop %v5579
        %v5596 = vrsqrt.pop %v5580
        %v5597 = vmul.f32 %v5469, %v5581
        %v5598 = vmul.f32 %v5470, %v5582
        %v5599 = vmul.f32 %v5471, %v5583
        %v5600 = vmul.f32 %v5472, %v5584
        %v5601 = vmul.f32 %v5473, %v5585
        %v5602 = vmul.f32 %v5474, %v5586
        %v5603 = vmul.f32 %v5475, %v5587
        %v5604 = vmul.f32 %v5476, %v5588
        %v5605 = vmul.f32 %v5477, %v5589
        %v5606 = vmul.f32 %v5478, %v5590
        %v5607 = vmul.f32 %v5479, %v5591
        %v5608 = vmul.f32 %v5480, %v5592
        %v5609 = vmul.f32 %v5481, %v5593
        %v5610 = vmul.f32 %v5482, %v5594
        %v5611 = vmul.f32 %v5483, %v5595
        %v5612 = vmul.f32 %v5484, %v5596
        %v5613 = vlaneseq
        %v5614 = vshrl.u32 %v5613, 7
        %v5615 = vsub.s32 0, %v5614
        %v5616 = vrot.slane %v5400, %v5615
        %v5617 = vmul.f32 %v5597, %v5616
        %v5618 = vmul.f32 %v5598, %v5616
        %v5619 = vmul.f32 %v5599, %v5616
        %v5620 = vmul.f32 %v5600, %v5616
        %v5621 = vmul.f32 %v5601, %v5616
        %v5622 = vmul.f32 %v5602, %v5616
        %v5623 = vmul.f32 %v5603, %v5616
        %v5624 = vmul.f32 %v5604, %v5616
        %v5625 = vmul.f32 %v5605, %v5616
        %v5626 = vmul.f32 %v5606, %v5616
        %v5627 = vmul.f32 %v5607, %v5616
        %v5628 = vmul.f32 %v5608, %v5616
        %v5629 = vmul.f32 %v5609, %v5616
        %v5630 = vmul.f32 %v5610, %v5616
        %v5631 = vmul.f32 %v5611, %v5616
        %v5632 = vmul.f32 %v5612, %v5616
        %v5633 = vlaneseq
        %v5634 = vshrl.u32 %v5633, 7
        %v5635 = vsub.s32 1, %v5634
        %v5636 = vrot.slane %v5400, %v5635
        %v5637 = vadd.f32 %v5617, %v5636
        %v5638 = vadd.f32 %v5618, %v5636
        %v5639 = vadd.f32 %v5619, %v5636
        %v5640 = vadd.f32 %v5620, %v5636
        %v5641 = vadd.f32 %v5621, %v5636
        %v5642 = vadd.f32 %v5622, %v5636
        %v5643 = vadd.f32 %v5623, %v5636
        %v5644 = vadd.f32 %v5624, %v5636
        %v5645 = vadd.f32 %v5625, %v5636
        %v5646 = vadd.f32 %v5626, %v5636
        %v5647 = vadd.f32 %v5627, %v5636
        %v5648 = vadd.f32 %v5628, %v5636
        %v5649 = vadd.f32 %v5629, %v5636
        %v5650 = vadd.f32 %v5630, %v5636
        %v5651 = vadd.f32 %v5631, %v5636
        %v5652 = vadd.f32 %v5632, %v5636
        %v5653 = vpack.c.bf16 %v5638, %v5637
        %v5654 = vpack.c.bf16 %v5640, %v5639
        %v5655 = vpack.c.bf16 %v5642, %v5641
        %v5656 = vpack.c.bf16 %v5644, %v5643
        %v5657 = vpack.c.bf16 %v5646, %v5645
        %v5658 = vpack.c.bf16 %v5648, %v5647
        %v5659 = vpack.c.bf16 %v5650, %v5649
        %v5660 = vpack.c.bf16 %v5652, %v5651
        %v5661 = vld [vmem:[%s7] sm:$0xf]
        %v5662 = vld [vmem:[%s7 + $0x4] sm:$0xf]
        %v5663 = vld [vmem:[%s7 + $0x8] sm:$0xf]
        %v5664 = vld [vmem:[%s7 + $0xc] sm:$0xf]
        %v5665 = vlaneseq
        %v5666 = vshrl.u32 %v5665, 7
        %v5667 = vsub.s32 1, %v5666
        %v5668 = vrot.slane %v5401, %v5667
        %v5673 = vunpack.c.l.b16 %v5661
        %v5674 = vunpack.c.l.b16 %v5662
        %v5675 = vunpack.c.l.b16 %v5663
        %v5676 = vunpack.c.l.b16 %v5664
        %v5677 = vpack.c.b16 %v5674, %v5673
        %v5678 = vpack.c.b16 %v5676, %v5675
        %v5682 = vsel %vm579, %v5653, 0
        %v5685 = vsel %vm579, %v5654, 0
        %v5688 = vsel %vm579, %v5655, 0
        %v5691 = vsel %vm579, %v5656, 0
        %v5694 = vsel %vm579, %v5657, 0
        %v5697 = vsel %vm579, %v5658, 0
        %v5700 = vsel %vm579, %v5659, 0
        %v5703 = vsel %vm579, %v5660, 0
        %5705 = vmatprep.subr.bf16.mxu0 0
        %5706 = vmatpush1.bf16.msra.mxu0 0
        %5707 = vmatprep.subr.bf16.mxu0 0
        %5708 = vmatpush1.bf16.msra.mxu0 0
        %5709 = vmatprep.subr.bf16.mxu0 0
        %5710 = vmatpush1.bf16.msra.mxu0 0
        %5711 = vmatprep.subr.bf16.mxu0 0
        %5712 = vmatpush1.bf16.msra.mxu0 0
        %5713 = vmatprep.subr.bf16.mxu0 0
        %5714 = vmatpush1.bf16.msra.mxu0 0
        %5715 = vmatprep.subr.bf16.mxu0 0
        %5716 = vmatpush1.bf16.msra.mxu0 0
        %5717 = vmatprep.subr.bf16.mxu0 0
        %5718 = vmatpush1.bf16.msra.mxu0 %v5678
        %5719 = vmatprep.subr.bf16.mxu0 0
        %5720 = vmatpush1.bf16.msra.mxu0 %v5677
        %5721 = vmatprep.subr.bf16.mxu0 0
        %5722 = vmatpush2.bf16.msra.mxu0 0
        %5723 = vmatprep.subr.bf16.mxu0 0
        %5724 = vmatpush2.bf16.msra.mxu0 0
        %5725 = vmatprep.subr.bf16.mxu0 0
        %5726 = vmatpush2.bf16.msra.mxu0 0
        %5727 = vmatprep.subr.bf16.mxu0 0
        %5728 = vmatpush2.bf16.msra.mxu0 0
        %5729 = vmatprep.subr.bf16.mxu0 0
        %5730 = vmatpush2.bf16.msra.mxu0 0
        %5731 = vmatprep.subr.bf16.mxu0 0
        %5732 = vmatpush2.bf16.msra.mxu0 0
        %5733 = vmatprep.subr.bf16.mxu0 0
        %5734 = vmatpush2.bf16.msra.mxu0 0
        %5735 = vmatprep.subr.bf16.mxu0 0
        %5736 = vmatpush2.bf16.msra.mxu0 0
        %5737 = vmatprep.mubr.bf16.mxu0 0
        %5738 = vmatmul.mubr.bf16.gmra.mxu0 %v5682
        %v5739 = vpop.f32.mrf.mxu0
        %v5740 = vadd.f32 %v5668, %v5739
        %v5741 = vpop.f32.mrf.mxu0
        %v5742 = vpop.f32.mrf.mxu0
        %v5743 = vadd.f32 %v5668, %v5742
        %v5744 = vpop.f32.mrf.mxu0
        %5745 = vmatprep.mubr.bf16.mxu0 0
        %5746 = vmatmul.mubr.bf16.gmra.mxu0 %v5685
        %v5747 = vpop.f32.mrf.mxu0
        %v5748 = vadd.f32 %v5668, %v5747
        %v5749 = vpop.f32.mrf.mxu0
        %v5750 = vpop.f32.mrf.mxu0
        %v5751 = vadd.f32 %v5668, %v5750
        %v5752 = vpop.f32.mrf.mxu0
        %5753 = vmatprep.mubr.bf16.mxu0 0
        %5754 = vmatmul.mubr.bf16.gmra.mxu0 %v5688
        %v5755 = vpop.f32.mrf.mxu0
        %v5756 = vadd.f32 %v5668, %v5755
        %v5757 = vpop.f32.mrf.mxu0
        %v5758 = vpop.f32.mrf.mxu0
        %v5759 = vadd.f32 %v5668, %v5758
        %v5760 = vpop.f32.mrf.mxu0
        %5761 = vmatprep.mubr.bf16.mxu0 0
        %5762 = vmatmul.mubr.bf16.gmra.mxu0 %v5691
        %v5763 = vpop.f32.mrf.mxu0
        %v5764 = vadd.f32 %v5668, %v5763
        %v5765 = vpop.f32.mrf.mxu0
        %v5766 = vpop.f32.mrf.mxu0
        %v5767 = vadd.f32 %v5668, %v5766
        %v5768 = vpop.f32.mrf.mxu0
        %5769 = vmatprep.mubr.bf16.mxu0 0
        %5770 = vmatmul.mubr.bf16.gmra.mxu0 %v5694
        %v5771 = vpop.f32.mrf.mxu0
        %v5772 = vadd.f32 %v5668, %v5771
        %v5773 = vpop.f32.mrf.mxu0
        %v5774 = vpop.f32.mrf.mxu0
        %v5775 = vadd.f32 %v5668, %v5774
        %v5776 = vpop.f32.mrf.mxu0
        %5777 = vmatprep.mubr.bf16.mxu0 0
        %5778 = vmatmul.mubr.bf16.gmra.mxu0 %v5697
        %v5779 = vpop.f32.mrf.mxu0
        %v5780 = vadd.f32 %v5668, %v5779
        %v5781 = vpop.f32.mrf.mxu0
        %v5782 = vpop.f32.mrf.mxu0
        %v5783 = vadd.f32 %v5668, %v5782
        %v5784 = vpop.f32.mrf.mxu0
        %5785 = vmatprep.mubr.bf16.mxu0 0
        %5786 = vmatmul.mubr.bf16.gmra.mxu0 %v5700
        %v5787 = vpop.f32.mrf.mxu0
        %v5788 = vadd.f32 %v5668, %v5787
        %v5789 = vpop.f32.mrf.mxu0
        %v5790 = vpop.f32.mrf.mxu0
        %v5791 = vadd.f32 %v5668, %v5790
        %v5792 = vpop.f32.mrf.mxu0
        %5793 = vmatprep.mubr.bf16.mxu0 0
        %5794 = vmatmul.mubr.bf16.gmra.mxu0 %v5703
        %v5795 = vpop.f32.mrf.mxu0
        %v5796 = vadd.f32 %v5668, %v5795
        %v5797 = vpop.f32.mrf.mxu0
        %v5798 = vpop.f32.mrf.mxu0
        %v5799 = vadd.f32 %v5668, %v5798
        %v5800 = vpop.f32.mrf.mxu0
        %5801 = vdwg.mxu0
        %v5802 = vpack.c.bf16 %v431, %v430
        %v5803 = vpack.c.bf16 %v433, %v432
        %v5804 = vpack.c.bf16 %v435, %v434
        %v5805 = vpack.c.bf16 %v437, %v436
        %v5806 = vpack.c.bf16 %v439, %v438
        %v5807 = vpack.c.bf16 %v441, %v440
        %v5808 = vpack.c.bf16 %v443, %v442
        %v5809 = vpack.c.bf16 %v445, %v444
        %v5810 = vpack.c.bf16 %v5743, %v5740
        %v5811 = vpack.c.bf16 %v5751, %v5748
        %v5812 = vpack.c.bf16 %v5759, %v5756
        %v5813 = vpack.c.bf16 %v5767, %v5764
        %v5814 = vpack.c.bf16 %v5775, %v5772
        %v5815 = vpack.c.bf16 %v5783, %v5780
        %v5816 = vpack.c.bf16 %v5791, %v5788
        %v5817 = vpack.c.bf16 %v5799, %v5796
        %v5819 = vpack.i.b16 %v5403, %v5403
        %v5821 = vlaneseq
        %v5822 = vshrl.u32 %v5821, 7
        %v5823 = vsub.s32 1, %v5822
        %v5824 = vrot.slane %v5819, %v5823
        %v5825 = vmul.bf16 %v5802, %v5824
        %v5826 = vmul.bf16 %v5803, %v5824
        %v5827 = vmul.bf16 %v5804, %v5824
        %v5828 = vmul.bf16 %v5805, %v5824
        %v5829 = vmul.bf16 %v5806, %v5824
        %v5830 = vmul.bf16 %v5807, %v5824
        %v5831 = vmul.bf16 %v5808, %v5824
        %v5832 = vmul.bf16 %v5809, %v5824
        %v5833 = vshrl.u32 %v5403, 16
        %v5834 = vpack.i.b16 %v5833, %v5833
        %v5836 = vlaneseq
        %v5837 = vshrl.u32 %v5836, 7
        %v5838 = vsub.s32 1, %v5837
        %v5839 = vrot.slane %v5834, %v5838
        %v5840 = vmul.bf16 %v5802, %v5839
        %v5841 = vmul.bf16 %v5803, %v5839
        %v5842 = vmul.bf16 %v5804, %v5839
        %v5843 = vmul.bf16 %v5805, %v5839
        %v5844 = vmul.bf16 %v5806, %v5839
        %v5845 = vmul.bf16 %v5807, %v5839
        %v5846 = vmul.bf16 %v5808, %v5839
        %v5847 = vmul.bf16 %v5809, %v5839
        %v5848 = vlaneseq
        %v5849 = vshrl.u32 %v5848, 7
        %v5850 = vsub.s32 2, %v5849
        %v5851 = vrot.slane %v5819, %v5850
        %v5852 = vmul.bf16 %v5802, %v5851
        %v5853 = vmul.bf16 %v5803, %v5851
        %v5854 = vmul.bf16 %v5804, %v5851
        %v5855 = vmul.bf16 %v5805, %v5851
        %v5856 = vmul.bf16 %v5806, %v5851
        %v5857 = vmul.bf16 %v5807, %v5851
        %v5858 = vmul.bf16 %v5808, %v5851
        %v5859 = vmul.bf16 %v5809, %v5851
        %v5860 = vlaneseq
        %v5861 = vshrl.u32 %v5860, 7
        %v5862 = vsub.s32 2, %v5861
        %v5863 = vrot.slane %v5834, %v5862
        %v5864 = vmul.bf16 %v5802, %v5863
        %v5865 = vmul.bf16 %v5803, %v5863
        %v5866 = vmul.bf16 %v5804, %v5863
        %v5867 = vmul.bf16 %v5805, %v5863
        %v5868 = vmul.bf16 %v5806, %v5863
        %v5869 = vmul.bf16 %v5807, %v5863
        %v5870 = vmul.bf16 %v5808, %v5863
        %v5871 = vmul.bf16 %v5809, %v5863
        %v5872 = vlaneseq
        %v5873 = vshrl.u32 %v5872, 7
        %v5874 = vsub.s32 3, %v5873
        %v5875 = vrot.slane %v5819, %v5874
        %v5876 = vmul.bf16 %v5802, %v5875
        %v5877 = vmul.bf16 %v5803, %v5875
        %v5878 = vmul.bf16 %v5804, %v5875
        %v5879 = vmul.bf16 %v5805, %v5875
        %v5880 = vmul.bf16 %v5806, %v5875
        %v5881 = vmul.bf16 %v5807, %v5875
        %v5882 = vmul.bf16 %v5808, %v5875
        %v5883 = vmul.bf16 %v5809, %v5875
        %v5884 = vlaneseq
        %v5885 = vshrl.u32 %v5884, 7
        %v5886 = vsub.s32 3, %v5885
        %v5887 = vrot.slane %v5834, %v5886
        %v5888 = vmul.bf16 %v5802, %v5887
        %v5889 = vmul.bf16 %v5803, %v5887
        %v5890 = vmul.bf16 %v5804, %v5887
        %v5891 = vmul.bf16 %v5805, %v5887
        %v5892 = vmul.bf16 %v5806, %v5887
        %v5893 = vmul.bf16 %v5807, %v5887
        %v5894 = vmul.bf16 %v5808, %v5887
        %v5895 = vmul.bf16 %v5809, %v5887
        %v5897 = vpack.i.b16 %v5404, %v5404
        %v5899 = vlaneseq
        %v5900 = vshrl.u32 %v5899, 7
        %v5901 = vsub.s32 0, %v5900
        %v5902 = vrot.slane %v5897, %v5901
        %v5903 = vmul.bf16 %v5802, %v5902
        %v5904 = vmul.bf16 %v5803, %v5902
        %v5905 = vmul.bf16 %v5804, %v5902
        %v5906 = vmul.bf16 %v5805, %v5902
        %v5907 = vmul.bf16 %v5806, %v5902
        %v5908 = vmul.bf16 %v5807, %v5902
        %v5909 = vmul.bf16 %v5808, %v5902
        %v5910 = vmul.bf16 %v5809, %v5902
        %v5911 = vshrl.u32 %v5404, 16
        %v5912 = vpack.i.b16 %v5911, %v5911
        %v5914 = vlaneseq
        %v5915 = vshrl.u32 %v5914, 7
        %v5916 = vsub.s32 0, %v5915
        %v5917 = vrot.slane %v5912, %v5916
        %v5918 = vmul.bf16 %v5802, %v5917
        %v5919 = vmul.bf16 %v5803, %v5917
        %v5920 = vmul.bf16 %v5804, %v5917
        %v5921 = vmul.bf16 %v5805, %v5917
        %v5922 = vmul.bf16 %v5806, %v5917
        %v5923 = vmul.bf16 %v5807, %v5917
        %v5924 = vmul.bf16 %v5808, %v5917
        %v5925 = vmul.bf16 %v5809, %v5917
        %v5926 = vunpack.c.l.bf16 %v5272
        %v5927 = vunpack.c.l.bf16 %v5273
        %v5928 = vunpack.c.l.bf16 %v5274
        %v5929 = vunpack.c.l.bf16 %v5275
        %v5930 = vunpack.c.l.bf16 %v5276
        %v5931 = vunpack.c.l.bf16 %v5277
        %v5932 = vunpack.c.l.bf16 %v5278
        %v5933 = vunpack.c.l.bf16 %v5279
        %v5934 = vunpack.c.l.bf16 %v5280
        %v5935 = vunpack.c.l.bf16 %v5281
        %v5936 = vunpack.c.l.bf16 %v5282
        %v5937 = vunpack.c.l.bf16 %v5283
        %v5938 = vunpack.c.l.bf16 %v5284
        %v5939 = vunpack.c.l.bf16 %v5285
        %v5940 = vunpack.c.l.bf16 %v5286
        %v5941 = vunpack.c.l.bf16 %v5287
        %v5942 = vunpack.c.l.bf16 %v5288
        %v5943 = vunpack.c.l.bf16 %v5289
        %v5944 = vunpack.c.l.bf16 %v5290
        %v5945 = vunpack.c.l.bf16 %v5291
        %v5946 = vunpack.c.l.bf16 %v5292
        %v5947 = vunpack.c.l.bf16 %v5293
        %v5948 = vunpack.c.l.bf16 %v5294
        %v5949 = vunpack.c.l.bf16 %v5295
        %v5950 = vunpack.c.l.bf16 %v5296
        %v5951 = vunpack.c.l.bf16 %v5297
        %v5952 = vunpack.c.l.bf16 %v5298
        %v5953 = vunpack.c.l.bf16 %v5299
        %v5954 = vunpack.c.l.bf16 %v5300
        %v5955 = vunpack.c.l.bf16 %v5301
        %v5956 = vunpack.c.l.bf16 %v5302
        %v5957 = vunpack.c.l.bf16 %v5303
        %v5958 = vunpack.c.l.bf16 %v5304
        %v5959 = vunpack.c.l.bf16 %v5305
        %v5960 = vunpack.c.l.bf16 %v5306
        %v5961 = vunpack.c.l.bf16 %v5307
        %v5962 = vunpack.c.l.bf16 %v5308
        %v5963 = vunpack.c.l.bf16 %v5309
        %v5964 = vunpack.c.l.bf16 %v5310
        %v5965 = vunpack.c.l.bf16 %v5311
        %v5966 = vunpack.c.l.bf16 %v5312
        %v5967 = vunpack.c.l.bf16 %v5313
        %v5968 = vunpack.c.l.bf16 %v5314
        %v5969 = vunpack.c.l.bf16 %v5315
        %v5970 = vunpack.c.l.bf16 %v5316
        %v5971 = vunpack.c.l.bf16 %v5317
        %v5972 = vunpack.c.l.bf16 %v5318
        %v5973 = vunpack.c.l.bf16 %v5319
        %v5974 = vunpack.c.l.bf16 %v5320
        %v5975 = vunpack.c.l.bf16 %v5321
        %v5976 = vunpack.c.l.bf16 %v5322
        %v5977 = vunpack.c.l.bf16 %v5323
        %v5978 = vunpack.c.l.bf16 %v5324
        %v5979 = vunpack.c.l.bf16 %v5325
        %v5980 = vunpack.c.l.bf16 %v5326
        %v5981 = vunpack.c.l.bf16 %v5327
        %v5982 = vunpack.c.l.bf16 %v5328
        %v5983 = vunpack.c.l.bf16 %v5329
        %v5984 = vunpack.c.l.bf16 %v5330
        %v5985 = vunpack.c.l.bf16 %v5331
        %v5986 = vunpack.c.l.bf16 %v5332
        %v5987 = vunpack.c.l.bf16 %v5333
        %v5988 = vunpack.c.l.bf16 %v5334
        %v5989 = vunpack.c.l.bf16 %v5335
        %v5990 = vunpack.c.l.bf16 %v5336
        %v5991 = vunpack.c.l.bf16 %v5337
        %v5992 = vunpack.c.l.bf16 %v5338
        %v5993 = vunpack.c.l.bf16 %v5339
        %v5994 = vunpack.c.l.bf16 %v5340
        %v5995 = vunpack.c.l.bf16 %v5341
        %v5996 = vunpack.c.l.bf16 %v5342
        %v5997 = vunpack.c.l.bf16 %v5343
        %v5998 = vunpack.c.l.bf16 %v5344
        %v5999 = vunpack.c.l.bf16 %v5345
        %v6000 = vunpack.c.l.bf16 %v5346
        %v6001 = vunpack.c.l.bf16 %v5347
        %v6002 = vunpack.c.l.bf16 %v5348
        %v6003 = vunpack.c.l.bf16 %v5349
        %v6004 = vunpack.c.l.bf16 %v5350
        %v6005 = vunpack.c.l.bf16 %v5351
        %v6006 = vunpack.c.l.bf16 %v5352
        %v6007 = vunpack.c.l.bf16 %v5353
        %v6008 = vunpack.c.l.bf16 %v5354
        %v6009 = vunpack.c.l.bf16 %v5355
        %v6010 = vunpack.c.l.bf16 %v5356
        %v6011 = vunpack.c.l.bf16 %v5357
        %v6012 = vunpack.c.l.bf16 %v5358
        %v6013 = vunpack.c.l.bf16 %v5359
        %v6014 = vunpack.c.l.bf16 %v5360
        %v6015 = vunpack.c.l.bf16 %v5361
        %v6016 = vunpack.c.l.bf16 %v5362
        %v6017 = vunpack.c.l.bf16 %v5363
        %v6018 = vunpack.c.l.bf16 %v5364
        %v6019 = vunpack.c.l.bf16 %v5365
        %v6020 = vunpack.c.l.bf16 %v5366
        %v6021 = vunpack.c.l.bf16 %v5367
        %v6022 = vunpack.c.l.bf16 %v5368
        %v6023 = vunpack.c.l.bf16 %v5369
        %v6024 = vunpack.c.l.bf16 %v5370
        %v6025 = vunpack.c.l.bf16 %v5371
        %v6026 = vunpack.c.l.bf16 %v5372
        %v6027 = vunpack.c.l.bf16 %v5373
        %v6028 = vunpack.c.l.bf16 %v5374
        %v6029 = vunpack.c.l.bf16 %v5375
        %v6030 = vunpack.c.l.bf16 %v5376
        %v6031 = vunpack.c.l.bf16 %v5377
        %v6032 = vunpack.c.l.bf16 %v5378
        %v6033 = vunpack.c.l.bf16 %v5379
        %v6034 = vunpack.c.l.bf16 %v5380
        %v6035 = vunpack.c.l.bf16 %v5381
        %v6036 = vunpack.c.l.bf16 %v5382
        %v6037 = vunpack.c.l.bf16 %v5383
        %v6038 = vunpack.c.l.bf16 %v5384
        %v6039 = vunpack.c.l.bf16 %v5385
        %v6040 = vunpack.c.l.bf16 %v5386
        %v6041 = vunpack.c.l.bf16 %v5387
        %v6042 = vunpack.c.l.bf16 %v5388
        %v6043 = vunpack.c.l.bf16 %v5389
        %v6044 = vunpack.c.l.bf16 %v5390
        %v6045 = vunpack.c.l.bf16 %v5391
        %v6046 = vunpack.c.l.bf16 %v5392
        %v6047 = vunpack.c.l.bf16 %v5393
        %v6048 = vunpack.c.l.bf16 %v5394
        %v6049 = vunpack.c.l.bf16 %v5395
        %v6050 = vunpack.c.l.bf16 %v5396
        %v6051 = vunpack.c.l.bf16 %v5397
        %v6052 = vunpack.c.l.bf16 %v5398
        %v6053 = vunpack.c.l.bf16 %v5399
        %v6055 = vsel %vm579, %v5825, 0
        %v6058 = vsel %vm579, %v5826, 0
        %v6061 = vsel %vm579, %v5827, 0
        %v6064 = vsel %vm579, %v5828, 0
        %v6067 = vsel %vm579, %v5829, 0
        %v6070 = vsel %vm579, %v5830, 0
        %v6073 = vsel %vm579, %v5831, 0
        %v6076 = vsel %vm579, %v5832, 0
        %v6079 = vsel %vm579, %v5840, 0
        %v6082 = vsel %vm579, %v5841, 0
        %v6085 = vsel %vm579, %v5842, 0
        %v6088 = vsel %vm579, %v5843, 0
        %v6091 = vsel %vm579, %v5844, 0
        %v6094 = vsel %vm579, %v5845, 0
        %v6097 = vsel %vm579, %v5846, 0
        %v6100 = vsel %vm579, %v5847, 0
        %v6103 = vsel %vm579, %v5852, 0
        %v6106 = vsel %vm579, %v5853, 0
        %v6109 = vsel %vm579, %v5854, 0
        %v6112 = vsel %vm579, %v5855, 0
        %v6115 = vsel %vm579, %v5856, 0
        %v6118 = vsel %vm579, %v5857, 0
        %v6121 = vsel %vm579, %v5858, 0
        %v6124 = vsel %vm579, %v5859, 0
        %v6127 = vsel %vm579, %v5864, 0
        %v6130 = vsel %vm579, %v5865, 0
        %v6133 = vsel %vm579, %v5866, 0
        %v6136 = vsel %vm579, %v5867, 0
        %v6139 = vsel %vm579, %v5868, 0
        %v6142 = vsel %vm579, %v5869, 0
        %v6145 = vsel %vm579, %v5870, 0
        %v6148 = vsel %vm579, %v5871, 0
        %v6151 = vsel %vm579, %v5876, 0
        %v6154 = vsel %vm579, %v5877, 0
        %v6157 = vsel %vm579, %v5878, 0
        %v6160 = vsel %vm579, %v5879, 0
        %v6163 = vsel %vm579, %v5880, 0
        %v6166 = vsel %vm579, %v5881, 0
        %v6169 = vsel %vm579, %v5882, 0
        %v6172 = vsel %vm579, %v5883, 0
        %v6175 = vsel %vm579, %v5888, 0
        %v6178 = vsel %vm579, %v5889, 0
        %v6181 = vsel %vm579, %v5890, 0
        %v6184 = vsel %vm579, %v5891, 0
        %v6187 = vsel %vm579, %v5892, 0
        %v6190 = vsel %vm579, %v5893, 0
        %v6193 = vsel %vm579, %v5894, 0
        %v6196 = vsel %vm579, %v5895, 0
        %v6199 = vsel %vm579, %v5903, 0
        %v6202 = vsel %vm579, %v5904, 0
        %v6205 = vsel %vm579, %v5905, 0
        %v6208 = vsel %vm579, %v5906, 0
        %v6211 = vsel %vm579, %v5907, 0
        %v6214 = vsel %vm579, %v5908, 0
        %v6217 = vsel %vm579, %v5909, 0
        %v6220 = vsel %vm579, %v5910, 0
        %v6223 = vsel %vm579, %v5918, 0
        %v6226 = vsel %vm579, %v5919, 0
        %v6229 = vsel %vm579, %v5920, 0
        %v6232 = vsel %vm579, %v5921, 0
        %v6235 = vsel %vm579, %v5922, 0
        %v6238 = vsel %vm579, %v5923, 0
        %v6241 = vsel %vm579, %v5924, 0
        %v6244 = vsel %vm579, %v5925, 0
        %v6247 = vsel %vm579, %v5810, 0
        %v6250 = vsel %vm579, %v5811, 0
        %v6253 = vsel %vm579, %v5812, 0
        %v6256 = vsel %vm579, %v5813, 0
        %v6259 = vsel %vm579, %v5814, 0
        %v6262 = vsel %vm579, %v5815, 0
        %v6265 = vsel %vm579, %v5816, 0
        %v6268 = vsel %vm579, %v5817, 0
        %6270 = vmatprep.subr.bf16.mxu0 0
        %6271 = vmatpush1.bf16.xpose.msra.mxu0 %v6268
        %6272 = vmatprep.subr.bf16.mxu0 0
        %6273 = vmatpush1.bf16.xpose.msra.mxu0 %v6265
        %6274 = vmatprep.subr.bf16.mxu0 0
        %6275 = vmatpush1.bf16.xpose.msra.mxu0 %v6262
        %6276 = vmatprep.subr.bf16.mxu0 0
        %6277 = vmatpush1.bf16.xpose.msra.mxu0 %v6259
        %6278 = vmatprep.subr.bf16.mxu0 0
        %6279 = vmatpush1.bf16.xpose.msra.mxu0 %v6256
        %6280 = vmatprep.subr.bf16.mxu0 0
        %6281 = vmatpush1.bf16.xpose.msra.mxu0 %v6253
        %6282 = vmatprep.subr.bf16.mxu0 0
        %6283 = vmatpush1.bf16.xpose.msra.mxu0 %v6250
        %6284 = vmatprep.subr.bf16.mxu0 0
        %6285 = vmatpush1.bf16.xpose.msra.mxu0 %v6247
        %6286 = vmatprep.subr.bf16.mxu0 0
        %6287 = vmatpush2.bf16.xpose.msra.mxu0 0
        %6288 = vmatprep.subr.bf16.mxu0 0
        %6289 = vmatpush2.bf16.xpose.msra.mxu0 0
        %6290 = vmatprep.subr.bf16.mxu0 0
        %6291 = vmatpush2.bf16.xpose.msra.mxu0 0
        %6292 = vmatprep.subr.bf16.mxu0 0
        %6293 = vmatpush2.bf16.xpose.msra.mxu0 0
        %6294 = vmatprep.subr.bf16.mxu0 0
        %6295 = vmatpush2.bf16.xpose.msra.mxu0 0
        %6296 = vmatprep.subr.bf16.mxu0 0
        %6297 = vmatpush2.bf16.xpose.msra.mxu0 0
        %6298 = vmatprep.subr.bf16.mxu0 0
        %6299 = vmatpush2.bf16.xpose.msra.mxu0 0
        %6300 = vmatprep.subr.bf16.mxu0 0
        %6301 = vmatpush2.bf16.xpose.msra.mxu0 0
        %6302 = vmatprep.mubr.bf16.mxu0 0
        %6303 = vmatmul.mubr.bf16.gmra.mxu0 %v6055
        %v6304 = vpop.f32.mrf.mxu0
        %v6305 = vadd.f32 %v5926, %v6304
        %v6306 = vpop.f32.mrf.mxu0
        %v6307 = vpop.f32.mrf.mxu0
        %v6308 = vadd.f32 %v5927, %v6307
        %v6309 = vpop.f32.mrf.mxu0
        %6310 = vmatprep.mubr.bf16.mxu0 0
        %6311 = vmatmul.mubr.bf16.gmra.mxu0 %v6058
        %v6312 = vpop.f32.mrf.mxu0
        %v6313 = vadd.f32 %v5928, %v6312
        %v6314 = vpop.f32.mrf.mxu0
        %v6315 = vpop.f32.mrf.mxu0
        %v6316 = vadd.f32 %v5929, %v6315
        %v6317 = vpop.f32.mrf.mxu0
        %6318 = vmatprep.mubr.bf16.mxu0 0
        %6319 = vmatmul.mubr.bf16.gmra.mxu0 %v6061
        %v6320 = vpop.f32.mrf.mxu0
        %v6321 = vadd.f32 %v5930, %v6320
        %v6322 = vpop.f32.mrf.mxu0
        %v6323 = vpop.f32.mrf.mxu0
        %v6324 = vadd.f32 %v5931, %v6323
        %v6325 = vpop.f32.mrf.mxu0
        %6326 = vmatprep.mubr.bf16.mxu0 0
        %6327 = vmatmul.mubr.bf16.gmra.mxu0 %v6064
        %v6328 = vpop.f32.mrf.mxu0
        %v6329 = vadd.f32 %v5932, %v6328
        %v6330 = vpop.f32.mrf.mxu0
        %v6331 = vpop.f32.mrf.mxu0
        %v6332 = vadd.f32 %v5933, %v6331
        %v6333 = vpop.f32.mrf.mxu0
        %6334 = vmatprep.mubr.bf16.mxu0 0
        %6335 = vmatmul.mubr.bf16.gmra.mxu0 %v6067
        %v6336 = vpop.f32.mrf.mxu0
        %v6337 = vadd.f32 %v5934, %v6336
        %v6338 = vpop.f32.mrf.mxu0
        %v6339 = vpop.f32.mrf.mxu0
        %v6340 = vadd.f32 %v5935, %v6339
        %v6341 = vpop.f32.mrf.mxu0
        %6342 = vmatprep.mubr.bf16.mxu0 0
        %6343 = vmatmul.mubr.bf16.gmra.mxu0 %v6070
        %v6344 = vpop.f32.mrf.mxu0
        %v6345 = vadd.f32 %v5936, %v6344
        %v6346 = vpop.f32.mrf.mxu0
        %v6347 = vpop.f32.mrf.mxu0
        %v6348 = vadd.f32 %v5937, %v6347
        %v6349 = vpop.f32.mrf.mxu0
        %6350 = vmatprep.mubr.bf16.mxu0 0
        %6351 = vmatmul.mubr.bf16.gmra.mxu0 %v6073
        %v6352 = vpop.f32.mrf.mxu0
        %v6353 = vadd.f32 %v5938, %v6352
        %v6354 = vpop.f32.mrf.mxu0
        %v6355 = vpop.f32.mrf.mxu0
        %v6356 = vadd.f32 %v5939, %v6355
        %v6357 = vpop.f32.mrf.mxu0
        %6358 = vmatprep.mubr.bf16.mxu0 0
        %6359 = vmatmul.mubr.bf16.gmra.mxu0 %v6076
        %v6360 = vpop.f32.mrf.mxu0
        %v6361 = vadd.f32 %v5940, %v6360
        %v6362 = vpop.f32.mrf.mxu0
        %v6363 = vpop.f32.mrf.mxu0
        %v6364 = vadd.f32 %v5941, %v6363
        %v6365 = vpop.f32.mrf.mxu0
        %6366 = vmatprep.mubr.bf16.mxu0 0
        %6367 = vmatmul.mubr.bf16.gmra.mxu0 %v6079
        %v6368 = vpop.f32.mrf.mxu0
        %v6369 = vadd.f32 %v5942, %v6368
        %v6370 = vpop.f32.mrf.mxu0
        %v6371 = vpop.f32.mrf.mxu0
        %v6372 = vadd.f32 %v5943, %v6371
        %v6373 = vpop.f32.mrf.mxu0
        %6374 = vmatprep.mubr.bf16.mxu0 0
        %6375 = vmatmul.mubr.bf16.gmra.mxu0 %v6082
        %v6376 = vpop.f32.mrf.mxu0
        %v6377 = vadd.f32 %v5944, %v6376
        %v6378 = vpop.f32.mrf.mxu0
        %v6379 = vpop.f32.mrf.mxu0
        %v6380 = vadd.f32 %v5945, %v6379
        %v6381 = vpop.f32.mrf.mxu0
        %6382 = vmatprep.mubr.bf16.mxu0 0
        %6383 = vmatmul.mubr.bf16.gmra.mxu0 %v6085
        %v6384 = vpop.f32.mrf.mxu0
        %v6385 = vadd.f32 %v5946, %v6384
        %v6386 = vpop.f32.mrf.mxu0
        %v6387 = vpop.f32.mrf.mxu0
        %v6388 = vadd.f32 %v5947, %v6387
        %v6389 = vpop.f32.mrf.mxu0
        %6390 = vmatprep.mubr.bf16.mxu0 0
        %6391 = vmatmul.mubr.bf16.gmra.mxu0 %v6088
        %v6392 = vpop.f32.mrf.mxu0
        %v6393 = vadd.f32 %v5948, %v6392
        %v6394 = vpop.f32.mrf.mxu0
        %v6395 = vpop.f32.mrf.mxu0
        %v6396 = vadd.f32 %v5949, %v6395
        %v6397 = vpop.f32.mrf.mxu0
        %6398 = vmatprep.mubr.bf16.mxu0 0
        %6399 = vmatmul.mubr.bf16.gmra.mxu0 %v6091
        %v6400 = vpop.f32.mrf.mxu0
        %v6401 = vadd.f32 %v5950, %v6400
        %v6402 = vpop.f32.mrf.mxu0
        %v6403 = vpop.f32.mrf.mxu0
        %v6404 = vadd.f32 %v5951, %v6403
        %v6405 = vpop.f32.mrf.mxu0
        %6406 = vmatprep.mubr.bf16.mxu0 0
        %6407 = vmatmul.mubr.bf16.gmra.mxu0 %v6094
        %v6408 = vpop.f32.mrf.mxu0
        %v6409 = vadd.f32 %v5952, %v6408
        %v6410 = vpop.f32.mrf.mxu0
        %v6411 = vpop.f32.mrf.mxu0
        %v6412 = vadd.f32 %v5953, %v6411
        %v6413 = vpop.f32.mrf.mxu0
        %6414 = vmatprep.mubr.bf16.mxu0 0
        %6415 = vmatmul.mubr.bf16.gmra.mxu0 %v6097
        %v6416 = vpop.f32.mrf.mxu0
        %v6417 = vadd.f32 %v5954, %v6416
        %v6418 = vpop.f32.mrf.mxu0
        %v6419 = vpop.f32.mrf.mxu0
        %v6420 = vadd.f32 %v5955, %v6419
        %v6421 = vpop.f32.mrf.mxu0
        %6422 = vmatprep.mubr.bf16.mxu0 0
        %6423 = vmatmul.mubr.bf16.gmra.mxu0 %v6100
        %v6424 = vpop.f32.mrf.mxu0
        %v6425 = vadd.f32 %v5956, %v6424
        %v6426 = vpop.f32.mrf.mxu0
        %v6427 = vpop.f32.mrf.mxu0
        %v6428 = vadd.f32 %v5957, %v6427
        %v6429 = vpop.f32.mrf.mxu0
        %6430 = vmatprep.mubr.bf16.mxu0 0
        %6431 = vmatmul.mubr.bf16.gmra.mxu0 %v6103
        %v6432 = vpop.f32.mrf.mxu0
        %v6433 = vadd.f32 %v5958, %v6432
        %v6434 = vpop.f32.mrf.mxu0
        %v6435 = vpop.f32.mrf.mxu0
        %v6436 = vadd.f32 %v5959, %v6435
        %v6437 = vpop.f32.mrf.mxu0
        %6438 = vmatprep.mubr.bf16.mxu0 0
        %6439 = vmatmul.mubr.bf16.gmra.mxu0 %v6106
        %v6440 = vpop.f32.mrf.mxu0
        %v6441 = vadd.f32 %v5960, %v6440
        %v6442 = vpop.f32.mrf.mxu0
        %v6443 = vpop.f32.mrf.mxu0
        %v6444 = vadd.f32 %v5961, %v6443
        %v6445 = vpop.f32.mrf.mxu0
        %6446 = vmatprep.mubr.bf16.mxu0 0
        %6447 = vmatmul.mubr.bf16.gmra.mxu0 %v6109
        %v6448 = vpop.f32.mrf.mxu0
        %v6449 = vadd.f32 %v5962, %v6448
        %v6450 = vpop.f32.mrf.mxu0
        %v6451 = vpop.f32.mrf.mxu0
        %v6452 = vadd.f32 %v5963, %v6451
        %v6453 = vpop.f32.mrf.mxu0
        %6454 = vmatprep.mubr.bf16.mxu0 0
        %6455 = vmatmul.mubr.bf16.gmra.mxu0 %v6112
        %v6456 = vpop.f32.mrf.mxu0
        %v6457 = vadd.f32 %v5964, %v6456
        %v6458 = vpop.f32.mrf.mxu0
        %v6459 = vpop.f32.mrf.mxu0
        %v6460 = vadd.f32 %v5965, %v6459
        %v6461 = vpop.f32.mrf.mxu0
        %6462 = vmatprep.mubr.bf16.mxu0 0
        %6463 = vmatmul.mubr.bf16.gmra.mxu0 %v6115
        %v6464 = vpop.f32.mrf.mxu0
        %v6465 = vadd.f32 %v5966, %v6464
        %v6466 = vpop.f32.mrf.mxu0
        %v6467 = vpop.f32.mrf.mxu0
        %v6468 = vadd.f32 %v5967, %v6467
        %v6469 = vpop.f32.mrf.mxu0
        %6470 = vmatprep.mubr.bf16.mxu0 0
        %6471 = vmatmul.mubr.bf16.gmra.mxu0 %v6118
        %v6472 = vpop.f32.mrf.mxu0
        %v6473 = vadd.f32 %v5968, %v6472
        %v6474 = vpop.f32.mrf.mxu0
        %v6475 = vpop.f32.mrf.mxu0
        %v6476 = vadd.f32 %v5969, %v6475
        %v6477 = vpop.f32.mrf.mxu0
        %6478 = vmatprep.mubr.bf16.mxu0 0
        %6479 = vmatmul.mubr.bf16.gmra.mxu0 %v6121
        %v6480 = vpop.f32.mrf.mxu0
        %v6481 = vadd.f32 %v5970, %v6480
        %v6482 = vpop.f32.mrf.mxu0
        %v6483 = vpop.f32.mrf.mxu0
        %v6484 = vadd.f32 %v5971, %v6483
        %v6485 = vpop.f32.mrf.mxu0
        %6486 = vmatprep.mubr.bf16.mxu0 0
        %6487 = vmatmul.mubr.bf16.gmra.mxu0 %v6124
        %v6488 = vpop.f32.mrf.mxu0
        %v6489 = vadd.f32 %v5972, %v6488
        %v6490 = vpop.f32.mrf.mxu0
        %v6491 = vpop.f32.mrf.mxu0
        %v6492 = vadd.f32 %v5973, %v6491
        %v6493 = vpop.f32.mrf.mxu0
        %6494 = vmatprep.mubr.bf16.mxu0 0
        %6495 = vmatmul.mubr.bf16.gmra.mxu0 %v6127
        %v6496 = vpop.f32.mrf.mxu0
        %v6497 = vadd.f32 %v5974, %v6496
        %v6498 = vpop.f32.mrf.mxu0
        %v6499 = vpop.f32.mrf.mxu0
        %v6500 = vadd.f32 %v5975, %v6499
        %v6501 = vpop.f32.mrf.mxu0
        %6502 = vmatprep.mubr.bf16.mxu0 0
        %6503 = vmatmul.mubr.bf16.gmra.mxu0 %v6130
        %v6504 = vpop.f32.mrf.mxu0
        %v6505 = vadd.f32 %v5976, %v6504
        %v6506 = vpop.f32.mrf.mxu0
        %v6507 = vpop.f32.mrf.mxu0
        %v6508 = vadd.f32 %v5977, %v6507
        %v6509 = vpop.f32.mrf.mxu0
        %6510 = vmatprep.mubr.bf16.mxu0 0
        %6511 = vmatmul.mubr.bf16.gmra.mxu0 %v6133
        %v6512 = vpop.f32.mrf.mxu0
        %v6513 = vadd.f32 %v5978, %v6512
        %v6514 = vpop.f32.mrf.mxu0
        %v6515 = vpop.f32.mrf.mxu0
        %v6516 = vadd.f32 %v5979, %v6515
        %v6517 = vpop.f32.mrf.mxu0
        %6518 = vmatprep.mubr.bf16.mxu0 0
        %6519 = vmatmul.mubr.bf16.gmra.mxu0 %v6136
        %v6520 = vpop.f32.mrf.mxu0
        %v6521 = vadd.f32 %v5980, %v6520
        %v6522 = vpop.f32.mrf.mxu0
        %v6523 = vpop.f32.mrf.mxu0
        %v6524 = vadd.f32 %v5981, %v6523
        %v6525 = vpop.f32.mrf.mxu0
        %6526 = vmatprep.mubr.bf16.mxu0 0
        %6527 = vmatmul.mubr.bf16.gmra.mxu0 %v6139
        %v6528 = vpop.f32.mrf.mxu0
        %v6529 = vadd.f32 %v5982, %v6528
        %v6530 = vpop.f32.mrf.mxu0
        %v6531 = vpop.f32.mrf.mxu0
        %v6532 = vadd.f32 %v5983, %v6531
        %v6533 = vpop.f32.mrf.mxu0
        %6534 = vmatprep.mubr.bf16.mxu0 0
        %6535 = vmatmul.mubr.bf16.gmra.mxu0 %v6142
        %v6536 = vpop.f32.mrf.mxu0
        %v6537 = vadd.f32 %v5984, %v6536
        %v6538 = vpop.f32.mrf.mxu0
        %v6539 = vpop.f32.mrf.mxu0
        %v6540 = vadd.f32 %v5985, %v6539
        %v6541 = vpop.f32.mrf.mxu0
        %6542 = vmatprep.mubr.bf16.mxu0 0
        %6543 = vmatmul.mubr.bf16.gmra.mxu0 %v6145
        %v6544 = vpop.f32.mrf.mxu0
        %v6545 = vadd.f32 %v5986, %v6544
        %v6546 = vpop.f32.mrf.mxu0
        %v6547 = vpop.f32.mrf.mxu0
        %v6548 = vadd.f32 %v5987, %v6547
        %v6549 = vpop.f32.mrf.mxu0
        %6550 = vmatprep.mubr.bf16.mxu0 0
        %6551 = vmatmul.mubr.bf16.gmra.mxu0 %v6148
        %v6552 = vpop.f32.mrf.mxu0
        %v6553 = vadd.f32 %v5988, %v6552
        %v6554 = vpop.f32.mrf.mxu0
        %v6555 = vpop.f32.mrf.mxu0
        %v6556 = vadd.f32 %v5989, %v6555
        %v6557 = vpop.f32.mrf.mxu0
        %6558 = vmatprep.mubr.bf16.mxu0 0
        %6559 = vmatmul.mubr.bf16.gmra.mxu0 %v6151
        %v6560 = vpop.f32.mrf.mxu0
        %v6561 = vadd.f32 %v5990, %v6560
        %v6562 = vpop.f32.mrf.mxu0
        %v6563 = vpop.f32.mrf.mxu0
        %v6564 = vadd.f32 %v5991, %v6563
        %v6565 = vpop.f32.mrf.mxu0
        %6566 = vmatprep.mubr.bf16.mxu0 0
        %6567 = vmatmul.mubr.bf16.gmra.mxu0 %v6154
        %v6568 = vpop.f32.mrf.mxu0
        %v6569 = vadd.f32 %v5992, %v6568
        %v6570 = vpop.f32.mrf.mxu0
        %v6571 = vpop.f32.mrf.mxu0
        %v6572 = vadd.f32 %v5993, %v6571
        %v6573 = vpop.f32.mrf.mxu0
        %6574 = vmatprep.mubr.bf16.mxu0 0
        %6575 = vmatmul.mubr.bf16.gmra.mxu0 %v6157
        %v6576 = vpop.f32.mrf.mxu0
        %v6577 = vadd.f32 %v5994, %v6576
        %v6578 = vpop.f32.mrf.mxu0
        %v6579 = vpop.f32.mrf.mxu0
        %v6580 = vadd.f32 %v5995, %v6579
        %v6581 = vpop.f32.mrf.mxu0
        %6582 = vmatprep.mubr.bf16.mxu0 0
        %6583 = vmatmul.mubr.bf16.gmra.mxu0 %v6160
        %v6584 = vpop.f32.mrf.mxu0
        %v6585 = vadd.f32 %v5996, %v6584
        %v6586 = vpop.f32.mrf.mxu0
        %v6587 = vpop.f32.mrf.mxu0
        %v6588 = vadd.f32 %v5997, %v6587
        %v6589 = vpop.f32.mrf.mxu0
        %6590 = vmatprep.mubr.bf16.mxu0 0
        %6591 = vmatmul.mubr.bf16.gmra.mxu0 %v6163
        %v6592 = vpop.f32.mrf.mxu0
        %v6593 = vadd.f32 %v5998, %v6592
        %v6594 = vpop.f32.mrf.mxu0
        %v6595 = vpop.f32.mrf.mxu0
        %v6596 = vadd.f32 %v5999, %v6595
        %v6597 = vpop.f32.mrf.mxu0
        %6598 = vmatprep.mubr.bf16.mxu0 0
        %6599 = vmatmul.mubr.bf16.gmra.mxu0 %v6166
        %v6600 = vpop.f32.mrf.mxu0
        %v6601 = vadd.f32 %v6000, %v6600
        %v6602 = vpop.f32.mrf.mxu0
        %v6603 = vpop.f32.mrf.mxu0
        %v6604 = vadd.f32 %v6001, %v6603
        %v6605 = vpop.f32.mrf.mxu0
        %6606 = vmatprep.mubr.bf16.mxu0 0
        %6607 = vmatmul.mubr.bf16.gmra.mxu0 %v6169
        %v6608 = vpop.f32.mrf.mxu0
        %v6609 = vadd.f32 %v6002, %v6608
        %v6610 = vpop.f32.mrf.mxu0
        %v6611 = vpop.f32.mrf.mxu0
        %v6612 = vadd.f32 %v6003, %v6611
        %v6613 = vpop.f32.mrf.mxu0
        %6614 = vmatprep.mubr.bf16.mxu0 0
        %6615 = vmatmul.mubr.bf16.gmra.mxu0 %v6172
        %v6616 = vpop.f32.mrf.mxu0
        %v6617 = vadd.f32 %v6004, %v6616
        %v6618 = vpop.f32.mrf.mxu0
        %v6619 = vpop.f32.mrf.mxu0
        %v6620 = vadd.f32 %v6005, %v6619
        %v6621 = vpop.f32.mrf.mxu0
        %6622 = vmatprep.mubr.bf16.mxu0 0
        %6623 = vmatmul.mubr.bf16.gmra.mxu0 %v6175
        %v6624 = vpop.f32.mrf.mxu0
        %v6625 = vadd.f32 %v6006, %v6624
        %v6626 = vpop.f32.mrf.mxu0
        %v6627 = vpop.f32.mrf.mxu0
        %v6628 = vadd.f32 %v6007, %v6627
        %v6629 = vpop.f32.mrf.mxu0
        %6630 = vmatprep.mubr.bf16.mxu0 0
        %6631 = vmatmul.mubr.bf16.gmra.mxu0 %v6178
        %v6632 = vpop.f32.mrf.mxu0
        %v6633 = vadd.f32 %v6008, %v6632
        %v6634 = vpop.f32.mrf.mxu0
        %v6635 = vpop.f32.mrf.mxu0
        %v6636 = vadd.f32 %v6009, %v6635
        %v6637 = vpop.f32.mrf.mxu0
        %6638 = vmatprep.mubr.bf16.mxu0 0
        %6639 = vmatmul.mubr.bf16.gmra.mxu0 %v6181
        %v6640 = vpop.f32.mrf.mxu0
        %v6641 = vadd.f32 %v6010, %v6640
        %v6642 = vpop.f32.mrf.mxu0
        %v6643 = vpop.f32.mrf.mxu0
        %v6644 = vadd.f32 %v6011, %v6643
        %v6645 = vpop.f32.mrf.mxu0
        %6646 = vmatprep.mubr.bf16.mxu0 0
        %6647 = vmatmul.mubr.bf16.gmra.mxu0 %v6184
        %v6648 = vpop.f32.mrf.mxu0
        %v6649 = vadd.f32 %v6012, %v6648
        %v6650 = vpop.f32.mrf.mxu0
        %v6651 = vpop.f32.mrf.mxu0
        %v6652 = vadd.f32 %v6013, %v6651
        %v6653 = vpop.f32.mrf.mxu0
        %6654 = vmatprep.mubr.bf16.mxu0 0
        %6655 = vmatmul.mubr.bf16.gmra.mxu0 %v6187
        %v6656 = vpop.f32.mrf.mxu0
        %v6657 = vadd.f32 %v6014, %v6656
        %v6658 = vpop.f32.mrf.mxu0
        %v6659 = vpop.f32.mrf.mxu0
        %v6660 = vadd.f32 %v6015, %v6659
        %v6661 = vpop.f32.mrf.mxu0
        %6662 = vmatprep.mubr.bf16.mxu0 0
        %6663 = vmatmul.mubr.bf16.gmra.mxu0 %v6190
        %v6664 = vpop.f32.mrf.mxu0
        %v6665 = vadd.f32 %v6016, %v6664
        %v6666 = vpop.f32.mrf.mxu0
        %v6667 = vpop.f32.mrf.mxu0
        %v6668 = vadd.f32 %v6017, %v6667
        %v6669 = vpop.f32.mrf.mxu0
        %6670 = vmatprep.mubr.bf16.mxu0 0
        %6671 = vmatmul.mubr.bf16.gmra.mxu0 %v6193
        %v6672 = vpop.f32.mrf.mxu0
        %v6673 = vadd.f32 %v6018, %v6672
        %v6674 = vpop.f32.mrf.mxu0
        %v6675 = vpop.f32.mrf.mxu0
        %v6676 = vadd.f32 %v6019, %v6675
        %v6677 = vpop.f32.mrf.mxu0
        %6678 = vmatprep.mubr.bf16.mxu0 0
        %6679 = vmatmul.mubr.bf16.gmra.mxu0 %v6196
        %v6680 = vpop.f32.mrf.mxu0
        %v6681 = vadd.f32 %v6020, %v6680
        %v6682 = vpop.f32.mrf.mxu0
        %v6683 = vpop.f32.mrf.mxu0
        %v6684 = vadd.f32 %v6021, %v6683
        %v6685 = vpop.f32.mrf.mxu0
        %6686 = vmatprep.mubr.bf16.mxu0 0
        %6687 = vmatmul.mubr.bf16.gmra.mxu0 %v6199
        %v6688 = vpop.f32.mrf.mxu0
        %v6689 = vadd.f32 %v6022, %v6688
        %v6690 = vpop.f32.mrf.mxu0
        %v6691 = vpop.f32.mrf.mxu0
        %v6692 = vadd.f32 %v6023, %v6691
        %v6693 = vpop.f32.mrf.mxu0
        %6694 = vmatprep.mubr.bf16.mxu0 0
        %6695 = vmatmul.mubr.bf16.gmra.mxu0 %v6202
        %v6696 = vpop.f32.mrf.mxu0
        %v6697 = vadd.f32 %v6024, %v6696
        %v6698 = vpop.f32.mrf.mxu0
        %v6699 = vpop.f32.mrf.mxu0
        %v6700 = vadd.f32 %v6025, %v6699
        %v6701 = vpop.f32.mrf.mxu0
        %6702 = vmatprep.mubr.bf16.mxu0 0
        %6703 = vmatmul.mubr.bf16.gmra.mxu0 %v6205
        %v6704 = vpop.f32.mrf.mxu0
        %v6705 = vadd.f32 %v6026, %v6704
        %v6706 = vpop.f32.mrf.mxu0
        %v6707 = vpop.f32.mrf.mxu0
        %v6708 = vadd.f32 %v6027, %v6707
        %v6709 = vpop.f32.mrf.mxu0
        %6710 = vmatprep.mubr.bf16.mxu0 0
        %6711 = vmatmul.mubr.bf16.gmra.mxu0 %v6208
        %v6712 = vpop.f32.mrf.mxu0
        %v6713 = vadd.f32 %v6028, %v6712
        %v6714 = vpop.f32.mrf.mxu0
        %v6715 = vpop.f32.mrf.mxu0
        %v6716 = vadd.f32 %v6029, %v6715
        %v6717 = vpop.f32.mrf.mxu0
        %6718 = vmatprep.mubr.bf16.mxu0 0
        %6719 = vmatmul.mubr.bf16.gmra.mxu0 %v6211
        %v6720 = vpop.f32.mrf.mxu0
        %v6721 = vadd.f32 %v6030, %v6720
        %v6722 = vpop.f32.mrf.mxu0
        %v6723 = vpop.f32.mrf.mxu0
        %v6724 = vadd.f32 %v6031, %v6723
        %v6725 = vpop.f32.mrf.mxu0
        %6726 = vmatprep.mubr.bf16.mxu0 0
        %6727 = vmatmul.mubr.bf16.gmra.mxu0 %v6214
        %v6728 = vpop.f32.mrf.mxu0
        %v6729 = vadd.f32 %v6032, %v6728
        %v6730 = vpop.f32.mrf.mxu0
        %v6731 = vpop.f32.mrf.mxu0
        %v6732 = vadd.f32 %v6033, %v6731
        %v6733 = vpop.f32.mrf.mxu0
        %6734 = vmatprep.mubr.bf16.mxu0 0
        %6735 = vmatmul.mubr.bf16.gmra.mxu0 %v6217
        %v6736 = vpop.f32.mrf.mxu0
        %v6737 = vadd.f32 %v6034, %v6736
        %v6738 = vpop.f32.mrf.mxu0
        %v6739 = vpop.f32.mrf.mxu0
        %v6740 = vadd.f32 %v6035, %v6739
        %v6741 = vpop.f32.mrf.mxu0
        %6742 = vmatprep.mubr.bf16.mxu0 0
        %6743 = vmatmul.mubr.bf16.gmra.mxu0 %v6220
        %v6744 = vpop.f32.mrf.mxu0
        %v6745 = vadd.f32 %v6036, %v6744
        %v6746 = vpop.f32.mrf.mxu0
        %v6747 = vpop.f32.mrf.mxu0
        %v6748 = vadd.f32 %v6037, %v6747
        %v6749 = vpop.f32.mrf.mxu0
        %6750 = vmatprep.mubr.bf16.mxu0 0
        %6751 = vmatmul.mubr.bf16.gmra.mxu0 %v6223
        %v6752 = vpop.f32.mrf.mxu0
        %v6753 = vadd.f32 %v6038, %v6752
        %v6754 = vpop.f32.mrf.mxu0
        %v6755 = vpop.f32.mrf.mxu0
        %v6756 = vadd.f32 %v6039, %v6755
        %v6757 = vpop.f32.mrf.mxu0
        %6758 = vmatprep.mubr.bf16.mxu0 0
        %6759 = vmatmul.mubr.bf16.gmra.mxu0 %v6226
        %v6760 = vpop.f32.mrf.mxu0
        %v6761 = vadd.f32 %v6040, %v6760
        %v6762 = vpop.f32.mrf.mxu0
        %v6763 = vpop.f32.mrf.mxu0
        %v6764 = vadd.f32 %v6041, %v6763
        %v6765 = vpop.f32.mrf.mxu0
        %6766 = vmatprep.mubr.bf16.mxu0 0
        %6767 = vmatmul.mubr.bf16.gmra.mxu0 %v6229
        %v6768 = vpop.f32.mrf.mxu0
        %v6769 = vadd.f32 %v6042, %v6768
        %v6770 = vpop.f32.mrf.mxu0
        %v6771 = vpop.f32.mrf.mxu0
        %v6772 = vadd.f32 %v6043, %v6771
        %v6773 = vpop.f32.mrf.mxu0
        %6774 = vmatprep.mubr.bf16.mxu0 0
        %6775 = vmatmul.mubr.bf16.gmra.mxu0 %v6232
        %v6776 = vpop.f32.mrf.mxu0
        %v6777 = vadd.f32 %v6044, %v6776
        %v6778 = vpop.f32.mrf.mxu0
        %v6779 = vpop.f32.mrf.mxu0
        %v6780 = vadd.f32 %v6045, %v6779
        %v6781 = vpop.f32.mrf.mxu0
        %6782 = vmatprep.mubr.bf16.mxu0 0
        %6783 = vmatmul.mubr.bf16.gmra.mxu0 %v6235
        %v6784 = vpop.f32.mrf.mxu0
        %v6785 = vadd.f32 %v6046, %v6784
        %v6786 = vpop.f32.mrf.mxu0
        %v6787 = vpop.f32.mrf.mxu0
        %v6788 = vadd.f32 %v6047, %v6787
        %v6789 = vpop.f32.mrf.mxu0
        %6790 = vmatprep.mubr.bf16.mxu0 0
        %6791 = vmatmul.mubr.bf16.gmra.mxu0 %v6238
        %v6792 = vpop.f32.mrf.mxu0
        %v6793 = vadd.f32 %v6048, %v6792
        %v6794 = vpop.f32.mrf.mxu0
        %v6795 = vpop.f32.mrf.mxu0
        %v6796 = vadd.f32 %v6049, %v6795
        %v6797 = vpop.f32.mrf.mxu0
        %6798 = vmatprep.mubr.bf16.mxu0 0
        %6799 = vmatmul.mubr.bf16.gmra.mxu0 %v6241
        %v6800 = vpop.f32.mrf.mxu0
        %v6801 = vadd.f32 %v6050, %v6800
        %v6802 = vpop.f32.mrf.mxu0
        %v6803 = vpop.f32.mrf.mxu0
        %v6804 = vadd.f32 %v6051, %v6803
        %v6805 = vpop.f32.mrf.mxu0
        %6806 = vmatprep.mubr.bf16.mxu0 0
        %6807 = vmatmul.mubr.bf16.gmra.mxu0 %v6244
        %v6808 = vpop.f32.mrf.mxu0
        %v6809 = vadd.f32 %v6052, %v6808
        %v6810 = vpop.f32.mrf.mxu0
        %v6811 = vpop.f32.mrf.mxu0
        %v6812 = vadd.f32 %v6053, %v6811
        %v6813 = vpop.f32.mrf.mxu0
        %6814 = vdwg.mxu0
        %6815 = vmax.xlane.f32.xlu0 %v6305
        %v6816 = vpop.xlane.xlu0 %6815
        %6817 = vmax.xlane.f32.xlu0 %v6308
        %v6818 = vpop.xlane.xlu0 %6817
        %6819 = vmax.xlane.f32.xlu0 %v6313
        %v6820 = vpop.xlane.xlu0 %6819
        %6821 = vmax.xlane.f32.xlu0 %v6316
        %v6822 = vpop.xlane.xlu0 %6821
        %6823 = vmax.xlane.f32.xlu0 %v6321
        %v6824 = vpop.xlane.xlu0 %6823
        %6825 = vmax.xlane.f32.xlu0 %v6324
        %v6826 = vpop.xlane.xlu0 %6825
        %6827 = vmax.xlane.f32.xlu0 %v6329
        %v6828 = vpop.xlane.xlu0 %6827
        %6829 = vmax.xlane.f32.xlu0 %v6332
        %v6830 = vpop.xlane.xlu0 %6829
        %6831 = vmax.xlane.f32.xlu0 %v6337
        %v6832 = vpop.xlane.xlu0 %6831
        %6833 = vmax.xlane.f32.xlu0 %v6340
        %v6834 = vpop.xlane.xlu0 %6833
        %6835 = vmax.xlane.f32.xlu0 %v6345
        %v6836 = vpop.xlane.xlu0 %6835
        %6837 = vmax.xlane.f32.xlu0 %v6348
        %v6838 = vpop.xlane.xlu0 %6837
        %6839 = vmax.xlane.f32.xlu0 %v6353
        %v6840 = vpop.xlane.xlu0 %6839
        %6841 = vmax.xlane.f32.xlu0 %v6356
        %v6842 = vpop.xlane.xlu0 %6841
        %6843 = vmax.xlane.f32.xlu0 %v6361
        %v6844 = vpop.xlane.xlu0 %6843
        %6845 = vmax.xlane.f32.xlu0 %v6364
        %v6846 = vpop.xlane.xlu0 %6845
        %6847 = vmax.xlane.f32.xlu0 %v6369
        %v6848 = vpop.xlane.xlu0 %6847
        %6849 = vmax.xlane.f32.xlu0 %v6372
        %v6850 = vpop.xlane.xlu0 %6849
        %6851 = vmax.xlane.f32.xlu0 %v6377
        %v6852 = vpop.xlane.xlu0 %6851
        %6853 = vmax.xlane.f32.xlu0 %v6380
        %v6854 = vpop.xlane.xlu0 %6853
        %6855 = vmax.xlane.f32.xlu0 %v6385
        %v6856 = vpop.xlane.xlu0 %6855
        %6857 = vmax.xlane.f32.xlu0 %v6388
        %v6858 = vpop.xlane.xlu0 %6857
        %6859 = vmax.xlane.f32.xlu0 %v6393
        %v6860 = vpop.xlane.xlu0 %6859
        %6861 = vmax.xlane.f32.xlu0 %v6396
        %v6862 = vpop.xlane.xlu0 %6861
        %6863 = vmax.xlane.f32.xlu0 %v6401
        %v6864 = vpop.xlane.xlu0 %6863
        %6865 = vmax.xlane.f32.xlu0 %v6404
        %v6866 = vpop.xlane.xlu0 %6865
        %6867 = vmax.xlane.f32.xlu0 %v6409
        %v6868 = vpop.xlane.xlu0 %6867
        %6869 = vmax.xlane.f32.xlu0 %v6412
        %v6870 = vpop.xlane.xlu0 %6869
        %6871 = vmax.xlane.f32.xlu0 %v6417
        %v6872 = vpop.xlane.xlu0 %6871
        %6873 = vmax.xlane.f32.xlu0 %v6420
        %v6874 = vpop.xlane.xlu0 %6873
        %6875 = vmax.xlane.f32.xlu0 %v6425
        %v6876 = vpop.xlane.xlu0 %6875
        %6877 = vmax.xlane.f32.xlu0 %v6428
        %v6878 = vpop.xlane.xlu0 %6877
        %6879 = vmax.xlane.f32.xlu0 %v6433
        %v6880 = vpop.xlane.xlu0 %6879
        %6881 = vmax.xlane.f32.xlu0 %v6436
        %v6882 = vpop.xlane.xlu0 %6881
        %6883 = vmax.xlane.f32.xlu0 %v6441
        %v6884 = vpop.xlane.xlu0 %6883
        %6885 = vmax.xlane.f32.xlu0 %v6444
        %v6886 = vpop.xlane.xlu0 %6885
        %6887 = vmax.xlane.f32.xlu0 %v6449
        %v6888 = vpop.xlane.xlu0 %6887
        %6889 = vmax.xlane.f32.xlu0 %v6452
        %v6890 = vpop.xlane.xlu0 %6889
        %6891 = vmax.xlane.f32.xlu0 %v6457
        %v6892 = vpop.xlane.xlu0 %6891
        %6893 = vmax.xlane.f32.xlu0 %v6460
        %v6894 = vpop.xlane.xlu0 %6893
        %6895 = vmax.xlane.f32.xlu0 %v6465
        %v6896 = vpop.xlane.xlu0 %6895
        %6897 = vmax.xlane.f32.xlu0 %v6468
        %v6898 = vpop.xlane.xlu0 %6897
        %6899 = vmax.xlane.f32.xlu0 %v6473
        %v6900 = vpop.xlane.xlu0 %6899
        %6901 = vmax.xlane.f32.xlu0 %v6476
        %v6902 = vpop.xlane.xlu0 %6901
        %6903 = vmax.xlane.f32.xlu0 %v6481
        %v6904 = vpop.xlane.xlu0 %6903
        %6905 = vmax.xlane.f32.xlu0 %v6484
        %v6906 = vpop.xlane.xlu0 %6905
        %6907 = vmax.xlane.f32.xlu0 %v6489
        %v6908 = vpop.xlane.xlu0 %6907
        %6909 = vmax.xlane.f32.xlu0 %v6492
        %v6910 = vpop.xlane.xlu0 %6909
        %6911 = vmax.xlane.f32.xlu0 %v6497
        %v6912 = vpop.xlane.xlu0 %6911
        %6913 = vmax.xlane.f32.xlu0 %v6500
        %v6914 = vpop.xlane.xlu0 %6913
        %6915 = vmax.xlane.f32.xlu0 %v6505
        %v6916 = vpop.xlane.xlu0 %6915
        %6917 = vmax.xlane.f32.xlu0 %v6508
        %v6918 = vpop.xlane.xlu0 %6917
        %6919 = vmax.xlane.f32.xlu0 %v6513
        %v6920 = vpop.xlane.xlu0 %6919
        %6921 = vmax.xlane.f32.xlu0 %v6516
        %v6922 = vpop.xlane.xlu0 %6921
        %6923 = vmax.xlane.f32.xlu0 %v6521
        %v6924 = vpop.xlane.xlu0 %6923
        %6925 = vmax.xlane.f32.xlu0 %v6524
        %v6926 = vpop.xlane.xlu0 %6925
        %6927 = vmax.xlane.f32.xlu0 %v6529
        %v6928 = vpop.xlane.xlu0 %6927
        %6929 = vmax.xlane.f32.xlu0 %v6532
        %v6930 = vpop.xlane.xlu0 %6929
        %6931 = vmax.xlane.f32.xlu0 %v6537
        %v6932 = vpop.xlane.xlu0 %6931
        %6933 = vmax.xlane.f32.xlu0 %v6540
        %v6934 = vpop.xlane.xlu0 %6933
        %6935 = vmax.xlane.f32.xlu0 %v6545
        %v6936 = vpop.xlane.xlu0 %6935
        %6937 = vmax.xlane.f32.xlu0 %v6548
        %v6938 = vpop.xlane.xlu0 %6937
        %6939 = vmax.xlane.f32.xlu0 %v6553
        %v6940 = vpop.xlane.xlu0 %6939
        %6941 = vmax.xlane.f32.xlu0 %v6556
        %v6942 = vpop.xlane.xlu0 %6941
        %6943 = vmax.xlane.f32.xlu0 %v6561
        %v6944 = vpop.xlane.xlu0 %6943
        %6945 = vmax.xlane.f32.xlu0 %v6564
        %v6946 = vpop.xlane.xlu0 %6945
        %6947 = vmax.xlane.f32.xlu0 %v6569
        %v6948 = vpop.xlane.xlu0 %6947
        %6949 = vmax.xlane.f32.xlu0 %v6572
        %v6950 = vpop.xlane.xlu0 %6949
        %6951 = vmax.xlane.f32.xlu0 %v6577
        %v6952 = vpop.xlane.xlu0 %6951
        %6953 = vmax.xlane.f32.xlu0 %v6580
        %v6954 = vpop.xlane.xlu0 %6953
        %6955 = vmax.xlane.f32.xlu0 %v6585
        %v6956 = vpop.xlane.xlu0 %6955
        %6957 = vmax.xlane.f32.xlu0 %v6588
        %v6958 = vpop.xlane.xlu0 %6957
        %6959 = vmax.xlane.f32.xlu0 %v6593
        %v6960 = vpop.xlane.xlu0 %6959
        %6961 = vmax.xlane.f32.xlu0 %v6596
        %v6962 = vpop.xlane.xlu0 %6961
        %6963 = vmax.xlane.f32.xlu0 %v6601
        %v6964 = vpop.xlane.xlu0 %6963
        %6965 = vmax.xlane.f32.xlu0 %v6604
        %v6966 = vpop.xlane.xlu0 %6965
        %6967 = vmax.xlane.f32.xlu0 %v6609
        %v6968 = vpop.xlane.xlu0 %6967
        %6969 = vmax.xlane.f32.xlu0 %v6612
        %v6970 = vpop.xlane.xlu0 %6969
        %6971 = vmax.xlane.f32.xlu0 %v6617
        %v6972 = vpop.xlane.xlu0 %6971
        %6973 = vmax.xlane.f32.xlu0 %v6620
        %v6974 = vpop.xlane.xlu0 %6973
        %6975 = vmax.xlane.f32.xlu0 %v6625
        %v6976 = vpop.xlane.xlu0 %6975
        %6977 = vmax.xlane.f32.xlu0 %v6628
        %v6978 = vpop.xlane.xlu0 %6977
        %6979 = vmax.xlane.f32.xlu0 %v6633
        %v6980 = vpop.xlane.xlu0 %6979
        %6981 = vmax.xlane.f32.xlu0 %v6636
        %v6982 = vpop.xlane.xlu0 %6981
        %6983 = vmax.xlane.f32.xlu0 %v6641
        %v6984 = vpop.xlane.xlu0 %6983
        %6985 = vmax.xlane.f32.xlu0 %v6644
        %v6986 = vpop.xlane.xlu0 %6985
        %6987 = vmax.xlane.f32.xlu0 %v6649
        %v6988 = vpop.xlane.xlu0 %6987
        %6989 = vmax.xlane.f32.xlu0 %v6652
        %v6990 = vpop.xlane.xlu0 %6989
        %6991 = vmax.xlane.f32.xlu0 %v6657
        %v6992 = vpop.xlane.xlu0 %6991
        %6993 = vmax.xlane.f32.xlu0 %v6660
        %v6994 = vpop.xlane.xlu0 %6993
        %6995 = vmax.xlane.f32.xlu0 %v6665
        %v6996 = vpop.xlane.xlu0 %6995
        %6997 = vmax.xlane.f32.xlu0 %v6668
        %v6998 = vpop.xlane.xlu0 %6997
        %6999 = vmax.xlane.f32.xlu0 %v6673
        %v7000 = vpop.xlane.xlu0 %6999
        %7001 = vmax.xlane.f32.xlu0 %v6676
        %v7002 = vpop.xlane.xlu0 %7001
        %7003 = vmax.xlane.f32.xlu0 %v6681
        %v7004 = vpop.xlane.xlu0 %7003
        %7005 = vmax.xlane.f32.xlu0 %v6684
        %v7006 = vpop.xlane.xlu0 %7005
        %7007 = vmax.xlane.f32.xlu0 %v6689
        %v7008 = vpop.xlane.xlu0 %7007
        %7009 = vmax.xlane.f32.xlu0 %v6692
        %v7010 = vpop.xlane.xlu0 %7009
        %7011 = vmax.xlane.f32.xlu0 %v6697
        %v7012 = vpop.xlane.xlu0 %7011
        %7013 = vmax.xlane.f32.xlu0 %v6700
        %v7014 = vpop.xlane.xlu0 %7013
        %7015 = vmax.xlane.f32.xlu0 %v6705
        %v7016 = vpop.xlane.xlu0 %7015
        %7017 = vmax.xlane.f32.xlu0 %v6708
        %v7018 = vpop.xlane.xlu0 %7017
        %7019 = vmax.xlane.f32.xlu0 %v6713
        %v7020 = vpop.xlane.xlu0 %7019
        %7021 = vmax.xlane.f32.xlu0 %v6716
        %v7022 = vpop.xlane.xlu0 %7021
        %7023 = vmax.xlane.f32.xlu0 %v6721
        %v7024 = vpop.xlane.xlu0 %7023
        %7025 = vmax.xlane.f32.xlu0 %v6724
        %v7026 = vpop.xlane.xlu0 %7025
        %7027 = vmax.xlane.f32.xlu0 %v6729
        %v7028 = vpop.xlane.xlu0 %7027
        %7029 = vmax.xlane.f32.xlu0 %v6732
        %v7030 = vpop.xlane.xlu0 %7029
        %7031 = vmax.xlane.f32.xlu0 %v6737
        %v7032 = vpop.xlane.xlu0 %7031
        %7033 = vmax.xlane.f32.xlu0 %v6740
        %v7034 = vpop.xlane.xlu0 %7033
        %7035 = vmax.xlane.f32.xlu0 %v6745
        %v7036 = vpop.xlane.xlu0 %7035
        %7037 = vmax.xlane.f32.xlu0 %v6748
        %v7038 = vpop.xlane.xlu0 %7037
        %7039 = vmax.xlane.f32.xlu0 %v6753
        %v7040 = vpop.xlane.xlu0 %7039
        %7041 = vmax.xlane.f32.xlu0 %v6756
        %v7042 = vpop.xlane.xlu0 %7041
        %7043 = vmax.xlane.f32.xlu0 %v6761
        %v7044 = vpop.xlane.xlu0 %7043
        %7045 = vmax.xlane.f32.xlu0 %v6764
        %v7046 = vpop.xlane.xlu0 %7045
        %7047 = vmax.xlane.f32.xlu0 %v6769
        %v7048 = vpop.xlane.xlu0 %7047
        %7049 = vmax.xlane.f32.xlu0 %v6772
        %v7050 = vpop.xlane.xlu0 %7049
        %7051 = vmax.xlane.f32.xlu0 %v6777
        %v7052 = vpop.xlane.xlu0 %7051
        %7053 = vmax.xlane.f32.xlu0 %v6780
        %v7054 = vpop.xlane.xlu0 %7053
        %7055 = vmax.xlane.f32.xlu0 %v6785
        %v7056 = vpop.xlane.xlu0 %7055
        %7057 = vmax.xlane.f32.xlu0 %v6788
        %v7058 = vpop.xlane.xlu0 %7057
        %7059 = vmax.xlane.f32.xlu0 %v6793
        %v7060 = vpop.xlane.xlu0 %7059
        %7061 = vmax.xlane.f32.xlu0 %v6796
        %v7062 = vpop.xlane.xlu0 %7061
        %7063 = vmax.xlane.f32.xlu0 %v6801
        %v7064 = vpop.xlane.xlu0 %7063
        %7065 = vmax.xlane.f32.xlu0 %v6804
        %v7066 = vpop.xlane.xlu0 %7065
        %7067 = vmax.xlane.f32.xlu0 %v6809
        %v7068 = vpop.xlane.xlu0 %7067
        %7069 = vmax.xlane.f32.xlu0 %v6812
        %v7070 = vpop.xlane.xlu0 %7069
        %v7071 = vsub.f32 %v6305, %v6816
        %v7072 = vsub.f32 %v6308, %v6818
        %v7073 = vsub.f32 %v6313, %v6820
        %v7074 = vsub.f32 %v6316, %v6822
        %v7075 = vsub.f32 %v6321, %v6824
        %v7076 = vsub.f32 %v6324, %v6826
        %v7077 = vsub.f32 %v6329, %v6828
        %v7078 = vsub.f32 %v6332, %v6830
        %v7079 = vsub.f32 %v6337, %v6832
        %v7080 = vsub.f32 %v6340, %v6834
        %v7081 = vsub.f32 %v6345, %v6836
        %v7082 = vsub.f32 %v6348, %v6838
        %v7083 = vsub.f32 %v6353, %v6840
        %v7084 = vsub.f32 %v6356, %v6842
        %v7085 = vsub.f32 %v6361, %v6844
        %v7086 = vsub.f32 %v6364, %v6846
        %v7087 = vsub.f32 %v6369, %v6848
        %v7088 = vsub.f32 %v6372, %v6850
        %v7089 = vsub.f32 %v6377, %v6852
        %v7090 = vsub.f32 %v6380, %v6854
        %v7091 = vsub.f32 %v6385, %v6856
        %v7092 = vsub.f32 %v6388, %v6858
        %v7093 = vsub.f32 %v6393, %v6860
        %v7094 = vsub.f32 %v6396, %v6862
        %v7095 = vsub.f32 %v6401, %v6864
        %v7096 = vsub.f32 %v6404, %v6866
        %v7097 = vsub.f32 %v6409, %v6868
        %v7098 = vsub.f32 %v6412, %v6870
        %v7099 = vsub.f32 %v6417, %v6872
        %v7100 = vsub.f32 %v6420, %v6874
        %v7101 = vsub.f32 %v6425, %v6876
        %v7102 = vsub.f32 %v6428, %v6878
        %v7103 = vsub.f32 %v6433, %v6880
        %v7104 = vsub.f32 %v6436, %v6882
        %v7105 = vsub.f32 %v6441, %v6884
        %v7106 = vsub.f32 %v6444, %v6886
        %v7107 = vsub.f32 %v6449, %v6888
        %v7108 = vsub.f32 %v6452, %v6890
        %v7109 = vsub.f32 %v6457, %v6892
        %v7110 = vsub.f32 %v6460, %v6894
        %v7111 = vsub.f32 %v6465, %v6896
        %v7112 = vsub.f32 %v6468, %v6898
        %v7113 = vsub.f32 %v6473, %v6900
        %v7114 = vsub.f32 %v6476, %v6902
        %v7115 = vsub.f32 %v6481, %v6904
        %v7116 = vsub.f32 %v6484, %v6906
        %v7117 = vsub.f32 %v6489, %v6908
        %v7118 = vsub.f32 %v6492, %v6910
        %v7119 = vsub.f32 %v6497, %v6912
        %v7120 = vsub.f32 %v6500, %v6914
        %v7121 = vsub.f32 %v6505, %v6916
        %v7122 = vsub.f32 %v6508, %v6918
        %v7123 = vsub.f32 %v6513, %v6920
        %v7124 = vsub.f32 %v6516, %v6922
        %v7125 = vsub.f32 %v6521, %v6924
        %v7126 = vsub.f32 %v6524, %v6926
        %v7127 = vsub.f32 %v6529, %v6928
        %v7128 = vsub.f32 %v6532, %v6930
        %v7129 = vsub.f32 %v6537, %v6932
        %v7130 = vsub.f32 %v6540, %v6934
        %v7131 = vsub.f32 %v6545, %v6936
        %v7132 = vsub.f32 %v6548, %v6938
        %v7133 = vsub.f32 %v6553, %v6940
        %v7134 = vsub.f32 %v6556, %v6942
        %v7135 = vsub.f32 %v6561, %v6944
        %v7136 = vsub.f32 %v6564, %v6946
        %v7137 = vsub.f32 %v6569, %v6948
        %v7138 = vsub.f32 %v6572, %v6950
        %v7139 = vsub.f32 %v6577, %v6952
        %v7140 = vsub.f32 %v6580, %v6954
        %v7141 = vsub.f32 %v6585, %v6956
        %v7142 = vsub.f32 %v6588, %v6958
        %v7143 = vsub.f32 %v6593, %v6960
        %v7144 = vsub.f32 %v6596, %v6962
        %v7145 = vsub.f32 %v6601, %v6964
        %v7146 = vsub.f32 %v6604, %v6966
        %v7147 = vsub.f32 %v6609, %v6968
        %v7148 = vsub.f32 %v6612, %v6970
        %v7149 = vsub.f32 %v6617, %v6972
        %v7150 = vsub.f32 %v6620, %v6974
        %v7151 = vsub.f32 %v6625, %v6976
        %v7152 = vsub.f32 %v6628, %v6978
        %v7153 = vsub.f32 %v6633, %v6980
        %v7154 = vsub.f32 %v6636, %v6982
        %v7155 = vsub.f32 %v6641, %v6984
        %v7156 = vsub.f32 %v6644, %v6986
        %v7157 = vsub.f32 %v6649, %v6988
        %v7158 = vsub.f32 %v6652, %v6990
        %v7159 = vsub.f32 %v6657, %v6992
        %v7160 = vsub.f32 %v6660, %v6994
        %v7161 = vsub.f32 %v6665, %v6996
        %v7162 = vsub.f32 %v6668, %v6998
        %v7163 = vsub.f32 %v6673, %v7000
        %v7164 = vsub.f32 %v6676, %v7002
        %v7165 = vsub.f32 %v6681, %v7004
        %v7166 = vsub.f32 %v6684, %v7006
        %v7167 = vsub.f32 %v6689, %v7008
        %v7168 = vsub.f32 %v6692, %v7010
        %v7169 = vsub.f32 %v6697, %v7012
        %v7170 = vsub.f32 %v6700, %v7014
        %v7171 = vsub.f32 %v6705, %v7016
        %v7172 = vsub.f32 %v6708, %v7018
        %v7173 = vsub.f32 %v6713, %v7020
        %v7174 = vsub.f32 %v6716, %v7022
        %v7175 = vsub.f32 %v6721, %v7024
        %v7176 = vsub.f32 %v6724, %v7026
        %v7177 = vsub.f32 %v6729, %v7028
        %v7178 = vsub.f32 %v6732, %v7030
        %v7179 = vsub.f32 %v6737, %v7032
        %v7180 = vsub.f32 %v6740, %v7034
        %v7181 = vsub.f32 %v6745, %v7036
        %v7182 = vsub.f32 %v6748, %v7038
        %v7183 = vsub.f32 %v6753, %v7040
        %v7184 = vsub.f32 %v6756, %v7042
        %v7185 = vsub.f32 %v6761, %v7044
        %v7186 = vsub.f32 %v6764, %v7046
        %v7187 = vsub.f32 %v6769, %v7048
        %v7188 = vsub.f32 %v6772, %v7050
        %v7189 = vsub.f32 %v6777, %v7052
        %v7190 = vsub.f32 %v6780, %v7054
        %v7191 = vsub.f32 %v6785, %v7056
        %v7192 = vsub.f32 %v6788, %v7058
        %v7193 = vsub.f32 %v6793, %v7060
        %v7194 = vsub.f32 %v6796, %v7062
        %v7195 = vsub.f32 %v6801, %v7064
        %v7196 = vsub.f32 %v6804, %v7066
        %v7197 = vsub.f32 %v6809, %v7068
        %v7198 = vsub.f32 %v6812, %v7070
        %v7199 = vmul.f32 %v7071, 1.442695
        %v7200 = vpow.pop %v7199
        %v7201 = vmul.f32 %v7072, 1.442695
        %v7202 = vpow.pop %v7201
        %v7203 = vmul.f32 %v7073, 1.442695
        %v7204 = vpow.pop %v7203
        %v7205 = vmul.f32 %v7074, 1.442695
        %v7206 = vpow.pop %v7205
        %v7207 = vmul.f32 %v7075, 1.442695
        %v7208 = vpow.pop %v7207
        %v7209 = vmul.f32 %v7076, 1.442695
        %v7210 = vpow.pop %v7209
        %v7211 = vmul.f32 %v7077, 1.442695
        %v7212 = vpow.pop %v7211
        %v7213 = vmul.f32 %v7078, 1.442695
        %v7214 = vpow.pop %v7213
        %v7215 = vmul.f32 %v7079, 1.442695
        %v7216 = vpow.pop %v7215
        %v7217 = vmul.f32 %v7080, 1.442695
        %v7218 = vpow.pop %v7217
        %v7219 = vmul.f32 %v7081, 1.442695
        %v7220 = vpow.pop %v7219
        %v7221 = vmul.f32 %v7082, 1.442695
        %v7222 = vpow.pop %v7221
        %v7223 = vmul.f32 %v7083, 1.442695
        %v7224 = vpow.pop %v7223
        %v7225 = vmul.f32 %v7084, 1.442695
        %v7226 = vpow.pop %v7225
        %v7227 = vmul.f32 %v7085, 1.442695
        %v7228 = vpow.pop %v7227
        %v7229 = vmul.f32 %v7086, 1.442695
        %v7230 = vpow.pop %v7229
        %v7231 = vmul.f32 %v7087, 1.442695
        %v7232 = vpow.pop %v7231
        %v7233 = vmul.f32 %v7088, 1.442695
        %v7234 = vpow.pop %v7233
        %v7235 = vmul.f32 %v7089, 1.442695
        %v7236 = vpow.pop %v7235
        %v7237 = vmul.f32 %v7090, 1.442695
        %v7238 = vpow.pop %v7237
        %v7239 = vmul.f32 %v7091, 1.442695
        %v7240 = vpow.pop %v7239
        %v7241 = vmul.f32 %v7092, 1.442695
        %v7242 = vpow.pop %v7241
        %v7243 = vmul.f32 %v7093, 1.442695
        %v7244 = vpow.pop %v7243
        %v7245 = vmul.f32 %v7094, 1.442695
        %v7246 = vpow.pop %v7245
        %v7247 = vmul.f32 %v7095, 1.442695
        %v7248 = vpow.pop %v7247
        %v7249 = vmul.f32 %v7096, 1.442695
        %v7250 = vpow.pop %v7249
        %v7251 = vmul.f32 %v7097, 1.442695
        %v7252 = vpow.pop %v7251
        %v7253 = vmul.f32 %v7098, 1.442695
        %v7254 = vpow.pop %v7253
        %v7255 = vmul.f32 %v7099, 1.442695
        %v7256 = vpow.pop %v7255
        %v7257 = vmul.f32 %v7100, 1.442695
        %v7258 = vpow.pop %v7257
        %v7259 = vmul.f32 %v7101, 1.442695
        %v7260 = vpow.pop %v7259
        %v7261 = vmul.f32 %v7102, 1.442695
        %v7262 = vpow.pop %v7261
        %v7263 = vmul.f32 %v7103, 1.442695
        %v7264 = vpow.pop %v7263
        %v7265 = vmul.f32 %v7104, 1.442695
        %v7266 = vpow.pop %v7265
        %v7267 = vmul.f32 %v7105, 1.442695
        %v7268 = vpow.pop %v7267
        %v7269 = vmul.f32 %v7106, 1.442695
        %v7270 = vpow.pop %v7269
        %v7271 = vmul.f32 %v7107, 1.442695
        %v7272 = vpow.pop %v7271
        %v7273 = vmul.f32 %v7108, 1.442695
        %v7274 = vpow.pop %v7273
        %v7275 = vmul.f32 %v7109, 1.442695
        %v7276 = vpow.pop %v7275
        %v7277 = vmul.f32 %v7110, 1.442695
        %v7278 = vpow.pop %v7277
        %v7279 = vmul.f32 %v7111, 1.442695
        %v7280 = vpow.pop %v7279
        %v7281 = vmul.f32 %v7112, 1.442695
        %v7282 = vpow.pop %v7281
        %v7283 = vmul.f32 %v7113, 1.442695
        %v7284 = vpow.pop %v7283
        %v7285 = vmul.f32 %v7114, 1.442695
        %v7286 = vpow.pop %v7285
        %v7287 = vmul.f32 %v7115, 1.442695
        %v7288 = vpow.pop %v7287
        %v7289 = vmul.f32 %v7116, 1.442695
        %v7290 = vpow.pop %v7289
        %v7291 = vmul.f32 %v7117, 1.442695
        %v7292 = vpow.pop %v7291
        %v7293 = vmul.f32 %v7118, 1.442695
        %v7294 = vpow.pop %v7293
        %v7295 = vmul.f32 %v7119, 1.442695
        %v7296 = vpow.pop %v7295
        %v7297 = vmul.f32 %v7120, 1.442695
        %v7298 = vpow.pop %v7297
        %v7299 = vmul.f32 %v7121, 1.442695
        %v7300 = vpow.pop %v7299
        %v7301 = vmul.f32 %v7122, 1.442695
        %v7302 = vpow.pop %v7301
        %v7303 = vmul.f32 %v7123, 1.442695
        %v7304 = vpow.pop %v7303
        %v7305 = vmul.f32 %v7124, 1.442695
        %v7306 = vpow.pop %v7305
        %v7307 = vmul.f32 %v7125, 1.442695
        %v7308 = vpow.pop %v7307
        %v7309 = vmul.f32 %v7126, 1.442695
        %v7310 = vpow.pop %v7309
        %v7311 = vmul.f32 %v7127, 1.442695
        %v7312 = vpow.pop %v7311
        %v7313 = vmul.f32 %v7128, 1.442695
        %v7314 = vpow.pop %v7313
        %v7315 = vmul.f32 %v7129, 1.442695
        %v7316 = vpow.pop %v7315
        %v7317 = vmul.f32 %v7130, 1.442695
        %v7318 = vpow.pop %v7317
        %v7319 = vmul.f32 %v7131, 1.442695
        %v7320 = vpow.pop %v7319
        %v7321 = vmul.f32 %v7132, 1.442695
        %v7322 = vpow.pop %v7321
        %v7323 = vmul.f32 %v7133, 1.442695
        %v7324 = vpow.pop %v7323
        %v7325 = vmul.f32 %v7134, 1.442695
        %v7326 = vpow.pop %v7325
        %v7327 = vmul.f32 %v7135, 1.442695
        %v7328 = vpow.pop %v7327
        %v7329 = vmul.f32 %v7136, 1.442695
        %v7330 = vpow.pop %v7329
        %v7331 = vmul.f32 %v7137, 1.442695
        %v7332 = vpow.pop %v7331
        %v7333 = vmul.f32 %v7138, 1.442695
        %v7334 = vpow.pop %v7333
        %v7335 = vmul.f32 %v7139, 1.442695
        %v7336 = vpow.pop %v7335
        %v7337 = vmul.f32 %v7140, 1.442695
        %v7338 = vpow.pop %v7337
        %v7339 = vmul.f32 %v7141, 1.442695
        %v7340 = vpow.pop %v7339
        %v7341 = vmul.f32 %v7142, 1.442695
        %v7342 = vpow.pop %v7341
        %v7343 = vmul.f32 %v7143, 1.442695
        %v7344 = vpow.pop %v7343
        %v7345 = vmul.f32 %v7144, 1.442695
        %v7346 = vpow.pop %v7345
        %v7347 = vmul.f32 %v7145, 1.442695
        %v7348 = vpow.pop %v7347
        %v7349 = vmul.f32 %v7146, 1.442695
        %v7350 = vpow.pop %v7349
        %v7351 = vmul.f32 %v7147, 1.442695
        %v7352 = vpow.pop %v7351
        %v7353 = vmul.f32 %v7148, 1.442695
        %v7354 = vpow.pop %v7353
        %v7355 = vmul.f32 %v7149, 1.442695
        %v7356 = vpow.pop %v7355
        %v7357 = vmul.f32 %v7150, 1.442695
        %v7358 = vpow.pop %v7357
        %v7359 = vmul.f32 %v7151, 1.442695
        %v7360 = vpow.pop %v7359
        %v7361 = vmul.f32 %v7152, 1.442695
        %v7362 = vpow.pop %v7361
        %v7363 = vmul.f32 %v7153, 1.442695
        %v7364 = vpow.pop %v7363
        %v7365 = vmul.f32 %v7154, 1.442695
        %v7366 = vpow.pop %v7365
        %v7367 = vmul.f32 %v7155, 1.442695
        %v7368 = vpow.pop %v7367
        %v7369 = vmul.f32 %v7156, 1.442695
        %v7370 = vpow.pop %v7369
        %v7371 = vmul.f32 %v7157, 1.442695
        %v7372 = vpow.pop %v7371
        %v7373 = vmul.f32 %v7158, 1.442695
        %v7374 = vpow.pop %v7373
        %v7375 = vmul.f32 %v7159, 1.442695
        %v7376 = vpow.pop %v7375
        %v7377 = vmul.f32 %v7160, 1.442695
        %v7378 = vpow.pop %v7377
        %v7379 = vmul.f32 %v7161, 1.442695
        %v7380 = vpow.pop %v7379
        %v7381 = vmul.f32 %v7162, 1.442695
        %v7382 = vpow.pop %v7381
        %v7383 = vmul.f32 %v7163, 1.442695
        %v7384 = vpow.pop %v7383
        %v7385 = vmul.f32 %v7164, 1.442695
        %v7386 = vpow.pop %v7385
        %v7387 = vmul.f32 %v7165, 1.442695
        %v7388 = vpow.pop %v7387
        %v7389 = vmul.f32 %v7166, 1.442695
        %v7390 = vpow.pop %v7389
        %v7391 = vmul.f32 %v7167, 1.442695
        %v7392 = vpow.pop %v7391
        %v7393 = vmul.f32 %v7168, 1.442695
        %v7394 = vpow.pop %v7393
        %v7395 = vmul.f32 %v7169, 1.442695
        %v7396 = vpow.pop %v7395
        %v7397 = vmul.f32 %v7170, 1.442695
        %v7398 = vpow.pop %v7397
        %v7399 = vmul.f32 %v7171, 1.442695
        %v7400 = vpow.pop %v7399
        %v7401 = vmul.f32 %v7172, 1.442695
        %v7402 = vpow.pop %v7401
        %v7403 = vmul.f32 %v7173, 1.442695
        %v7404 = vpow.pop %v7403
        %v7405 = vmul.f32 %v7174, 1.442695
        %v7406 = vpow.pop %v7405
        %v7407 = vmul.f32 %v7175, 1.442695
        %v7408 = vpow.pop %v7407
        %v7409 = vmul.f32 %v7176, 1.442695
        %v7410 = vpow.pop %v7409
        %v7411 = vmul.f32 %v7177, 1.442695
        %v7412 = vpow.pop %v7411
        %v7413 = vmul.f32 %v7178, 1.442695
        %v7414 = vpow.pop %v7413
        %v7415 = vmul.f32 %v7179, 1.442695
        %v7416 = vpow.pop %v7415
        %v7417 = vmul.f32 %v7180, 1.442695
        %v7418 = vpow.pop %v7417
        %v7419 = vmul.f32 %v7181, 1.442695
        %v7420 = vpow.pop %v7419
        %v7421 = vmul.f32 %v7182, 1.442695
        %v7422 = vpow.pop %v7421
        %v7423 = vmul.f32 %v7183, 1.442695
        %v7424 = vpow.pop %v7423
        %v7425 = vmul.f32 %v7184, 1.442695
        %v7426 = vpow.pop %v7425
        %v7427 = vmul.f32 %v7185, 1.442695
        %v7428 = vpow.pop %v7427
        %v7429 = vmul.f32 %v7186, 1.442695
        %v7430 = vpow.pop %v7429
        %v7431 = vmul.f32 %v7187, 1.442695
        %v7432 = vpow.pop %v7431
        %v7433 = vmul.f32 %v7188, 1.442695
        %v7434 = vpow.pop %v7433
        %v7435 = vmul.f32 %v7189, 1.442695
        %v7436 = vpow.pop %v7435
        %v7437 = vmul.f32 %v7190, 1.442695
        %v7438 = vpow.pop %v7437
        %v7439 = vmul.f32 %v7191, 1.442695
        %v7440 = vpow.pop %v7439
        %v7441 = vmul.f32 %v7192, 1.442695
        %v7442 = vpow.pop %v7441
        %v7443 = vmul.f32 %v7193, 1.442695
        %v7444 = vpow.pop %v7443
        %v7445 = vmul.f32 %v7194, 1.442695
        %v7446 = vpow.pop %v7445
        %v7447 = vmul.f32 %v7195, 1.442695
        %v7448 = vpow.pop %v7447
        %v7449 = vmul.f32 %v7196, 1.442695
        %v7450 = vpow.pop %v7449
        %v7451 = vmul.f32 %v7197, 1.442695
        %v7452 = vpow.pop %v7451
        %v7453 = vmul.f32 %v7198, 1.442695
        %v7454 = vpow.pop %v7453
        %7455 = vadd.xlane.f32.xlu0 %v7200
        %v7456 = vpop.xlane.xlu0 %7455
        %7457 = vadd.xlane.f32.xlu0 %v7202
        %v7458 = vpop.xlane.xlu0 %7457
        %7459 = vadd.xlane.f32.xlu0 %v7204
        %v7460 = vpop.xlane.xlu0 %7459
        %7461 = vadd.xlane.f32.xlu0 %v7206
        %v7462 = vpop.xlane.xlu0 %7461
        %7463 = vadd.xlane.f32.xlu0 %v7208
        %v7464 = vpop.xlane.xlu0 %7463
        %7465 = vadd.xlane.f32.xlu0 %v7210
        %v7466 = vpop.xlane.xlu0 %7465
        %7467 = vadd.xlane.f32.xlu0 %v7212
        %v7468 = vpop.xlane.xlu0 %7467
        %7469 = vadd.xlane.f32.xlu0 %v7214
        %v7470 = vpop.xlane.xlu0 %7469
        %7471 = vadd.xlane.f32.xlu0 %v7216
        %v7472 = vpop.xlane.xlu0 %7471
        %7473 = vadd.xlane.f32.xlu0 %v7218
        %v7474 = vpop.xlane.xlu0 %7473
        %7475 = vadd.xlane.f32.xlu0 %v7220
        %v7476 = vpop.xlane.xlu0 %7475
        %7477 = vadd.xlane.f32.xlu0 %v7222
        %v7478 = vpop.xlane.xlu0 %7477
        %7479 = vadd.xlane.f32.xlu0 %v7224
        %v7480 = vpop.xlane.xlu0 %7479
        %7481 = vadd.xlane.f32.xlu0 %v7226
        %v7482 = vpop.xlane.xlu0 %7481
        %7483 = vadd.xlane.f32.xlu0 %v7228
        %v7484 = vpop.xlane.xlu0 %7483
        %7485 = vadd.xlane.f32.xlu0 %v7230
        %v7486 = vpop.xlane.xlu0 %7485
        %7487 = vadd.xlane.f32.xlu0 %v7232
        %v7488 = vpop.xlane.xlu0 %7487
        %7489 = vadd.xlane.f32.xlu0 %v7234
        %v7490 = vpop.xlane.xlu0 %7489
        %7491 = vadd.xlane.f32.xlu0 %v7236
        %v7492 = vpop.xlane.xlu0 %7491
        %7493 = vadd.xlane.f32.xlu0 %v7238
        %v7494 = vpop.xlane.xlu0 %7493
        %7495 = vadd.xlane.f32.xlu0 %v7240
        %v7496 = vpop.xlane.xlu0 %7495
        %7497 = vadd.xlane.f32.xlu0 %v7242
        %v7498 = vpop.xlane.xlu0 %7497
        %7499 = vadd.xlane.f32.xlu0 %v7244
        %v7500 = vpop.xlane.xlu0 %7499
        %7501 = vadd.xlane.f32.xlu0 %v7246
        %v7502 = vpop.xlane.xlu0 %7501
        %7503 = vadd.xlane.f32.xlu0 %v7248
        %v7504 = vpop.xlane.xlu0 %7503
        %7505 = vadd.xlane.f32.xlu0 %v7250
        %v7506 = vpop.xlane.xlu0 %7505
        %7507 = vadd.xlane.f32.xlu0 %v7252
        %v7508 = vpop.xlane.xlu0 %7507
        %7509 = vadd.xlane.f32.xlu0 %v7254
        %v7510 = vpop.xlane.xlu0 %7509
        %7511 = vadd.xlane.f32.xlu0 %v7256
        %v7512 = vpop.xlane.xlu0 %7511
        %7513 = vadd.xlane.f32.xlu0 %v7258
        %v7514 = vpop.xlane.xlu0 %7513
        %7515 = vadd.xlane.f32.xlu0 %v7260
        %v7516 = vpop.xlane.xlu0 %7515
        %7517 = vadd.xlane.f32.xlu0 %v7262
        %v7518 = vpop.xlane.xlu0 %7517
        %7519 = vadd.xlane.f32.xlu0 %v7264
        %v7520 = vpop.xlane.xlu0 %7519
        %7521 = vadd.xlane.f32.xlu0 %v7266
        %v7522 = vpop.xlane.xlu0 %7521
        %7523 = vadd.xlane.f32.xlu0 %v7268
        %v7524 = vpop.xlane.xlu0 %7523
        %7525 = vadd.xlane.f32.xlu0 %v7270
        %v7526 = vpop.xlane.xlu0 %7525
        %7527 = vadd.xlane.f32.xlu0 %v7272
        %v7528 = vpop.xlane.xlu0 %7527
        %7529 = vadd.xlane.f32.xlu0 %v7274
        %v7530 = vpop.xlane.xlu0 %7529
        %7531 = vadd.xlane.f32.xlu0 %v7276
        %v7532 = vpop.xlane.xlu0 %7531
        %7533 = vadd.xlane.f32.xlu0 %v7278
        %v7534 = vpop.xlane.xlu0 %7533
        %7535 = vadd.xlane.f32.xlu0 %v7280
        %v7536 = vpop.xlane.xlu0 %7535
        %7537 = vadd.xlane.f32.xlu0 %v7282
        %v7538 = vpop.xlane.xlu0 %7537
        %7539 = vadd.xlane.f32.xlu0 %v7284
        %v7540 = vpop.xlane.xlu0 %7539
        %7541 = vadd.xlane.f32.xlu0 %v7286
        %v7542 = vpop.xlane.xlu0 %7541
        %7543 = vadd.xlane.f32.xlu0 %v7288
        %v7544 = vpop.xlane.xlu0 %7543
        %7545 = vadd.xlane.f32.xlu0 %v7290
        %v7546 = vpop.xlane.xlu0 %7545
        %7547 = vadd.xlane.f32.xlu0 %v7292
        %v7548 = vpop.xlane.xlu0 %7547
        %7549 = vadd.xlane.f32.xlu0 %v7294
        %v7550 = vpop.xlane.xlu0 %7549
        %7551 = vadd.xlane.f32.xlu0 %v7296
        %v7552 = vpop.xlane.xlu0 %7551
        %7553 = vadd.xlane.f32.xlu0 %v7298
        %v7554 = vpop.xlane.xlu0 %7553
        %7555 = vadd.xlane.f32.xlu0 %v7300
        %v7556 = vpop.xlane.xlu0 %7555
        %7557 = vadd.xlane.f32.xlu0 %v7302
        %v7558 = vpop.xlane.xlu0 %7557
        %7559 = vadd.xlane.f32.xlu0 %v7304
        %v7560 = vpop.xlane.xlu0 %7559
        %7561 = vadd.xlane.f32.xlu0 %v7306
        %v7562 = vpop.xlane.xlu0 %7561
        %7563 = vadd.xlane.f32.xlu0 %v7308
        %v7564 = vpop.xlane.xlu0 %7563
        %7565 = vadd.xlane.f32.xlu0 %v7310
        %v7566 = vpop.xlane.xlu0 %7565
        %7567 = vadd.xlane.f32.xlu0 %v7312
        %v7568 = vpop.xlane.xlu0 %7567
        %7569 = vadd.xlane.f32.xlu0 %v7314
        %v7570 = vpop.xlane.xlu0 %7569
        %7571 = vadd.xlane.f32.xlu0 %v7316
        %v7572 = vpop.xlane.xlu0 %7571
        %7573 = vadd.xlane.f32.xlu0 %v7318
        %v7574 = vpop.xlane.xlu0 %7573
        %7575 = vadd.xlane.f32.xlu0 %v7320
        %v7576 = vpop.xlane.xlu0 %7575
        %7577 = vadd.xlane.f32.xlu0 %v7322
        %v7578 = vpop.xlane.xlu0 %7577
        %7579 = vadd.xlane.f32.xlu0 %v7324
        %v7580 = vpop.xlane.xlu0 %7579
        %7581 = vadd.xlane.f32.xlu0 %v7326
        %v7582 = vpop.xlane.xlu0 %7581
        %7583 = vadd.xlane.f32.xlu0 %v7328
        %v7584 = vpop.xlane.xlu0 %7583
        %7585 = vadd.xlane.f32.xlu0 %v7330
        %v7586 = vpop.xlane.xlu0 %7585
        %7587 = vadd.xlane.f32.xlu0 %v7332
        %v7588 = vpop.xlane.xlu0 %7587
        %7589 = vadd.xlane.f32.xlu0 %v7334
        %v7590 = vpop.xlane.xlu0 %7589
        %7591 = vadd.xlane.f32.xlu0 %v7336
        %v7592 = vpop.xlane.xlu0 %7591
        %7593 = vadd.xlane.f32.xlu0 %v7338
        %v7594 = vpop.xlane.xlu0 %7593
        %7595 = vadd.xlane.f32.xlu0 %v7340
        %v7596 = vpop.xlane.xlu0 %7595
        %7597 = vadd.xlane.f32.xlu0 %v7342
        %v7598 = vpop.xlane.xlu0 %7597
        %7599 = vadd.xlane.f32.xlu0 %v7344
        %v7600 = vpop.xlane.xlu0 %7599
        %7601 = vadd.xlane.f32.xlu0 %v7346
        %v7602 = vpop.xlane.xlu0 %7601
        %7603 = vadd.xlane.f32.xlu0 %v7348
        %v7604 = vpop.xlane.xlu0 %7603
        %7605 = vadd.xlane.f32.xlu0 %v7350
        %v7606 = vpop.xlane.xlu0 %7605
        %7607 = vadd.xlane.f32.xlu0 %v7352
        %v7608 = vpop.xlane.xlu0 %7607
        %7609 = vadd.xlane.f32.xlu0 %v7354
        %v7610 = vpop.xlane.xlu0 %7609
        %7611 = vadd.xlane.f32.xlu0 %v7356
        %v7612 = vpop.xlane.xlu0 %7611
        %7613 = vadd.xlane.f32.xlu0 %v7358
        %v7614 = vpop.xlane.xlu0 %7613
        %7615 = vadd.xlane.f32.xlu0 %v7360
        %v7616 = vpop.xlane.xlu0 %7615
        %7617 = vadd.xlane.f32.xlu0 %v7362
        %v7618 = vpop.xlane.xlu0 %7617
        %7619 = vadd.xlane.f32.xlu0 %v7364
        %v7620 = vpop.xlane.xlu0 %7619
        %7621 = vadd.xlane.f32.xlu0 %v7366
        %v7622 = vpop.xlane.xlu0 %7621
        %7623 = vadd.xlane.f32.xlu0 %v7368
        %v7624 = vpop.xlane.xlu0 %7623
        %7625 = vadd.xlane.f32.xlu0 %v7370
        %v7626 = vpop.xlane.xlu0 %7625
        %7627 = vadd.xlane.f32.xlu0 %v7372
        %v7628 = vpop.xlane.xlu0 %7627
        %7629 = vadd.xlane.f32.xlu0 %v7374
        %v7630 = vpop.xlane.xlu0 %7629
        %7631 = vadd.xlane.f32.xlu0 %v7376
        %v7632 = vpop.xlane.xlu0 %7631
        %7633 = vadd.xlane.f32.xlu0 %v7378
        %v7634 = vpop.xlane.xlu0 %7633
        %7635 = vadd.xlane.f32.xlu0 %v7380
        %v7636 = vpop.xlane.xlu0 %7635
        %7637 = vadd.xlane.f32.xlu0 %v7382
        %v7638 = vpop.xlane.xlu0 %7637
        %7639 = vadd.xlane.f32.xlu0 %v7384
        %v7640 = vpop.xlane.xlu0 %7639
        %7641 = vadd.xlane.f32.xlu0 %v7386
        %v7642 = vpop.xlane.xlu0 %7641
        %7643 = vadd.xlane.f32.xlu0 %v7388
        %v7644 = vpop.xlane.xlu0 %7643
        %7645 = vadd.xlane.f32.xlu0 %v7390
        %v7646 = vpop.xlane.xlu0 %7645
        %7647 = vadd.xlane.f32.xlu0 %v7392
        %v7648 = vpop.xlane.xlu0 %7647
        %7649 = vadd.xlane.f32.xlu0 %v7394
        %v7650 = vpop.xlane.xlu0 %7649
        %7651 = vadd.xlane.f32.xlu0 %v7396
        %v7652 = vpop.xlane.xlu0 %7651
        %7653 = vadd.xlane.f32.xlu0 %v7398
        %v7654 = vpop.xlane.xlu0 %7653
        %7655 = vadd.xlane.f32.xlu0 %v7400
        %v7656 = vpop.xlane.xlu0 %7655
        %7657 = vadd.xlane.f32.xlu0 %v7402
        %v7658 = vpop.xlane.xlu0 %7657
        %7659 = vadd.xlane.f32.xlu0 %v7404
        %v7660 = vpop.xlane.xlu0 %7659
        %7661 = vadd.xlane.f32.xlu0 %v7406
        %v7662 = vpop.xlane.xlu0 %7661
        %7663 = vadd.xlane.f32.xlu0 %v7408
        %v7664 = vpop.xlane.xlu0 %7663
        %7665 = vadd.xlane.f32.xlu0 %v7410
        %v7666 = vpop.xlane.xlu0 %7665
        %7667 = vadd.xlane.f32.xlu0 %v7412
        %v7668 = vpop.xlane.xlu0 %7667
        %7669 = vadd.xlane.f32.xlu0 %v7414
        %v7670 = vpop.xlane.xlu0 %7669
        %7671 = vadd.xlane.f32.xlu0 %v7416
        %v7672 = vpop.xlane.xlu0 %7671
        %7673 = vadd.xlane.f32.xlu0 %v7418
        %v7674 = vpop.xlane.xlu0 %7673
        %7675 = vadd.xlane.f32.xlu0 %v7420
        %v7676 = vpop.xlane.xlu0 %7675
        %7677 = vadd.xlane.f32.xlu0 %v7422
        %v7678 = vpop.xlane.xlu0 %7677
        %7679 = vadd.xlane.f32.xlu0 %v7424
        %v7680 = vpop.xlane.xlu0 %7679
        %7681 = vadd.xlane.f32.xlu0 %v7426
        %v7682 = vpop.xlane.xlu0 %7681
        %7683 = vadd.xlane.f32.xlu0 %v7428
        %v7684 = vpop.xlane.xlu0 %7683
        %7685 = vadd.xlane.f32.xlu0 %v7430
        %v7686 = vpop.xlane.xlu0 %7685
        %7687 = vadd.xlane.f32.xlu0 %v7432
        %v7688 = vpop.xlane.xlu0 %7687
        %7689 = vadd.xlane.f32.xlu0 %v7434
        %v7690 = vpop.xlane.xlu0 %7689
        %7691 = vadd.xlane.f32.xlu0 %v7436
        %v7692 = vpop.xlane.xlu0 %7691
        %7693 = vadd.xlane.f32.xlu0 %v7438
        %v7694 = vpop.xlane.xlu0 %7693
        %7695 = vadd.xlane.f32.xlu0 %v7440
        %v7696 = vpop.xlane.xlu0 %7695
        %7697 = vadd.xlane.f32.xlu0 %v7442
        %v7698 = vpop.xlane.xlu0 %7697
        %7699 = vadd.xlane.f32.xlu0 %v7444
        %v7700 = vpop.xlane.xlu0 %7699
        %7701 = vadd.xlane.f32.xlu0 %v7446
        %v7702 = vpop.xlane.xlu0 %7701
        %7703 = vadd.xlane.f32.xlu0 %v7448
        %v7704 = vpop.xlane.xlu0 %7703
        %7705 = vadd.xlane.f32.xlu0 %v7450
        %v7706 = vpop.xlane.xlu0 %7705
        %7707 = vadd.xlane.f32.xlu0 %v7452
        %v7708 = vpop.xlane.xlu0 %7707
        %7709 = vadd.xlane.f32.xlu0 %v7454
        %v7710 = vpop.xlane.xlu0 %7709
        %v7711 = vrcp.pop %v7456
        %v7712 = vrcp.pop %v7458
        %v7713 = vrcp.pop %v7460
        %v7714 = vrcp.pop %v7462
        %v7715 = vrcp.pop %v7464
        %v7716 = vrcp.pop %v7466
        %v7717 = vrcp.pop %v7468
        %v7718 = vrcp.pop %v7470
        %v7719 = vrcp.pop %v7472
        %v7720 = vrcp.pop %v7474
        %v7721 = vrcp.pop %v7476
        %v7722 = vrcp.pop %v7478
        %v7723 = vrcp.pop %v7480
        %v7724 = vrcp.pop %v7482
        %v7725 = vrcp.pop %v7484
        %v7726 = vrcp.pop %v7486
        %v7727 = vrcp.pop %v7488
        %v7728 = vrcp.pop %v7490
        %v7729 = vrcp.pop %v7492
        %v7730 = vrcp.pop %v7494
        %v7731 = vrcp.pop %v7496
        %v7732 = vrcp.pop %v7498
        %v7733 = vrcp.pop %v7500
        %v7734 = vrcp.pop %v7502
        %v7735 = vrcp.pop %v7504
        %v7736 = vrcp.pop %v7506
        %v7737 = vrcp.pop %v7508
        %v7738 = vrcp.pop %v7510
        %v7739 = vrcp.pop %v7512
        %v7740 = vrcp.pop %v7514
        %v7741 = vrcp.pop %v7516
        %v7742 = vrcp.pop %v7518
        %v7743 = vrcp.pop %v7520
        %v7744 = vrcp.pop %v7522
        %v7745 = vrcp.pop %v7524
        %v7746 = vrcp.pop %v7526
        %v7747 = vrcp.pop %v7528
        %v7748 = vrcp.pop %v7530
        %v7749 = vrcp.pop %v7532
        %v7750 = vrcp.pop %v7534
        %v7751 = vrcp.pop %v7536
        %v7752 = vrcp.pop %v7538
        %v7753 = vrcp.pop %v7540
        %v7754 = vrcp.pop %v7542
        %v7755 = vrcp.pop %v7544
        %v7756 = vrcp.pop %v7546
        %v7757 = vrcp.pop %v7548
        %v7758 = vrcp.pop %v7550
        %v7759 = vrcp.pop %v7552
        %v7760 = vrcp.pop %v7554
        %v7761 = vrcp.pop %v7556
        %v7762 = vrcp.pop %v7558
        %v7763 = vrcp.pop %v7560
        %v7764 = vrcp.pop %v7562
        %v7765 = vrcp.pop %v7564
        %v7766 = vrcp.pop %v7566
        %v7767 = vrcp.pop %v7568
        %v7768 = vrcp.pop %v7570
        %v7769 = vrcp.pop %v7572
        %v7770 = vrcp.pop %v7574
        %v7771 = vrcp.pop %v7576
        %v7772 = vrcp.pop %v7578
        %v7773 = vrcp.pop %v7580
        %v7774 = vrcp.pop %v7582
        %v7775 = vrcp.pop %v7584
        %v7776 = vrcp.pop %v7586
        %v7777 = vrcp.pop %v7588
        %v7778 = vrcp.pop %v7590
        %v7779 = vrcp.pop %v7592
        %v7780 = vrcp.pop %v7594
        %v7781 = vrcp.pop %v7596
        %v7782 = vrcp.pop %v7598
        %v7783 = vrcp.pop %v7600
        %v7784 = vrcp.pop %v7602
        %v7785 = vrcp.pop %v7604
        %v7786 = vrcp.pop %v7606
        %v7787 = vrcp.pop %v7608
        %v7788 = vrcp.pop %v7610
        %v7789 = vrcp.pop %v7612
        %v7790 = vrcp.pop %v7614
        %v7791 = vrcp.pop %v7616
        %v7792 = vrcp.pop %v7618
        %v7793 = vrcp.pop %v7620
        %v7794 = vrcp.pop %v7622
        %v7795 = vrcp.pop %v7624
        %v7796 = vrcp.pop %v7626
        %v7797 = vrcp.pop %v7628
        %v7798 = vrcp.pop %v7630
        %v7799 = vrcp.pop %v7632
        %v7800 = vrcp.pop %v7634
        %v7801 = vrcp.pop %v7636
        %v7802 = vrcp.pop %v7638
        %v7803 = vrcp.pop %v7640
        %v7804 = vrcp.pop %v7642
        %v7805 = vrcp.pop %v7644
        %v7806 = vrcp.pop %v7646
        %v7807 = vrcp.pop %v7648
        %v7808 = vrcp.pop %v7650
        %v7809 = vrcp.pop %v7652
        %v7810 = vrcp.pop %v7654
        %v7811 = vrcp.pop %v7656
        %v7812 = vrcp.pop %v7658
        %v7813 = vrcp.pop %v7660
        %v7814 = vrcp.pop %v7662
        %v7815 = vrcp.pop %v7664
        %v7816 = vrcp.pop %v7666
        %v7817 = vrcp.pop %v7668
        %v7818 = vrcp.pop %v7670
        %v7819 = vrcp.pop %v7672
        %v7820 = vrcp.pop %v7674
        %v7821 = vrcp.pop %v7676
        %v7822 = vrcp.pop %v7678
        %v7823 = vrcp.pop %v7680
        %v7824 = vrcp.pop %v7682
        %v7825 = vrcp.pop %v7684
        %v7826 = vrcp.pop %v7686
        %v7827 = vrcp.pop %v7688
        %v7828 = vrcp.pop %v7690
        %v7829 = vrcp.pop %v7692
        %v7830 = vrcp.pop %v7694
        %v7831 = vrcp.pop %v7696
        %v7832 = vrcp.pop %v7698
        %v7833 = vrcp.pop %v7700
        %v7834 = vrcp.pop %v7702
        %v7835 = vrcp.pop %v7704
        %v7836 = vrcp.pop %v7706
        %v7837 = vrcp.pop %v7708
        %v7838 = vrcp.pop %v7710
        %v7839 = vmul.f32 %v7200, %v7711
        %v7840 = vmul.f32 %v7202, %v7712
        %v7841 = vmul.f32 %v7204, %v7713
        %v7842 = vmul.f32 %v7206, %v7714
        %v7843 = vmul.f32 %v7208, %v7715
        %v7844 = vmul.f32 %v7210, %v7716
        %v7845 = vmul.f32 %v7212, %v7717
        %v7846 = vmul.f32 %v7214, %v7718
        %v7847 = vmul.f32 %v7216, %v7719
        %v7848 = vmul.f32 %v7218, %v7720
        %v7849 = vmul.f32 %v7220, %v7721
        %v7850 = vmul.f32 %v7222, %v7722
        %v7851 = vmul.f32 %v7224, %v7723
        %v7852 = vmul.f32 %v7226, %v7724
        %v7853 = vmul.f32 %v7228, %v7725
        %v7854 = vmul.f32 %v7230, %v7726
        %v7855 = vmul.f32 %v7232, %v7727
        %v7856 = vmul.f32 %v7234, %v7728
        %v7857 = vmul.f32 %v7236, %v7729
        %v7858 = vmul.f32 %v7238, %v7730
        %v7859 = vmul.f32 %v7240, %v7731
        %v7860 = vmul.f32 %v7242, %v7732
        %v7861 = vmul.f32 %v7244, %v7733
        %v7862 = vmul.f32 %v7246, %v7734
        %v7863 = vmul.f32 %v7248, %v7735
        %v7864 = vmul.f32 %v7250, %v7736
        %v7865 = vmul.f32 %v7252, %v7737
        %v7866 = vmul.f32 %v7254, %v7738
        %v7867 = vmul.f32 %v7256, %v7739
        %v7868 = vmul.f32 %v7258, %v7740
        %v7869 = vmul.f32 %v7260, %v7741
        %v7870 = vmul.f32 %v7262, %v7742
        %v7871 = vmul.f32 %v7264, %v7743
        %v7872 = vmul.f32 %v7266, %v7744
        %v7873 = vmul.f32 %v7268, %v7745
        %v7874 = vmul.f32 %v7270, %v7746
        %v7875 = vmul.f32 %v7272, %v7747
        %v7876 = vmul.f32 %v7274, %v7748
        %v7877 = vmul.f32 %v7276, %v7749
        %v7878 = vmul.f32 %v7278, %v7750
        %v7879 = vmul.f32 %v7280, %v7751
        %v7880 = vmul.f32 %v7282, %v7752
        %v7881 = vmul.f32 %v7284, %v7753
        %v7882 = vmul.f32 %v7286, %v7754
        %v7883 = vmul.f32 %v7288, %v7755
        %v7884 = vmul.f32 %v7290, %v7756
        %v7885 = vmul.f32 %v7292, %v7757
        %v7886 = vmul.f32 %v7294, %v7758
        %v7887 = vmul.f32 %v7296, %v7759
        %v7888 = vmul.f32 %v7298, %v7760
        %v7889 = vmul.f32 %v7300, %v7761
        %v7890 = vmul.f32 %v7302, %v7762
        %v7891 = vmul.f32 %v7304, %v7763
        %v7892 = vmul.f32 %v7306, %v7764
        %v7893 = vmul.f32 %v7308, %v7765
        %v7894 = vmul.f32 %v7310, %v7766
        %v7895 = vmul.f32 %v7312, %v7767
        %v7896 = vmul.f32 %v7314, %v7768
        %v7897 = vmul.f32 %v7316, %v7769
        %v7898 = vmul.f32 %v7318, %v7770
        %v7899 = vmul.f32 %v7320, %v7771
        %v7900 = vmul.f32 %v7322, %v7772
        %v7901 = vmul.f32 %v7324, %v7773
        %v7902 = vmul.f32 %v7326, %v7774
        %v7903 = vmul.f32 %v7328, %v7775
        %v7904 = vmul.f32 %v7330, %v7776
        %v7905 = vmul.f32 %v7332, %v7777
        %v7906 = vmul.f32 %v7334, %v7778
        %v7907 = vmul.f32 %v7336, %v7779
        %v7908 = vmul.f32 %v7338, %v7780
        %v7909 = vmul.f32 %v7340, %v7781
        %v7910 = vmul.f32 %v7342, %v7782
        %v7911 = vmul.f32 %v7344, %v7783
        %v7912 = vmul.f32 %v7346, %v7784
        %v7913 = vmul.f32 %v7348, %v7785
        %v7914 = vmul.f32 %v7350, %v7786
        %v7915 = vmul.f32 %v7352, %v7787
        %v7916 = vmul.f32 %v7354, %v7788
        %v7917 = vmul.f32 %v7356, %v7789
        %v7918 = vmul.f32 %v7358, %v7790
        %v7919 = vmul.f32 %v7360, %v7791
        %v7920 = vmul.f32 %v7362, %v7792
        %v7921 = vmul.f32 %v7364, %v7793
        %v7922 = vmul.f32 %v7366, %v7794
        %v7923 = vmul.f32 %v7368, %v7795
        %v7924 = vmul.f32 %v7370, %v7796
        %v7925 = vmul.f32 %v7372, %v7797
        %v7926 = vmul.f32 %v7374, %v7798
        %v7927 = vmul.f32 %v7376, %v7799
        %v7928 = vmul.f32 %v7378, %v7800
        %v7929 = vmul.f32 %v7380, %v7801
        %v7930 = vmul.f32 %v7382, %v7802
        %v7931 = vmul.f32 %v7384, %v7803
        %v7932 = vmul.f32 %v7386, %v7804
        %v7933 = vmul.f32 %v7388, %v7805
        %v7934 = vmul.f32 %v7390, %v7806
        %v7935 = vmul.f32 %v7392, %v7807
        %v7936 = vmul.f32 %v7394, %v7808
        %v7937 = vmul.f32 %v7396, %v7809
        %v7938 = vmul.f32 %v7398, %v7810
        %v7939 = vmul.f32 %v7400, %v7811
        %v7940 = vmul.f32 %v7402, %v7812
        %v7941 = vmul.f32 %v7404, %v7813
        %v7942 = vmul.f32 %v7406, %v7814
        %v7943 = vmul.f32 %v7408, %v7815
        %v7944 = vmul.f32 %v7410, %v7816
        %v7945 = vmul.f32 %v7412, %v7817
        %v7946 = vmul.f32 %v7414, %v7818
        %v7947 = vmul.f32 %v7416, %v7819
        %v7948 = vmul.f32 %v7418, %v7820
        %v7949 = vmul.f32 %v7420, %v7821
        %v7950 = vmul.f32 %v7422, %v7822
        %v7951 = vmul.f32 %v7424, %v7823
        %v7952 = vmul.f32 %v7426, %v7824
        %v7953 = vmul.f32 %v7428, %v7825
        %v7954 = vmul.f32 %v7430, %v7826
        %v7955 = vmul.f32 %v7432, %v7827
        %v7956 = vmul.f32 %v7434, %v7828
        %v7957 = vmul.f32 %v7436, %v7829
        %v7958 = vmul.f32 %v7438, %v7830
        %v7959 = vmul.f32 %v7440, %v7831
        %v7960 = vmul.f32 %v7442, %v7832
        %v7961 = vmul.f32 %v7444, %v7833
        %v7962 = vmul.f32 %v7446, %v7834
        %v7963 = vmul.f32 %v7448, %v7835
        %v7964 = vmul.f32 %v7450, %v7836
        %v7965 = vmul.f32 %v7452, %v7837
        %v7966 = vmul.f32 %v7454, %v7838
        %v7967 = vpack.c.bf16 %v7840, %v7839
        %v7968 = vpack.c.bf16 %v7842, %v7841
        %v7969 = vpack.c.bf16 %v7844, %v7843
        %v7970 = vpack.c.bf16 %v7846, %v7845
        %v7971 = vpack.c.bf16 %v7848, %v7847
        %v7972 = vpack.c.bf16 %v7850, %v7849
        %v7973 = vpack.c.bf16 %v7852, %v7851
        %v7974 = vpack.c.bf16 %v7854, %v7853
        %v7975 = vpack.c.bf16 %v7856, %v7855
        %v7976 = vpack.c.bf16 %v7858, %v7857
        %v7977 = vpack.c.bf16 %v7860, %v7859
        %v7978 = vpack.c.bf16 %v7862, %v7861
        %v7979 = vpack.c.bf16 %v7864, %v7863
        %v7980 = vpack.c.bf16 %v7866, %v7865
        %v7981 = vpack.c.bf16 %v7868, %v7867
        %v7982 = vpack.c.bf16 %v7870, %v7869
        %v7983 = vpack.c.bf16 %v7872, %v7871
        %v7984 = vpack.c.bf16 %v7874, %v7873
        %v7985 = vpack.c.bf16 %v7876, %v7875
        %v7986 = vpack.c.bf16 %v7878, %v7877
        %v7987 = vpack.c.bf16 %v7880, %v7879
        %v7988 = vpack.c.bf16 %v7882, %v7881
        %v7989 = vpack.c.bf16 %v7884, %v7883
        %v7990 = vpack.c.bf16 %v7886, %v7885
        %v7991 = vpack.c.bf16 %v7888, %v7887
        %v7992 = vpack.c.bf16 %v7890, %v7889
        %v7993 = vpack.c.bf16 %v7892, %v7891
        %v7994 = vpack.c.bf16 %v7894, %v7893
        %v7995 = vpack.c.bf16 %v7896, %v7895
        %v7996 = vpack.c.bf16 %v7898, %v7897
        %v7997 = vpack.c.bf16 %v7900, %v7899
        %v7998 = vpack.c.bf16 %v7902, %v7901
        %v7999 = vpack.c.bf16 %v7904, %v7903
        %v8000 = vpack.c.bf16 %v7906, %v7905
        %v8001 = vpack.c.bf16 %v7908, %v7907
        %v8002 = vpack.c.bf16 %v7910, %v7909
        %v8003 = vpack.c.bf16 %v7912, %v7911
        %v8004 = vpack.c.bf16 %v7914, %v7913
        %v8005 = vpack.c.bf16 %v7916, %v7915
        %v8006 = vpack.c.bf16 %v7918, %v7917
        %v8007 = vpack.c.bf16 %v7920, %v7919
        %v8008 = vpack.c.bf16 %v7922, %v7921
        %v8009 = vpack.c.bf16 %v7924, %v7923
        %v8010 = vpack.c.bf16 %v7926, %v7925
        %v8011 = vpack.c.bf16 %v7928, %v7927
        %v8012 = vpack.c.bf16 %v7930, %v7929
        %v8013 = vpack.c.bf16 %v7932, %v7931
        %v8014 = vpack.c.bf16 %v7934, %v7933
        %v8015 = vpack.c.bf16 %v7936, %v7935
        %v8016 = vpack.c.bf16 %v7938, %v7937
        %v8017 = vpack.c.bf16 %v7940, %v7939
        %v8018 = vpack.c.bf16 %v7942, %v7941
        %v8019 = vpack.c.bf16 %v7944, %v7943
        %v8020 = vpack.c.bf16 %v7946, %v7945
        %v8021 = vpack.c.bf16 %v7948, %v7947
        %v8022 = vpack.c.bf16 %v7950, %v7949
        %v8023 = vpack.c.bf16 %v7952, %v7951
        %v8024 = vpack.c.bf16 %v7954, %v7953
        %v8025 = vpack.c.bf16 %v7956, %v7955
        %v8026 = vpack.c.bf16 %v7958, %v7957
        %v8027 = vpack.c.bf16 %v7960, %v7959
        %v8028 = vpack.c.bf16 %v7962, %v7961
        %v8029 = vpack.c.bf16 %v7964, %v7963
        %v8030 = vpack.c.bf16 %v7966, %v7965
        %8039 = vrot.lane.b32.xlu0 %v5810, 96
        %v8040 = vpop.permute.xlu0 %8039
        %8041 = vrot.lane.b32.xlu0 %v5811, 96
        %v8042 = vpop.permute.xlu0 %8041
        %8043 = vrot.lane.b32.xlu0 %v5812, 96
        %v8044 = vpop.permute.xlu0 %8043
        %8045 = vrot.lane.b32.xlu0 %v5813, 96
        %v8046 = vpop.permute.xlu0 %8045
        %8047 = vrot.lane.b32.xlu0 %v5814, 96
        %v8048 = vpop.permute.xlu0 %8047
        %8049 = vrot.lane.b32.xlu0 %v5815, 96
        %v8050 = vpop.permute.xlu0 %8049
        %8051 = vrot.lane.b32.xlu0 %v5816, 96
        %v8052 = vpop.permute.xlu0 %8051
        %8053 = vrot.lane.b32.xlu0 %v5817, 96
        %v8054 = vpop.permute.xlu0 %8053
        %8063 = vmatprep.subr.bf16.mxu0 0
        %8064 = vmatpush1.bf16.msra.mxu0 %v8054
        %8065 = vmatprep.subr.bf16.mxu0 0
        %8066 = vmatpush1.bf16.msra.mxu0 %v8052
        %8067 = vmatprep.subr.bf16.mxu0 0
        %8068 = vmatpush1.bf16.msra.mxu0 %v8050
        %8069 = vmatprep.subr.bf16.mxu0 0
        %8070 = vmatpush1.bf16.msra.mxu0 %v8048
        %8071 = vmatprep.subr.bf16.mxu0 0
        %8072 = vmatpush1.bf16.msra.mxu0 %v8046
        %8073 = vmatprep.subr.bf16.mxu0 0
        %8074 = vmatpush1.bf16.msra.mxu0 %v8044
        %8075 = vmatprep.subr.bf16.mxu0 0
        %8076 = vmatpush1.bf16.msra.mxu0 %v8042
        %8077 = vmatprep.subr.bf16.mxu0 0
        %8078 = vmatpush1.bf16.msra.mxu0 %v8040
        %8079 = vmatprep.subr.bf16.mxu0 0
        %8080 = vmatpush2.bf16.msra.mxu0 0
        %8081 = vmatprep.subr.bf16.mxu0 0
        %8082 = vmatpush2.bf16.msra.mxu0 0
        %8083 = vmatprep.subr.bf16.mxu0 0
        %8084 = vmatpush2.bf16.msra.mxu0 0
        %8085 = vmatprep.subr.bf16.mxu0 0
        %8086 = vmatpush2.bf16.msra.mxu0 0
        %8087 = vmatprep.subr.bf16.mxu0 0
        %8088 = vmatpush2.bf16.msra.mxu0 0
        %8089 = vmatprep.subr.bf16.mxu0 0
        %8090 = vmatpush2.bf16.msra.mxu0 0
        %8091 = vmatprep.subr.bf16.mxu0 0
        %8092 = vmatpush2.bf16.msra.mxu0 0
        %8093 = vmatprep.subr.bf16.mxu0 0
        %8094 = vmatpush2.bf16.msra.mxu0 0
        %8095 = vmatprep.mubr.bf16.mxu0 0
        %8096 = vmatmul.mubr.bf16.gmra.mxu0 %v7967
        %v8097 = vpop.f32.mrf.mxu0
        %v8098 = vadd.f32 0.0, %v8097
        %v8099 = vpop.f32.mrf.mxu0
        %v8100 = vpop.f32.mrf.mxu0
        %v8101 = vadd.f32 0.0, %v8100
        %v8102 = vpop.f32.mrf.mxu0
        %8103 = vmatprep.mubr.bf16.mxu0 0
        %8104 = vmatmul.mubr.bf16.gmra.mxu0 %v7968
        %v8105 = vpop.f32.mrf.mxu0
        %v8106 = vadd.f32 0.0, %v8105
        %v8107 = vpop.f32.mrf.mxu0
        %v8108 = vpop.f32.mrf.mxu0
        %v8109 = vadd.f32 0.0, %v8108
        %v8110 = vpop.f32.mrf.mxu0
        %8111 = vmatprep.mubr.bf16.mxu0 0
        %8112 = vmatmul.mubr.bf16.gmra.mxu0 %v7969
        %v8113 = vpop.f32.mrf.mxu0
        %v8114 = vadd.f32 0.0, %v8113
        %v8115 = vpop.f32.mrf.mxu0
        %v8116 = vpop.f32.mrf.mxu0
        %v8117 = vadd.f32 0.0, %v8116
        %v8118 = vpop.f32.mrf.mxu0
        %8119 = vmatprep.mubr.bf16.mxu0 0
        %8120 = vmatmul.mubr.bf16.gmra.mxu0 %v7970
        %v8121 = vpop.f32.mrf.mxu0
        %v8122 = vadd.f32 0.0, %v8121
        %v8123 = vpop.f32.mrf.mxu0
        %v8124 = vpop.f32.mrf.mxu0
        %v8125 = vadd.f32 0.0, %v8124
        %v8126 = vpop.f32.mrf.mxu0
        %8127 = vmatprep.mubr.bf16.mxu0 0
        %8128 = vmatmul.mubr.bf16.gmra.mxu0 %v7971
        %v8129 = vpop.f32.mrf.mxu0
        %v8130 = vadd.f32 0.0, %v8129
        %v8131 = vpop.f32.mrf.mxu0
        %v8132 = vpop.f32.mrf.mxu0
        %v8133 = vadd.f32 0.0, %v8132
        %v8134 = vpop.f32.mrf.mxu0
        %8135 = vmatprep.mubr.bf16.mxu0 0
        %8136 = vmatmul.mubr.bf16.gmra.mxu0 %v7972
        %v8137 = vpop.f32.mrf.mxu0
        %v8138 = vadd.f32 0.0, %v8137
        %v8139 = vpop.f32.mrf.mxu0
        %v8140 = vpop.f32.mrf.mxu0
        %v8141 = vadd.f32 0.0, %v8140
        %v8142 = vpop.f32.mrf.mxu0
        %8143 = vmatprep.mubr.bf16.mxu0 0
        %8144 = vmatmul.mubr.bf16.gmra.mxu0 %v7973
        %v8145 = vpop.f32.mrf.mxu0
        %v8146 = vadd.f32 0.0, %v8145
        %v8147 = vpop.f32.mrf.mxu0
        %v8148 = vpop.f32.mrf.mxu0
        %v8149 = vadd.f32 0.0, %v8148
        %v8150 = vpop.f32.mrf.mxu0
        %8151 = vmatprep.mubr.bf16.mxu0 0
        %8152 = vmatmul.mubr.bf16.gmra.mxu0 %v7974
        %v8153 = vpop.f32.mrf.mxu0
        %v8154 = vadd.f32 0.0, %v8153
        %v8155 = vpop.f32.mrf.mxu0
        %v8156 = vpop.f32.mrf.mxu0
        %v8157 = vadd.f32 0.0, %v8156
        %v8158 = vpop.f32.mrf.mxu0
        %8159 = vmatprep.mubr.bf16.mxu0 0
        %8160 = vmatmul.mubr.bf16.gmra.mxu0 %v7975
        %v8161 = vpop.f32.mrf.mxu0
        %v8162 = vadd.f32 0.0, %v8161
        %v8163 = vpop.f32.mrf.mxu0
        %v8164 = vpop.f32.mrf.mxu0
        %v8165 = vadd.f32 0.0, %v8164
        %v8166 = vpop.f32.mrf.mxu0
        %8167 = vmatprep.mubr.bf16.mxu0 0
        %8168 = vmatmul.mubr.bf16.gmra.mxu0 %v7976
        %v8169 = vpop.f32.mrf.mxu0
        %v8170 = vadd.f32 0.0, %v8169
        %v8171 = vpop.f32.mrf.mxu0
        %v8172 = vpop.f32.mrf.mxu0
        %v8173 = vadd.f32 0.0, %v8172
        %v8174 = vpop.f32.mrf.mxu0
        %8175 = vmatprep.mubr.bf16.mxu0 0
        %8176 = vmatmul.mubr.bf16.gmra.mxu0 %v7977
        %v8177 = vpop.f32.mrf.mxu0
        %v8178 = vadd.f32 0.0, %v8177
        %v8179 = vpop.f32.mrf.mxu0
        %v8180 = vpop.f32.mrf.mxu0
        %v8181 = vadd.f32 0.0, %v8180
        %v8182 = vpop.f32.mrf.mxu0
        %8183 = vmatprep.mubr.bf16.mxu0 0
        %8184 = vmatmul.mubr.bf16.gmra.mxu0 %v7978
        %v8185 = vpop.f32.mrf.mxu0
        %v8186 = vadd.f32 0.0, %v8185
        %v8187 = vpop.f32.mrf.mxu0
        %v8188 = vpop.f32.mrf.mxu0
        %v8189 = vadd.f32 0.0, %v8188
        %v8190 = vpop.f32.mrf.mxu0
        %8191 = vmatprep.mubr.bf16.mxu0 0
        %8192 = vmatmul.mubr.bf16.gmra.mxu0 %v7979
        %v8193 = vpop.f32.mrf.mxu0
        %v8194 = vadd.f32 0.0, %v8193
        %v8195 = vpop.f32.mrf.mxu0
        %v8196 = vpop.f32.mrf.mxu0
        %v8197 = vadd.f32 0.0, %v8196
        %v8198 = vpop.f32.mrf.mxu0
        %8199 = vmatprep.mubr.bf16.mxu0 0
        %8200 = vmatmul.mubr.bf16.gmra.mxu0 %v7980
        %v8201 = vpop.f32.mrf.mxu0
        %v8202 = vadd.f32 0.0, %v8201
        %v8203 = vpop.f32.mrf.mxu0
        %v8204 = vpop.f32.mrf.mxu0
        %v8205 = vadd.f32 0.0, %v8204
        %v8206 = vpop.f32.mrf.mxu0
        %8207 = vmatprep.mubr.bf16.mxu0 0
        %8208 = vmatmul.mubr.bf16.gmra.mxu0 %v7981
        %v8209 = vpop.f32.mrf.mxu0
        %v8210 = vadd.f32 0.0, %v8209
        %v8211 = vpop.f32.mrf.mxu0
        %v8212 = vpop.f32.mrf.mxu0
        %v8213 = vadd.f32 0.0, %v8212
        %v8214 = vpop.f32.mrf.mxu0
        %8215 = vmatprep.mubr.bf16.mxu0 0
        %8216 = vmatmul.mubr.bf16.gmra.mxu0 %v7982
        %v8217 = vpop.f32.mrf.mxu0
        %v8218 = vadd.f32 0.0, %v8217
        %v8219 = vpop.f32.mrf.mxu0
        %v8220 = vpop.f32.mrf.mxu0
        %v8221 = vadd.f32 0.0, %v8220
        %v8222 = vpop.f32.mrf.mxu0
        %8223 = vmatprep.mubr.bf16.mxu0 0
        %8224 = vmatmul.mubr.bf16.gmra.mxu0 %v7983
        %v8225 = vpop.f32.mrf.mxu0
        %v8226 = vadd.f32 0.0, %v8225
        %v8227 = vpop.f32.mrf.mxu0
        %v8228 = vpop.f32.mrf.mxu0
        %v8229 = vadd.f32 0.0, %v8228
        %v8230 = vpop.f32.mrf.mxu0
        %8231 = vmatprep.mubr.bf16.mxu0 0
        %8232 = vmatmul.mubr.bf16.gmra.mxu0 %v7984
        %v8233 = vpop.f32.mrf.mxu0
        %v8234 = vadd.f32 0.0, %v8233
        %v8235 = vpop.f32.mrf.mxu0
        %v8236 = vpop.f32.mrf.mxu0
        %v8237 = vadd.f32 0.0, %v8236
        %v8238 = vpop.f32.mrf.mxu0
        %8239 = vmatprep.mubr.bf16.mxu0 0
        %8240 = vmatmul.mubr.bf16.gmra.mxu0 %v7985
        %v8241 = vpop.f32.mrf.mxu0
        %v8242 = vadd.f32 0.0, %v8241
        %v8243 = vpop.f32.mrf.mxu0
        %v8244 = vpop.f32.mrf.mxu0
        %v8245 = vadd.f32 0.0, %v8244
        %v8246 = vpop.f32.mrf.mxu0
        %8247 = vmatprep.mubr.bf16.mxu0 0
        %8248 = vmatmul.mubr.bf16.gmra.mxu0 %v7986
        %v8249 = vpop.f32.mrf.mxu0
        %v8250 = vadd.f32 0.0, %v8249
        %v8251 = vpop.f32.mrf.mxu0
        %v8252 = vpop.f32.mrf.mxu0
        %v8253 = vadd.f32 0.0, %v8252
        %v8254 = vpop.f32.mrf.mxu0
        %8255 = vmatprep.mubr.bf16.mxu0 0
        %8256 = vmatmul.mubr.bf16.gmra.mxu0 %v7987
        %v8257 = vpop.f32.mrf.mxu0
        %v8258 = vadd.f32 0.0, %v8257
        %v8259 = vpop.f32.mrf.mxu0
        %v8260 = vpop.f32.mrf.mxu0
        %v8261 = vadd.f32 0.0, %v8260
        %v8262 = vpop.f32.mrf.mxu0
        %8263 = vmatprep.mubr.bf16.mxu0 0
        %8264 = vmatmul.mubr.bf16.gmra.mxu0 %v7988
        %v8265 = vpop.f32.mrf.mxu0
        %v8266 = vadd.f32 0.0, %v8265
        %v8267 = vpop.f32.mrf.mxu0
        %v8268 = vpop.f32.mrf.mxu0
        %v8269 = vadd.f32 0.0, %v8268
        %v8270 = vpop.f32.mrf.mxu0
        %8271 = vmatprep.mubr.bf16.mxu0 0
        %8272 = vmatmul.mubr.bf16.gmra.mxu0 %v7989
        %v8273 = vpop.f32.mrf.mxu0
        %v8274 = vadd.f32 0.0, %v8273
        %v8275 = vpop.f32.mrf.mxu0
        %v8276 = vpop.f32.mrf.mxu0
        %v8277 = vadd.f32 0.0, %v8276
        %v8278 = vpop.f32.mrf.mxu0
        %8279 = vmatprep.mubr.bf16.mxu0 0
        %8280 = vmatmul.mubr.bf16.gmra.mxu0 %v7990
        %v8281 = vpop.f32.mrf.mxu0
        %v8282 = vadd.f32 0.0, %v8281
        %v8283 = vpop.f32.mrf.mxu0
        %v8284 = vpop.f32.mrf.mxu0
        %v8285 = vadd.f32 0.0, %v8284
        %v8286 = vpop.f32.mrf.mxu0
        %8287 = vmatprep.mubr.bf16.mxu0 0
        %8288 = vmatmul.mubr.bf16.gmra.mxu0 %v7991
        %v8289 = vpop.f32.mrf.mxu0
        %v8290 = vadd.f32 0.0, %v8289
        %v8291 = vpop.f32.mrf.mxu0
        %v8292 = vpop.f32.mrf.mxu0
        %v8293 = vadd.f32 0.0, %v8292
        %v8294 = vpop.f32.mrf.mxu0
        %8295 = vmatprep.mubr.bf16.mxu0 0
        %8296 = vmatmul.mubr.bf16.gmra.mxu0 %v7992
        %v8297 = vpop.f32.mrf.mxu0
        %v8298 = vadd.f32 0.0, %v8297
        %v8299 = vpop.f32.mrf.mxu0
        %v8300 = vpop.f32.mrf.mxu0
        %v8301 = vadd.f32 0.0, %v8300
        %v8302 = vpop.f32.mrf.mxu0
        %8303 = vmatprep.mubr.bf16.mxu0 0
        %8304 = vmatmul.mubr.bf16.gmra.mxu0 %v7993
        %v8305 = vpop.f32.mrf.mxu0
        %v8306 = vadd.f32 0.0, %v8305
        %v8307 = vpop.f32.mrf.mxu0
        %v8308 = vpop.f32.mrf.mxu0
        %v8309 = vadd.f32 0.0, %v8308
        %v8310 = vpop.f32.mrf.mxu0
        %8311 = vmatprep.mubr.bf16.mxu0 0
        %8312 = vmatmul.mubr.bf16.gmra.mxu0 %v7994
        %v8313 = vpop.f32.mrf.mxu0
        %v8314 = vadd.f32 0.0, %v8313
        %v8315 = vpop.f32.mrf.mxu0
        %v8316 = vpop.f32.mrf.mxu0
        %v8317 = vadd.f32 0.0, %v8316
        %v8318 = vpop.f32.mrf.mxu0
        %8319 = vmatprep.mubr.bf16.mxu0 0
        %8320 = vmatmul.mubr.bf16.gmra.mxu0 %v7995
        %v8321 = vpop.f32.mrf.mxu0
        %v8322 = vadd.f32 0.0, %v8321
        %v8323 = vpop.f32.mrf.mxu0
        %v8324 = vpop.f32.mrf.mxu0
        %v8325 = vadd.f32 0.0, %v8324
        %v8326 = vpop.f32.mrf.mxu0
        %8327 = vmatprep.mubr.bf16.mxu0 0
        %8328 = vmatmul.mubr.bf16.gmra.mxu0 %v7996
        %v8329 = vpop.f32.mrf.mxu0
        %v8330 = vadd.f32 0.0, %v8329
        %v8331 = vpop.f32.mrf.mxu0
        %v8332 = vpop.f32.mrf.mxu0
        %v8333 = vadd.f32 0.0, %v8332
        %v8334 = vpop.f32.mrf.mxu0
        %8335 = vmatprep.mubr.bf16.mxu0 0
        %8336 = vmatmul.mubr.bf16.gmra.mxu0 %v7997
        %v8337 = vpop.f32.mrf.mxu0
        %v8338 = vadd.f32 0.0, %v8337
        %v8339 = vpop.f32.mrf.mxu0
        %v8340 = vpop.f32.mrf.mxu0
        %v8341 = vadd.f32 0.0, %v8340
        %v8342 = vpop.f32.mrf.mxu0
        %8343 = vmatprep.mubr.bf16.mxu0 0
        %8344 = vmatmul.mubr.bf16.gmra.mxu0 %v7998
        %v8345 = vpop.f32.mrf.mxu0
        %v8346 = vadd.f32 0.0, %v8345
        %v8347 = vpop.f32.mrf.mxu0
        %v8348 = vpop.f32.mrf.mxu0
        %v8349 = vadd.f32 0.0, %v8348
        %v8350 = vpop.f32.mrf.mxu0
        %8351 = vmatprep.mubr.bf16.mxu0 0
        %8352 = vmatmul.mubr.bf16.gmra.mxu0 %v7999
        %v8353 = vpop.f32.mrf.mxu0
        %v8354 = vadd.f32 0.0, %v8353
        %v8355 = vpop.f32.mrf.mxu0
        %v8356 = vpop.f32.mrf.mxu0
        %v8357 = vadd.f32 0.0, %v8356
        %v8358 = vpop.f32.mrf.mxu0
        %8359 = vmatprep.mubr.bf16.mxu0 0
        %8360 = vmatmul.mubr.bf16.gmra.mxu0 %v8000
        %v8361 = vpop.f32.mrf.mxu0
        %v8362 = vadd.f32 0.0, %v8361
        %v8363 = vpop.f32.mrf.mxu0
        %v8364 = vpop.f32.mrf.mxu0
        %v8365 = vadd.f32 0.0, %v8364
        %v8366 = vpop.f32.mrf.mxu0
        %8367 = vmatprep.mubr.bf16.mxu0 0
        %8368 = vmatmul.mubr.bf16.gmra.mxu0 %v8001
        %v8369 = vpop.f32.mrf.mxu0
        %v8370 = vadd.f32 0.0, %v8369
        %v8371 = vpop.f32.mrf.mxu0
        %v8372 = vpop.f32.mrf.mxu0
        %v8373 = vadd.f32 0.0, %v8372
        %v8374 = vpop.f32.mrf.mxu0
        %8375 = vmatprep.mubr.bf16.mxu0 0
        %8376 = vmatmul.mubr.bf16.gmra.mxu0 %v8002
        %v8377 = vpop.f32.mrf.mxu0
        %v8378 = vadd.f32 0.0, %v8377
        %v8379 = vpop.f32.mrf.mxu0
        %v8380 = vpop.f32.mrf.mxu0
        %v8381 = vadd.f32 0.0, %v8380
        %v8382 = vpop.f32.mrf.mxu0
        %8383 = vmatprep.mubr.bf16.mxu0 0
        %8384 = vmatmul.mubr.bf16.gmra.mxu0 %v8003
        %v8385 = vpop.f32.mrf.mxu0
        %v8386 = vadd.f32 0.0, %v8385
        %v8387 = vpop.f32.mrf.mxu0
        %v8388 = vpop.f32.mrf.mxu0
        %v8389 = vadd.f32 0.0, %v8388
        %v8390 = vpop.f32.mrf.mxu0
        %8391 = vmatprep.mubr.bf16.mxu0 0
        %8392 = vmatmul.mubr.bf16.gmra.mxu0 %v8004
        %v8393 = vpop.f32.mrf.mxu0
        %v8394 = vadd.f32 0.0, %v8393
        %v8395 = vpop.f32.mrf.mxu0
        %v8396 = vpop.f32.mrf.mxu0
        %v8397 = vadd.f32 0.0, %v8396
        %v8398 = vpop.f32.mrf.mxu0
        %8399 = vmatprep.mubr.bf16.mxu0 0
        %8400 = vmatmul.mubr.bf16.gmra.mxu0 %v8005
        %v8401 = vpop.f32.mrf.mxu0
        %v8402 = vadd.f32 0.0, %v8401
        %v8403 = vpop.f32.mrf.mxu0
        %v8404 = vpop.f32.mrf.mxu0
        %v8405 = vadd.f32 0.0, %v8404
        %v8406 = vpop.f32.mrf.mxu0
        %8407 = vmatprep.mubr.bf16.mxu0 0
        %8408 = vmatmul.mubr.bf16.gmra.mxu0 %v8006
        %v8409 = vpop.f32.mrf.mxu0
        %v8410 = vadd.f32 0.0, %v8409
        %v8411 = vpop.f32.mrf.mxu0
        %v8412 = vpop.f32.mrf.mxu0
        %v8413 = vadd.f32 0.0, %v8412
        %v8414 = vpop.f32.mrf.mxu0
        %8415 = vmatprep.mubr.bf16.mxu0 0
        %8416 = vmatmul.mubr.bf16.gmra.mxu0 %v8007
        %v8417 = vpop.f32.mrf.mxu0
        %v8418 = vadd.f32 0.0, %v8417
        %v8419 = vpop.f32.mrf.mxu0
        %v8420 = vpop.f32.mrf.mxu0
        %v8421 = vadd.f32 0.0, %v8420
        %v8422 = vpop.f32.mrf.mxu0
        %8423 = vmatprep.mubr.bf16.mxu0 0
        %8424 = vmatmul.mubr.bf16.gmra.mxu0 %v8008
        %v8425 = vpop.f32.mrf.mxu0
        %v8426 = vadd.f32 0.0, %v8425
        %v8427 = vpop.f32.mrf.mxu0
        %v8428 = vpop.f32.mrf.mxu0
        %v8429 = vadd.f32 0.0, %v8428
        %v8430 = vpop.f32.mrf.mxu0
        %8431 = vmatprep.mubr.bf16.mxu0 0
        %8432 = vmatmul.mubr.bf16.gmra.mxu0 %v8009
        %v8433 = vpop.f32.mrf.mxu0
        %v8434 = vadd.f32 0.0, %v8433
        %v8435 = vpop.f32.mrf.mxu0
        %v8436 = vpop.f32.mrf.mxu0
        %v8437 = vadd.f32 0.0, %v8436
        %v8438 = vpop.f32.mrf.mxu0
        %8439 = vmatprep.mubr.bf16.mxu0 0
        %8440 = vmatmul.mubr.bf16.gmra.mxu0 %v8010
        %v8441 = vpop.f32.mrf.mxu0
        %v8442 = vadd.f32 0.0, %v8441
        %v8443 = vpop.f32.mrf.mxu0
        %v8444 = vpop.f32.mrf.mxu0
        %v8445 = vadd.f32 0.0, %v8444
        %v8446 = vpop.f32.mrf.mxu0
        %8447 = vmatprep.mubr.bf16.mxu0 0
        %8448 = vmatmul.mubr.bf16.gmra.mxu0 %v8011
        %v8449 = vpop.f32.mrf.mxu0
        %v8450 = vadd.f32 0.0, %v8449
        %v8451 = vpop.f32.mrf.mxu0
        %v8452 = vpop.f32.mrf.mxu0
        %v8453 = vadd.f32 0.0, %v8452
        %v8454 = vpop.f32.mrf.mxu0
        %8455 = vmatprep.mubr.bf16.mxu0 0
        %8456 = vmatmul.mubr.bf16.gmra.mxu0 %v8012
        %v8457 = vpop.f32.mrf.mxu0
        %v8458 = vadd.f32 0.0, %v8457
        %v8459 = vpop.f32.mrf.mxu0
        %v8460 = vpop.f32.mrf.mxu0
        %v8461 = vadd.f32 0.0, %v8460
        %v8462 = vpop.f32.mrf.mxu0
        %8463 = vmatprep.mubr.bf16.mxu0 0
        %8464 = vmatmul.mubr.bf16.gmra.mxu0 %v8013
        %v8465 = vpop.f32.mrf.mxu0
        %v8466 = vadd.f32 0.0, %v8465
        %v8467 = vpop.f32.mrf.mxu0
        %v8468 = vpop.f32.mrf.mxu0
        %v8469 = vadd.f32 0.0, %v8468
        %v8470 = vpop.f32.mrf.mxu0
        %8471 = vmatprep.mubr.bf16.mxu0 0
        %8472 = vmatmul.mubr.bf16.gmra.mxu0 %v8014
        %v8473 = vpop.f32.mrf.mxu0
        %v8474 = vadd.f32 0.0, %v8473
        %v8475 = vpop.f32.mrf.mxu0
        %v8476 = vpop.f32.mrf.mxu0
        %v8477 = vadd.f32 0.0, %v8476
        %v8478 = vpop.f32.mrf.mxu0
        %8479 = vmatprep.mubr.bf16.mxu0 0
        %8480 = vmatmul.mubr.bf16.gmra.mxu0 %v8015
        %v8481 = vpop.f32.mrf.mxu0
        %v8482 = vadd.f32 0.0, %v8481
        %v8483 = vpop.f32.mrf.mxu0
        %v8484 = vpop.f32.mrf.mxu0
        %v8485 = vadd.f32 0.0, %v8484
        %v8486 = vpop.f32.mrf.mxu0
        %8487 = vmatprep.mubr.bf16.mxu0 0
        %8488 = vmatmul.mubr.bf16.gmra.mxu0 %v8016
        %v8489 = vpop.f32.mrf.mxu0
        %v8490 = vadd.f32 0.0, %v8489
        %v8491 = vpop.f32.mrf.mxu0
        %v8492 = vpop.f32.mrf.mxu0
        %v8493 = vadd.f32 0.0, %v8492
        %v8494 = vpop.f32.mrf.mxu0
        %8495 = vmatprep.mubr.bf16.mxu0 0
        %8496 = vmatmul.mubr.bf16.gmra.mxu0 %v8017
        %v8497 = vpop.f32.mrf.mxu0
        %v8498 = vadd.f32 0.0, %v8497
        %v8499 = vpop.f32.mrf.mxu0
        %v8500 = vpop.f32.mrf.mxu0
        %v8501 = vadd.f32 0.0, %v8500
        %v8502 = vpop.f32.mrf.mxu0
        %8503 = vmatprep.mubr.bf16.mxu0 0
        %8504 = vmatmul.mubr.bf16.gmra.mxu0 %v8018
        %v8505 = vpop.f32.mrf.mxu0
        %v8506 = vadd.f32 0.0, %v8505
        %v8507 = vpop.f32.mrf.mxu0
        %v8508 = vpop.f32.mrf.mxu0
        %v8509 = vadd.f32 0.0, %v8508
        %v8510 = vpop.f32.mrf.mxu0
        %8511 = vmatprep.mubr.bf16.mxu0 0
        %8512 = vmatmul.mubr.bf16.gmra.mxu0 %v8019
        %v8513 = vpop.f32.mrf.mxu0
        %v8514 = vadd.f32 0.0, %v8513
        %v8515 = vpop.f32.mrf.mxu0
        %v8516 = vpop.f32.mrf.mxu0
        %v8517 = vadd.f32 0.0, %v8516
        %v8518 = vpop.f32.mrf.mxu0
        %8519 = vmatprep.mubr.bf16.mxu0 0
        %8520 = vmatmul.mubr.bf16.gmra.mxu0 %v8020
        %v8521 = vpop.f32.mrf.mxu0
        %v8522 = vadd.f32 0.0, %v8521
        %v8523 = vpop.f32.mrf.mxu0
        %v8524 = vpop.f32.mrf.mxu0
        %v8525 = vadd.f32 0.0, %v8524
        %v8526 = vpop.f32.mrf.mxu0
        %8527 = vmatprep.mubr.bf16.mxu0 0
        %8528 = vmatmul.mubr.bf16.gmra.mxu0 %v8021
        %v8529 = vpop.f32.mrf.mxu0
        %v8530 = vadd.f32 0.0, %v8529
        %v8531 = vpop.f32.mrf.mxu0
        %v8532 = vpop.f32.mrf.mxu0
        %v8533 = vadd.f32 0.0, %v8532
        %v8534 = vpop.f32.mrf.mxu0
        %8535 = vmatprep.mubr.bf16.mxu0 0
        %8536 = vmatmul.mubr.bf16.gmra.mxu0 %v8022
        %v8537 = vpop.f32.mrf.mxu0
        %v8538 = vadd.f32 0.0, %v8537
        %v8539 = vpop.f32.mrf.mxu0
        %v8540 = vpop.f32.mrf.mxu0
        %v8541 = vadd.f32 0.0, %v8540
        %v8542 = vpop.f32.mrf.mxu0
        %8543 = vmatprep.mubr.bf16.mxu0 0
        %8544 = vmatmul.mubr.bf16.gmra.mxu0 %v8023
        %v8545 = vpop.f32.mrf.mxu0
        %v8546 = vadd.f32 0.0, %v8545
        %v8547 = vpop.f32.mrf.mxu0
        %v8548 = vpop.f32.mrf.mxu0
        %v8549 = vadd.f32 0.0, %v8548
        %v8550 = vpop.f32.mrf.mxu0
        %8551 = vmatprep.mubr.bf16.mxu0 0
        %8552 = vmatmul.mubr.bf16.gmra.mxu0 %v8024
        %v8553 = vpop.f32.mrf.mxu0
        %v8554 = vadd.f32 0.0, %v8553
        %v8555 = vpop.f32.mrf.mxu0
        %v8556 = vpop.f32.mrf.mxu0
        %v8557 = vadd.f32 0.0, %v8556
        %v8558 = vpop.f32.mrf.mxu0
        %8559 = vmatprep.mubr.bf16.mxu0 0
        %8560 = vmatmul.mubr.bf16.gmra.mxu0 %v8025
        %v8561 = vpop.f32.mrf.mxu0
        %v8562 = vadd.f32 0.0, %v8561
        %v8563 = vpop.f32.mrf.mxu0
        %v8564 = vpop.f32.mrf.mxu0
        %v8565 = vadd.f32 0.0, %v8564
        %v8566 = vpop.f32.mrf.mxu0
        %8567 = vmatprep.mubr.bf16.mxu0 0
        %8568 = vmatmul.mubr.bf16.gmra.mxu0 %v8026
        %v8569 = vpop.f32.mrf.mxu0
        %v8570 = vadd.f32 0.0, %v8569
        %v8571 = vpop.f32.mrf.mxu0
        %v8572 = vpop.f32.mrf.mxu0
        %v8573 = vadd.f32 0.0, %v8572
        %v8574 = vpop.f32.mrf.mxu0
        %8575 = vmatprep.mubr.bf16.mxu0 0
        %8576 = vmatmul.mubr.bf16.gmra.mxu0 %v8027
        %v8577 = vpop.f32.mrf.mxu0
        %v8578 = vadd.f32 0.0, %v8577
        %v8579 = vpop.f32.mrf.mxu0
        %v8580 = vpop.f32.mrf.mxu0
        %v8581 = vadd.f32 0.0, %v8580
        %v8582 = vpop.f32.mrf.mxu0
        %8583 = vmatprep.mubr.bf16.mxu0 0
        %8584 = vmatmul.mubr.bf16.gmra.mxu0 %v8028
        %v8585 = vpop.f32.mrf.mxu0
        %v8586 = vadd.f32 0.0, %v8585
        %v8587 = vpop.f32.mrf.mxu0
        %v8588 = vpop.f32.mrf.mxu0
        %v8589 = vadd.f32 0.0, %v8588
        %v8590 = vpop.f32.mrf.mxu0
        %8591 = vmatprep.mubr.bf16.mxu0 0
        %8592 = vmatmul.mubr.bf16.gmra.mxu0 %v8029
        %v8593 = vpop.f32.mrf.mxu0
        %v8594 = vadd.f32 0.0, %v8593
        %v8595 = vpop.f32.mrf.mxu0
        %v8596 = vpop.f32.mrf.mxu0
        %v8597 = vadd.f32 0.0, %v8596
        %v8598 = vpop.f32.mrf.mxu0
        %8599 = vmatprep.mubr.bf16.mxu0 0
        %8600 = vmatmul.mubr.bf16.gmra.mxu0 %v8030
        %v8601 = vpop.f32.mrf.mxu0
        %v8602 = vadd.f32 0.0, %v8601
        %v8603 = vpop.f32.mrf.mxu0
        %v8604 = vpop.f32.mrf.mxu0
        %v8605 = vadd.f32 0.0, %v8604
        %v8606 = vpop.f32.mrf.mxu0
        %8607 = vdwg.mxu0
        %v8608 = vlaneseq
        %v8609 = vshrl.u32 %v8608, 7
        %v8610 = vsub.s32 2, %v8609
        %v8611 = vrot.slane %v5401, %v8610
        %v8612 = vmul.f32 %v8098, %v8611
        %v8613 = vmul.f32 %v8101, %v8611
        %v8614 = vmul.f32 %v8106, %v8611
        %v8615 = vmul.f32 %v8109, %v8611
        %v8616 = vmul.f32 %v8114, %v8611
        %v8617 = vmul.f32 %v8117, %v8611
        %v8618 = vmul.f32 %v8122, %v8611
        %v8619 = vmul.f32 %v8125, %v8611
        %v8620 = vmul.f32 %v8130, %v8611
        %v8621 = vmul.f32 %v8133, %v8611
        %v8622 = vmul.f32 %v8138, %v8611
        %v8623 = vmul.f32 %v8141, %v8611
        %v8624 = vmul.f32 %v8146, %v8611
        %v8625 = vmul.f32 %v8149, %v8611
        %v8626 = vmul.f32 %v8154, %v8611
        %v8627 = vmul.f32 %v8157, %v8611
        %v8628 = vlaneseq
        %v8629 = vshrl.u32 %v8628, 7
        %v8630 = vsub.s32 3, %v8629
        %v8631 = vrot.slane %v5401, %v8630
        %v8632 = vmul.f32 %v8162, %v8631
        %v8633 = vmul.f32 %v8165, %v8631
        %v8634 = vmul.f32 %v8170, %v8631
        %v8635 = vmul.f32 %v8173, %v8631
        %v8636 = vmul.f32 %v8178, %v8631
        %v8637 = vmul.f32 %v8181, %v8631
        %v8638 = vmul.f32 %v8186, %v8631
        %v8639 = vmul.f32 %v8189, %v8631
        %v8640 = vmul.f32 %v8194, %v8631
        %v8641 = vmul.f32 %v8197, %v8631
        %v8642 = vmul.f32 %v8202, %v8631
        %v8643 = vmul.f32 %v8205, %v8631
        %v8644 = vmul.f32 %v8210, %v8631
        %v8645 = vmul.f32 %v8213, %v8631
        %v8646 = vmul.f32 %v8218, %v8631
        %v8647 = vmul.f32 %v8221, %v8631
        %v8648 = vadd.f32 %v8612, %v8632
        %v8649 = vadd.f32 %v8613, %v8633
        %v8650 = vadd.f32 %v8614, %v8634
        %v8651 = vadd.f32 %v8615, %v8635
        %v8652 = vadd.f32 %v8616, %v8636
        %v8653 = vadd.f32 %v8617, %v8637
        %v8654 = vadd.f32 %v8618, %v8638
        %v8655 = vadd.f32 %v8619, %v8639
        %v8656 = vadd.f32 %v8620, %v8640
        %v8657 = vadd.f32 %v8621, %v8641
        %v8658 = vadd.f32 %v8622, %v8642
        %v8659 = vadd.f32 %v8623, %v8643
        %v8660 = vadd.f32 %v8624, %v8644
        %v8661 = vadd.f32 %v8625, %v8645
        %v8662 = vadd.f32 %v8626, %v8646
        %v8663 = vadd.f32 %v8627, %v8647
        %v8664 = vlaneseq
        %v8665 = vshrl.u32 %v8664, 7
        %v8666 = vsub.s32 4, %v8665
        %v8667 = vrot.slane %v5401, %v8666
        %v8668 = vmul.f32 %v8226, %v8667
        %v8669 = vmul.f32 %v8229, %v8667
        %v8670 = vmul.f32 %v8234, %v8667
        %v8671 = vmul.f32 %v8237, %v8667
        %v8672 = vmul.f32 %v8242, %v8667
        %v8673 = vmul.f32 %v8245, %v8667
        %v8674 = vmul.f32 %v8250, %v8667
        %v8675 = vmul.f32 %v8253, %v8667
        %v8676 = vmul.f32 %v8258, %v8667
        %v8677 = vmul.f32 %v8261, %v8667
        %v8678 = vmul.f32 %v8266, %v8667
        %v8679 = vmul.f32 %v8269, %v8667
        %v8680 = vmul.f32 %v8274, %v8667
        %v8681 = vmul.f32 %v8277, %v8667
        %v8682 = vmul.f32 %v8282, %v8667
        %v8683 = vmul.f32 %v8285, %v8667
        %v8684 = vadd.f32 %v8648, %v8668
        %v8685 = vadd.f32 %v8649, %v8669
        %v8686 = vadd.f32 %v8650, %v8670
        %v8687 = vadd.f32 %v8651, %v8671
        %v8688 = vadd.f32 %v8652, %v8672
        %v8689 = vadd.f32 %v8653, %v8673
        %v8690 = vadd.f32 %v8654, %v8674
        %v8691 = vadd.f32 %v8655, %v8675
        %v8692 = vadd.f32 %v8656, %v8676
        %v8693 = vadd.f32 %v8657, %v8677
        %v8694 = vadd.f32 %v8658, %v8678
        %v8695 = vadd.f32 %v8659, %v8679
        %v8696 = vadd.f32 %v8660, %v8680
        %v8697 = vadd.f32 %v8661, %v8681
        %v8698 = vadd.f32 %v8662, %v8682
        %v8699 = vadd.f32 %v8663, %v8683
        %v8700 = vlaneseq
        %v8701 = vshrl.u32 %v8700, 7
        %v8702 = vsub.s32 5, %v8701
        %v8703 = vrot.slane %v5401, %v8702
        %v8704 = vmul.f32 %v8290, %v8703
        %v8705 = vmul.f32 %v8293, %v8703
        %v8706 = vmul.f32 %v8298, %v8703
        %v8707 = vmul.f32 %v8301, %v8703
        %v8708 = vmul.f32 %v8306, %v8703
        %v8709 = vmul.f32 %v8309, %v8703
        %v8710 = vmul.f32 %v8314, %v8703
        %v8711 = vmul.f32 %v8317, %v8703
        %v8712 = vmul.f32 %v8322, %v8703
        %v8713 = vmul.f32 %v8325, %v8703
        %v8714 = vmul.f32 %v8330, %v8703
        %v8715 = vmul.f32 %v8333, %v8703
        %v8716 = vmul.f32 %v8338, %v8703
        %v8717 = vmul.f32 %v8341, %v8703
        %v8718 = vmul.f32 %v8346, %v8703
        %v8719 = vmul.f32 %v8349, %v8703
        %v8720 = vadd.f32 %v8684, %v8704
        %v8721 = vadd.f32 %v8685, %v8705
        %v8722 = vadd.f32 %v8686, %v8706
        %v8723 = vadd.f32 %v8687, %v8707
        %v8724 = vadd.f32 %v8688, %v8708
        %v8725 = vadd.f32 %v8689, %v8709
        %v8726 = vadd.f32 %v8690, %v8710
        %v8727 = vadd.f32 %v8691, %v8711
        %v8728 = vadd.f32 %v8692, %v8712
        %v8729 = vadd.f32 %v8693, %v8713
        %v8730 = vadd.f32 %v8694, %v8714
        %v8731 = vadd.f32 %v8695, %v8715
        %v8732 = vadd.f32 %v8696, %v8716
        %v8733 = vadd.f32 %v8697, %v8717
        %v8734 = vadd.f32 %v8698, %v8718
        %v8735 = vadd.f32 %v8699, %v8719
        %v8736 = vlaneseq
        %v8737 = vshrl.u32 %v8736, 7
        %v8738 = vsub.s32 6, %v8737
        %v8739 = vrot.slane %v5401, %v8738
        %v8740 = vmul.f32 %v8354, %v8739
        %v8741 = vmul.f32 %v8357, %v8739
        %v8742 = vmul.f32 %v8362, %v8739
        %v8743 = vmul.f32 %v8365, %v8739
        %v8744 = vmul.f32 %v8370, %v8739
        %v8745 = vmul.f32 %v8373, %v8739
        %v8746 = vmul.f32 %v8378, %v8739
        %v8747 = vmul.f32 %v8381, %v8739
        %v8748 = vmul.f32 %v8386, %v8739
        %v8749 = vmul.f32 %v8389, %v8739
        %v8750 = vmul.f32 %v8394, %v8739
        %v8751 = vmul.f32 %v8397, %v8739
        %v8752 = vmul.f32 %v8402, %v8739
        %v8753 = vmul.f32 %v8405, %v8739
        %v8754 = vmul.f32 %v8410, %v8739
        %v8755 = vmul.f32 %v8413, %v8739
        %v8756 = vadd.f32 %v8720, %v8740
        %v8757 = vadd.f32 %v8721, %v8741
        %v8758 = vadd.f32 %v8722, %v8742
        %v8759 = vadd.f32 %v8723, %v8743
        %v8760 = vadd.f32 %v8724, %v8744
        %v8761 = vadd.f32 %v8725, %v8745
        %v8762 = vadd.f32 %v8726, %v8746
        %v8763 = vadd.f32 %v8727, %v8747
        %v8764 = vadd.f32 %v8728, %v8748
        %v8765 = vadd.f32 %v8729, %v8749
        %v8766 = vadd.f32 %v8730, %v8750
        %v8767 = vadd.f32 %v8731, %v8751
        %v8768 = vadd.f32 %v8732, %v8752
        %v8769 = vadd.f32 %v8733, %v8753
        %v8770 = vadd.f32 %v8734, %v8754
        %v8771 = vadd.f32 %v8735, %v8755
        %v8772 = vlaneseq
        %v8773 = vshrl.u32 %v8772, 7
        %v8774 = vsub.s32 7, %v8773
        %v8775 = vrot.slane %v5401, %v8774
        %v8776 = vmul.f32 %v8418, %v8775
        %v8777 = vmul.f32 %v8421, %v8775
        %v8778 = vmul.f32 %v8426, %v8775
        %v8779 = vmul.f32 %v8429, %v8775
        %v8780 = vmul.f32 %v8434, %v8775
        %v8781 = vmul.f32 %v8437, %v8775
        %v8782 = vmul.f32 %v8442, %v8775
        %v8783 = vmul.f32 %v8445, %v8775
        %v8784 = vmul.f32 %v8450, %v8775
        %v8785 = vmul.f32 %v8453, %v8775
        %v8786 = vmul.f32 %v8458, %v8775
        %v8787 = vmul.f32 %v8461, %v8775
        %v8788 = vmul.f32 %v8466, %v8775
        %v8789 = vmul.f32 %v8469, %v8775
        %v8790 = vmul.f32 %v8474, %v8775
        %v8791 = vmul.f32 %v8477, %v8775
        %v8792 = vadd.f32 %v8756, %v8776
        %v8793 = vadd.f32 %v8757, %v8777
        %v8794 = vadd.f32 %v8758, %v8778
        %v8795 = vadd.f32 %v8759, %v8779
        %v8796 = vadd.f32 %v8760, %v8780
        %v8797 = vadd.f32 %v8761, %v8781
        %v8798 = vadd.f32 %v8762, %v8782
        %v8799 = vadd.f32 %v8763, %v8783
        %v8800 = vadd.f32 %v8764, %v8784
        %v8801 = vadd.f32 %v8765, %v8785
        %v8802 = vadd.f32 %v8766, %v8786
        %v8803 = vadd.f32 %v8767, %v8787
        %v8804 = vadd.f32 %v8768, %v8788
        %v8805 = vadd.f32 %v8769, %v8789
        %v8806 = vadd.f32 %v8770, %v8790
        %v8807 = vadd.f32 %v8771, %v8791
        %v8808 = vlaneseq
        %v8809 = vshrl.u32 %v8808, 7
        %v8810 = vsub.s32 0, %v8809
        %v8811 = vrot.slane %v5402, %v8810
        %v8812 = vmul.f32 %v8482, %v8811
        %v8813 = vmul.f32 %v8485, %v8811
        %v8814 = vmul.f32 %v8490, %v8811
        %v8815 = vmul.f32 %v8493, %v8811
        %v8816 = vmul.f32 %v8498, %v8811
        %v8817 = vmul.f32 %v8501, %v8811
        %v8818 = vmul.f32 %v8506, %v8811
        %v8819 = vmul.f32 %v8509, %v8811
        %v8820 = vmul.f32 %v8514, %v8811
        %v8821 = vmul.f32 %v8517, %v8811
        %v8822 = vmul.f32 %v8522, %v8811
        %v8823 = vmul.f32 %v8525, %v8811
        %v8824 = vmul.f32 %v8530, %v8811
        %v8825 = vmul.f32 %v8533, %v8811
        %v8826 = vmul.f32 %v8538, %v8811
        %v8827 = vmul.f32 %v8541, %v8811
        %v8828 = vadd.f32 %v8792, %v8812
        %v8829 = vadd.f32 %v8793, %v8813
        %v8830 = vadd.f32 %v8794, %v8814
        %v8831 = vadd.f32 %v8795, %v8815
        %v8832 = vadd.f32 %v8796, %v8816
        %v8833 = vadd.f32 %v8797, %v8817
        %v8834 = vadd.f32 %v8798, %v8818
        %v8835 = vadd.f32 %v8799, %v8819
        %v8836 = vadd.f32 %v8800, %v8820
        %v8837 = vadd.f32 %v8801, %v8821
        %v8838 = vadd.f32 %v8802, %v8822
        %v8839 = vadd.f32 %v8803, %v8823
        %v8840 = vadd.f32 %v8804, %v8824
        %v8841 = vadd.f32 %v8805, %v8825
        %v8842 = vadd.f32 %v8806, %v8826
        %v8843 = vadd.f32 %v8807, %v8827
        %v8844 = vlaneseq
        %v8845 = vshrl.u32 %v8844, 7
        %v8846 = vsub.s32 1, %v8845
        %v8847 = vrot.slane %v5402, %v8846
        %v8848 = vmul.f32 %v8546, %v8847
        %v8849 = vmul.f32 %v8549, %v8847
        %v8850 = vmul.f32 %v8554, %v8847
        %v8851 = vmul.f32 %v8557, %v8847
        %v8852 = vmul.f32 %v8562, %v8847
        %v8853 = vmul.f32 %v8565, %v8847
        %v8854 = vmul.f32 %v8570, %v8847
        %v8855 = vmul.f32 %v8573, %v8847
        %v8856 = vmul.f32 %v8578, %v8847
        %v8857 = vmul.f32 %v8581, %v8847
        %v8858 = vmul.f32 %v8586, %v8847
        %v8859 = vmul.f32 %v8589, %v8847
        %v8860 = vmul.f32 %v8594, %v8847
        %v8861 = vmul.f32 %v8597, %v8847
        %v8862 = vmul.f32 %v8602, %v8847
        %v8863 = vmul.f32 %v8605, %v8847
        %v8864 = vadd.f32 %v8828, %v8848
        %v8865 = vadd.f32 %v8829, %v8849
        %v8866 = vadd.f32 %v8830, %v8850
        %v8867 = vadd.f32 %v8831, %v8851
        %v8868 = vadd.f32 %v8832, %v8852
        %v8869 = vadd.f32 %v8833, %v8853
        %v8870 = vadd.f32 %v8834, %v8854
        %v8871 = vadd.f32 %v8835, %v8855
        %v8872 = vadd.f32 %v8836, %v8856
        %v8873 = vadd.f32 %v8837, %v8857
        %v8874 = vadd.f32 %v8838, %v8858
        %v8875 = vadd.f32 %v8839, %v8859
        %v8876 = vadd.f32 %v8840, %v8860
        %v8877 = vadd.f32 %v8841, %v8861
        %v8878 = vadd.f32 %v8842, %v8862
        %v8879 = vadd.f32 %v8843, %v8863
        %v8880 = vpack.c.bf16 %v8865, %v8864
        %v8881 = vpack.c.bf16 %v8867, %v8866
        %v8882 = vpack.c.bf16 %v8869, %v8868
        %v8883 = vpack.c.bf16 %v8871, %v8870
        %v8884 = vpack.c.bf16 %v8873, %v8872
        %v8885 = vpack.c.bf16 %v8875, %v8874
        %v8886 = vpack.c.bf16 %v8877, %v8876
        %v8887 = vpack.c.bf16 %v8879, %v8878
        %v8888 = vld [vmem:[%s8] sm:$0xf]
        %v8889 = vld [vmem:[%s8 + $0x4] sm:$0xf]
        %v8890 = vld [vmem:[%s8 + $0x8] sm:$0xf]
        %v8891 = vld [vmem:[%s8 + $0xc] sm:$0xf]
        %v8892 = vlaneseq
        %v8893 = vshrl.u32 %v8892, 7
        %v8894 = vsub.s32 6, %v8893
        %v8895 = vrot.slane %v5400, %v8894
        %v8900 = vunpack.c.l.b16 %v8888
        %v8901 = vunpack.c.l.b16 %v8889
        %v8902 = vunpack.c.l.b16 %v8890
        %v8903 = vunpack.c.l.b16 %v8891
        %v8904 = vpack.c.b16 %v8901, %v8900
        %v8905 = vpack.c.b16 %v8903, %v8902
        %v8909 = vsel %vm579, %v8880, 0
        %v8912 = vsel %vm579, %v8881, 0
        %v8915 = vsel %vm579, %v8882, 0
        %v8918 = vsel %vm579, %v8883, 0
        %v8921 = vsel %vm579, %v8884, 0
        %v8924 = vsel %vm579, %v8885, 0
        %v8927 = vsel %vm579, %v8886, 0
        %v8930 = vsel %vm579, %v8887, 0
        %8932 = vmatprep.subr.bf16.mxu0 0
        %8933 = vmatpush1.bf16.msra.mxu0 0
        %8934 = vmatprep.subr.bf16.mxu0 0
        %8935 = vmatpush1.bf16.msra.mxu0 0
        %8936 = vmatprep.subr.bf16.mxu0 0
        %8937 = vmatpush1.bf16.msra.mxu0 0
        %8938 = vmatprep.subr.bf16.mxu0 0
        %8939 = vmatpush1.bf16.msra.mxu0 0
        %8940 = vmatprep.subr.bf16.mxu0 0
        %8941 = vmatpush1.bf16.msra.mxu0 0
        %8942 = vmatprep.subr.bf16.mxu0 0
        %8943 = vmatpush1.bf16.msra.mxu0 0
        %8944 = vmatprep.subr.bf16.mxu0 0
        %8945 = vmatpush1.bf16.msra.mxu0 %v8905
        %8946 = vmatprep.subr.bf16.mxu0 0
        %8947 = vmatpush1.bf16.msra.mxu0 %v8904
        %8948 = vmatprep.subr.bf16.mxu0 0
        %8949 = vmatpush2.bf16.msra.mxu0 0
        %8950 = vmatprep.subr.bf16.mxu0 0
        %8951 = vmatpush2.bf16.msra.mxu0 0
        %8952 = vmatprep.subr.bf16.mxu0 0
        %8953 = vmatpush2.bf16.msra.mxu0 0
        %8954 = vmatprep.subr.bf16.mxu0 0
        %8955 = vmatpush2.bf16.msra.mxu0 0
        %8956 = vmatprep.subr.bf16.mxu0 0
        %8957 = vmatpush2.bf16.msra.mxu0 0
        %8958 = vmatprep.subr.bf16.mxu0 0
        %8959 = vmatpush2.bf16.msra.mxu0 0
        %8960 = vmatprep.subr.bf16.mxu0 0
        %8961 = vmatpush2.bf16.msra.mxu0 0
        %8962 = vmatprep.subr.bf16.mxu0 0
        %8963 = vmatpush2.bf16.msra.mxu0 0
        %8964 = vmatprep.mubr.bf16.mxu0 0
        %8965 = vmatmul.mubr.bf16.gmra.mxu0 %v8909
        %v8966 = vpop.f32.mrf.mxu0
        %v8967 = vadd.f32 %v8895, %v8966
        %v8968 = vpop.f32.mrf.mxu0
        %v8969 = vpop.f32.mrf.mxu0
        %v8970 = vadd.f32 %v8895, %v8969
        %v8971 = vpop.f32.mrf.mxu0
        %8972 = vmatprep.mubr.bf16.mxu0 0
        %8973 = vmatmul.mubr.bf16.gmra.mxu0 %v8912
        %v8974 = vpop.f32.mrf.mxu0
        %v8975 = vadd.f32 %v8895, %v8974
        %v8976 = vpop.f32.mrf.mxu0
        %v8977 = vpop.f32.mrf.mxu0
        %v8978 = vadd.f32 %v8895, %v8977
        %v8979 = vpop.f32.mrf.mxu0
        %8980 = vmatprep.mubr.bf16.mxu0 0
        %8981 = vmatmul.mubr.bf16.gmra.mxu0 %v8915
        %v8982 = vpop.f32.mrf.mxu0
        %v8983 = vadd.f32 %v8895, %v8982
        %v8984 = vpop.f32.mrf.mxu0
        %v8985 = vpop.f32.mrf.mxu0
        %v8986 = vadd.f32 %v8895, %v8985
        %v8987 = vpop.f32.mrf.mxu0
        %8988 = vmatprep.mubr.bf16.mxu0 0
        %8989 = vmatmul.mubr.bf16.gmra.mxu0 %v8918
        %v8990 = vpop.f32.mrf.mxu0
        %v8991 = vadd.f32 %v8895, %v8990
        %v8992 = vpop.f32.mrf.mxu0
        %v8993 = vpop.f32.mrf.mxu0
        %v8994 = vadd.f32 %v8895, %v8993
        %v8995 = vpop.f32.mrf.mxu0
        %8996 = vmatprep.mubr.bf16.mxu0 0
        %8997 = vmatmul.mubr.bf16.gmra.mxu0 %v8921
        %v8998 = vpop.f32.mrf.mxu0
        %v8999 = vadd.f32 %v8895, %v8998
        %v9000 = vpop.f32.mrf.mxu0
        %v9001 = vpop.f32.mrf.mxu0
        %v9002 = vadd.f32 %v8895, %v9001
        %v9003 = vpop.f32.mrf.mxu0
        %9004 = vmatprep.mubr.bf16.mxu0 0
        %9005 = vmatmul.mubr.bf16.gmra.mxu0 %v8924
        %v9006 = vpop.f32.mrf.mxu0
        %v9007 = vadd.f32 %v8895, %v9006
        %v9008 = vpop.f32.mrf.mxu0
        %v9009 = vpop.f32.mrf.mxu0
        %v9010 = vadd.f32 %v8895, %v9009
        %v9011 = vpop.f32.mrf.mxu0
        %9012 = vmatprep.mubr.bf16.mxu0 0
        %9013 = vmatmul.mubr.bf16.gmra.mxu0 %v8927
        %v9014 = vpop.f32.mrf.mxu0
        %v9015 = vadd.f32 %v8895, %v9014
        %v9016 = vpop.f32.mrf.mxu0
        %v9017 = vpop.f32.mrf.mxu0
        %v9018 = vadd.f32 %v8895, %v9017
        %v9019 = vpop.f32.mrf.mxu0
        %9020 = vmatprep.mubr.bf16.mxu0 0
        %9021 = vmatmul.mubr.bf16.gmra.mxu0 %v8930
        %v9022 = vpop.f32.mrf.mxu0
        %v9023 = vadd.f32 %v8895, %v9022
        %v9024 = vpop.f32.mrf.mxu0
        %v9025 = vpop.f32.mrf.mxu0
        %v9026 = vadd.f32 %v8895, %v9025
        %v9027 = vpop.f32.mrf.mxu0
        %9028 = vdwg.mxu0
        %v9029 = vlaneseq
        %v9030 = vshrl.u32 %v9029, 7
        %v9031 = vsub.s32 2, %v9030
        %v9032 = vrot.slane %v5400, %v9031
        %v9033 = vmul.f32 %v9032, %v8967
        %v9034 = vmul.f32 %v9032, %v8970
        %v9035 = vmul.f32 %v9032, %v8975
        %v9036 = vmul.f32 %v9032, %v8978
        %v9037 = vmul.f32 %v9032, %v8983
        %v9038 = vmul.f32 %v9032, %v8986
        %v9039 = vmul.f32 %v9032, %v8991
        %v9040 = vmul.f32 %v9032, %v8994
        %v9041 = vmul.f32 %v9032, %v8999
        %v9042 = vmul.f32 %v9032, %v9002
        %v9043 = vmul.f32 %v9032, %v9007
        %v9044 = vmul.f32 %v9032, %v9010
        %v9045 = vmul.f32 %v9032, %v9015
        %v9046 = vmul.f32 %v9032, %v9018
        %v9047 = vmul.f32 %v9032, %v9023
        %v9048 = vmul.f32 %v9032, %v9026
        %v9049 = vadd.f32 %v5637, %v9033
        %v9050 = vadd.f32 %v5638, %v9034
        %v9051 = vadd.f32 %v5639, %v9035
        %v9052 = vadd.f32 %v5640, %v9036
        %v9053 = vadd.f32 %v5641, %v9037
        %v9054 = vadd.f32 %v5642, %v9038
        %v9055 = vadd.f32 %v5643, %v9039
        %v9056 = vadd.f32 %v5644, %v9040
        %v9057 = vadd.f32 %v5645, %v9041
        %v9058 = vadd.f32 %v5646, %v9042
        %v9059 = vadd.f32 %v5647, %v9043
        %v9060 = vadd.f32 %v5648, %v9044
        %v9061 = vadd.f32 %v5649, %v9045
        %v9062 = vadd.f32 %v5650, %v9046
        %v9063 = vadd.f32 %v5651, %v9047
        %v9064 = vadd.f32 %v5652, %v9048
        %v9065 = vsel %vm579, %v9049, 0.0
        %9066 = vadd.xlane.f32.xlu0 %v9065
        %v9067 = vpop.xlane.xlu0 %9066
        %v9068 = vsel %vm579, %v9050, 0.0
        %9069 = vadd.xlane.f32.xlu0 %v9068
        %v9070 = vpop.xlane.xlu0 %9069
        %v9071 = vsel %vm579, %v9051, 0.0
        %9072 = vadd.xlane.f32.xlu0 %v9071
        %v9073 = vpop.xlane.xlu0 %9072
        %v9074 = vsel %vm579, %v9052, 0.0
        %9075 = vadd.xlane.f32.xlu0 %v9074
        %v9076 = vpop.xlane.xlu0 %9075
        %v9077 = vsel %vm579, %v9053, 0.0
        %9078 = vadd.xlane.f32.xlu0 %v9077
        %v9079 = vpop.xlane.xlu0 %9078
        %v9080 = vsel %vm579, %v9054, 0.0
        %9081 = vadd.xlane.f32.xlu0 %v9080
        %v9082 = vpop.xlane.xlu0 %9081
        %v9083 = vsel %vm579, %v9055, 0.0
        %9084 = vadd.xlane.f32.xlu0 %v9083
        %v9085 = vpop.xlane.xlu0 %9084
        %v9086 = vsel %vm579, %v9056, 0.0
        %9087 = vadd.xlane.f32.xlu0 %v9086
        %v9088 = vpop.xlane.xlu0 %9087
        %v9089 = vsel %vm579, %v9057, 0.0
        %9090 = vadd.xlane.f32.xlu0 %v9089
        %v9091 = vpop.xlane.xlu0 %9090
        %v9092 = vsel %vm579, %v9058, 0.0
        %9093 = vadd.xlane.f32.xlu0 %v9092
        %v9094 = vpop.xlane.xlu0 %9093
        %v9095 = vsel %vm579, %v9059, 0.0
        %9096 = vadd.xlane.f32.xlu0 %v9095
        %v9097 = vpop.xlane.xlu0 %9096
        %v9098 = vsel %vm579, %v9060, 0.0
        %9099 = vadd.xlane.f32.xlu0 %v9098
        %v9100 = vpop.xlane.xlu0 %9099
        %v9101 = vsel %vm579, %v9061, 0.0
        %9102 = vadd.xlane.f32.xlu0 %v9101
        %v9103 = vpop.xlane.xlu0 %9102
        %v9104 = vsel %vm579, %v9062, 0.0
        %9105 = vadd.xlane.f32.xlu0 %v9104
        %v9106 = vpop.xlane.xlu0 %9105
        %v9107 = vsel %vm579, %v9063, 0.0
        %9108 = vadd.xlane.f32.xlu0 %v9107
        %v9109 = vpop.xlane.xlu0 %9108
        %v9110 = vsel %vm579, %v9064, 0.0
        %9111 = vadd.xlane.f32.xlu0 %v9110
        %v9112 = vpop.xlane.xlu0 %9111
        %v9113 = vmul.f32 %v9067, %v628
        %v9114 = vmul.f32 %v9070, %v628
        %v9115 = vmul.f32 %v9073, %v628
        %v9116 = vmul.f32 %v9076, %v628
        %v9117 = vmul.f32 %v9079, %v628
        %v9118 = vmul.f32 %v9082, %v628
        %v9119 = vmul.f32 %v9085, %v628
        %v9120 = vmul.f32 %v9088, %v628
        %v9121 = vmul.f32 %v9091, %v628
        %v9122 = vmul.f32 %v9094, %v628
        %v9123 = vmul.f32 %v9097, %v628
        %v9124 = vmul.f32 %v9100, %v628
        %v9125 = vmul.f32 %v9103, %v628
        %v9126 = vmul.f32 %v9106, %v628
        %v9127 = vmul.f32 %v9109, %v628
        %v9128 = vmul.f32 %v9112, %v628
        %v9129 = vsub.f32 %v9049, %v9113
        %v9130 = vsub.f32 %v9050, %v9114
        %v9131 = vsub.f32 %v9051, %v9115
        %v9132 = vsub.f32 %v9052, %v9116
        %v9133 = vsub.f32 %v9053, %v9117
        %v9134 = vsub.f32 %v9054, %v9118
        %v9135 = vsub.f32 %v9055, %v9119
        %v9136 = vsub.f32 %v9056, %v9120
        %v9137 = vsub.f32 %v9057, %v9121
        %v9138 = vsub.f32 %v9058, %v9122
        %v9139 = vsub.f32 %v9059, %v9123
        %v9140 = vsub.f32 %v9060, %v9124
        %v9141 = vsub.f32 %v9061, %v9125
        %v9142 = vsub.f32 %v9062, %v9126
        %v9143 = vsub.f32 %v9063, %v9127
        %v9144 = vsub.f32 %v9064, %v9128
        %v9145 = vmul.f32 %v9129, %v9129
        %v9146 = vmul.f32 %v9130, %v9130
        %v9147 = vmul.f32 %v9131, %v9131
        %v9148 = vmul.f32 %v9132, %v9132
        %v9149 = vmul.f32 %v9133, %v9133
        %v9150 = vmul.f32 %v9134, %v9134
        %v9151 = vmul.f32 %v9135, %v9135
        %v9152 = vmul.f32 %v9136, %v9136
        %v9153 = vmul.f32 %v9137, %v9137
        %v9154 = vmul.f32 %v9138, %v9138
        %v9155 = vmul.f32 %v9139, %v9139
        %v9156 = vmul.f32 %v9140, %v9140
        %v9157 = vmul.f32 %v9141, %v9141
        %v9158 = vmul.f32 %v9142, %v9142
        %v9159 = vmul.f32 %v9143, %v9143
        %v9160 = vmul.f32 %v9144, %v9144
        %v9161 = vsel %vm579, %v9145, 0.0
        %9162 = vadd.xlane.f32.xlu0 %v9161
        %v9163 = vpop.xlane.xlu0 %9162
        %v9164 = vsel %vm579, %v9146, 0.0
        %9165 = vadd.xlane.f32.xlu0 %v9164
        %v9166 = vpop.xlane.xlu0 %9165
        %v9167 = vsel %vm579, %v9147, 0.0
        %9168 = vadd.xlane.f32.xlu0 %v9167
        %v9169 = vpop.xlane.xlu0 %9168
        %v9170 = vsel %vm579, %v9148, 0.0
        %9171 = vadd.xlane.f32.xlu0 %v9170
        %v9172 = vpop.xlane.xlu0 %9171
        %v9173 = vsel %vm579, %v9149, 0.0
        %9174 = vadd.xlane.f32.xlu0 %v9173
        %v9175 = vpop.xlane.xlu0 %9174
        %v9176 = vsel %vm579, %v9150, 0.0
        %9177 = vadd.xlane.f32.xlu0 %v9176
        %v9178 = vpop.xlane.xlu0 %9177
        %v9179 = vsel %vm579, %v9151, 0.0
        %9180 = vadd.xlane.f32.xlu0 %v9179
        %v9181 = vpop.xlane.xlu0 %9180
        %v9182 = vsel %vm579, %v9152, 0.0
        %9183 = vadd.xlane.f32.xlu0 %v9182
        %v9184 = vpop.xlane.xlu0 %9183
        %v9185 = vsel %vm579, %v9153, 0.0
        %9186 = vadd.xlane.f32.xlu0 %v9185
        %v9187 = vpop.xlane.xlu0 %9186
        %v9188 = vsel %vm579, %v9154, 0.0
        %9189 = vadd.xlane.f32.xlu0 %v9188
        %v9190 = vpop.xlane.xlu0 %9189
        %v9191 = vsel %vm579, %v9155, 0.0
        %9192 = vadd.xlane.f32.xlu0 %v9191
        %v9193 = vpop.xlane.xlu0 %9192
        %v9194 = vsel %vm579, %v9156, 0.0
        %9195 = vadd.xlane.f32.xlu0 %v9194
        %v9196 = vpop.xlane.xlu0 %9195
        %v9197 = vsel %vm579, %v9157, 0.0
        %9198 = vadd.xlane.f32.xlu0 %v9197
        %v9199 = vpop.xlane.xlu0 %9198
        %v9200 = vsel %vm579, %v9158, 0.0
        %9201 = vadd.xlane.f32.xlu0 %v9200
        %v9202 = vpop.xlane.xlu0 %9201
        %v9203 = vsel %vm579, %v9159, 0.0
        %9204 = vadd.xlane.f32.xlu0 %v9203
        %v9205 = vpop.xlane.xlu0 %9204
        %v9206 = vsel %vm579, %v9160, 0.0
        %9207 = vadd.xlane.f32.xlu0 %v9206
        %v9208 = vpop.xlane.xlu0 %9207
        %v9209 = vmul.f32 %v9163, %v628
        %v9210 = vmul.f32 %v9166, %v628
        %v9211 = vmul.f32 %v9169, %v628
        %v9212 = vmul.f32 %v9172, %v628
        %v9213 = vmul.f32 %v9175, %v628
        %v9214 = vmul.f32 %v9178, %v628
        %v9215 = vmul.f32 %v9181, %v628
        %v9216 = vmul.f32 %v9184, %v628
        %v9217 = vmul.f32 %v9187, %v628
        %v9218 = vmul.f32 %v9190, %v628
        %v9219 = vmul.f32 %v9193, %v628
        %v9220 = vmul.f32 %v9196, %v628
        %v9221 = vmul.f32 %v9199, %v628
        %v9222 = vmul.f32 %v9202, %v628
        %v9223 = vmul.f32 %v9205, %v628
        %v9224 = vmul.f32 %v9208, %v628
        %v9225 = vadd.f32 %v9209, 1e-05
        %v9226 = vadd.f32 %v9210, 1e-05
        %v9227 = vadd.f32 %v9211, 1e-05
        %v9228 = vadd.f32 %v9212, 1e-05
        %v9229 = vadd.f32 %v9213, 1e-05
        %v9230 = vadd.f32 %v9214, 1e-05
        %v9231 = vadd.f32 %v9215, 1e-05
        %v9232 = vadd.f32 %v9216, 1e-05
        %v9233 = vadd.f32 %v9217, 1e-05
        %v9234 = vadd.f32 %v9218, 1e-05
        %v9235 = vadd.f32 %v9219, 1e-05
        %v9236 = vadd.f32 %v9220, 1e-05
        %v9237 = vadd.f32 %v9221, 1e-05
        %v9238 = vadd.f32 %v9222, 1e-05
        %v9239 = vadd.f32 %v9223, 1e-05
        %v9240 = vadd.f32 %v9224, 1e-05
        %v9241 = vrsqrt.pop %v9225
        %v9242 = vrsqrt.pop %v9226
        %v9243 = vrsqrt.pop %v9227
        %v9244 = vrsqrt.pop %v9228
        %v9245 = vrsqrt.pop %v9229
        %v9246 = vrsqrt.pop %v9230
        %v9247 = vrsqrt.pop %v9231
        %v9248 = vrsqrt.pop %v9232
        %v9249 = vrsqrt.pop %v9233
        %v9250 = vrsqrt.pop %v9234
        %v9251 = vrsqrt.pop %v9235
        %v9252 = vrsqrt.pop %v9236
        %v9253 = vrsqrt.pop %v9237
        %v9254 = vrsqrt.pop %v9238
        %v9255 = vrsqrt.pop %v9239
        %v9256 = vrsqrt.pop %v9240
        %v9257 = vmul.f32 %v9129, %v9241
        %v9258 = vmul.f32 %v9130, %v9242
        %v9259 = vmul.f32 %v9131, %v9243
        %v9260 = vmul.f32 %v9132, %v9244
        %v9261 = vmul.f32 %v9133, %v9245
        %v9262 = vmul.f32 %v9134, %v9246
        %v9263 = vmul.f32 %v9135, %v9247
        %v9264 = vmul.f32 %v9136, %v9248
        %v9265 = vmul.f32 %v9137, %v9249
        %v9266 = vmul.f32 %v9138, %v9250
        %v9267 = vmul.f32 %v9139, %v9251
        %v9268 = vmul.f32 %v9140, %v9252
        %v9269 = vmul.f32 %v9141, %v9253
        %v9270 = vmul.f32 %v9142, %v9254
        %v9271 = vmul.f32 %v9143, %v9255
        %v9272 = vmul.f32 %v9144, %v9256
        %v9273 = vlaneseq
        %v9274 = vshrl.u32 %v9273, 7
        %v9275 = vsub.s32 3, %v9274
        %v9276 = vrot.slane %v5400, %v9275
        %v9277 = vmul.f32 %v9257, %v9276
        %v9278 = vmul.f32 %v9258, %v9276
        %v9279 = vmul.f32 %v9259, %v9276
        %v9280 = vmul.f32 %v9260, %v9276
        %v9281 = vmul.f32 %v9261, %v9276
        %v9282 = vmul.f32 %v9262, %v9276
        %v9283 = vmul.f32 %v9263, %v9276
        %v9284 = vmul.f32 %v9264, %v9276
        %v9285 = vmul.f32 %v9265, %v9276
        %v9286 = vmul.f32 %v9266, %v9276
        %v9287 = vmul.f32 %v9267, %v9276
        %v9288 = vmul.f32 %v9268, %v9276
        %v9289 = vmul.f32 %v9269, %v9276
        %v9290 = vmul.f32 %v9270, %v9276
        %v9291 = vmul.f32 %v9271, %v9276
        %v9292 = vmul.f32 %v9272, %v9276
        %v9293 = vlaneseq
        %v9294 = vshrl.u32 %v9293, 7
        %v9295 = vsub.s32 4, %v9294
        %v9296 = vrot.slane %v5400, %v9295
        %v9297 = vadd.f32 %v9277, %v9296
        %v9298 = vadd.f32 %v9278, %v9296
        %v9299 = vadd.f32 %v9279, %v9296
        %v9300 = vadd.f32 %v9280, %v9296
        %v9301 = vadd.f32 %v9281, %v9296
        %v9302 = vadd.f32 %v9282, %v9296
        %v9303 = vadd.f32 %v9283, %v9296
        %v9304 = vadd.f32 %v9284, %v9296
        %v9305 = vadd.f32 %v9285, %v9296
        %v9306 = vadd.f32 %v9286, %v9296
        %v9307 = vadd.f32 %v9287, %v9296
        %v9308 = vadd.f32 %v9288, %v9296
        %v9309 = vadd.f32 %v9289, %v9296
        %v9310 = vadd.f32 %v9290, %v9296
        %v9311 = vadd.f32 %v9291, %v9296
        %v9312 = vadd.f32 %v9292, %v9296
        %v9313 = vpack.c.bf16 %v9298, %v9297
        %v9314 = vpack.c.bf16 %v9300, %v9299
        %v9315 = vpack.c.bf16 %v9302, %v9301
        %v9316 = vpack.c.bf16 %v9304, %v9303
        %v9317 = vpack.c.bf16 %v9306, %v9305
        %v9318 = vpack.c.bf16 %v9308, %v9307
        %v9319 = vpack.c.bf16 %v9310, %v9309
        %v9320 = vpack.c.bf16 %v9312, %v9311
        %v9321 = vld [vmem:[%s9] sm:$0xf]
        %v9322 = vld [vmem:[%s9 + $0x4] sm:$0xf]
        %v9323 = vld [vmem:[%s9 + $0x8] sm:$0xf]
        %v9324 = vld [vmem:[%s9 + $0xc] sm:$0xf]
        %v9325 = vlaneseq
        %v9326 = vshrl.u32 %v9325, 7
        %v9327 = vsub.s32 0, %v9326
        %v9328 = vrot.slane %v5401, %v9327
        %v9333 = vunpack.c.l.b16 %v9321
        %v9334 = vunpack.c.l.b16 %v9322
        %v9335 = vunpack.c.l.b16 %v9323
        %v9336 = vunpack.c.l.b16 %v9324
        %v9337 = vpack.c.b16 %v9334, %v9333
        %v9338 = vpack.c.b16 %v9336, %v9335
        %v9342 = vsel %vm579, %v9313, 0
        %v9345 = vsel %vm579, %v9314, 0
        %v9348 = vsel %vm579, %v9315, 0
        %v9351 = vsel %vm579, %v9316, 0
        %v9354 = vsel %vm579, %v9317, 0
        %v9357 = vsel %vm579, %v9318, 0
        %v9360 = vsel %vm579, %v9319, 0
        %v9363 = vsel %vm579, %v9320, 0
        %9365 = vmatprep.subr.bf16.mxu0 0
        %9366 = vmatpush1.bf16.msra.mxu0 0
        %9367 = vmatprep.subr.bf16.mxu0 0
        %9368 = vmatpush1.bf16.msra.mxu0 0
        %9369 = vmatprep.subr.bf16.mxu0 0
        %9370 = vmatpush1.bf16.msra.mxu0 0
        %9371 = vmatprep.subr.bf16.mxu0 0
        %9372 = vmatpush1.bf16.msra.mxu0 0
        %9373 = vmatprep.subr.bf16.mxu0 0
        %9374 = vmatpush1.bf16.msra.mxu0 0
        %9375 = vmatprep.subr.bf16.mxu0 0
        %9376 = vmatpush1.bf16.msra.mxu0 0
        %9377 = vmatprep.subr.bf16.mxu0 0
        %9378 = vmatpush1.bf16.msra.mxu0 %v9338
        %9379 = vmatprep.subr.bf16.mxu0 0
        %9380 = vmatpush1.bf16.msra.mxu0 %v9337
        %9381 = vmatprep.subr.bf16.mxu0 0
        %9382 = vmatpush2.bf16.msra.mxu0 0
        %9383 = vmatprep.subr.bf16.mxu0 0
        %9384 = vmatpush2.bf16.msra.mxu0 0
        %9385 = vmatprep.subr.bf16.mxu0 0
        %9386 = vmatpush2.bf16.msra.mxu0 0
        %9387 = vmatprep.subr.bf16.mxu0 0
        %9388 = vmatpush2.bf16.msra.mxu0 0
        %9389 = vmatprep.subr.bf16.mxu0 0
        %9390 = vmatpush2.bf16.msra.mxu0 0
        %9391 = vmatprep.subr.bf16.mxu0 0
        %9392 = vmatpush2.bf16.msra.mxu0 0
        %9393 = vmatprep.subr.bf16.mxu0 0
        %9394 = vmatpush2.bf16.msra.mxu0 0
        %9395 = vmatprep.subr.bf16.mxu0 0
        %9396 = vmatpush2.bf16.msra.mxu0 0
        %9397 = vmatprep.mubr.bf16.mxu0 0
        %9398 = vmatmul.mubr.bf16.gmra.mxu0 %v9342
        %v9399 = vpop.f32.mrf.mxu0
        %v9400 = vadd.f32 %v9328, %v9399
        %v9401 = vpop.f32.mrf.mxu0
        %v9402 = vpop.f32.mrf.mxu0
        %v9403 = vadd.f32 %v9328, %v9402
        %v9404 = vpop.f32.mrf.mxu0
        %9405 = vmatprep.mubr.bf16.mxu0 0
        %9406 = vmatmul.mubr.bf16.gmra.mxu0 %v9345
        %v9407 = vpop.f32.mrf.mxu0
        %v9408 = vadd.f32 %v9328, %v9407
        %v9409 = vpop.f32.mrf.mxu0
        %v9410 = vpop.f32.mrf.mxu0
        %v9411 = vadd.f32 %v9328, %v9410
        %v9412 = vpop.f32.mrf.mxu0
        %9413 = vmatprep.mubr.bf16.mxu0 0
        %9414 = vmatmul.mubr.bf16.gmra.mxu0 %v9348
        %v9415 = vpop.f32.mrf.mxu0
        %v9416 = vadd.f32 %v9328, %v9415
        %v9417 = vpop.f32.mrf.mxu0
        %v9418 = vpop.f32.mrf.mxu0
        %v9419 = vadd.f32 %v9328, %v9418
        %v9420 = vpop.f32.mrf.mxu0
        %9421 = vmatprep.mubr.bf16.mxu0 0
        %9422 = vmatmul.mubr.bf16.gmra.mxu0 %v9351
        %v9423 = vpop.f32.mrf.mxu0
        %v9424 = vadd.f32 %v9328, %v9423
        %v9425 = vpop.f32.mrf.mxu0
        %v9426 = vpop.f32.mrf.mxu0
        %v9427 = vadd.f32 %v9328, %v9426
        %v9428 = vpop.f32.mrf.mxu0
        %9429 = vmatprep.mubr.bf16.mxu0 0
        %9430 = vmatmul.mubr.bf16.gmra.mxu0 %v9354
        %v9431 = vpop.f32.mrf.mxu0
        %v9432 = vadd.f32 %v9328, %v9431
        %v9433 = vpop.f32.mrf.mxu0
        %v9434 = vpop.f32.mrf.mxu0
        %v9435 = vadd.f32 %v9328, %v9434
        %v9436 = vpop.f32.mrf.mxu0
        %9437 = vmatprep.mubr.bf16.mxu0 0
        %9438 = vmatmul.mubr.bf16.gmra.mxu0 %v9357
        %v9439 = vpop.f32.mrf.mxu0
        %v9440 = vadd.f32 %v9328, %v9439
        %v9441 = vpop.f32.mrf.mxu0
        %v9442 = vpop.f32.mrf.mxu0
        %v9443 = vadd.f32 %v9328, %v9442
        %v9444 = vpop.f32.mrf.mxu0
        %9445 = vmatprep.mubr.bf16.mxu0 0
        %9446 = vmatmul.mubr.bf16.gmra.mxu0 %v9360
        %v9447 = vpop.f32.mrf.mxu0
        %v9448 = vadd.f32 %v9328, %v9447
        %v9449 = vpop.f32.mrf.mxu0
        %v9450 = vpop.f32.mrf.mxu0
        %v9451 = vadd.f32 %v9328, %v9450
        %v9452 = vpop.f32.mrf.mxu0
        %9453 = vmatprep.mubr.bf16.mxu0 0
        %9454 = vmatmul.mubr.bf16.gmra.mxu0 %v9363
        %v9455 = vpop.f32.mrf.mxu0
        %v9456 = vadd.f32 %v9328, %v9455
        %v9457 = vpop.f32.mrf.mxu0
        %v9458 = vpop.f32.mrf.mxu0
        %v9459 = vadd.f32 %v9328, %v9458
        %v9460 = vpop.f32.mrf.mxu0
        %9461 = vdwg.mxu0
        %v9462 = vmul.f32 %v9400, 0.70710677
        %v9463 = vmul.f32 %v9403, 0.70710677
        %v9464 = vmul.f32 %v9408, 0.70710677
        %v9465 = vmul.f32 %v9411, 0.70710677
        %v9466 = vmul.f32 %v9416, 0.70710677
        %v9467 = vmul.f32 %v9419, 0.70710677
        %v9468 = vmul.f32 %v9424, 0.70710677
        %v9469 = vmul.f32 %v9427, 0.70710677
        %v9470 = vmul.f32 %v9432, 0.70710677
        %v9471 = vmul.f32 %v9435, 0.70710677
        %v9472 = vmul.f32 %v9440, 0.70710677
        %v9473 = vmul.f32 %v9443, 0.70710677
        %v9474 = vmul.f32 %v9448, 0.70710677
        %v9475 = vmul.f32 %v9451, 0.70710677
        %v9476 = vmul.f32 %v9456, 0.70710677
        %v9477 = vmul.f32 %v9459, 0.70710677
        %v9478 = vand.u32 2147483647, %v9462
        %v9479 = vand.u32 2147483647, %v9463
        %v9480 = vand.u32 2147483647, %v9464
        %v9481 = vand.u32 2147483647, %v9465
        %v9482 = vand.u32 2147483647, %v9466
        %v9483 = vand.u32 2147483647, %v9467
        %v9484 = vand.u32 2147483647, %v9468
        %v9485 = vand.u32 2147483647, %v9469
        %v9486 = vand.u32 2147483647, %v9470
        %v9487 = vand.u32 2147483647, %v9471
        %v9488 = vand.u32 2147483647, %v9472
        %v9489 = vand.u32 2147483647, %v9473
        %v9490 = vand.u32 2147483647, %v9474
        %v9491 = vand.u32 2147483647, %v9475
        %v9492 = vand.u32 2147483647, %v9476
        %v9493 = vand.u32 2147483647, %v9477
        %v9494 = vmul.f32 %v9478, 0.3275911
        %v9495 = vmul.f32 %v9479, 0.3275911
        %v9496 = vmul.f32 %v9480, 0.3275911
        %v9497 = vmul.f32 %v9481, 0.3275911
        %v9498 = vmul.f32 %v9482, 0.3275911
        %v9499 = vmul.f32 %v9483, 0.3275911
        %v9500 = vmul.f32 %v9484, 0.3275911
        %v9501 = vmul.f32 %v9485, 0.3275911
        %v9502 = vmul.f32 %v9486, 0.3275911
        %v9503 = vmul.f32 %v9487, 0.3275911
        %v9504 = vmul.f32 %v9488, 0.3275911
        %v9505 = vmul.f32 %v9489, 0.3275911
        %v9506 = vmul.f32 %v9490, 0.3275911
        %v9507 = vmul.f32 %v9491, 0.3275911
        %v9508 = vmul.f32 %v9492, 0.3275911
        %v9509 = vmul.f32 %v9493, 0.3275911
        %v9510 = vadd.f32 %v9494, 1.0
        %v9511 = vadd.f32 %v9495, 1.0
        %v9512 = vadd.f32 %v9496, 1.0
        %v9513 = vadd.f32 %v9497, 1.0
        %v9514 = vadd.f32 %v9498, 1.0
        %v9515 = vadd.f32 %v9499, 1.0
        %v9516 = vadd.f32 %v9500, 1.0
        %v9517 = vadd.f32 %v9501, 1.0
        %v9518 = vadd.f32 %v9502, 1.0
        %v9519 = vadd.f32 %v9503, 1.0
        %v9520 = vadd.f32 %v9504, 1.0
        %v9521 = vadd.f32 %v9505, 1.0
        %v9522 = vadd.f32 %v9506, 1.0
        %v9523 = vadd.f32 %v9507, 1.0
        %v9524 = vadd.f32 %v9508, 1.0
        %v9525 = vadd.f32 %v9509, 1.0
        %v9526 = vrcp.pop %v9510
        %v9527 = vrcp.pop %v9511
        %v9528 = vrcp.pop %v9512
        %v9529 = vrcp.pop %v9513
        %v9530 = vrcp.pop %v9514
        %v9531 = vrcp.pop %v9515
        %v9532 = vrcp.pop %v9516
        %v9533 = vrcp.pop %v9517
        %v9534 = vrcp.pop %v9518
        %v9535 = vrcp.pop %v9519
        %v9536 = vrcp.pop %v9520
        %v9537 = vrcp.pop %v9521
        %v9538 = vrcp.pop %v9522
        %v9539 = vrcp.pop %v9523
        %v9540 = vrcp.pop %v9524
        %v9541 = vrcp.pop %v9525
        %v9542 = vmul.f32 %v9526, 1.0614054
        %v9543 = vmul.f32 %v9527, 1.0614054
        %v9544 = vmul.f32 %v9528, 1.0614054
        %v9545 = vmul.f32 %v9529, 1.0614054
        %v9546 = vmul.f32 %v9530, 1.0614054
        %v9547 = vmul.f32 %v9531, 1.0614054
        %v9548 = vmul.f32 %v9532, 1.0614054
        %v9549 = vmul.f32 %v9533, 1.0614054
        %v9550 = vmul.f32 %v9534, 1.0614054
        %v9551 = vmul.f32 %v9535, 1.0614054
        %v9552 = vmul.f32 %v9536, 1.0614054
        %v9553 = vmul.f32 %v9537, 1.0614054
        %v9554 = vmul.f32 %v9538, 1.0614054
        %v9555 = vmul.f32 %v9539, 1.0614054
        %v9556 = vmul.f32 %v9540, 1.0614054
        %v9557 = vmul.f32 %v9541, 1.0614054
        %v9558 = vsub.f32 %v9542, 1.4531521
        %v9559 = vsub.f32 %v9543, 1.4531521
        %v9560 = vsub.f32 %v9544, 1.4531521
        %v9561 = vsub.f32 %v9545, 1.4531521
        %v9562 = vsub.f32 %v9546, 1.4531521
        %v9563 = vsub.f32 %v9547, 1.4531521
        %v9564 = vsub.f32 %v9548, 1.4531521
        %v9565 = vsub.f32 %v9549, 1.4531521
        %v9566 = vsub.f32 %v9550, 1.4531521
        %v9567 = vsub.f32 %v9551, 1.4531521
        %v9568 = vsub.f32 %v9552, 1.4531521
        %v9569 = vsub.f32 %v9553, 1.4531521
        %v9570 = vsub.f32 %v9554, 1.4531521
        %v9571 = vsub.f32 %v9555, 1.4531521
        %v9572 = vsub.f32 %v9556, 1.4531521
        %v9573 = vsub.f32 %v9557, 1.4531521
        %v9574 = vmul.f32 %v9558, %v9526
        %v9575 = vmul.f32 %v9559, %v9527
        %v9576 = vmul.f32 %v9560, %v9528
        %v9577 = vmul.f32 %v9561, %v9529
        %v9578 = vmul.f32 %v9562, %v9530
        %v9579 = vmul.f32 %v9563, %v9531
        %v9580 = vmul.f32 %v9564, %v9532
        %v9581 = vmul.f32 %v9565, %v9533
        %v9582 = vmul.f32 %v9566, %v9534
        %v9583 = vmul.f32 %v9567, %v9535
        %v9584 = vmul.f32 %v9568, %v9536
        %v9585 = vmul.f32 %v9569, %v9537
        %v9586 = vmul.f32 %v9570, %v9538
        %v9587 = vmul.f32 %v9571, %v9539
        %v9588 = vmul.f32 %v9572, %v9540
        %v9589 = vmul.f32 %v9573, %v9541
        %v9590 = vadd.f32 %v9574, 1.4214138
        %v9591 = vadd.f32 %v9575, 1.4214138
        %v9592 = vadd.f32 %v9576, 1.4214138
        %v9593 = vadd.f32 %v9577, 1.4214138
        %v9594 = vadd.f32 %v9578, 1.4214138
        %v9595 = vadd.f32 %v9579, 1.4214138
        %v9596 = vadd.f32 %v9580, 1.4214138
        %v9597 = vadd.f32 %v9581, 1.4214138
        %v9598 = vadd.f32 %v9582, 1.4214138
        %v9599 = vadd.f32 %v9583, 1.4214138
        %v9600 = vadd.f32 %v9584, 1.4214138
        %v9601 = vadd.f32 %v9585, 1.4214138
        %v9602 = vadd.f32 %v9586, 1.4214138
        %v9603 = vadd.f32 %v9587, 1.4214138
        %v9604 = vadd.f32 %v9588, 1.4214138
        %v9605 = vadd.f32 %v9589, 1.4214138
        %v9606 = vmul.f32 %v9590, %v9526
        %v9607 = vmul.f32 %v9591, %v9527
        %v9608 = vmul.f32 %v9592, %v9528
        %v9609 = vmul.f32 %v9593, %v9529
        %v9610 = vmul.f32 %v9594, %v9530
        %v9611 = vmul.f32 %v9595, %v9531
        %v9612 = vmul.f32 %v9596, %v9532
        %v9613 = vmul.f32 %v9597, %v9533
        %v9614 = vmul.f32 %v9598, %v9534
        %v9615 = vmul.f32 %v9599, %v9535
        %v9616 = vmul.f32 %v9600, %v9536
        %v9617 = vmul.f32 %v9601, %v9537
        %v9618 = vmul.f32 %v9602, %v9538
        %v9619 = vmul.f32 %v9603, %v9539
        %v9620 = vmul.f32 %v9604, %v9540
        %v9621 = vmul.f32 %v9605, %v9541
        %v9622 = vsub.f32 %v9606, 0.28449672
        %v9623 = vsub.f32 %v9607, 0.28449672
        %v9624 = vsub.f32 %v9608, 0.28449672
        %v9625 = vsub.f32 %v9609, 0.28449672
        %v9626 = vsub.f32 %v9610, 0.28449672
        %v9627 = vsub.f32 %v9611, 0.28449672
        %v9628 = vsub.f32 %v9612, 0.28449672
        %v9629 = vsub.f32 %v9613, 0.28449672
        %v9630 = vsub.f32 %v9614, 0.28449672
        %v9631 = vsub.f32 %v9615, 0.28449672
        %v9632 = vsub.f32 %v9616, 0.28449672
        %v9633 = vsub.f32 %v9617, 0.28449672
        %v9634 = vsub.f32 %v9618, 0.28449672
        %v9635 = vsub.f32 %v9619, 0.28449672
        %v9636 = vsub.f32 %v9620, 0.28449672
        %v9637 = vsub.f32 %v9621, 0.28449672
        %v9638 = vmul.f32 %v9622, %v9526
        %v9639 = vmul.f32 %v9623, %v9527
        %v9640 = vmul.f32 %v9624, %v9528
        %v9641 = vmul.f32 %v9625, %v9529
        %v9642 = vmul.f32 %v9626, %v9530
        %v9643 = vmul.f32 %v9627, %v9531
        %v9644 = vmul.f32 %v9628, %v9532
        %v9645 = vmul.f32 %v9629, %v9533
        %v9646 = vmul.f32 %v9630, %v9534
        %v9647 = vmul.f32 %v9631, %v9535
        %v9648 = vmul.f32 %v9632, %v9536
        %v9649 = vmul.f32 %v9633, %v9537
        %v9650 = vmul.f32 %v9634, %v9538
        %v9651 = vmul.f32 %v9635, %v9539
        %v9652 = vmul.f32 %v9636, %v9540
        %v9653 = vmul.f32 %v9637, %v9541
        %v9654 = vadd.f32 %v9638, 0.2548296
        %v9655 = vadd.f32 %v9639, 0.2548296
        %v9656 = vadd.f32 %v9640, 0.2548296
        %v9657 = vadd.f32 %v9641, 0.2548296
        %v9658 = vadd.f32 %v9642, 0.2548296
        %v9659 = vadd.f32 %v9643, 0.2548296
        %v9660 = vadd.f32 %v9644, 0.2548296
        %v9661 = vadd.f32 %v9645, 0.2548296
        %v9662 = vadd.f32 %v9646, 0.2548296
        %v9663 = vadd.f32 %v9647, 0.2548296
        %v9664 = vadd.f32 %v9648, 0.2548296
        %v9665 = vadd.f32 %v9649, 0.2548296
        %v9666 = vadd.f32 %v9650, 0.2548296
        %v9667 = vadd.f32 %v9651, 0.2548296
        %v9668 = vadd.f32 %v9652, 0.2548296
        %v9669 = vadd.f32 %v9653, 0.2548296
        %v9670 = vmul.f32 %v9654, %v9526
        %v9671 = vmul.f32 %v9655, %v9527
        %v9672 = vmul.f32 %v9656, %v9528
        %v9673 = vmul.f32 %v9657, %v9529
        %v9674 = vmul.f32 %v9658, %v9530
        %v9675 = vmul.f32 %v9659, %v9531
        %v9676 = vmul.f32 %v9660, %v9532
        %v9677 = vmul.f32 %v9661, %v9533
        %v9678 = vmul.f32 %v9662, %v9534
        %v9679 = vmul.f32 %v9663, %v9535
        %v9680 = vmul.f32 %v9664, %v9536
        %v9681 = vmul.f32 %v9665, %v9537
        %v9682 = vmul.f32 %v9666, %v9538
        %v9683 = vmul.f32 %v9667, %v9539
        %v9684 = vmul.f32 %v9668, %v9540
        %v9685 = vmul.f32 %v9669, %v9541
        %v9686 = vmul.f32 %v9478, %v9478
        %v9687 = vmul.f32 %v9479, %v9479
        %v9688 = vmul.f32 %v9480, %v9480
        %v9689 = vmul.f32 %v9481, %v9481
        %v9690 = vmul.f32 %v9482, %v9482
        %v9691 = vmul.f32 %v9483, %v9483
        %v9692 = vmul.f32 %v9484, %v9484
        %v9693 = vmul.f32 %v9485, %v9485
        %v9694 = vmul.f32 %v9486, %v9486
        %v9695 = vmul.f32 %v9487, %v9487
        %v9696 = vmul.f32 %v9488, %v9488
        %v9697 = vmul.f32 %v9489, %v9489
        %v9698 = vmul.f32 %v9490, %v9490
        %v9699 = vmul.f32 %v9491, %v9491
        %v9700 = vmul.f32 %v9492, %v9492
        %v9701 = vmul.f32 %v9493, %v9493
        %v9702 = vsub.f32 0.0, %v9686
        %v9703 = vsub.f32 0.0, %v9687
        %v9704 = vsub.f32 0.0, %v9688
        %v9705 = vsub.f32 0.0, %v9689
        %v9706 = vsub.f32 0.0, %v9690
        %v9707 = vsub.f32 0.0, %v9691
        %v9708 = vsub.f32 0.0, %v9692
        %v9709 = vsub.f32 0.0, %v9693
        %v9710 = vsub.f32 0.0, %v9694
        %v9711 = vsub.f32 0.0, %v9695
        %v9712 = vsub.f32 0.0, %v9696
        %v9713 = vsub.f32 0.0, %v9697
        %v9714 = vsub.f32 0.0, %v9698
        %v9715 = vsub.f32 0.0, %v9699
        %v9716 = vsub.f32 0.0, %v9700
        %v9717 = vsub.f32 0.0, %v9701
        %v9718 = vmul.f32 %v9702, 1.442695
        %v9719 = vpow.pop %v9718
        %v9720 = vmul.f32 %v9703, 1.442695
        %v9721 = vpow.pop %v9720
        %v9722 = vmul.f32 %v9704, 1.442695
        %v9723 = vpow.pop %v9722
        %v9724 = vmul.f32 %v9705, 1.442695
        %v9725 = vpow.pop %v9724
        %v9726 = vmul.f32 %v9706, 1.442695
        %v9727 = vpow.pop %v9726
        %v9728 = vmul.f32 %v9707, 1.442695
        %v9729 = vpow.pop %v9728
        %v9730 = vmul.f32 %v9708, 1.442695
        %v9731 = vpow.pop %v9730
        %v9732 = vmul.f32 %v9709, 1.442695
        %v9733 = vpow.pop %v9732
        %v9734 = vmul.f32 %v9710, 1.442695
        %v9735 = vpow.pop %v9734
        %v9736 = vmul.f32 %v9711, 1.442695
        %v9737 = vpow.pop %v9736
        %v9738 = vmul.f32 %v9712, 1.442695
        %v9739 = vpow.pop %v9738
        %v9740 = vmul.f32 %v9713, 1.442695
        %v9741 = vpow.pop %v9740
        %v9742 = vmul.f32 %v9714, 1.442695
        %v9743 = vpow.pop %v9742
        %v9744 = vmul.f32 %v9715, 1.442695
        %v9745 = vpow.pop %v9744
        %v9746 = vmul.f32 %v9716, 1.442695
        %v9747 = vpow.pop %v9746
        %v9748 = vmul.f32 %v9717, 1.442695
        %v9749 = vpow.pop %v9748
        %v9750 = vmul.f32 %v9670, %v9719
        %v9751 = vmul.f32 %v9671, %v9721
        %v9752 = vmul.f32 %v9672, %v9723
        %v9753 = vmul.f32 %v9673, %v9725
        %v9754 = vmul.f32 %v9674, %v9727
        %v9755 = vmul.f32 %v9675, %v9729
        %v9756 = vmul.f32 %v9676, %v9731
        %v9757 = vmul.f32 %v9677, %v9733
        %v9758 = vmul.f32 %v9678, %v9735
        %v9759 = vmul.f32 %v9679, %v9737
        %v9760 = vmul.f32 %v9680, %v9739
        %v9761 = vmul.f32 %v9681, %v9741
        %v9762 = vmul.f32 %v9682, %v9743
        %v9763 = vmul.f32 %v9683, %v9745
        %v9764 = vmul.f32 %v9684, %v9747
        %v9765 = vmul.f32 %v9685, %v9749
        %v9766 = vsub.f32 1.0, %v9750
        %v9767 = vsub.f32 1.0, %v9751
        %v9768 = vsub.f32 1.0, %v9752
        %v9769 = vsub.f32 1.0, %v9753
        %v9770 = vsub.f32 1.0, %v9754
        %v9771 = vsub.f32 1.0, %v9755
        %v9772 = vsub.f32 1.0, %v9756
        %v9773 = vsub.f32 1.0, %v9757
        %v9774 = vsub.f32 1.0, %v9758
        %v9775 = vsub.f32 1.0, %v9759
        %v9776 = vsub.f32 1.0, %v9760
        %v9777 = vsub.f32 1.0, %v9761
        %v9778 = vsub.f32 1.0, %v9762
        %v9779 = vsub.f32 1.0, %v9763
        %v9780 = vsub.f32 1.0, %v9764
        %v9781 = vsub.f32 1.0, %v9765
        %vm9782 = vcmp.ge.f32.partialorder %v9462, 0.0
        %vm9783 = vcmp.ge.f32.partialorder %v9463, 0.0
        %vm9784 = vcmp.ge.f32.partialorder %v9464, 0.0
        %vm9785 = vcmp.ge.f32.partialorder %v9465, 0.0
        %vm9786 = vcmp.ge.f32.partialorder %v9466, 0.0
        %vm9787 = vcmp.ge.f32.partialorder %v9467, 0.0
        %vm9788 = vcmp.ge.f32.partialorder %v9468, 0.0
        %vm9789 = vcmp.ge.f32.partialorder %v9469, 0.0
        %vm9790 = vcmp.ge.f32.partialorder %v9470, 0.0
        %vm9791 = vcmp.ge.f32.partialorder %v9471, 0.0
        %vm9792 = vcmp.ge.f32.partialorder %v9472, 0.0
        %vm9793 = vcmp.ge.f32.partialorder %v9473, 0.0
        %vm9794 = vcmp.ge.f32.partialorder %v9474, 0.0
        %vm9795 = vcmp.ge.f32.partialorder %v9475, 0.0
        %vm9796 = vcmp.ge.f32.partialorder %v9476, 0.0
        %vm9797 = vcmp.ge.f32.partialorder %v9477, 0.0
        %v9798 = vsub.f32 0.0, %v9766
        %v9799 = vsub.f32 0.0, %v9767
        %v9800 = vsub.f32 0.0, %v9768
        %v9801 = vsub.f32 0.0, %v9769
        %v9802 = vsub.f32 0.0, %v9770
        %v9803 = vsub.f32 0.0, %v9771
        %v9804 = vsub.f32 0.0, %v9772
        %v9805 = vsub.f32 0.0, %v9773
        %v9806 = vsub.f32 0.0, %v9774
        %v9807 = vsub.f32 0.0, %v9775
        %v9808 = vsub.f32 0.0, %v9776
        %v9809 = vsub.f32 0.0, %v9777
        %v9810 = vsub.f32 0.0, %v9778
        %v9811 = vsub.f32 0.0, %v9779
        %v9812 = vsub.f32 0.0, %v9780
        %v9813 = vsub.f32 0.0, %v9781
        %v9814 = vsel %vm9782, %v9766, %v9798
        %v9815 = vsel %vm9783, %v9767, %v9799
        %v9816 = vsel %vm9784, %v9768, %v9800
        %v9817 = vsel %vm9785, %v9769, %v9801
        %v9818 = vsel %vm9786, %v9770, %v9802
        %v9819 = vsel %vm9787, %v9771, %v9803
        %v9820 = vsel %vm9788, %v9772, %v9804
        %v9821 = vsel %vm9789, %v9773, %v9805
        %v9822 = vsel %vm9790, %v9774, %v9806
        %v9823 = vsel %vm9791, %v9775, %v9807
        %v9824 = vsel %vm9792, %v9776, %v9808
        %v9825 = vsel %vm9793, %v9777, %v9809
        %v9826 = vsel %vm9794, %v9778, %v9810
        %v9827 = vsel %vm9795, %v9779, %v9811
        %v9828 = vsel %vm9796, %v9780, %v9812
        %v9829 = vsel %vm9797, %v9781, %v9813
        %v9830 = vmul.f32 %v9400, 0.5
        %v9831 = vmul.f32 %v9403, 0.5
        %v9832 = vmul.f32 %v9408, 0.5
        %v9833 = vmul.f32 %v9411, 0.5
        %v9834 = vmul.f32 %v9416, 0.5
        %v9835 = vmul.f32 %v9419, 0.5
        %v9836 = vmul.f32 %v9424, 0.5
        %v9837 = vmul.f32 %v9427, 0.5
        %v9838 = vmul.f32 %v9432, 0.5
        %v9839 = vmul.f32 %v9435, 0.5
        %v9840 = vmul.f32 %v9440, 0.5
        %v9841 = vmul.f32 %v9443, 0.5
        %v9842 = vmul.f32 %v9448, 0.5
        %v9843 = vmul.f32 %v9451, 0.5
        %v9844 = vmul.f32 %v9456, 0.5
        %v9845 = vmul.f32 %v9459, 0.5
        %v9846 = vadd.f32 %v9814, 1.0
        %v9847 = vadd.f32 %v9815, 1.0
        %v9848 = vadd.f32 %v9816, 1.0
        %v9849 = vadd.f32 %v9817, 1.0
        %v9850 = vadd.f32 %v9818, 1.0
        %v9851 = vadd.f32 %v9819, 1.0
        %v9852 = vadd.f32 %v9820, 1.0
        %v9853 = vadd.f32 %v9821, 1.0
        %v9854 = vadd.f32 %v9822, 1.0
        %v9855 = vadd.f32 %v9823, 1.0
        %v9856 = vadd.f32 %v9824, 1.0
        %v9857 = vadd.f32 %v9825, 1.0
        %v9858 = vadd.f32 %v9826, 1.0
        %v9859 = vadd.f32 %v9827, 1.0
        %v9860 = vadd.f32 %v9828, 1.0
        %v9861 = vadd.f32 %v9829, 1.0
        %v9862 = vmul.f32 %v9830, %v9846
        %v9863 = vmul.f32 %v9831, %v9847
        %v9864 = vmul.f32 %v9832, %v9848
        %v9865 = vmul.f32 %v9833, %v9849
        %v9866 = vmul.f32 %v9834, %v9850
        %v9867 = vmul.f32 %v9835, %v9851
        %v9868 = vmul.f32 %v9836, %v9852
        %v9869 = vmul.f32 %v9837, %v9853
        %v9870 = vmul.f32 %v9838, %v9854
        %v9871 = vmul.f32 %v9839, %v9855
        %v9872 = vmul.f32 %v9840, %v9856
        %v9873 = vmul.f32 %v9841, %v9857
        %v9874 = vmul.f32 %v9842, %v9858
        %v9875 = vmul.f32 %v9843, %v9859
        %v9876 = vmul.f32 %v9844, %v9860
        %v9877 = vmul.f32 %v9845, %v9861
        %v9878 = vpack.c.bf16 %v9863, %v9862
        %v9879 = vpack.c.bf16 %v9865, %v9864
        %v9880 = vpack.c.bf16 %v9867, %v9866
        %v9881 = vpack.c.bf16 %v9869, %v9868
        %v9882 = vpack.c.bf16 %v9871, %v9870
        %v9883 = vpack.c.bf16 %v9873, %v9872
        %v9884 = vpack.c.bf16 %v9875, %v9874
        %v9885 = vpack.c.bf16 %v9877, %v9876
        %v9886 = vld [vmem:[%s10] sm:$0xf]
        %v9887 = vld [vmem:[%s10 + $0x4] sm:$0xf]
        %v9888 = vld [vmem:[%s10 + $0x8] sm:$0xf]
        %v9889 = vld [vmem:[%s10 + $0xc] sm:$0xf]
        %v9890 = vld [vmem:[%s10 + $0x10] sm:$0xf]
        %v9891 = vld [vmem:[%s10 + $0x14] sm:$0xf]
        %v9892 = vld [vmem:[%s10 + $0x18] sm:$0xf]
        %v9893 = vld [vmem:[%s10 + $0x1c] sm:$0xf]
        %v9894 = vld [vmem:[%s10 + $0x20] sm:$0xf]
        %v9895 = vld [vmem:[%s10 + $0x24] sm:$0xf]
        %v9896 = vld [vmem:[%s10 + $0x28] sm:$0xf]
        %v9897 = vld [vmem:[%s10 + $0x2c] sm:$0xf]
        %v9898 = vld [vmem:[%s10 + $0x30] sm:$0xf]
        %v9899 = vld [vmem:[%s10 + $0x34] sm:$0xf]
        %v9900 = vld [vmem:[%s10 + $0x38] sm:$0xf]
        %v9901 = vld [vmem:[%s10 + $0x3c] sm:$0xf]
        %v9902 = vlaneseq
        %v9903 = vshrl.u32 %v9902, 7
        %v9904 = vsub.s32 7, %v9903
        %v9905 = vrot.slane %v5400, %v9904
        %v9922 = vunpack.c.l.b16 %v9886
        %v9923 = vunpack.c.l.b16 %v9887
        %v9924 = vunpack.c.l.b16 %v9888
        %v9925 = vunpack.c.l.b16 %v9889
        %v9926 = vunpack.c.l.b16 %v9890
        %v9927 = vunpack.c.l.b16 %v9891
        %v9928 = vunpack.c.l.b16 %v9892
        %v9929 = vunpack.c.l.b16 %v9893
        %v9930 = vunpack.c.l.b16 %v9894
        %v9931 = vunpack.c.l.b16 %v9895
        %v9932 = vunpack.c.l.b16 %v9896
        %v9933 = vunpack.c.l.b16 %v9897
        %v9934 = vunpack.c.l.b16 %v9898
        %v9935 = vunpack.c.l.b16 %v9899
        %v9936 = vunpack.c.l.b16 %v9900
        %v9937 = vunpack.c.l.b16 %v9901
        %v9938 = vpack.c.b16 %v9923, %v9922
        %v9939 = vpack.c.b16 %v9925, %v9924
        %v9940 = vpack.c.b16 %v9927, %v9926
        %v9941 = vpack.c.b16 %v9929, %v9928
        %v9942 = vpack.c.b16 %v9931, %v9930
        %v9943 = vpack.c.b16 %v9933, %v9932
        %v9944 = vpack.c.b16 %v9935, %v9934
        %v9945 = vpack.c.b16 %v9937, %v9936
        %9954 = vmatprep.subr.bf16.mxu0 0
        %9955 = vmatpush1.bf16.msra.mxu0 %v9945
        %9956 = vmatprep.subr.bf16.mxu0 0
        %9957 = vmatpush1.bf16.msra.mxu0 %v9944
        %9958 = vmatprep.subr.bf16.mxu0 0
        %9959 = vmatpush1.bf16.msra.mxu0 %v9943
        %9960 = vmatprep.subr.bf16.mxu0 0
        %9961 = vmatpush1.bf16.msra.mxu0 %v9942
        %9962 = vmatprep.subr.bf16.mxu0 0
        %9963 = vmatpush1.bf16.msra.mxu0 %v9941
        %9964 = vmatprep.subr.bf16.mxu0 0
        %9965 = vmatpush1.bf16.msra.mxu0 %v9940
        %9966 = vmatprep.subr.bf16.mxu0 0
        %9967 = vmatpush1.bf16.msra.mxu0 %v9939
        %9968 = vmatprep.subr.bf16.mxu0 0
        %9969 = vmatpush1.bf16.msra.mxu0 %v9938
        %9970 = vmatprep.subr.bf16.mxu0 0
        %9971 = vmatpush2.bf16.msra.mxu0 0
        %9972 = vmatprep.subr.bf16.mxu0 0
        %9973 = vmatpush2.bf16.msra.mxu0 0
        %9974 = vmatprep.subr.bf16.mxu0 0
        %9975 = vmatpush2.bf16.msra.mxu0 0
        %9976 = vmatprep.subr.bf16.mxu0 0
        %9977 = vmatpush2.bf16.msra.mxu0 0
        %9978 = vmatprep.subr.bf16.mxu0 0
        %9979 = vmatpush2.bf16.msra.mxu0 0
        %9980 = vmatprep.subr.bf16.mxu0 0
        %9981 = vmatpush2.bf16.msra.mxu0 0
        %9982 = vmatprep.subr.bf16.mxu0 0
        %9983 = vmatpush2.bf16.msra.mxu0 0
        %9984 = vmatprep.subr.bf16.mxu0 0
        %9985 = vmatpush2.bf16.msra.mxu0 0
        %9986 = vmatprep.mubr.bf16.mxu0 0
        %9987 = vmatmul.mubr.bf16.gmra.mxu0 %v9878
        %v9988 = vpop.f32.mrf.mxu0
        %v9989 = vadd.f32 %v9905, %v9988
        %v9990 = vpop.f32.mrf.mxu0
        %v9991 = vpop.f32.mrf.mxu0
        %v9992 = vadd.f32 %v9905, %v9991
        %v9993 = vpop.f32.mrf.mxu0
        %9994 = vmatprep.mubr.bf16.mxu0 0
        %9995 = vmatmul.mubr.bf16.gmra.mxu0 %v9879
        %v9996 = vpop.f32.mrf.mxu0
        %v9997 = vadd.f32 %v9905, %v9996
        %v9998 = vpop.f32.mrf.mxu0
        %v9999 = vpop.f32.mrf.mxu0
        %v10000 = vadd.f32 %v9905, %v9999
        %v10001 = vpop.f32.mrf.mxu0
        %10002 = vmatprep.mubr.bf16.mxu0 0
        %10003 = vmatmul.mubr.bf16.gmra.mxu0 %v9880
        %v10004 = vpop.f32.mrf.mxu0
        %v10005 = vadd.f32 %v9905, %v10004
        %v10006 = vpop.f32.mrf.mxu0
        %v10007 = vpop.f32.mrf.mxu0
        %v10008 = vadd.f32 %v9905, %v10007
        %v10009 = vpop.f32.mrf.mxu0
        %10010 = vmatprep.mubr.bf16.mxu0 0
        %10011 = vmatmul.mubr.bf16.gmra.mxu0 %v9881
        %v10012 = vpop.f32.mrf.mxu0
        %v10013 = vadd.f32 %v9905, %v10012
        %v10014 = vpop.f32.mrf.mxu0
        %v10015 = vpop.f32.mrf.mxu0
        %v10016 = vadd.f32 %v9905, %v10015
        %v10017 = vpop.f32.mrf.mxu0
        %10018 = vmatprep.mubr.bf16.mxu0 0
        %10019 = vmatmul.mubr.bf16.gmra.mxu0 %v9882
        %v10020 = vpop.f32.mrf.mxu0
        %v10021 = vadd.f32 %v9905, %v10020
        %v10022 = vpop.f32.mrf.mxu0
        %v10023 = vpop.f32.mrf.mxu0
        %v10024 = vadd.f32 %v9905, %v10023
        %v10025 = vpop.f32.mrf.mxu0
        %10026 = vmatprep.mubr.bf16.mxu0 0
        %10027 = vmatmul.mubr.bf16.gmra.mxu0 %v9883
        %v10028 = vpop.f32.mrf.mxu0
        %v10029 = vadd.f32 %v9905, %v10028
        %v10030 = vpop.f32.mrf.mxu0
        %v10031 = vpop.f32.mrf.mxu0
        %v10032 = vadd.f32 %v9905, %v10031
        %v10033 = vpop.f32.mrf.mxu0
        %10034 = vmatprep.mubr.bf16.mxu0 0
        %10035 = vmatmul.mubr.bf16.gmra.mxu0 %v9884
        %v10036 = vpop.f32.mrf.mxu0
        %v10037 = vadd.f32 %v9905, %v10036
        %v10038 = vpop.f32.mrf.mxu0
        %v10039 = vpop.f32.mrf.mxu0
        %v10040 = vadd.f32 %v9905, %v10039
        %v10041 = vpop.f32.mrf.mxu0
        %10042 = vmatprep.mubr.bf16.mxu0 0
        %10043 = vmatmul.mubr.bf16.gmra.mxu0 %v9885
        %v10044 = vpop.f32.mrf.mxu0
        %v10045 = vadd.f32 %v9905, %v10044
        %v10046 = vpop.f32.mrf.mxu0
        %v10047 = vpop.f32.mrf.mxu0
        %v10048 = vadd.f32 %v9905, %v10047
        %v10049 = vpop.f32.mrf.mxu0
        %10050 = vdwg.mxu0
        %v10051 = vlaneseq
        %v10052 = vshrl.u32 %v10051, 7
        %v10053 = vsub.s32 5, %v10052
        %v10054 = vrot.slane %v5400, %v10053
        %v10055 = vmul.f32 %v10054, %v9989
        %v10056 = vmul.f32 %v10054, %v9992
        %v10057 = vmul.f32 %v10054, %v9997
        %v10058 = vmul.f32 %v10054, %v10000
        %v10059 = vmul.f32 %v10054, %v10005
        %v10060 = vmul.f32 %v10054, %v10008
        %v10061 = vmul.f32 %v10054, %v10013
        %v10062 = vmul.f32 %v10054, %v10016
        %v10063 = vmul.f32 %v10054, %v10021
        %v10064 = vmul.f32 %v10054, %v10024
        %v10065 = vmul.f32 %v10054, %v10029
        %v10066 = vmul.f32 %v10054, %v10032
        %v10067 = vmul.f32 %v10054, %v10037
        %v10068 = vmul.f32 %v10054, %v10040
        %v10069 = vmul.f32 %v10054, %v10045
        %v10070 = vmul.f32 %v10054, %v10048
        %v10071 = vadd.f32 %v9049, %v10055
        %v10072 = vadd.f32 %v9050, %v10056
        %v10073 = vadd.f32 %v9051, %v10057
        %v10074 = vadd.f32 %v9052, %v10058
        %v10075 = vadd.f32 %v9053, %v10059
        %v10076 = vadd.f32 %v9054, %v10060
        %v10077 = vadd.f32 %v9055, %v10061
        %v10078 = vadd.f32 %v9056, %v10062
        %v10079 = vadd.f32 %v9057, %v10063
        %v10080 = vadd.f32 %v9058, %v10064
        %v10081 = vadd.f32 %v9059, %v10065
        %v10082 = vadd.f32 %v9060, %v10066
        %v10083 = vadd.f32 %v9061, %v10067
        %v10084 = vadd.f32 %v9062, %v10068
        %v10085 = vadd.f32 %v9063, %v10069
        %v10086 = vadd.f32 %v9064, %v10070
        %10087 = vst.msk [vmem:[%s428] sm:$0xff] %vm579, %v10071
        %10088 = vst.msk [vmem:[%s428 + $0x8] sm:$0xff] %vm579, %v10072
        %10089 = vst.msk [vmem:[%s428 + $0x10] sm:$0xff] %vm579, %v10073
        %10090 = vst.msk [vmem:[%s428 + $0x18] sm:$0xff] %vm579, %v10074
        %10091 = vst.msk [vmem:[%s428 + $0x20] sm:$0xff] %vm579, %v10075
        %10092 = vst.msk [vmem:[%s428 + $0x28] sm:$0xff] %vm579, %v10076
        %10093 = vst.msk [vmem:[%s428 + $0x30] sm:$0xff] %vm579, %v10077
        %10094 = vst.msk [vmem:[%s428 + $0x38] sm:$0xff] %vm579, %v10078
        %10095 = vst.msk [vmem:[%s428 + $0x40] sm:$0xff] %vm579, %v10079
        %10096 = vst.msk [vmem:[%s428 + $0x48] sm:$0xff] %vm579, %v10080
        %10097 = vst.msk [vmem:[%s428 + $0x50] sm:$0xff] %vm579, %v10081
        %10098 = vst.msk [vmem:[%s428 + $0x58] sm:$0xff] %vm579, %v10082
        %10099 = vst.msk [vmem:[%s428 + $0x60] sm:$0xff] %vm579, %v10083
        %10100 = vst.msk [vmem:[%s428 + $0x68] sm:$0xff] %vm579, %v10084
        %10101 = vst.msk [vmem:[%s428 + $0x70] sm:$0xff] %vm579, %v10085
        %10102 = vst.msk [vmem:[%s428 + $0x78] sm:$0xff] %vm579, %v10086
        %p10103 = scmp.lt.s32.totalorder %s24, 1
        %s10104 = scalar_select %p10103, %s24, 1
        %s10105 = smul.addr %s10104, 16
        %s10106 = smul.addr %s10105, 8
        %s10107 = scalar_lea.vmem %s12, %s10106
        // Predicated region
        $region73: #{tpu_custom_call.1} parent=67 // pred_check
          %p10108 = pneg %p299
        $region74: #{tpu_custom_call.1} parent=67 // pred_check_branch
          %10110 = sbr.rel (%p10108) target = $region76
        $region75: #{tpu_custom_call.1} parent=67 // pred_region
          _
        $region76: #{tpu_custom_call.1} parent=67 // pred_fallthru
          _
      $region68: #{tpu_custom_call.1} parent=5 // pred_fallthru
        _
      %p10111 = scmp.le.s32.totalorder 2, %s19
      // Predicated region
      $region77: #{tpu_custom_call.1} parent=5 // pred_check
        %p10112 = pneg %p10111
      $region78: #{tpu_custom_call.1} parent=5 // pred_check_branch
        %10114 = sbr.rel (%p10112) target = $region80
      $region79: #{tpu_custom_call.1} parent=5 // pred_region
        %s10115 = ssub.s32 %s19, 2
        // Predicated region
        $region81: #{tpu_custom_call.1} parent=79 // pred_check
          %p10116 = pneg %p305
        $region82: #{tpu_custom_call.1} parent=79 // pred_check_branch
          %10118 = sbr.rel (%p10116) target = $region84
        $region83: #{tpu_custom_call.1} parent=79 // pred_region
          %p10119 = scmp.lt.s32.totalorder %s25, 1
          %s10120 = scalar_select %p10119, %s25, 1
          %s10121 = smul.addr %s10120, 16
          %s10122 = smul.addr %s10121, 8
          %s10123 = scalar_lea.vmem %s12, %s10122
        $region84: #{tpu_custom_call.1} parent=79 // pred_fallthru
          _
      $region80: #{tpu_custom_call.1} parent=5 // pred_fallthru
        _
    $region6: #{tpu_custom_call.1} parent=1 // loop_footer
      %s23 = sadd.s32 1, %s19
    $region7: #{tpu_custom_call.1} parent=1 // loop_footer_branch
      %18 = sbr.rel target = $region3
    $region8: #{tpu_custom_call.1} parent=1 // loop_exit
      _
    %10124 = vsyncpa [#allocation3], 1
    %s10125 = scalar_lea.sflag [#allocation3], 1
    %10126 = vsyncpa %s10125, 1

</llo_original>
